<compile_context>
chip_gen: v5e
topology: v5e:2x2
jax: 0.10.0
libtpu: 0.0.40
codegen_flags: <defaults>
</compile_context>

<pallas_src>
import numpy as np
import jax
import jax.numpy as jnp
from jax.experimental import pallas as pl
from jax.experimental.pallas import tpu as pltpu

NEG_SLOPE = 0.01          # F.leaky_relu default negative_slope
BN_EPS = 1e-5

# ---- hyperparameters (module-level globals of the original script) ----
GNN, MD, MBTR = 1, 1, 1
p1, p2 = 8, 16
p_md, p_mbtr = 16, 16
nbr_node_features = 8
nbr_edge_features = 4
nbrGlobalFeatures = 8
nbrMBTRFeatures = 24

TOT = 2 * p2 + p_md + p_mbtr          # 64
P1A = p1 + 1                          # edge-net hidden width + 1 "ones" column (bias)


# ----------------------------------------------------------------------
# Static layout of the packed weight slab (single VMEM input)
# ----------------------------------------------------------------------
def _build_layout():
    entries = [
        ('lin0_w', (nbr_node_features, p2)),
        ('lin0_b', (1, p2)),
        ('enn1_w', (nbr_edge_features, p1)),
        ('enn1_b', (1, p1)),
        ('w2b',    (P1A * p2, p2)),                       # edge-net stage2 (matmul-ified)
        ('root_w', (p2, p2)),
        ('root_b', (1, p2)),
        ('gru_w',  (2 * p2, 4 * p2)),                     # fused [m|h] GRU weight
        ('gru_b',  (1, 4 * p2)),
        ('lstm_w', (3 * p2, 4 * p2)),                     # fused [q|r|h] LSTM weight
        ('lstm_b', (1, 4 * p2)),
        ('mm1_w',  (nbrGlobalFeatures + nbrMBTRFeatures, 4 * (p_md + p_mbtr))),
        ('mm1_b',  (1, 4 * (p_md + p_mbtr))),
        ('mm2_w',  (4 * (p_md + p_mbtr), 2 * (p_md + p_mbtr))),
        ('mm2_b',  (1, 2 * (p_md + p_mbtr))),
        ('mm3_w',  (2 * (p_md + p_mbtr), p_md + p_mbtr)),
        ('mm3_b',  (1, p_md + p_mbtr)),
        ('l1_w',   (TOT, round(TOT / 2))),
        ('l1_b',   (1, round(TOT / 2))),
        ('l2_w',   (round(TOT / 2), round(TOT / 4))),
        ('l2_b',   (1, round(TOT / 4))),
        ('lf_w',   (round(TOT / 4), 1)),
        ('lf_b',   (1, 1)),
    ]
    layout, off, maxc = {}, 0, 0
    for name, (r, c) in entries:
        layout[name] = (off, r, c)
        off += -(-r // 8) * 8          # 8-align every row offset (sublane boundary)
        maxc = max(maxc, c)
    return layout, off, maxc


LAYOUT, SLAB_ROWS, SLAB_COLS = _build_layout()


# ----------------------------------------------------------------------
# Single fused Pallas kernel: whole Net.forward (eval mode)
# ----------------------------------------------------------------------
def _net_kernel(x_ref, ea_ref, src_ref, dst_ref, bat_ref, u_ref, mbtr_ref, w_ref, o_ref):
    f32 = jnp.float32
    N = x_ref.shape[0]
    E = ea_ref.shape[0]
    B = u_ref.shape[0]
    P2 = p2

    def w(name):
        off, r, c = LAYOUT[name]
        return w_ref[off:off + r, 0:c]

    def leaky(v):
        return jnp.where(v >= 0.0, v, NEG_SLOPE * v)

    def sigm(v):
        # divide goes to the (idle) EUP slot
        return pl.reciprocal(1.0 + jnp.exp(-v), approx=True)

    def mm(a, b):
        return jnp.dot(a, b, preferred_element_type=f32)

    # ---- assignment matrices built in-kernel from index vectors -------------
    # G[e, n]  = 1 if src[e] == n           (gather of source-node features)
    # Dt[n, e] = 1 if dst[e] == n           (scatter sum at dst; mean via inv_deg)
    # M[b, n]  = 1 if batch[n] == b         (per-graph membership mask)
    src = src_ref[...]                                                    # (E, 1) i32
    G = jnp.where(src == jax.lax.broadcasted_iota(jnp.int32, (E, N), 1), 1.0, 0.0)
    dst = dst_ref[...]                                                    # (1, E) i32
    Dt = jnp.where(dst == jax.lax.broadcasted_iota(jnp.int32, (N, E), 0), 1.0, 0.0)
    inv_deg = 1.0 / jnp.maximum(jnp.sum(Dt, axis=1, keepdims=True), 1.0)  # (N, 1)
    bat = bat_ref[...]                                                    # (1, N) i32
    M = jnp.where(bat == jax.lax.broadcasted_iota(jnp.int32, (B, N), 0), 1.0, 0.0)

    # ---- GNN branch: lin0 + BN0 (folded) + LeakyReLU --------------------------
    out = leaky(mm(x_ref[...], w('lin0_w')) + w('lin0_b'))               # (N, P2)
    h = out                                                              # GRU hidden

    # edge network stage 1, plus replicated layout for the matmul-ified stage 2:
    # eh_rep[e, k*P2 + p] = eh_aug[e, k]   (eh_aug = [eh | 1]; the 1 carries enn2 bias)
    eh = leaky(mm(ea_ref[...], w('enn1_w')) + w('enn1_b'))               # (E, p1)
    eh_aug = jnp.concatenate([eh, jnp.ones((E, 1), f32)], axis=1)        # (E, p1+1)
    kk = jax.lax.broadcasted_iota(jnp.int32, (P1A, P1A * P2), 0)
    jj = jax.lax.broadcasted_iota(jnp.int32, (P1A, P1A * P2), 1)
    R = jnp.where((jj >= kk * P2) & (jj < (kk + 1) * P2), 1.0, 0.0)      # (p1+1, (p1+1)*P2)
    eh_rep = mm(eh_aug, R)                                               # (E, (p1+1)*P2)

    w2b = w('w2b')                                                       # ((p1+1)*P2, P2)
    root_w, root_b = w('root_w'), w('root_b')
    gru_w, gru_b = w('gru_w'), w('gru_b')

    # ---- 3 rounds of leaky_relu(NNConv(mean)) + GRU --------------------------
    for _ in range(3):
        xs = mm(G, out)                                                  # (E, P2) gather x[src]
        xs_rep = jnp.concatenate([xs] * P1A, axis=1)                     # (E, (p1+1)*P2)
        # msg[e,q] = sum_p xs[e,p] * (enn2(eh)[e, p*P2+q])  as ONE MXU dot
        msg = mm(eh_rep * xs_rep, w2b)                                   # (E, P2)
        agg = mm(Dt, msg) * inv_deg                                      # (N, P2) mean at dst
        m = leaky(agg + mm(out, root_w) + root_b)                        # NNConv + leaky_relu
        # GRU cell, fused input/hidden matmul; PyTorch gate order (r, z, n)
        mh = jnp.concatenate([m, h], axis=1)                             # (N, 2*P2)
        g = mm(mh, gru_w) + gru_b                                        # (N, 4*P2)
        r = sigm(g[:, 0:P2])
        z = sigm(g[:, P2:2 * P2])
        n = jnp.tanh(g[:, 2 * P2:3 * P2] + r * g[:, 3 * P2:4 * P2])
        out = (1.0 - z) * n + z * h
        h = out

    # ---- Set2Set (processing_steps = 3); segment softmax via mask matrix M ---
    lstm_w, lstm_b = w('lstm_w'), w('lstm_b')
    outT = out.T                                                         # (P2, N) hoisted
    hs = jnp.zeros((B, P2), f32)
    cs = jnp.zeros((B, P2), f32)
    q = jnp.zeros((B, P2), f32)          # first half of q_star
    r_read = jnp.zeros((B, P2), f32)     # second half of q_star
    for _ in range(3):
        # LSTM step on q_star = [q, r_read]; all three dots fused into one matmul
        qrh = jnp.concatenate([q, r_read, hs], axis=1)                   # (B, 3*P2)
        g = mm(qrh, lstm_w) + lstm_b                                     # (B, 4*P2)
        ig = sigm(g[:, 0:P2])
        fg = sigm(g[:, P2:2 * P2])
        gg = jnp.tanh(g[:, 2 * P2:3 * P2])
        og = sigm(g[:, 3 * P2:4 * P2])
        cs = fg * cs + ig * gg
        hs = og * jnp.tanh(cs)
        q = hs
        # attention scores e[b, n] = q[b] . out[n]
        e = mm(q, outT)                                                  # (B, N)
        e = jnp.where(M > 0.0, e, jnp.float32(-1e30))
        a = jnp.exp(e - jnp.max(e, axis=-1, keepdims=True)) * M
        a = a / jnp.maximum(jnp.sum(a, axis=-1, keepdims=True), 1e-12)   # per-graph softmax
        r_read = mm(a, out)                                              # (B, P2) readout

    # ---- MD + MBTR branches, fused with block-diagonal weights ---------------
    mb = mbtr_ref[...]
    mb = jnp.where(jnp.isnan(mb), 0.0, mb)                               # NaN -> 0
    z0 = jnp.concatenate([u_ref[...], mb], axis=1)                       # (B, 8+24)
    z1 = leaky(mm(z0, w('mm1_w')) + w('mm1_b'))                          # (B, 160)
    z2 = leaky(mm(z1, w('mm2_w')) + w('mm2_b'))                          # (B, 80)
    z3 = leaky(mm(z2, w('mm3_w')) + w('mm3_b'))                          # (B, 32) = [y_md|y_mbtr]

    # ---- final MLP; dropout(p=0.5) is identity in eval mode ------------------
    yin = jnp.concatenate([q, r_read, z3], axis=1)                       # (B, TOT)
    y = leaky(mm(yin, w('l1_w')) + w('l1_b'))
    y = leaky(mm(y, w('l2_w')) + w('l2_b'))
    y = mm(y, w('lf_w')) + w('lf_b')                                     # (B, 1)
    o_ref[...] = y


# ----------------------------------------------------------------------
# Parameters (deterministic synthetic init; PyTorch (out,in) weights stored as (in,out))
# ----------------------------------------------------------------------
def init_params(key):
    keys = iter(jax.random.split(key, 80))
    nk = lambda: next(keys)

    def W(shape):
        return jax.random.normal(nk(), shape, jnp.float32) / jnp.sqrt(shape[0])

    def b(n):
        return 0.1 * jax.random.normal(nk(), (n,), jnp.float32)

    def gamma(n):
        return 1.0 + 0.1 * jax.random.normal(nk(), (n,), jnp.float32)

    def bn_stats(n):   # fresh-BN running stats; fold is general (mean/var kept)
        return jnp.zeros((n,), jnp.float32), jnp.ones((n,), jnp.float32)

    P = {}
    # GNN branch
    P['lin0_w'] = W((nbr_node_features, p2))
    P['bn0_g'], P['bn0_b'] = gamma(p2), b(p2)
    P['bn0_m'], P['bn0_v'] = bn_stats(p2)
    P['enn1_w'] = W((nbr_edge_features, p1))
    P['enn_bn1_g'], P['enn_bn1_b'] = gamma(p1), b(p1)
    P['enn_bn1_m'], P['enn_bn1_v'] = bn_stats(p1)
    P['enn2_w'] = W((p1, p2 * p2))
    P['enn_bn2_g'], P['enn_bn2_b'] = gamma(p2 * p2), b(p2 * p2)
    P['enn_bn2_m'], P['enn_bn2_v'] = bn_stats(p2 * p2)
    P['conv_root_w'] = W((p2, p2))
    P['conv_bias'] = b(p2)
    P['gru_wih'], P['gru_whh'] = W((p2, 3 * p2)), W((p2, 3 * p2))
    P['gru_bih'], P['gru_bhh'] = b(3 * p2), b(3 * p2)
    P['s2s_wih'], P['s2s_whh'] = W((2 * p2, 4 * p2)), W((p2, 4 * p2))
    P['s2s_bih'], P['s2s_bhh'] = b(4 * p2), b(4 * p2)
    # MD branch
    P['md1_w'], P['md1_b'] = W((nbrGlobalFeatures, 4 * p_md)), b(4 * p_md)
    P['md2_w'], P['md2_b'] = W((4 * p_md, 2 * p_md)), b(2 * p_md)
    P['md3_w'], P['md3_b'] = W((2 * p_md, p_md)), b(p_md)
    # MBTR branch
    P['mbtr1_w'] = W((nbrMBTRFeatures, 4 * p_mbtr))
    P['mbtr_bn1_g'], P['mbtr_bn1_b'] = gamma(4 * p_mbtr), b(4 * p_mbtr)
    P['mbtr_bn1_m'], P['mbtr_bn1_v'] = bn_stats(4 * p_mbtr)
    P['mbtr2_w'] = W((4 * p_mbtr, 2 * p_mbtr))
    P['mbtr_bn2_g'], P['mbtr_bn2_b'] = gamma(2 * p_mbtr), b(2 * p_mbtr)
    P['mbtr_bn2_m'], P['mbtr_bn2_v'] = bn_stats(2 * p_mbtr)
    P['mbtr3_w'] = W((2 * p_mbtr, p_mbtr))
    P['mbtr_bn3_g'], P['mbtr_bn3_b'] = gamma(p_mbtr), b(p_mbtr)
    P['mbtr_bn3_m'], P['mbtr_bn3_v'] = bn_stats(p_mbtr)
    # final MLP
    tot = 2 * p2 + p_md + p_mbtr
    P['lin1_w'], P['lin1_b'] = W((tot, round(tot / 2))), b(round(tot / 2))
    P['lin2_w'], P['lin2_b'] = W((round(tot / 2), round(tot / 4))), b(round(tot / 4))
    P['linf_w'], P['linf_b'] = W((round(tot / 4), 1)), b(1)
    return P


def fold_params(P):
    """Fold eval-mode BatchNorm into the preceding (bias-free) linear, fuse recurrent /
    branch weights, and pack everything into ONE (SLAB_ROWS, SLAB_COLS) f32 slab.
    Done ONCE outside the jitted forward."""

    def fold_bn(Wm, g, beta, mean, var):
        scale = g / jnp.sqrt(var + BN_EPS)
        return np.asarray(Wm * scale[None, :], np.float32), np.asarray(beta - mean * scale, np.float32)

    def arr(a):
        return np.asarray(a, np.float32)

    def blockdiag(a, bm):
        r = np.zeros((a.shape[0] + bm.shape[0], a.shape[1] + bm.shape[1]), np.float32)
        r[:a.shape[0], :a.shape[1]] = a
        r[a.shape[0]:, a.shape[1]:] = bm
        return r

    F = {}
    # GNN: lin0 + BN0
    F['lin0_w'], bb = fold_bn(P['lin0_w'], P['bn0_g'], P['bn0_b'], P['bn0_m'], P['bn0_v'])
    F['lin0_b'] = bb[None, :]
    # edge net stage 1 (+BN)
    F['enn1_w'], bb = fold_bn(P['enn1_w'], P['enn_bn1_g'], P['enn_bn1_b'],
                              P['enn_bn1_m'], P['enn_bn1_v'])
    F['enn1_b'] = bb[None, :]
    # edge net stage 2 (+BN), reshaped for the matmul-ified contraction:
    # W2b[k*P2 + p, q] = W2full[k, p*P2 + q], with row k=p1 holding the folded bias.
    W2f, b2f = fold_bn(P['enn2_w'], P['enn_bn2_g'], P['enn_bn2_b'],
                       P['enn_bn2_m'], P['enn_bn2_v'])
    W2full = np.concatenate([W2f, b2f[None, :]], axis=0)                 # (p1+1, p2*p2)
    F['w2b'] = W2full.reshape(P1A * p2, p2)
    F['root_w'] = arr(P['conv_root_w'])
    F['root_b'] = arr(P['conv_bias'])[None, :]
    # GRU fused weight: [m|h] @ Wg -> [r_sum | z_sum | gi_n | gh_n]
    wih, whh = arr(P['gru_wih']), arr(P['gru_whh'])
    bih, bhh = arr(P['gru_bih']), arr(P['gru_bhh'])
    Wg = np.zeros((2 * p2, 4 * p2), np.float32)
    Wg[:p2, 0:p2] = wih[:, 0:p2];            Wg[p2:, 0:p2] = whh[:, 0:p2]
    Wg[:p2, p2:2 * p2] = wih[:, p2:2 * p2];  Wg[p2:, p2:2 * p2] = whh[:, p2:2 * p2]
    Wg[:p2, 2 * p2:3 * p2] = wih[:, 2 * p2:3 * p2]
    Wg[p2:, 3 * p2:4 * p2] = whh[:, 2 * p2:3 * p2]
    F['gru_w'] = Wg
    F['gru_b'] = np.concatenate([bih[0:p2] + bhh[0:p2],
                                 bih[p2:2 * p2] + bhh[p2:2 * p2],
                                 bih[2 * p2:3 * p2],
                                 bhh[2 * p2:3 * p2]])[None, :]
    # Set2Set LSTM fused weight: [q|r|h] @ Wl
    F['lstm_w'] = np.concatenate([arr(P['s2s_wih']), arr(P['s2s_whh'])], axis=0)
    F['lstm_b'] = (arr(P['s2s_bih']) + arr(P['s2s_bhh']))[None, :]
    # MD + MBTR branches as block-diagonals
    mb1_w, mb1_b = fold_bn(P['mbtr1_w'], P['mbtr_bn1_g'], P['mbtr_bn1_b'],
                           P['mbtr_bn1_m'], P['mbtr_bn1_v'])
    mb2_w, mb2_b = fold_bn(P['mbtr2_w'], P['mbtr_bn2_g'], P['mbtr_bn2_b'],
                           P['mbtr_bn2_m'], P['mbtr_bn2_v'])
    mb3_w, mb3_b = fold_bn(P['mbtr3_w'], P['mbtr_bn3_g'], P['mbtr_bn3_b'],
                           P['mbtr_bn3_m'], P['mbtr_bn3_v'])
    F['mm1_w'] = blockdiag(arr(P['md1_w']), mb1_w)
    F['mm1_b'] = np.concatenate([arr(P['md1_b']), mb1_b])[None, :]
    F['mm2_w'] = blockdiag(arr(P['md2_w']), mb2_w)
    F['mm2_b'] = np.concatenate([arr(P['md2_b']), mb2_b])[None, :]
    F['mm3_w'] = blockdiag(arr(P['md3_w']), mb3_w)
    F['mm3_b'] = np.concatenate([arr(P['md3_b']), mb3_b])[None, :]
    # final MLP
    F['l1_w'], F['l1_b'] = arr(P['lin1_w']), arr(P['lin1_b'])[None, :]
    F['l2_w'], F['l2_b'] = arr(P['lin2_w']), arr(P['lin2_b'])[None, :]
    F['lf_w'], F['lf_b'] = arr(P['linf_w']), arr(P['linf_b'])[None, :]

    slab = np.zeros((SLAB_ROWS, SLAB_COLS), np.float32)
    for name, (off, r, c) in LAYOUT.items():
        wmat = F[name].astype(np.float32)
        assert wmat.shape == (r, c), (name, wmat.shape, (r, c))
        slab[off:off + r, 0:c] = wmat
    return jnp.asarray(slab)


# ----------------------------------------------------------------------
# Forward pass: ONE pallas_call for the whole network
# ----------------------------------------------------------------------
def net_forward(slab, x, edge_index, edge_attr, batch, u, mbtr):
    N = x.shape[0]
    E = edge_attr.shape[0]
    B = u.shape[0]

    src2d = edge_index[0].reshape(E, 1).astype(jnp.int32)
    dst2d = edge_index[1].reshape(1, E).astype(jnp.int32)
    bat2d = batch.reshape(1, N).astype(jnp.int32)
    u2 = u.reshape(B, nbrGlobalFeatures).astype(jnp.float32)
    mb2 = mbtr.reshape(B, nbrMBTRFeatures).astype(jnp.float32)

    args = (x.astype(jnp.float32), edge_attr.astype(jnp.float32),
            src2d, dst2d, bat2d, u2, mb2, slab)

    y = pl.pallas_call(
        _net_kernel,
        out_shape=jax.ShapeDtypeStruct((B, 1), jnp.float32),
        in_specs=[pl.BlockSpec(memory_space=pltpu.MemorySpace.VMEM)] * len(args),
        out_specs=pl.BlockSpec(memory_space=pltpu.MemorySpace.VMEM),
    )(*args)
    return y[:, 0]


forward = jax.jit(net_forward)


if __name__ == "__main__":
    key = jax.random.PRNGKey(0)
    kp, kx, ke, ku, km = jax.random.split(key, 5)
    slab = fold_params(init_params(kp))   # BN folded + weights fused/packed once

    # Batch many graphs per call (amortizes fixed kernel overhead): 8 graphs,
    # 16 nodes each -> N = 128, E = 256.
    B = 8
    nodes_per_graph = 16
    N = B * nodes_per_graph
    x = jax.random.normal(kx, (N, nbr_node_features), jnp.float32)

    # bidirectional ring within each graph -> E = 2 * 16 * 8 = 256 edges
    src_list, dst_list = [], []
    for gph in range(B):
        for i in range(nodes_per_graph):
            a = gph * nodes_per_graph + i
            c = gph * nodes_per_graph + (i + 1) % nodes_per_graph
            src_list += [a, c]
            dst_list += [c, a]
    edge_index = jnp.array([src_list, dst_list], dtype=jnp.int32)
    E = edge_index.shape[1]
    edge_attr = jax.random.normal(ke, (E, nbr_edge_features), jnp.float32)
    batch = jnp.repeat(jnp.arange(B, dtype=jnp.int32), nodes_per_graph)

    u = jax.random.normal(ku, (B, nbrGlobalFeatures), jnp.float32)
    mbtr = jax.random.normal(km, (B, nbrMBTRFeatures), jnp.float32)
    mbtr = mbtr.at[0, 0].set(jnp.nan)   # exercise the NaN-zeroing path

    y = forward(slab, x, edge_index, edge_attr, batch, u, mbtr)
    y = jax.block_until_ready(y)
    assert y.shape == (B,) and bool(jnp.all(jnp.isfinite(y)))
    print("KERNEL_OK")
</pallas_src>

<mosaic_0001>
module attributes {stable_mosaic.version = 11 : i64} {
  func.func @_net_kernel(%arg0: memref<128x8xf32, #tpu.memory_space<vmem>>, %arg1: memref<256x4xf32, #tpu.memory_space<vmem>>, %arg2: memref<256x1xi32, #tpu.memory_space<vmem>>, %arg3: memref<1x256xi32, #tpu.memory_space<vmem>>, %arg4: memref<1x128xi32, #tpu.memory_space<vmem>>, %arg5: memref<8x8xf32, #tpu.memory_space<vmem>>, %arg6: memref<8x24xf32, #tpu.memory_space<vmem>>, %arg7: memref<680x128xf32, #tpu.memory_space<vmem>>, %arg8: memref<8x1xf32, #tpu.memory_space<vmem>>) attributes {dimension_semantics = [], scalar_prefetch = 0 : i64, scratch_operands = 0 : i64, tpu.core_type = #tpu.core_type<tc>} {
    %c0 = arith.constant 0 : index
    %c0_0 = arith.constant 0 : index
    %0 = vector.load %arg2[%c0, %c0_0] : memref<256x1xi32, #tpu.memory_space<vmem>>, vector<256x1xi32>
    %1 = tpu.iota {dimensions = array<i32: 1>} : vector<256x128xi32>
    %2 = vector.broadcast %0 : vector<256x1xi32> to vector<256x128xi32>
    %3 = arith.cmpi eq, %2, %1 : vector<256x128xi32>
    %cst = arith.constant 1.000000e+00 : f32
    %cst_1 = arith.constant 0.000000e+00 : f32
    %4 = vector.broadcast %cst : f32 to vector<256x128xf32>
    %5 = vector.broadcast %cst_1 : f32 to vector<256x128xf32>
    %6 = arith.select %3, %4, %5 : vector<256x128xi1>, vector<256x128xf32>
    %c0_2 = arith.constant 0 : index
    %c0_3 = arith.constant 0 : index
    %7 = vector.load %arg3[%c0_2, %c0_3] : memref<1x256xi32, #tpu.memory_space<vmem>>, vector<1x256xi32>
    %8 = tpu.iota {dimensions = array<i32: 0>} : vector<128x256xi32>
    %9 = vector.broadcast %7 : vector<1x256xi32> to vector<128x256xi32>
    %10 = arith.cmpi eq, %9, %8 : vector<128x256xi32>
    %cst_4 = arith.constant 1.000000e+00 : f32
    %cst_5 = arith.constant 0.000000e+00 : f32
    %11 = vector.broadcast %cst_4 : f32 to vector<128x256xf32>
    %12 = vector.broadcast %cst_5 : f32 to vector<128x256xf32>
    %13 = arith.select %10, %11, %12 : vector<128x256xi1>, vector<128x256xf32>
    %cst_6 = arith.constant dense<0.000000e+00> : vector<128xf32>
    %14 = vector.multi_reduction <add>, %13, %cst_6 [1] : vector<128x256xf32> to vector<128xf32>
    %15 = vector.shape_cast %14 : vector<128xf32> to vector<128x1xf32>
    %cst_7 = arith.constant 1.000000e+00 : f32
    %16 = vector.broadcast %cst_7 : f32 to vector<128x1xf32>
    %17 = arith.maximumf %15, %16 : vector<128x1xf32>
    %cst_8 = arith.constant 1.000000e+00 : f32
    %18 = vector.broadcast %cst_8 : f32 to vector<128x1xf32>
    %19 = arith.divf %18, %17 : vector<128x1xf32>
    %c0_9 = arith.constant 0 : index
    %c0_10 = arith.constant 0 : index
    %20 = vector.load %arg4[%c0_9, %c0_10] : memref<1x128xi32, #tpu.memory_space<vmem>>, vector<1x128xi32>
    %21 = tpu.iota {dimensions = array<i32: 0>} : vector<8x128xi32>
    %22 = vector.broadcast %20 : vector<1x128xi32> to vector<8x128xi32>
    %23 = arith.cmpi eq, %22, %21 : vector<8x128xi32>
    %cst_11 = arith.constant 1.000000e+00 : f32
    %cst_12 = arith.constant 0.000000e+00 : f32
    %24 = vector.broadcast %cst_11 : f32 to vector<8x128xf32>
    %25 = vector.broadcast %cst_12 : f32 to vector<8x128xf32>
    %26 = arith.select %23, %24, %25 : vector<8x128xi1>, vector<8x128xf32>
    %c0_13 = arith.constant 0 : index
    %c0_14 = arith.constant 0 : index
    %27 = vector.load %arg0[%c0_13, %c0_14] : memref<128x8xf32, #tpu.memory_space<vmem>>, vector<128x8xf32>
    %c0_15 = arith.constant 0 : index
    %c0_16 = arith.constant 0 : index
    %28 = vector.load %arg7[%c0_15, %c0_16] : memref<680x128xf32, #tpu.memory_space<vmem>>, vector<8x16xf32>
    %cst_17 = arith.constant dense<0.000000e+00> : vector<128x16xf32>
    %29 = tpu.matmul %27, %28, %cst_17 {dimension_numbers = #tpu.dot_dimension_numbers<[1], [0], [0], [1], [0, 0, 1, 1], [], []>} : vector<128x8xf32>, vector<8x16xf32>, vector<128x16xf32> -> vector<128x16xf32>
    %c8 = arith.constant 8 : index
    %c0_18 = arith.constant 0 : index
    %30 = vector.load %arg7[%c8, %c0_18] : memref<680x128xf32, #tpu.memory_space<vmem>>, vector<1x16xf32>
    %31 = vector.broadcast %30 : vector<1x16xf32> to vector<128x16xf32>
    %32 = arith.addf %29, %31 : vector<128x16xf32>
    %cst_19 = arith.constant 0.000000e+00 : f32
    %33 = vector.broadcast %cst_19 : f32 to vector<128x16xf32>
    %34 = arith.cmpf oge, %32, %33 : vector<128x16xf32>
    %cst_20 = arith.constant 0.00999999977 : f32
    %35 = vector.broadcast %cst_20 : f32 to vector<128x16xf32>
    %36 = arith.mulf %35, %32 : vector<128x16xf32>
    %37 = arith.select %34, %32, %36 : vector<128x16xi1>, vector<128x16xf32>
    %c0_21 = arith.constant 0 : index
    %c0_22 = arith.constant 0 : index
    %38 = vector.load %arg1[%c0_21, %c0_22] : memref<256x4xf32, #tpu.memory_space<vmem>>, vector<256x4xf32>
    %c16 = arith.constant 16 : index
    %c0_23 = arith.constant 0 : index
    %39 = vector.load %arg7[%c16, %c0_23] : memref<680x128xf32, #tpu.memory_space<vmem>>, vector<4x8xf32>
    %cst_24 = arith.constant dense<0.000000e+00> : vector<256x8xf32>
    %40 = tpu.matmul %38, %39, %cst_24 {dimension_numbers = #tpu.dot_dimension_numbers<[1], [0], [0], [1], [0, 0, 1, 1], [], []>} : vector<256x4xf32>, vector<4x8xf32>, vector<256x8xf32> -> vector<256x8xf32>
    %c24 = arith.constant 24 : index
    %c0_25 = arith.constant 0 : index
    %41 = vector.load %arg7[%c24, %c0_25] : memref<680x128xf32, #tpu.memory_space<vmem>>, vector<1x8xf32>
    %42 = vector.broadcast %41 : vector<1x8xf32> to vector<256x8xf32>
    %43 = arith.addf %40, %42 : vector<256x8xf32>
    %cst_26 = arith.constant 0.000000e+00 : f32
    %44 = vector.broadcast %cst_26 : f32 to vector<256x8xf32>
    %45 = arith.cmpf oge, %43, %44 : vector<256x8xf32>
    %cst_27 = arith.constant 0.00999999977 : f32
    %46 = vector.broadcast %cst_27 : f32 to vector<256x8xf32>
    %47 = arith.mulf %46, %43 : vector<256x8xf32>
    %48 = arith.select %45, %43, %47 : vector<256x8xi1>, vector<256x8xf32>
    %cst_28 = arith.constant 1.000000e+00 : f32
    %49 = vector.broadcast %cst_28 : f32 to vector<256x1xf32>
    %50 = tpu.concatenate %48, %49 in 1 : vector<256x8xf32>, vector<256x1xf32> -> vector<256x9xf32>
    %51 = tpu.iota {dimensions = array<i32: 0>} : vector<9x144xi32>
    %52 = tpu.iota {dimensions = array<i32: 1>} : vector<9x144xi32>
    %c16_i32 = arith.constant 16 : i32
    %53 = vector.broadcast %c16_i32 : i32 to vector<9x144xi32>
    %54 = arith.muli %51, %53 : vector<9x144xi32>
    %55 = arith.cmpi sge, %52, %54 : vector<9x144xi32>
    %c1_i32 = arith.constant 1 : i32
    %56 = vector.broadcast %c1_i32 : i32 to vector<9x144xi32>
    %57 = arith.addi %51, %56 : vector<9x144xi32>
    %c16_i32_29 = arith.constant 16 : i32
    %58 = vector.broadcast %c16_i32_29 : i32 to vector<9x144xi32>
    %59 = arith.muli %57, %58 : vector<9x144xi32>
    %60 = arith.cmpi slt, %52, %59 : vector<9x144xi32>
    %61 = arith.andi %55, %60 : vector<9x144xi1>
    %cst_30 = arith.constant 1.000000e+00 : f32
    %cst_31 = arith.constant 0.000000e+00 : f32
    %62 = vector.broadcast %cst_30 : f32 to vector<9x144xf32>
    %63 = vector.broadcast %cst_31 : f32 to vector<9x144xf32>
    %64 = arith.select %61, %62, %63 : vector<9x144xi1>, vector<9x144xf32>
    %cst_32 = arith.constant dense<0.000000e+00> : vector<256x144xf32>
    %65 = tpu.matmul %50, %64, %cst_32 {dimension_numbers = #tpu.dot_dimension_numbers<[1], [0], [0], [1], [0, 0, 1, 1], [], []>} : vector<256x9xf32>, vector<9x144xf32>, vector<256x144xf32> -> vector<256x144xf32>
    %c32 = arith.constant 32 : index
    %c0_33 = arith.constant 0 : index
    %66 = vector.load %arg7[%c32, %c0_33] : memref<680x128xf32, #tpu.memory_space<vmem>>, vector<144x16xf32>
    %c176 = arith.constant 176 : index
    %c0_34 = arith.constant 0 : index
    %67 = vector.load %arg7[%c176, %c0_34] : memref<680x128xf32, #tpu.memory_space<vmem>>, vector<16x16xf32>
    %c192 = arith.constant 192 : index
    %c0_35 = arith.constant 0 : index
    %68 = vector.load %arg7[%c192, %c0_35] : memref<680x128xf32, #tpu.memory_space<vmem>>, vector<1x16xf32>
    %c200 = arith.constant 200 : index
    %c0_36 = arith.constant 0 : index
    %69 = vector.load %arg7[%c200, %c0_36] : memref<680x128xf32, #tpu.memory_space<vmem>>, vector<32x64xf32>
    %c232 = arith.constant 232 : index
    %c0_37 = arith.constant 0 : index
    %70 = vector.load %arg7[%c232, %c0_37] : memref<680x128xf32, #tpu.memory_space<vmem>>, vector<1x64xf32>
    %cst_38 = arith.constant dense<0.000000e+00> : vector<256x16xf32>
    %71 = tpu.matmul %6, %37, %cst_38 {dimension_numbers = #tpu.dot_dimension_numbers<[1], [0], [0], [1], [0, 0, 1, 1], [], []>} : vector<256x128xf32>, vector<128x16xf32>, vector<256x16xf32> -> vector<256x16xf32>
    %72 = tpu.concatenate %71, %71, %71, %71, %71, %71, %71, %71, %71 in 1 : vector<256x16xf32>, vector<256x16xf32>, vector<256x16xf32>, vector<256x16xf32>, vector<256x16xf32>, vector<256x16xf32>, vector<256x16xf32>, vector<256x16xf32>, vector<256x16xf32> -> vector<256x144xf32>
    %73 = arith.mulf %65, %72 : vector<256x144xf32>
    %cst_39 = arith.constant dense<0.000000e+00> : vector<256x16xf32>
    %74 = tpu.matmul %73, %66, %cst_39 {dimension_numbers = #tpu.dot_dimension_numbers<[1], [0], [0], [1], [0, 0, 1, 1], [], []>} : vector<256x144xf32>, vector<144x16xf32>, vector<256x16xf32> -> vector<256x16xf32>
    %cst_40 = arith.constant dense<0.000000e+00> : vector<128x16xf32>
    %75 = tpu.matmul %13, %74, %cst_40 {dimension_numbers = #tpu.dot_dimension_numbers<[1], [0], [0], [1], [0, 0, 1, 1], [], []>} : vector<128x256xf32>, vector<256x16xf32>, vector<128x16xf32> -> vector<128x16xf32>
    %76 = vector.broadcast %19 : vector<128x1xf32> to vector<128x16xf32>
    %77 = arith.mulf %75, %76 : vector<128x16xf32>
    %cst_41 = arith.constant dense<0.000000e+00> : vector<128x16xf32>
    %78 = tpu.matmul %37, %67, %cst_41 {dimension_numbers = #tpu.dot_dimension_numbers<[1], [0], [0], [1], [0, 0, 1, 1], [], []>} : vector<128x16xf32>, vector<16x16xf32>, vector<128x16xf32> -> vector<128x16xf32>
    %79 = arith.addf %77, %78 : vector<128x16xf32>
    %80 = vector.broadcast %68 : vector<1x16xf32> to vector<128x16xf32>
    %81 = arith.addf %79, %80 : vector<128x16xf32>
    %cst_42 = arith.constant 0.000000e+00 : f32
    %82 = vector.broadcast %cst_42 : f32 to vector<128x16xf32>
    %83 = arith.cmpf oge, %81, %82 : vector<128x16xf32>
    %cst_43 = arith.constant 0.00999999977 : f32
    %84 = vector.broadcast %cst_43 : f32 to vector<128x16xf32>
    %85 = arith.mulf %84, %81 : vector<128x16xf32>
    %86 = arith.select %83, %81, %85 : vector<128x16xi1>, vector<128x16xf32>
    %87 = tpu.concatenate %86, %37 in 1 : vector<128x16xf32>, vector<128x16xf32> -> vector<128x32xf32>
    %cst_44 = arith.constant dense<0.000000e+00> : vector<128x64xf32>
    %88 = tpu.matmul %87, %69, %cst_44 {dimension_numbers = #tpu.dot_dimension_numbers<[1], [0], [0], [1], [0, 0, 1, 1], [], []>} : vector<128x32xf32>, vector<32x64xf32>, vector<128x64xf32> -> vector<128x64xf32>
    %89 = vector.broadcast %70 : vector<1x64xf32> to vector<128x64xf32>
    %90 = arith.addf %88, %89 : vector<128x64xf32>
    %91 = vector.extract_strided_slice %90 {offsets = [0, 0], sizes = [128, 16], strides = [1, 1]} : vector<128x64xf32> to vector<128x16xf32>
    %cst_45 = arith.constant 0.000000e+00 : f32
    %92 = vector.broadcast %cst_45 : f32 to vector<128x16xf32>
    %93 = arith.subf %92, %91 : vector<128x16xf32>
    %94 = math.exp %93 : vector<128x16xf32>
    %cst_46 = arith.constant 1.000000e+00 : f32
    %95 = vector.broadcast %cst_46 : f32 to vector<128x16xf32>
    %96 = arith.addf %95, %94 : vector<128x16xf32>
    %97 = tpu.reciprocal %96 {approx = true} : vector<128x16xf32> -> vector<128x16xf32>
    %98 = vector.extract_strided_slice %90 {offsets = [0, 16], sizes = [128, 16], strides = [1, 1]} : vector<128x64xf32> to vector<128x16xf32>
    %cst_47 = arith.constant 0.000000e+00 : f32
    %99 = vector.broadcast %cst_47 : f32 to vector<128x16xf32>
    %100 = arith.subf %99, %98 : vector<128x16xf32>
    %101 = math.exp %100 : vector<128x16xf32>
    %cst_48 = arith.constant 1.000000e+00 : f32
    %102 = vector.broadcast %cst_48 : f32 to vector<128x16xf32>
    %103 = arith.addf %102, %101 : vector<128x16xf32>
    %104 = tpu.reciprocal %103 {approx = true} : vector<128x16xf32> -> vector<128x16xf32>
    %105 = vector.extract_strided_slice %90 {offsets = [0, 32], sizes = [128, 16], strides = [1, 1]} : vector<128x64xf32> to vector<128x16xf32>
    %106 = vector.extract_strided_slice %90 {offsets = [0, 48], sizes = [128, 16], strides = [1, 1]} : vector<128x64xf32> to vector<128x16xf32>
    %107 = arith.mulf %97, %106 : vector<128x16xf32>
    %108 = arith.addf %105, %107 : vector<128x16xf32>
    %109 = math.tanh %108 : vector<128x16xf32>
    %cst_49 = arith.constant 1.000000e+00 : f32
    %110 = vector.broadcast %cst_49 : f32 to vector<128x16xf32>
    %111 = arith.subf %110, %104 : vector<128x16xf32>
    %112 = arith.mulf %111, %109 : vector<128x16xf32>
    %113 = arith.mulf %104, %37 : vector<128x16xf32>
    %114 = arith.addf %112, %113 : vector<128x16xf32>
    %cst_50 = arith.constant dense<0.000000e+00> : vector<256x16xf32>
    %115 = tpu.matmul %6, %114, %cst_50 {dimension_numbers = #tpu.dot_dimension_numbers<[1], [0], [0], [1], [0, 0, 1, 1], [], []>} : vector<256x128xf32>, vector<128x16xf32>, vector<256x16xf32> -> vector<256x16xf32>
    %116 = tpu.concatenate %115, %115, %115, %115, %115, %115, %115, %115, %115 in 1 : vector<256x16xf32>, vector<256x16xf32>, vector<256x16xf32>, vector<256x16xf32>, vector<256x16xf32>, vector<256x16xf32>, vector<256x16xf32>, vector<256x16xf32>, vector<256x16xf32> -> vector<256x144xf32>
    %117 = arith.mulf %65, %116 : vector<256x144xf32>
    %cst_51 = arith.constant dense<0.000000e+00> : vector<256x16xf32>
    %118 = tpu.matmul %117, %66, %cst_51 {dimension_numbers = #tpu.dot_dimension_numbers<[1], [0], [0], [1], [0, 0, 1, 1], [], []>} : vector<256x144xf32>, vector<144x16xf32>, vector<256x16xf32> -> vector<256x16xf32>
    %cst_52 = arith.constant dense<0.000000e+00> : vector<128x16xf32>
    %119 = tpu.matmul %13, %118, %cst_52 {dimension_numbers = #tpu.dot_dimension_numbers<[1], [0], [0], [1], [0, 0, 1, 1], [], []>} : vector<128x256xf32>, vector<256x16xf32>, vector<128x16xf32> -> vector<128x16xf32>
    %120 = vector.broadcast %19 : vector<128x1xf32> to vector<128x16xf32>
    %121 = arith.mulf %119, %120 : vector<128x16xf32>
    %cst_53 = arith.constant dense<0.000000e+00> : vector<128x16xf32>
    %122 = tpu.matmul %114, %67, %cst_53 {dimension_numbers = #tpu.dot_dimension_numbers<[1], [0], [0], [1], [0, 0, 1, 1], [], []>} : vector<128x16xf32>, vector<16x16xf32>, vector<128x16xf32> -> vector<128x16xf32>
    %123 = arith.addf %121, %122 : vector<128x16xf32>
    %124 = vector.broadcast %68 : vector<1x16xf32> to vector<128x16xf32>
    %125 = arith.addf %123, %124 : vector<128x16xf32>
    %cst_54 = arith.constant 0.000000e+00 : f32
    %126 = vector.broadcast %cst_54 : f32 to vector<128x16xf32>
    %127 = arith.cmpf oge, %125, %126 : vector<128x16xf32>
    %cst_55 = arith.constant 0.00999999977 : f32
    %128 = vector.broadcast %cst_55 : f32 to vector<128x16xf32>
    %129 = arith.mulf %128, %125 : vector<128x16xf32>
    %130 = arith.select %127, %125, %129 : vector<128x16xi1>, vector<128x16xf32>
    %131 = tpu.concatenate %130, %114 in 1 : vector<128x16xf32>, vector<128x16xf32> -> vector<128x32xf32>
    %cst_56 = arith.constant dense<0.000000e+00> : vector<128x64xf32>
    %132 = tpu.matmul %131, %69, %cst_56 {dimension_numbers = #tpu.dot_dimension_numbers<[1], [0], [0], [1], [0, 0, 1, 1], [], []>} : vector<128x32xf32>, vector<32x64xf32>, vector<128x64xf32> -> vector<128x64xf32>
    %133 = vector.broadcast %70 : vector<1x64xf32> to vector<128x64xf32>
    %134 = arith.addf %132, %133 : vector<128x64xf32>
    %135 = vector.extract_strided_slice %134 {offsets = [0, 0], sizes = [128, 16], strides = [1, 1]} : vector<128x64xf32> to vector<128x16xf32>
    %cst_57 = arith.constant 0.000000e+00 : f32
    %136 = vector.broadcast %cst_57 : f32 to vector<128x16xf32>
    %137 = arith.subf %136, %135 : vector<128x16xf32>
    %138 = math.exp %137 : vector<128x16xf32>
    %cst_58 = arith.constant 1.000000e+00 : f32
    %139 = vector.broadcast %cst_58 : f32 to vector<128x16xf32>
    %140 = arith.addf %139, %138 : vector<128x16xf32>
    %141 = tpu.reciprocal %140 {approx = true} : vector<128x16xf32> -> vector<128x16xf32>
    %142 = vector.extract_strided_slice %134 {offsets = [0, 16], sizes = [128, 16], strides = [1, 1]} : vector<128x64xf32> to vector<128x16xf32>
    %cst_59 = arith.constant 0.000000e+00 : f32
    %143 = vector.broadcast %cst_59 : f32 to vector<128x16xf32>
    %144 = arith.subf %143, %142 : vector<128x16xf32>
    %145 = math.exp %144 : vector<128x16xf32>
    %cst_60 = arith.constant 1.000000e+00 : f32
    %146 = vector.broadcast %cst_60 : f32 to vector<128x16xf32>
    %147 = arith.addf %146, %145 : vector<128x16xf32>
    %148 = tpu.reciprocal %147 {approx = true} : vector<128x16xf32> -> vector<128x16xf32>
    %149 = vector.extract_strided_slice %134 {offsets = [0, 32], sizes = [128, 16], strides = [1, 1]} : vector<128x64xf32> to vector<128x16xf32>
    %150 = vector.extract_strided_slice %134 {offsets = [0, 48], sizes = [128, 16], strides = [1, 1]} : vector<128x64xf32> to vector<128x16xf32>
    %151 = arith.mulf %141, %150 : vector<128x16xf32>
    %152 = arith.addf %149, %151 : vector<128x16xf32>
    %153 = math.tanh %152 : vector<128x16xf32>
    %cst_61 = arith.constant 1.000000e+00 : f32
    %154 = vector.broadcast %cst_61 : f32 to vector<128x16xf32>
    %155 = arith.subf %154, %148 : vector<128x16xf32>
    %156 = arith.mulf %155, %153 : vector<128x16xf32>
    %157 = arith.mulf %148, %114 : vector<128x16xf32>
    %158 = arith.addf %156, %157 : vector<128x16xf32>
    %cst_62 = arith.constant dense<0.000000e+00> : vector<256x16xf32>
    %159 = tpu.matmul %6, %158, %cst_62 {dimension_numbers = #tpu.dot_dimension_numbers<[1], [0], [0], [1], [0, 0, 1, 1], [], []>} : vector<256x128xf32>, vector<128x16xf32>, vector<256x16xf32> -> vector<256x16xf32>
    %160 = tpu.concatenate %159, %159, %159, %159, %159, %159, %159, %159, %159 in 1 : vector<256x16xf32>, vector<256x16xf32>, vector<256x16xf32>, vector<256x16xf32>, vector<256x16xf32>, vector<256x16xf32>, vector<256x16xf32>, vector<256x16xf32>, vector<256x16xf32> -> vector<256x144xf32>
    %161 = arith.mulf %65, %160 : vector<256x144xf32>
    %cst_63 = arith.constant dense<0.000000e+00> : vector<256x16xf32>
    %162 = tpu.matmul %161, %66, %cst_63 {dimension_numbers = #tpu.dot_dimension_numbers<[1], [0], [0], [1], [0, 0, 1, 1], [], []>} : vector<256x144xf32>, vector<144x16xf32>, vector<256x16xf32> -> vector<256x16xf32>
    %cst_64 = arith.constant dense<0.000000e+00> : vector<128x16xf32>
    %163 = tpu.matmul %13, %162, %cst_64 {dimension_numbers = #tpu.dot_dimension_numbers<[1], [0], [0], [1], [0, 0, 1, 1], [], []>} : vector<128x256xf32>, vector<256x16xf32>, vector<128x16xf32> -> vector<128x16xf32>
    %164 = vector.broadcast %19 : vector<128x1xf32> to vector<128x16xf32>
    %165 = arith.mulf %163, %164 : vector<128x16xf32>
    %cst_65 = arith.constant dense<0.000000e+00> : vector<128x16xf32>
    %166 = tpu.matmul %158, %67, %cst_65 {dimension_numbers = #tpu.dot_dimension_numbers<[1], [0], [0], [1], [0, 0, 1, 1], [], []>} : vector<128x16xf32>, vector<16x16xf32>, vector<128x16xf32> -> vector<128x16xf32>
    %167 = arith.addf %165, %166 : vector<128x16xf32>
    %168 = vector.broadcast %68 : vector<1x16xf32> to vector<128x16xf32>
    %169 = arith.addf %167, %168 : vector<128x16xf32>
    %cst_66 = arith.constant 0.000000e+00 : f32
    %170 = vector.broadcast %cst_66 : f32 to vector<128x16xf32>
    %171 = arith.cmpf oge, %169, %170 : vector<128x16xf32>
    %cst_67 = arith.constant 0.00999999977 : f32
    %172 = vector.broadcast %cst_67 : f32 to vector<128x16xf32>
    %173 = arith.mulf %172, %169 : vector<128x16xf32>
    %174 = arith.select %171, %169, %173 : vector<128x16xi1>, vector<128x16xf32>
    %175 = tpu.concatenate %174, %158 in 1 : vector<128x16xf32>, vector<128x16xf32> -> vector<128x32xf32>
    %cst_68 = arith.constant dense<0.000000e+00> : vector<128x64xf32>
    %176 = tpu.matmul %175, %69, %cst_68 {dimension_numbers = #tpu.dot_dimension_numbers<[1], [0], [0], [1], [0, 0, 1, 1], [], []>} : vector<128x32xf32>, vector<32x64xf32>, vector<128x64xf32> -> vector<128x64xf32>
    %177 = vector.broadcast %70 : vector<1x64xf32> to vector<128x64xf32>
    %178 = arith.addf %176, %177 : vector<128x64xf32>
    %179 = vector.extract_strided_slice %178 {offsets = [0, 0], sizes = [128, 16], strides = [1, 1]} : vector<128x64xf32> to vector<128x16xf32>
    %cst_69 = arith.constant 0.000000e+00 : f32
    %180 = vector.broadcast %cst_69 : f32 to vector<128x16xf32>
    %181 = arith.subf %180, %179 : vector<128x16xf32>
    %182 = math.exp %181 : vector<128x16xf32>
    %cst_70 = arith.constant 1.000000e+00 : f32
    %183 = vector.broadcast %cst_70 : f32 to vector<128x16xf32>
    %184 = arith.addf %183, %182 : vector<128x16xf32>
    %185 = tpu.reciprocal %184 {approx = true} : vector<128x16xf32> -> vector<128x16xf32>
    %186 = vector.extract_strided_slice %178 {offsets = [0, 16], sizes = [128, 16], strides = [1, 1]} : vector<128x64xf32> to vector<128x16xf32>
    %cst_71 = arith.constant 0.000000e+00 : f32
    %187 = vector.broadcast %cst_71 : f32 to vector<128x16xf32>
    %188 = arith.subf %187, %186 : vector<128x16xf32>
    %189 = math.exp %188 : vector<128x16xf32>
    %cst_72 = arith.constant 1.000000e+00 : f32
    %190 = vector.broadcast %cst_72 : f32 to vector<128x16xf32>
    %191 = arith.addf %190, %189 : vector<128x16xf32>
    %192 = tpu.reciprocal %191 {approx = true} : vector<128x16xf32> -> vector<128x16xf32>
    %193 = vector.extract_strided_slice %178 {offsets = [0, 32], sizes = [128, 16], strides = [1, 1]} : vector<128x64xf32> to vector<128x16xf32>
    %194 = vector.extract_strided_slice %178 {offsets = [0, 48], sizes = [128, 16], strides = [1, 1]} : vector<128x64xf32> to vector<128x16xf32>
    %195 = arith.mulf %185, %194 : vector<128x16xf32>
    %196 = arith.addf %193, %195 : vector<128x16xf32>
    %197 = math.tanh %196 : vector<128x16xf32>
    %cst_73 = arith.constant 1.000000e+00 : f32
    %198 = vector.broadcast %cst_73 : f32 to vector<128x16xf32>
    %199 = arith.subf %198, %192 : vector<128x16xf32>
    %200 = arith.mulf %199, %197 : vector<128x16xf32>
    %201 = arith.mulf %192, %158 : vector<128x16xf32>
    %202 = arith.addf %200, %201 : vector<128x16xf32>
    %c240 = arith.constant 240 : index
    %c0_74 = arith.constant 0 : index
    %203 = vector.load %arg7[%c240, %c0_74] : memref<680x128xf32, #tpu.memory_space<vmem>>, vector<48x64xf32>
    %c288 = arith.constant 288 : index
    %c0_75 = arith.constant 0 : index
    %204 = vector.load %arg7[%c288, %c0_75] : memref<680x128xf32, #tpu.memory_space<vmem>>, vector<1x64xf32>
    %205 = tpu.transpose %202, [1, 0] : vector<128x16xf32> -> vector<16x128xf32>
    %cst_76 = arith.constant 0.000000e+00 : f32
    %206 = vector.broadcast %cst_76 : f32 to vector<8x16xf32>
    %cst_77 = arith.constant 0.000000e+00 : f32
    %207 = vector.broadcast %cst_77 : f32 to vector<8x16xf32>
    %cst_78 = arith.constant 0.000000e+00 : f32
    %208 = vector.broadcast %cst_78 : f32 to vector<8x16xf32>
    %cst_79 = arith.constant 0.000000e+00 : f32
    %209 = vector.broadcast %cst_79 : f32 to vector<8x16xf32>
    %210 = tpu.concatenate %208, %209, %206 in 1 : vector<8x16xf32>, vector<8x16xf32>, vector<8x16xf32> -> vector<8x48xf32>
    %cst_80 = arith.constant dense<0.000000e+00> : vector<8x64xf32>
    %211 = tpu.matmul %210, %203, %cst_80 {dimension_numbers = #tpu.dot_dimension_numbers<[1], [0], [0], [1], [0, 0, 1, 1], [], []>} : vector<8x48xf32>, vector<48x64xf32>, vector<8x64xf32> -> vector<8x64xf32>
    %212 = vector.broadcast %204 : vector<1x64xf32> to vector<8x64xf32>
    %213 = arith.addf %211, %212 : vector<8x64xf32>
    %214 = vector.extract_strided_slice %213 {offsets = [0, 0], sizes = [8, 16], strides = [1, 1]} : vector<8x64xf32> to vector<8x16xf32>
    %cst_81 = arith.constant 0.000000e+00 : f32
    %215 = vector.broadcast %cst_81 : f32 to vector<8x16xf32>
    %216 = arith.subf %215, %214 : vector<8x16xf32>
    %217 = math.exp %216 : vector<8x16xf32>
    %cst_82 = arith.constant 1.000000e+00 : f32
    %218 = vector.broadcast %cst_82 : f32 to vector<8x16xf32>
    %219 = arith.addf %218, %217 : vector<8x16xf32>
    %220 = tpu.reciprocal %219 {approx = true} : vector<8x16xf32> -> vector<8x16xf32>
    %221 = vector.extract_strided_slice %213 {offsets = [0, 16], sizes = [8, 16], strides = [1, 1]} : vector<8x64xf32> to vector<8x16xf32>
    %cst_83 = arith.constant 0.000000e+00 : f32
    %222 = vector.broadcast %cst_83 : f32 to vector<8x16xf32>
    %223 = arith.subf %222, %221 : vector<8x16xf32>
    %224 = math.exp %223 : vector<8x16xf32>
    %cst_84 = arith.constant 1.000000e+00 : f32
    %225 = vector.broadcast %cst_84 : f32 to vector<8x16xf32>
    %226 = arith.addf %225, %224 : vector<8x16xf32>
    %227 = tpu.reciprocal %226 {approx = true} : vector<8x16xf32> -> vector<8x16xf32>
    %228 = vector.extract_strided_slice %213 {offsets = [0, 32], sizes = [8, 16], strides = [1, 1]} : vector<8x64xf32> to vector<8x16xf32>
    %229 = math.tanh %228 : vector<8x16xf32>
    %230 = vector.extract_strided_slice %213 {offsets = [0, 48], sizes = [8, 16], strides = [1, 1]} : vector<8x64xf32> to vector<8x16xf32>
    %cst_85 = arith.constant 0.000000e+00 : f32
    %231 = vector.broadcast %cst_85 : f32 to vector<8x16xf32>
    %232 = arith.subf %231, %230 : vector<8x16xf32>
    %233 = math.exp %232 : vector<8x16xf32>
    %cst_86 = arith.constant 1.000000e+00 : f32
    %234 = vector.broadcast %cst_86 : f32 to vector<8x16xf32>
    %235 = arith.addf %234, %233 : vector<8x16xf32>
    %236 = tpu.reciprocal %235 {approx = true} : vector<8x16xf32> -> vector<8x16xf32>
    %237 = arith.mulf %227, %207 : vector<8x16xf32>
    %238 = arith.mulf %220, %229 : vector<8x16xf32>
    %239 = arith.addf %237, %238 : vector<8x16xf32>
    %240 = math.tanh %239 : vector<8x16xf32>
    %241 = arith.mulf %236, %240 : vector<8x16xf32>
    %cst_87 = arith.constant dense<0.000000e+00> : vector<8x128xf32>
    %242 = tpu.matmul %241, %205, %cst_87 {dimension_numbers = #tpu.dot_dimension_numbers<[1], [0], [0], [1], [0, 0, 1, 1], [], []>} : vector<8x16xf32>, vector<16x128xf32>, vector<8x128xf32> -> vector<8x128xf32>
    %cst_88 = arith.constant 0.000000e+00 : f32
    %243 = vector.broadcast %cst_88 : f32 to vector<8x128xf32>
    %244 = arith.cmpf ogt, %26, %243 : vector<8x128xf32>
    %cst_89 = arith.constant -1.000000e+30 : f32
    %245 = vector.broadcast %cst_89 : f32 to vector<8x128xf32>
    %246 = arith.select %244, %242, %245 : vector<8x128xi1>, vector<8x128xf32>
    %cst_90 = arith.constant dense<0xFF800000> : vector<8xf32>
    %247 = vector.multi_reduction <maximumf>, %246, %cst_90 [1] : vector<8x128xf32> to vector<8xf32>
    %248 = vector.shape_cast %247 : vector<8xf32> to vector<8x1xf32>
    %249 = vector.broadcast %248 : vector<8x1xf32> to vector<8x128xf32>
    %250 = arith.subf %246, %249 : vector<8x128xf32>
    %251 = math.exp %250 : vector<8x128xf32>
    %252 = arith.mulf %251, %26 : vector<8x128xf32>
    %cst_91 = arith.constant dense<0.000000e+00> : vector<8xf32>
    %253 = vector.multi_reduction <add>, %252, %cst_91 [1] : vector<8x128xf32> to vector<8xf32>
    %254 = vector.shape_cast %253 : vector<8xf32> to vector<8x1xf32>
    %cst_92 = arith.constant 9.99999996E-13 : f32
    %255 = vector.broadcast %cst_92 : f32 to vector<8x1xf32>
    %256 = arith.maximumf %254, %255 : vector<8x1xf32>
    %257 = vector.broadcast %256 : vector<8x1xf32> to vector<8x128xf32>
    %258 = arith.divf %252, %257 : vector<8x128xf32>
    %cst_93 = arith.constant dense<0.000000e+00> : vector<8x16xf32>
    %259 = tpu.matmul %258, %202, %cst_93 {dimension_numbers = #tpu.dot_dimension_numbers<[1], [0], [0], [1], [0, 0, 1, 1], [], []>} : vector<8x128xf32>, vector<128x16xf32>, vector<8x16xf32> -> vector<8x16xf32>
    %260 = tpu.concatenate %241, %259, %241 in 1 : vector<8x16xf32>, vector<8x16xf32>, vector<8x16xf32> -> vector<8x48xf32>
    %cst_94 = arith.constant dense<0.000000e+00> : vector<8x64xf32>
    %261 = tpu.matmul %260, %203, %cst_94 {dimension_numbers = #tpu.dot_dimension_numbers<[1], [0], [0], [1], [0, 0, 1, 1], [], []>} : vector<8x48xf32>, vector<48x64xf32>, vector<8x64xf32> -> vector<8x64xf32>
    %262 = vector.broadcast %204 : vector<1x64xf32> to vector<8x64xf32>
    %263 = arith.addf %261, %262 : vector<8x64xf32>
    %264 = vector.extract_strided_slice %263 {offsets = [0, 0], sizes = [8, 16], strides = [1, 1]} : vector<8x64xf32> to vector<8x16xf32>
    %cst_95 = arith.constant 0.000000e+00 : f32
    %265 = vector.broadcast %cst_95 : f32 to vector<8x16xf32>
    %266 = arith.subf %265, %264 : vector<8x16xf32>
    %267 = math.exp %266 : vector<8x16xf32>
    %cst_96 = arith.constant 1.000000e+00 : f32
    %268 = vector.broadcast %cst_96 : f32 to vector<8x16xf32>
    %269 = arith.addf %268, %267 : vector<8x16xf32>
    %270 = tpu.reciprocal %269 {approx = true} : vector<8x16xf32> -> vector<8x16xf32>
    %271 = vector.extract_strided_slice %263 {offsets = [0, 16], sizes = [8, 16], strides = [1, 1]} : vector<8x64xf32> to vector<8x16xf32>
    %cst_97 = arith.constant 0.000000e+00 : f32
    %272 = vector.broadcast %cst_97 : f32 to vector<8x16xf32>
    %273 = arith.subf %272, %271 : vector<8x16xf32>
    %274 = math.exp %273 : vector<8x16xf32>
    %cst_98 = arith.constant 1.000000e+00 : f32
    %275 = vector.broadcast %cst_98 : f32 to vector<8x16xf32>
    %276 = arith.addf %275, %274 : vector<8x16xf32>
    %277 = tpu.reciprocal %276 {approx = true} : vector<8x16xf32> -> vector<8x16xf32>
    %278 = vector.extract_strided_slice %263 {offsets = [0, 32], sizes = [8, 16], strides = [1, 1]} : vector<8x64xf32> to vector<8x16xf32>
    %279 = math.tanh %278 : vector<8x16xf32>
    %280 = vector.extract_strided_slice %263 {offsets = [0, 48], sizes = [8, 16], strides = [1, 1]} : vector<8x64xf32> to vector<8x16xf32>
    %cst_99 = arith.constant 0.000000e+00 : f32
    %281 = vector.broadcast %cst_99 : f32 to vector<8x16xf32>
    %282 = arith.subf %281, %280 : vector<8x16xf32>
    %283 = math.exp %282 : vector<8x16xf32>
    %cst_100 = arith.constant 1.000000e+00 : f32
    %284 = vector.broadcast %cst_100 : f32 to vector<8x16xf32>
    %285 = arith.addf %284, %283 : vector<8x16xf32>
    %286 = tpu.reciprocal %285 {approx = true} : vector<8x16xf32> -> vector<8x16xf32>
    %287 = arith.mulf %277, %239 : vector<8x16xf32>
    %288 = arith.mulf %270, %279 : vector<8x16xf32>
    %289 = arith.addf %287, %288 : vector<8x16xf32>
    %290 = math.tanh %289 : vector<8x16xf32>
    %291 = arith.mulf %286, %290 : vector<8x16xf32>
    %cst_101 = arith.constant dense<0.000000e+00> : vector<8x128xf32>
    %292 = tpu.matmul %291, %205, %cst_101 {dimension_numbers = #tpu.dot_dimension_numbers<[1], [0], [0], [1], [0, 0, 1, 1], [], []>} : vector<8x16xf32>, vector<16x128xf32>, vector<8x128xf32> -> vector<8x128xf32>
    %cst_102 = arith.constant 0.000000e+00 : f32
    %293 = vector.broadcast %cst_102 : f32 to vector<8x128xf32>
    %294 = arith.cmpf ogt, %26, %293 : vector<8x128xf32>
    %cst_103 = arith.constant -1.000000e+30 : f32
    %295 = vector.broadcast %cst_103 : f32 to vector<8x128xf32>
    %296 = arith.select %294, %292, %295 : vector<8x128xi1>, vector<8x128xf32>
    %cst_104 = arith.constant dense<0xFF800000> : vector<8xf32>
    %297 = vector.multi_reduction <maximumf>, %296, %cst_104 [1] : vector<8x128xf32> to vector<8xf32>
    %298 = vector.shape_cast %297 : vector<8xf32> to vector<8x1xf32>
    %299 = vector.broadcast %298 : vector<8x1xf32> to vector<8x128xf32>
    %300 = arith.subf %296, %299 : vector<8x128xf32>
    %301 = math.exp %300 : vector<8x128xf32>
    %302 = arith.mulf %301, %26 : vector<8x128xf32>
    %cst_105 = arith.constant dense<0.000000e+00> : vector<8xf32>
    %303 = vector.multi_reduction <add>, %302, %cst_105 [1] : vector<8x128xf32> to vector<8xf32>
    %304 = vector.shape_cast %303 : vector<8xf32> to vector<8x1xf32>
    %cst_106 = arith.constant 9.99999996E-13 : f32
    %305 = vector.broadcast %cst_106 : f32 to vector<8x1xf32>
    %306 = arith.maximumf %304, %305 : vector<8x1xf32>
    %307 = vector.broadcast %306 : vector<8x1xf32> to vector<8x128xf32>
    %308 = arith.divf %302, %307 : vector<8x128xf32>
    %cst_107 = arith.constant dense<0.000000e+00> : vector<8x16xf32>
    %309 = tpu.matmul %308, %202, %cst_107 {dimension_numbers = #tpu.dot_dimension_numbers<[1], [0], [0], [1], [0, 0, 1, 1], [], []>} : vector<8x128xf32>, vector<128x16xf32>, vector<8x16xf32> -> vector<8x16xf32>
    %310 = tpu.concatenate %291, %309, %291 in 1 : vector<8x16xf32>, vector<8x16xf32>, vector<8x16xf32> -> vector<8x48xf32>
    %cst_108 = arith.constant dense<0.000000e+00> : vector<8x64xf32>
    %311 = tpu.matmul %310, %203, %cst_108 {dimension_numbers = #tpu.dot_dimension_numbers<[1], [0], [0], [1], [0, 0, 1, 1], [], []>} : vector<8x48xf32>, vector<48x64xf32>, vector<8x64xf32> -> vector<8x64xf32>
    %312 = vector.broadcast %204 : vector<1x64xf32> to vector<8x64xf32>
    %313 = arith.addf %311, %312 : vector<8x64xf32>
    %314 = vector.extract_strided_slice %313 {offsets = [0, 0], sizes = [8, 16], strides = [1, 1]} : vector<8x64xf32> to vector<8x16xf32>
    %cst_109 = arith.constant 0.000000e+00 : f32
    %315 = vector.broadcast %cst_109 : f32 to vector<8x16xf32>
    %316 = arith.subf %315, %314 : vector<8x16xf32>
    %317 = math.exp %316 : vector<8x16xf32>
    %cst_110 = arith.constant 1.000000e+00 : f32
    %318 = vector.broadcast %cst_110 : f32 to vector<8x16xf32>
    %319 = arith.addf %318, %317 : vector<8x16xf32>
    %320 = tpu.reciprocal %319 {approx = true} : vector<8x16xf32> -> vector<8x16xf32>
    %321 = vector.extract_strided_slice %313 {offsets = [0, 16], sizes = [8, 16], strides = [1, 1]} : vector<8x64xf32> to vector<8x16xf32>
    %cst_111 = arith.constant 0.000000e+00 : f32
    %322 = vector.broadcast %cst_111 : f32 to vector<8x16xf32>
    %323 = arith.subf %322, %321 : vector<8x16xf32>
    %324 = math.exp %323 : vector<8x16xf32>
    %cst_112 = arith.constant 1.000000e+00 : f32
    %325 = vector.broadcast %cst_112 : f32 to vector<8x16xf32>
    %326 = arith.addf %325, %324 : vector<8x16xf32>
    %327 = tpu.reciprocal %326 {approx = true} : vector<8x16xf32> -> vector<8x16xf32>
    %328 = vector.extract_strided_slice %313 {offsets = [0, 32], sizes = [8, 16], strides = [1, 1]} : vector<8x64xf32> to vector<8x16xf32>
    %329 = math.tanh %328 : vector<8x16xf32>
    %330 = vector.extract_strided_slice %313 {offsets = [0, 48], sizes = [8, 16], strides = [1, 1]} : vector<8x64xf32> to vector<8x16xf32>
    %cst_113 = arith.constant 0.000000e+00 : f32
    %331 = vector.broadcast %cst_113 : f32 to vector<8x16xf32>
    %332 = arith.subf %331, %330 : vector<8x16xf32>
    %333 = math.exp %332 : vector<8x16xf32>
    %cst_114 = arith.constant 1.000000e+00 : f32
    %334 = vector.broadcast %cst_114 : f32 to vector<8x16xf32>
    %335 = arith.addf %334, %333 : vector<8x16xf32>
    %336 = tpu.reciprocal %335 {approx = true} : vector<8x16xf32> -> vector<8x16xf32>
    %337 = arith.mulf %327, %289 : vector<8x16xf32>
    %338 = arith.mulf %320, %329 : vector<8x16xf32>
    %339 = arith.addf %337, %338 : vector<8x16xf32>
    %340 = math.tanh %339 : vector<8x16xf32>
    %341 = arith.mulf %336, %340 : vector<8x16xf32>
    %cst_115 = arith.constant dense<0.000000e+00> : vector<8x128xf32>
    %342 = tpu.matmul %341, %205, %cst_115 {dimension_numbers = #tpu.dot_dimension_numbers<[1], [0], [0], [1], [0, 0, 1, 1], [], []>} : vector<8x16xf32>, vector<16x128xf32>, vector<8x128xf32> -> vector<8x128xf32>
    %cst_116 = arith.constant 0.000000e+00 : f32
    %343 = vector.broadcast %cst_116 : f32 to vector<8x128xf32>
    %344 = arith.cmpf ogt, %26, %343 : vector<8x128xf32>
    %cst_117 = arith.constant -1.000000e+30 : f32
    %345 = vector.broadcast %cst_117 : f32 to vector<8x128xf32>
    %346 = arith.select %344, %342, %345 : vector<8x128xi1>, vector<8x128xf32>
    %cst_118 = arith.constant dense<0xFF800000> : vector<8xf32>
    %347 = vector.multi_reduction <maximumf>, %346, %cst_118 [1] : vector<8x128xf32> to vector<8xf32>
    %348 = vector.shape_cast %347 : vector<8xf32> to vector<8x1xf32>
    %349 = vector.broadcast %348 : vector<8x1xf32> to vector<8x128xf32>
    %350 = arith.subf %346, %349 : vector<8x128xf32>
    %351 = math.exp %350 : vector<8x128xf32>
    %352 = arith.mulf %351, %26 : vector<8x128xf32>
    %cst_119 = arith.constant dense<0.000000e+00> : vector<8xf32>
    %353 = vector.multi_reduction <add>, %352, %cst_119 [1] : vector<8x128xf32> to vector<8xf32>
    %354 = vector.shape_cast %353 : vector<8xf32> to vector<8x1xf32>
    %cst_120 = arith.constant 9.99999996E-13 : f32
    %355 = vector.broadcast %cst_120 : f32 to vector<8x1xf32>
    %356 = arith.maximumf %354, %355 : vector<8x1xf32>
    %357 = vector.broadcast %356 : vector<8x1xf32> to vector<8x128xf32>
    %358 = arith.divf %352, %357 : vector<8x128xf32>
    %cst_121 = arith.constant dense<0.000000e+00> : vector<8x16xf32>
    %359 = tpu.matmul %358, %202, %cst_121 {dimension_numbers = #tpu.dot_dimension_numbers<[1], [0], [0], [1], [0, 0, 1, 1], [], []>} : vector<8x128xf32>, vector<128x16xf32>, vector<8x16xf32> -> vector<8x16xf32>
    %c0_122 = arith.constant 0 : index
    %c0_123 = arith.constant 0 : index
    %360 = vector.load %arg6[%c0_122, %c0_123] : memref<8x24xf32, #tpu.memory_space<vmem>>, vector<8x24xf32>
    %361 = arith.cmpf one, %360, %360 : vector<8x24xf32>
    %cst_124 = arith.constant 0.000000e+00 : f32
    %362 = vector.broadcast %cst_124 : f32 to vector<8x24xf32>
    %363 = arith.select %361, %362, %360 : vector<8x24xi1>, vector<8x24xf32>
    %c0_125 = arith.constant 0 : index
    %c0_126 = arith.constant 0 : index
    %364 = vector.load %arg5[%c0_125, %c0_126] : memref<8x8xf32, #tpu.memory_space<vmem>>, vector<8x8xf32>
    %365 = tpu.concatenate %364, %363 in 1 : vector<8x8xf32>, vector<8x24xf32> -> vector<8x32xf32>
    %c296 = arith.constant 296 : index
    %c0_127 = arith.constant 0 : index
    %366 = vector.load %arg7[%c296, %c0_127] : memref<680x128xf32, #tpu.memory_space<vmem>>, vector<32x128xf32>
    %cst_128 = arith.constant dense<0.000000e+00> : vector<8x128xf32>
    %367 = tpu.matmul %365, %366, %cst_128 {dimension_numbers = #tpu.dot_dimension_numbers<[1], [0], [0], [1], [0, 0, 1, 1], [], []>} : vector<8x32xf32>, vector<32x128xf32>, vector<8x128xf32> -> vector<8x128xf32>
    %c328 = arith.constant 328 : index
    %c0_129 = arith.constant 0 : index
    %368 = vector.load %arg7[%c328, %c0_129] : memref<680x128xf32, #tpu.memory_space<vmem>>, vector<1x128xf32>
    %369 = vector.broadcast %368 : vector<1x128xf32> to vector<8x128xf32>
    %370 = arith.addf %367, %369 : vector<8x128xf32>
    %cst_130 = arith.constant 0.000000e+00 : f32
    %371 = vector.broadcast %cst_130 : f32 to vector<8x128xf32>
    %372 = arith.cmpf oge, %370, %371 : vector<8x128xf32>
    %cst_131 = arith.constant 0.00999999977 : f32
    %373 = vector.broadcast %cst_131 : f32 to vector<8x128xf32>
    %374 = arith.mulf %373, %370 : vector<8x128xf32>
    %375 = arith.select %372, %370, %374 : vector<8x128xi1>, vector<8x128xf32>
    %c336 = arith.constant 336 : index
    %c0_132 = arith.constant 0 : index
    %376 = vector.load %arg7[%c336, %c0_132] : memref<680x128xf32, #tpu.memory_space<vmem>>, vector<128x64xf32>
    %cst_133 = arith.constant dense<0.000000e+00> : vector<8x64xf32>
    %377 = tpu.matmul %375, %376, %cst_133 {dimension_numbers = #tpu.dot_dimension_numbers<[1], [0], [0], [1], [0, 0, 1, 1], [], []>} : vector<8x128xf32>, vector<128x64xf32>, vector<8x64xf32> -> vector<8x64xf32>
    %c464 = arith.constant 464 : index
    %c0_134 = arith.constant 0 : index
    %378 = vector.load %arg7[%c464, %c0_134] : memref<680x128xf32, #tpu.memory_space<vmem>>, vector<1x64xf32>
    %379 = vector.broadcast %378 : vector<1x64xf32> to vector<8x64xf32>
    %380 = arith.addf %377, %379 : vector<8x64xf32>
    %cst_135 = arith.constant 0.000000e+00 : f32
    %381 = vector.broadcast %cst_135 : f32 to vector<8x64xf32>
    %382 = arith.cmpf oge, %380, %381 : vector<8x64xf32>
    %cst_136 = arith.constant 0.00999999977 : f32
    %383 = vector.broadcast %cst_136 : f32 to vector<8x64xf32>
    %384 = arith.mulf %383, %380 : vector<8x64xf32>
    %385 = arith.select %382, %380, %384 : vector<8x64xi1>, vector<8x64xf32>
    %c472 = arith.constant 472 : index
    %c0_137 = arith.constant 0 : index
    %386 = vector.load %arg7[%c472, %c0_137] : memref<680x128xf32, #tpu.memory_space<vmem>>, vector<64x32xf32>
    %cst_138 = arith.constant dense<0.000000e+00> : vector<8x32xf32>
    %387 = tpu.matmul %385, %386, %cst_138 {dimension_numbers = #tpu.dot_dimension_numbers<[1], [0], [0], [1], [0, 0, 1, 1], [], []>} : vector<8x64xf32>, vector<64x32xf32>, vector<8x32xf32> -> vector<8x32xf32>
    %c536 = arith.constant 536 : index
    %c0_139 = arith.constant 0 : index
    %388 = vector.load %arg7[%c536, %c0_139] : memref<680x128xf32, #tpu.memory_space<vmem>>, vector<1x32xf32>
    %389 = vector.broadcast %388 : vector<1x32xf32> to vector<8x32xf32>
    %390 = arith.addf %387, %389 : vector<8x32xf32>
    %cst_140 = arith.constant 0.000000e+00 : f32
    %391 = vector.broadcast %cst_140 : f32 to vector<8x32xf32>
    %392 = arith.cmpf oge, %390, %391 : vector<8x32xf32>
    %cst_141 = arith.constant 0.00999999977 : f32
    %393 = vector.broadcast %cst_141 : f32 to vector<8x32xf32>
    %394 = arith.mulf %393, %390 : vector<8x32xf32>
    %395 = arith.select %392, %390, %394 : vector<8x32xi1>, vector<8x32xf32>
    %396 = tpu.concatenate %341, %359, %395 in 1 : vector<8x16xf32>, vector<8x16xf32>, vector<8x32xf32> -> vector<8x64xf32>
    %c544 = arith.constant 544 : index
    %c0_142 = arith.constant 0 : index
    %397 = vector.load %arg7[%c544, %c0_142] : memref<680x128xf32, #tpu.memory_space<vmem>>, vector<64x32xf32>
    %cst_143 = arith.constant dense<0.000000e+00> : vector<8x32xf32>
    %398 = tpu.matmul %396, %397, %cst_143 {dimension_numbers = #tpu.dot_dimension_numbers<[1], [0], [0], [1], [0, 0, 1, 1], [], []>} : vector<8x64xf32>, vector<64x32xf32>, vector<8x32xf32> -> vector<8x32xf32>
    %c608 = arith.constant 608 : index
    %c0_144 = arith.constant 0 : index
    %399 = vector.load %arg7[%c608, %c0_144] : memref<680x128xf32, #tpu.memory_space<vmem>>, vector<1x32xf32>
    %400 = vector.broadcast %399 : vector<1x32xf32> to vector<8x32xf32>
    %401 = arith.addf %398, %400 : vector<8x32xf32>
    %cst_145 = arith.constant 0.000000e+00 : f32
    %402 = vector.broadcast %cst_145 : f32 to vector<8x32xf32>
    %403 = arith.cmpf oge, %401, %402 : vector<8x32xf32>
    %cst_146 = arith.constant 0.00999999977 : f32
    %404 = vector.broadcast %cst_146 : f32 to vector<8x32xf32>
    %405 = arith.mulf %404, %401 : vector<8x32xf32>
    %406 = arith.select %403, %401, %405 : vector<8x32xi1>, vector<8x32xf32>
    %c616 = arith.constant 616 : index
    %c0_147 = arith.constant 0 : index
    %407 = vector.load %arg7[%c616, %c0_147] : memref<680x128xf32, #tpu.memory_space<vmem>>, vector<32x16xf32>
    %cst_148 = arith.constant dense<0.000000e+00> : vector<8x16xf32>
    %408 = tpu.matmul %406, %407, %cst_148 {dimension_numbers = #tpu.dot_dimension_numbers<[1], [0], [0], [1], [0, 0, 1, 1], [], []>} : vector<8x32xf32>, vector<32x16xf32>, vector<8x16xf32> -> vector<8x16xf32>
    %c648 = arith.constant 648 : index
    %c0_149 = arith.constant 0 : index
    %409 = vector.load %arg7[%c648, %c0_149] : memref<680x128xf32, #tpu.memory_space<vmem>>, vector<1x16xf32>
    %410 = vector.broadcast %409 : vector<1x16xf32> to vector<8x16xf32>
    %411 = arith.addf %408, %410 : vector<8x16xf32>
    %cst_150 = arith.constant 0.000000e+00 : f32
    %412 = vector.broadcast %cst_150 : f32 to vector<8x16xf32>
    %413 = arith.cmpf oge, %411, %412 : vector<8x16xf32>
    %cst_151 = arith.constant 0.00999999977 : f32
    %414 = vector.broadcast %cst_151 : f32 to vector<8x16xf32>
    %415 = arith.mulf %414, %411 : vector<8x16xf32>
    %416 = arith.select %413, %411, %415 : vector<8x16xi1>, vector<8x16xf32>
    %c656 = arith.constant 656 : index
    %c0_152 = arith.constant 0 : index
    %417 = vector.load %arg7[%c656, %c0_152] : memref<680x128xf32, #tpu.memory_space<vmem>>, vector<16x1xf32>
    %cst_153 = arith.constant dense<0.000000e+00> : vector<8x1xf32>
    %418 = tpu.matmul %416, %417, %cst_153 {dimension_numbers = #tpu.dot_dimension_numbers<[1], [0], [0], [1], [0, 0, 1, 1], [], []>} : vector<8x16xf32>, vector<16x1xf32>, vector<8x1xf32> -> vector<8x1xf32>
    %c672 = arith.constant 672 : index
    %c0_154 = arith.constant 0 : index
    %419 = vector.load %arg7[%c672, %c0_154] : memref<680x128xf32, #tpu.memory_space<vmem>>, vector<1x1xf32>
    %420 = vector.broadcast %419 : vector<1x1xf32> to vector<8x1xf32>
    %421 = arith.addf %418, %420 : vector<8x1xf32>
    %c0_155 = arith.constant 0 : index
    %c0_156 = arith.constant 0 : index
    %422 = vector.load %arg8[%c0_155, %c0_156] : memref<8x1xf32, #tpu.memory_space<vmem>>, vector<8x1xf32>
    tpu.vector_store %arg8[%c0_155, %c0_156], %421 {strides = array<i32>} : memref<8x1xf32, #tpu.memory_space<vmem>>, vector<8x1xf32>,
    return
  }
}

</mosaic_0001>

<llo_original>
// kernel: net_forward.1
$region0: #{net_forward.1}
  #allocation0 [shape = 'u32[]', space=smem, size = 0x4, offset = 0x4, fixed_abs, tag = 'smem constant byte address 0x4 - core index']
  #allocation1 [shape = 'u32[72,128]{1,0:T(1,128)}', space=vmem, size = 0x9000, scoped, tag = 'internal scratch']
  %s0 = inlined_call_operand.vmem [shape: f32[128,8], index: 0, kind: input, shape index: {}]
  %s1 = inlined_call_operand.vmem [shape: f32[256,4], index: 1, kind: input, shape index: {}]
  %s2 = inlined_call_operand.vmem [shape: s32[256,1], index: 2, kind: input, shape index: {}]
  %s3 = inlined_call_operand.vmem [shape: s32[1,256], index: 3, kind: input, shape index: {}]
  %s4 = inlined_call_operand.vmem [shape: s32[1,128], index: 4, kind: input, shape index: {}]
  %s5 = inlined_call_operand.vmem [shape: f32[8,8], index: 5, kind: input, shape index: {}]
  %s6 = inlined_call_operand.vmem [shape: f32[8,24], index: 6, kind: input, shape index: {}]
  %s7 = inlined_call_operand.hbm [shape: f32[680,128], index: 7, kind: input, shape index: {}]
  %s8 = inlined_call_operand.vmem [shape: f32[8,1], index: 8, kind: output, shape index: {}]
  %s9 = sld [smem:[#allocation0]]
  $region46: #{net_forward.1} parent=0
    _
  %s11 = ssub.s32 1, %s9
  %s12 = scalar_select 0, %s11, %s9
  $region1: #{net_forward.1} parent=0
    #allocation2 [shape = 'u8[348160]{0}', space=vmem, size = 0x55000, scoped, tag = 'input window, operand 7, single buffered']
    #allocation3 [shape = 's32[1]{0}', space=sflag, size = 0x4, scoped, tag = 'scoped memory for net_forward.1']
    %13 = vsyncpa [#allocation3], 0
    // Predicated region
    $region2: #{net_forward.1} parent=1 // pred_check
      _
    $region3: #{net_forward.1} parent=1 // pred_check_branch
      %15 = sbr.rel (0) target = $region5
    $region4: #{net_forward.1} parent=1 // pred_region
      _
    $region5: #{net_forward.1} parent=1 // pred_fallthru
      _
    // Predicated region
    $region6: #{net_forward.1} parent=1 // pred_check
      _
    $region7: #{net_forward.1} parent=1 // pred_check_branch
      %17 = sbr.rel (0) target = $region9
    $region8: #{net_forward.1} parent=1 // pred_region
      _
    $region9: #{net_forward.1} parent=1 // pred_fallthru
      _
    // Predicated region
    $region10: #{net_forward.1} parent=1 // pred_check
      _
    $region11: #{net_forward.1} parent=1 // pred_check_branch
      %19 = sbr.rel (0) target = $region13
    $region12: #{net_forward.1} parent=1 // pred_region
      _
    $region13: #{net_forward.1} parent=1 // pred_fallthru
      _
    // Predicated region
    $region14: #{net_forward.1} parent=1 // pred_check
      _
    $region15: #{net_forward.1} parent=1 // pred_check_branch
      %21 = sbr.rel (0) target = $region17
    $region16: #{net_forward.1} parent=1 // pred_region
      _
    $region17: #{net_forward.1} parent=1 // pred_fallthru
      _
    // Predicated region
    $region18: #{net_forward.1} parent=1 // pred_check
      _
    $region19: #{net_forward.1} parent=1 // pred_check_branch
      %23 = sbr.rel (0) target = $region21
    $region20: #{net_forward.1} parent=1 // pred_region
      _
    $region21: #{net_forward.1} parent=1 // pred_fallthru
      _
    // Predicated region
    $region22: #{net_forward.1} parent=1 // pred_check
      _
    $region23: #{net_forward.1} parent=1 // pred_check_branch
      %25 = sbr.rel (0) target = $region25
    $region24: #{net_forward.1} parent=1 // pred_region
      _
    $region25: #{net_forward.1} parent=1 // pred_fallthru
      _
    // Predicated region
    $region26: #{net_forward.1} parent=1 // pred_check
      _
    $region27: #{net_forward.1} parent=1 // pred_check_branch
      %27 = sbr.rel (0) target = $region29
    $region28: #{net_forward.1} parent=1 // pred_region
      _
    $region29: #{net_forward.1} parent=1 // pred_fallthru
      _
    // Predicated region
    $region30: #{net_forward.1} parent=1 // pred_check
      _
    $region31: #{net_forward.1} parent=1 // pred_check_branch
      %29 = sbr.rel (0) target = $region33
    $region32: #{net_forward.1} parent=1 // pred_region
      %31 = vsyncadd [#allocation3], 0
      %s32 = sshll.u32 %s7, 4
      %s33 = int_to_ptr.hbm [resolvable:$true] %s32
      %s34 = sshll.u32 [#allocation2], 4
      %s35 = int_to_ptr.vmem [resolvable:$true] %s34
      %40 = dma.hbm_to_vmem [thread:$0]  %s33, 10880, %s35, [#allocation3], 128, 128, 8
    $region33: #{net_forward.1} parent=1 // pred_fallthru
      _
    // Predicated region
    $region34: #{net_forward.1} parent=1 // pred_check
      _
    $region35: #{net_forward.1} parent=1 // pred_check_branch
      %42 = sbr.rel (0) target = $region37
    $region36: #{net_forward.1} parent=1 // pred_region
      %44 = dma.done [#allocation3], 10880
    $region37: #{net_forward.1} parent=1 // pred_fallthru
      _
    %v45 = vld [vmem:[%s2] sm:$0xff]
    %v46 = vld [vmem:[%s2 + $0x8] sm:$0xff]
    %v47 = vld [vmem:[%s2 + $0x10] sm:$0xff]
    %v48 = vld [vmem:[%s2 + $0x18] sm:$0xff]
    %v49 = vld [vmem:[%s2 + $0x20] sm:$0xff]
    %v50 = vld [vmem:[%s2 + $0x28] sm:$0xff]
    %v51 = vld [vmem:[%s2 + $0x30] sm:$0xff]
    %v52 = vld [vmem:[%s2 + $0x38] sm:$0xff]
    %v53 = vld [vmem:[%s2 + $0x40] sm:$0xff]
    %v54 = vld [vmem:[%s2 + $0x48] sm:$0xff]
    %v55 = vld [vmem:[%s2 + $0x50] sm:$0xff]
    %v56 = vld [vmem:[%s2 + $0x58] sm:$0xff]
    %v57 = vld [vmem:[%s2 + $0x60] sm:$0xff]
    %v58 = vld [vmem:[%s2 + $0x68] sm:$0xff]
    %v59 = vld [vmem:[%s2 + $0x70] sm:$0xff]
    %v60 = vld [vmem:[%s2 + $0x78] sm:$0xff]
    %v61 = vld [vmem:[%s2 + $0x80] sm:$0xff]
    %v62 = vld [vmem:[%s2 + $0x88] sm:$0xff]
    %v63 = vld [vmem:[%s2 + $0x90] sm:$0xff]
    %v64 = vld [vmem:[%s2 + $0x98] sm:$0xff]
    %v65 = vld [vmem:[%s2 + $0xa0] sm:$0xff]
    %v66 = vld [vmem:[%s2 + $0xa8] sm:$0xff]
    %v67 = vld [vmem:[%s2 + $0xb0] sm:$0xff]
    %v68 = vld [vmem:[%s2 + $0xb8] sm:$0xff]
    %v69 = vld [vmem:[%s2 + $0xc0] sm:$0xff]
    %v70 = vld [vmem:[%s2 + $0xc8] sm:$0xff]
    %v71 = vld [vmem:[%s2 + $0xd0] sm:$0xff]
    %v72 = vld [vmem:[%s2 + $0xd8] sm:$0xff]
    %v73 = vld [vmem:[%s2 + $0xe0] sm:$0xff]
    %v74 = vld [vmem:[%s2 + $0xe8] sm:$0xff]
    %v75 = vld [vmem:[%s2 + $0xf0] sm:$0xff]
    %v76 = vld [vmem:[%s2 + $0xf8] sm:$0xff]
    %v77 = vlaneseq
    %v78 = vand.u32 %v77, 127
    %79 = vset.pattern.permute.xlu0 0
    %80 = vperm.xlu0 %79, %v45
    %v81 = vpop.permute.xlu0 %80
    %82 = vset.pattern.permute.xlu0 0
    %83 = vperm.xlu0 %82, %v46
    %v84 = vpop.permute.xlu0 %83
    %85 = vset.pattern.permute.xlu0 0
    %86 = vperm.xlu0 %85, %v47
    %v87 = vpop.permute.xlu0 %86
    %88 = vset.pattern.permute.xlu0 0
    %89 = vperm.xlu0 %88, %v48
    %v90 = vpop.permute.xlu0 %89
    %91 = vset.pattern.permute.xlu0 0
    %92 = vperm.xlu0 %91, %v49
    %v93 = vpop.permute.xlu0 %92
    %94 = vset.pattern.permute.xlu0 0
    %95 = vperm.xlu0 %94, %v50
    %v96 = vpop.permute.xlu0 %95
    %97 = vset.pattern.permute.xlu0 0
    %98 = vperm.xlu0 %97, %v51
    %v99 = vpop.permute.xlu0 %98
    %100 = vset.pattern.permute.xlu0 0
    %101 = vperm.xlu0 %100, %v52
    %v102 = vpop.permute.xlu0 %101
    %103 = vset.pattern.permute.xlu0 0
    %104 = vperm.xlu0 %103, %v53
    %v105 = vpop.permute.xlu0 %104
    %106 = vset.pattern.permute.xlu0 0
    %107 = vperm.xlu0 %106, %v54
    %v108 = vpop.permute.xlu0 %107
    %109 = vset.pattern.permute.xlu0 0
    %110 = vperm.xlu0 %109, %v55
    %v111 = vpop.permute.xlu0 %110
    %112 = vset.pattern.permute.xlu0 0
    %113 = vperm.xlu0 %112, %v56
    %v114 = vpop.permute.xlu0 %113
    %115 = vset.pattern.permute.xlu0 0
    %116 = vperm.xlu0 %115, %v57
    %v117 = vpop.permute.xlu0 %116
    %118 = vset.pattern.permute.xlu0 0
    %119 = vperm.xlu0 %118, %v58
    %v120 = vpop.permute.xlu0 %119
    %121 = vset.pattern.permute.xlu0 0
    %122 = vperm.xlu0 %121, %v59
    %v123 = vpop.permute.xlu0 %122
    %124 = vset.pattern.permute.xlu0 0
    %125 = vperm.xlu0 %124, %v60
    %v126 = vpop.permute.xlu0 %125
    %127 = vset.pattern.permute.xlu0 0
    %128 = vperm.xlu0 %127, %v61
    %v129 = vpop.permute.xlu0 %128
    %130 = vset.pattern.permute.xlu0 0
    %131 = vperm.xlu0 %130, %v62
    %v132 = vpop.permute.xlu0 %131
    %133 = vset.pattern.permute.xlu0 0
    %134 = vperm.xlu0 %133, %v63
    %v135 = vpop.permute.xlu0 %134
    %136 = vset.pattern.permute.xlu0 0
    %137 = vperm.xlu0 %136, %v64
    %v138 = vpop.permute.xlu0 %137
    %139 = vset.pattern.permute.xlu0 0
    %140 = vperm.xlu0 %139, %v65
    %v141 = vpop.permute.xlu0 %140
    %142 = vset.pattern.permute.xlu0 0
    %143 = vperm.xlu0 %142, %v66
    %v144 = vpop.permute.xlu0 %143
    %145 = vset.pattern.permute.xlu0 0
    %146 = vperm.xlu0 %145, %v67
    %v147 = vpop.permute.xlu0 %146
    %148 = vset.pattern.permute.xlu0 0
    %149 = vperm.xlu0 %148, %v68
    %v150 = vpop.permute.xlu0 %149
    %151 = vset.pattern.permute.xlu0 0
    %152 = vperm.xlu0 %151, %v69
    %v153 = vpop.permute.xlu0 %152
    %154 = vset.pattern.permute.xlu0 0
    %155 = vperm.xlu0 %154, %v70
    %v156 = vpop.permute.xlu0 %155
    %157 = vset.pattern.permute.xlu0 0
    %158 = vperm.xlu0 %157, %v71
    %v159 = vpop.permute.xlu0 %158
    %160 = vset.pattern.permute.xlu0 0
    %161 = vperm.xlu0 %160, %v72
    %v162 = vpop.permute.xlu0 %161
    %163 = vset.pattern.permute.xlu0 0
    %164 = vperm.xlu0 %163, %v73
    %v165 = vpop.permute.xlu0 %164
    %166 = vset.pattern.permute.xlu0 0
    %167 = vperm.xlu0 %166, %v74
    %v168 = vpop.permute.xlu0 %167
    %169 = vset.pattern.permute.xlu0 0
    %170 = vperm.xlu0 %169, %v75
    %v171 = vpop.permute.xlu0 %170
    %172 = vset.pattern.permute.xlu0 0
    %173 = vperm.xlu0 %172, %v76
    %v174 = vpop.permute.xlu0 %173
    %vm175 = vcmp.eq.s32.totalorder %v81, %v78
    %vm176 = vcmp.eq.s32.totalorder %v84, %v78
    %vm177 = vcmp.eq.s32.totalorder %v87, %v78
    %vm178 = vcmp.eq.s32.totalorder %v90, %v78
    %vm179 = vcmp.eq.s32.totalorder %v93, %v78
    %vm180 = vcmp.eq.s32.totalorder %v96, %v78
    %vm181 = vcmp.eq.s32.totalorder %v99, %v78
    %vm182 = vcmp.eq.s32.totalorder %v102, %v78
    %vm183 = vcmp.eq.s32.totalorder %v105, %v78
    %vm184 = vcmp.eq.s32.totalorder %v108, %v78
    %vm185 = vcmp.eq.s32.totalorder %v111, %v78
    %vm186 = vcmp.eq.s32.totalorder %v114, %v78
    %vm187 = vcmp.eq.s32.totalorder %v117, %v78
    %vm188 = vcmp.eq.s32.totalorder %v120, %v78
    %vm189 = vcmp.eq.s32.totalorder %v123, %v78
    %vm190 = vcmp.eq.s32.totalorder %v126, %v78
    %vm191 = vcmp.eq.s32.totalorder %v129, %v78
    %vm192 = vcmp.eq.s32.totalorder %v132, %v78
    %vm193 = vcmp.eq.s32.totalorder %v135, %v78
    %vm194 = vcmp.eq.s32.totalorder %v138, %v78
    %vm195 = vcmp.eq.s32.totalorder %v141, %v78
    %vm196 = vcmp.eq.s32.totalorder %v144, %v78
    %vm197 = vcmp.eq.s32.totalorder %v147, %v78
    %vm198 = vcmp.eq.s32.totalorder %v150, %v78
    %vm199 = vcmp.eq.s32.totalorder %v153, %v78
    %vm200 = vcmp.eq.s32.totalorder %v156, %v78
    %vm201 = vcmp.eq.s32.totalorder %v159, %v78
    %vm202 = vcmp.eq.s32.totalorder %v162, %v78
    %vm203 = vcmp.eq.s32.totalorder %v165, %v78
    %vm204 = vcmp.eq.s32.totalorder %v168, %v78
    %vm205 = vcmp.eq.s32.totalorder %v171, %v78
    %vm206 = vcmp.eq.s32.totalorder %v174, %v78
    %v207 = vsel %vm175, 1.0, 0.0
    %v208 = vsel %vm176, 1.0, 0.0
    %v209 = vsel %vm177, 1.0, 0.0
    %v210 = vsel %vm178, 1.0, 0.0
    %v211 = vsel %vm179, 1.0, 0.0
    %v212 = vsel %vm180, 1.0, 0.0
    %v213 = vsel %vm181, 1.0, 0.0
    %v214 = vsel %vm182, 1.0, 0.0
    %v215 = vsel %vm183, 1.0, 0.0
    %v216 = vsel %vm184, 1.0, 0.0
    %v217 = vsel %vm185, 1.0, 0.0
    %v218 = vsel %vm186, 1.0, 0.0
    %v219 = vsel %vm187, 1.0, 0.0
    %v220 = vsel %vm188, 1.0, 0.0
    %v221 = vsel %vm189, 1.0, 0.0
    %v222 = vsel %vm190, 1.0, 0.0
    %v223 = vsel %vm191, 1.0, 0.0
    %v224 = vsel %vm192, 1.0, 0.0
    %v225 = vsel %vm193, 1.0, 0.0
    %v226 = vsel %vm194, 1.0, 0.0
    %v227 = vsel %vm195, 1.0, 0.0
    %v228 = vsel %vm196, 1.0, 0.0
    %v229 = vsel %vm197, 1.0, 0.0
    %v230 = vsel %vm198, 1.0, 0.0
    %v231 = vsel %vm199, 1.0, 0.0
    %v232 = vsel %vm200, 1.0, 0.0
    %v233 = vsel %vm201, 1.0, 0.0
    %v234 = vsel %vm202, 1.0, 0.0
    %v235 = vsel %vm203, 1.0, 0.0
    %v236 = vsel %vm204, 1.0, 0.0
    %v237 = vsel %vm205, 1.0, 0.0
    %v238 = vsel %vm206, 1.0, 0.0
    %v239 = vld [vmem:[%s3] sm:$0x3]
    %v240 = vlaneseq
    %v241 = vshrl.u32 %v240, 7
    %v242 = vadd.s32 %v241, 8
    %v243 = vadd.s32 %v241, 16
    %v244 = vadd.s32 %v241, 24
    %v245 = vadd.s32 %v241, 32
    %v246 = vadd.s32 %v241, 40
    %v247 = vadd.s32 %v241, 48
    %v248 = vadd.s32 %v241, 56
    %v249 = vadd.s32 %v241, 64
    %v250 = vadd.s32 %v241, 72
    %v251 = vadd.s32 %v241, 80
    %v252 = vadd.s32 %v241, 88
    %v253 = vadd.s32 %v241, 96
    %v254 = vadd.s32 %v241, 104
    %v255 = vadd.s32 %v241, 112
    %v256 = vadd.s32 %v241, 120
    %v257 = vperm.slane %v239, 0
    %v258 = vperm.slane %v239, 1
    %vm259 = vcmp.eq.s32.totalorder %v257, %v241
    %vm260 = vcmp.eq.s32.totalorder %v258, %v241
    %vm261 = vcmp.eq.s32.totalorder %v257, %v242
    %vm262 = vcmp.eq.s32.totalorder %v258, %v242
    %vm263 = vcmp.eq.s32.totalorder %v257, %v243
    %vm264 = vcmp.eq.s32.totalorder %v258, %v243
    %vm265 = vcmp.eq.s32.totalorder %v257, %v244
    %vm266 = vcmp.eq.s32.totalorder %v258, %v244
    %vm267 = vcmp.eq.s32.totalorder %v257, %v245
    %vm268 = vcmp.eq.s32.totalorder %v258, %v245
    %vm269 = vcmp.eq.s32.totalorder %v257, %v246
    %vm270 = vcmp.eq.s32.totalorder %v258, %v246
    %vm271 = vcmp.eq.s32.totalorder %v257, %v247
    %vm272 = vcmp.eq.s32.totalorder %v258, %v247
    %vm273 = vcmp.eq.s32.totalorder %v257, %v248
    %vm274 = vcmp.eq.s32.totalorder %v258, %v248
    %vm275 = vcmp.eq.s32.totalorder %v257, %v249
    %vm276 = vcmp.eq.s32.totalorder %v258, %v249
    %vm277 = vcmp.eq.s32.totalorder %v257, %v250
    %vm278 = vcmp.eq.s32.totalorder %v258, %v250
    %vm279 = vcmp.eq.s32.totalorder %v257, %v251
    %vm280 = vcmp.eq.s32.totalorder %v258, %v251
    %vm281 = vcmp.eq.s32.totalorder %v257, %v252
    %vm282 = vcmp.eq.s32.totalorder %v258, %v252
    %vm283 = vcmp.eq.s32.totalorder %v257, %v253
    %vm284 = vcmp.eq.s32.totalorder %v258, %v253
    %vm285 = vcmp.eq.s32.totalorder %v257, %v254
    %vm286 = vcmp.eq.s32.totalorder %v258, %v254
    %vm287 = vcmp.eq.s32.totalorder %v257, %v255
    %vm288 = vcmp.eq.s32.totalorder %v258, %v255
    %vm289 = vcmp.eq.s32.totalorder %v257, %v256
    %vm290 = vcmp.eq.s32.totalorder %v258, %v256
    %v291 = vsel %vm259, 1.0, 0.0
    %v292 = vsel %vm260, 1.0, 0.0
    %v293 = vsel %vm261, 1.0, 0.0
    %v294 = vsel %vm262, 1.0, 0.0
    %v295 = vsel %vm263, 1.0, 0.0
    %v296 = vsel %vm264, 1.0, 0.0
    %v297 = vsel %vm265, 1.0, 0.0
    %v298 = vsel %vm266, 1.0, 0.0
    %v299 = vsel %vm267, 1.0, 0.0
    %v300 = vsel %vm268, 1.0, 0.0
    %v301 = vsel %vm269, 1.0, 0.0
    %v302 = vsel %vm270, 1.0, 0.0
    %v303 = vsel %vm271, 1.0, 0.0
    %v304 = vsel %vm272, 1.0, 0.0
    %v305 = vsel %vm273, 1.0, 0.0
    %v306 = vsel %vm274, 1.0, 0.0
    %v307 = vsel %vm275, 1.0, 0.0
    %v308 = vsel %vm276, 1.0, 0.0
    %v309 = vsel %vm277, 1.0, 0.0
    %v310 = vsel %vm278, 1.0, 0.0
    %v311 = vsel %vm279, 1.0, 0.0
    %v312 = vsel %vm280, 1.0, 0.0
    %v313 = vsel %vm281, 1.0, 0.0
    %v314 = vsel %vm282, 1.0, 0.0
    %v315 = vsel %vm283, 1.0, 0.0
    %v316 = vsel %vm284, 1.0, 0.0
    %v317 = vsel %vm285, 1.0, 0.0
    %v318 = vsel %vm286, 1.0, 0.0
    %v319 = vsel %vm287, 1.0, 0.0
    %v320 = vsel %vm288, 1.0, 0.0
    %v321 = vsel %vm289, 1.0, 0.0
    %v322 = vsel %vm290, 1.0, 0.0
    %v323 = vadd.f32 %v291, %v292
    %324 = vadd.xlane.f32.xlu0 %v323
    %v325 = vpop.xlane.xlu0 %324
    %v326 = vadd.f32 %v293, %v294
    %327 = vadd.xlane.f32.xlu0 %v326
    %v328 = vpop.xlane.xlu0 %327
    %v329 = vadd.f32 %v295, %v296
    %330 = vadd.xlane.f32.xlu0 %v329
    %v331 = vpop.xlane.xlu0 %330
    %v332 = vadd.f32 %v297, %v298
    %333 = vadd.xlane.f32.xlu0 %v332
    %v334 = vpop.xlane.xlu0 %333
    %v335 = vadd.f32 %v299, %v300
    %336 = vadd.xlane.f32.xlu0 %v335
    %v337 = vpop.xlane.xlu0 %336
    %v338 = vadd.f32 %v301, %v302
    %339 = vadd.xlane.f32.xlu0 %v338
    %v340 = vpop.xlane.xlu0 %339
    %v341 = vadd.f32 %v303, %v304
    %342 = vadd.xlane.f32.xlu0 %v341
    %v343 = vpop.xlane.xlu0 %342
    %v344 = vadd.f32 %v305, %v306
    %345 = vadd.xlane.f32.xlu0 %v344
    %v346 = vpop.xlane.xlu0 %345
    %v347 = vadd.f32 %v307, %v308
    %348 = vadd.xlane.f32.xlu0 %v347
    %v349 = vpop.xlane.xlu0 %348
    %v350 = vadd.f32 %v309, %v310
    %351 = vadd.xlane.f32.xlu0 %v350
    %v352 = vpop.xlane.xlu0 %351
    %v353 = vadd.f32 %v311, %v312
    %354 = vadd.xlane.f32.xlu0 %v353
    %v355 = vpop.xlane.xlu0 %354
    %v356 = vadd.f32 %v313, %v314
    %357 = vadd.xlane.f32.xlu0 %v356
    %v358 = vpop.xlane.xlu0 %357
    %v359 = vadd.f32 %v315, %v316
    %360 = vadd.xlane.f32.xlu0 %v359
    %v361 = vpop.xlane.xlu0 %360
    %v362 = vadd.f32 %v317, %v318
    %363 = vadd.xlane.f32.xlu0 %v362
    %v364 = vpop.xlane.xlu0 %363
    %v365 = vadd.f32 %v319, %v320
    %366 = vadd.xlane.f32.xlu0 %v365
    %v367 = vpop.xlane.xlu0 %366
    %v368 = vadd.f32 %v321, %v322
    %369 = vadd.xlane.f32.xlu0 %v368
    %v370 = vpop.xlane.xlu0 %369
    %v371 = vmax.f32 %v325, 1.0
    %v372 = vmax.f32 %v328, 1.0
    %v373 = vmax.f32 %v331, 1.0
    %v374 = vmax.f32 %v334, 1.0
    %v375 = vmax.f32 %v337, 1.0
    %v376 = vmax.f32 %v340, 1.0
    %v377 = vmax.f32 %v343, 1.0
    %v378 = vmax.f32 %v346, 1.0
    %v379 = vmax.f32 %v349, 1.0
    %v380 = vmax.f32 %v352, 1.0
    %v381 = vmax.f32 %v355, 1.0
    %v382 = vmax.f32 %v358, 1.0
    %v383 = vmax.f32 %v361, 1.0
    %v384 = vmax.f32 %v364, 1.0
    %v385 = vmax.f32 %v367, 1.0
    %v386 = vmax.f32 %v370, 1.0
    %v387 = vrcp.pop %v371
    %v388 = vmul.f32 %v371, %v387
    %v389 = vsub.f32 1.0, %v388
    %v390 = vmul.f32 %v387, %v389
    %v391 = vadd.f32 %v387, %v390
    %vm392 = vweird.f32 %v371
    %vm393 = vweird.f32 %v387
    %vm394 = vmor %vm392, %vm393
    %v395 = vsel %vm394, %v387, %v391
    %v396 = vand.u32 2147483647, %v371
    %vm397 = vcmp.eq.f32.partialorder %v396, 8.507059e+37
    %v398 = vand.u32 %v371, 2147483648
    %v399 = vor.u32 1.1754944e-38, %v398
    %v400 = vsel %vm397, %v399, %v395
    %v401 = vmul.f32 1.0, %v400
    %v402 = vrcp.pop %v372
    %v403 = vmul.f32 %v372, %v402
    %v404 = vsub.f32 1.0, %v403
    %v405 = vmul.f32 %v402, %v404
    %v406 = vadd.f32 %v402, %v405
    %vm407 = vweird.f32 %v372
    %vm408 = vweird.f32 %v402
    %vm409 = vmor %vm407, %vm408
    %v410 = vsel %vm409, %v402, %v406
    %v411 = vand.u32 2147483647, %v372
    %vm412 = vcmp.eq.f32.partialorder %v411, 8.507059e+37
    %v413 = vand.u32 %v372, 2147483648
    %v414 = vor.u32 1.1754944e-38, %v413
    %v415 = vsel %vm412, %v414, %v410
    %v416 = vmul.f32 1.0, %v415
    %v417 = vrcp.pop %v373
    %v418 = vmul.f32 %v373, %v417
    %v419 = vsub.f32 1.0, %v418
    %v420 = vmul.f32 %v417, %v419
    %v421 = vadd.f32 %v417, %v420
    %vm422 = vweird.f32 %v373
    %vm423 = vweird.f32 %v417
    %vm424 = vmor %vm422, %vm423
    %v425 = vsel %vm424, %v417, %v421
    %v426 = vand.u32 2147483647, %v373
    %vm427 = vcmp.eq.f32.partialorder %v426, 8.507059e+37
    %v428 = vand.u32 %v373, 2147483648
    %v429 = vor.u32 1.1754944e-38, %v428
    %v430 = vsel %vm427, %v429, %v425
    %v431 = vmul.f32 1.0, %v430
    %v432 = vrcp.pop %v374
    %v433 = vmul.f32 %v374, %v432
    %v434 = vsub.f32 1.0, %v433
    %v435 = vmul.f32 %v432, %v434
    %v436 = vadd.f32 %v432, %v435
    %vm437 = vweird.f32 %v374
    %vm438 = vweird.f32 %v432
    %vm439 = vmor %vm437, %vm438
    %v440 = vsel %vm439, %v432, %v436
    %v441 = vand.u32 2147483647, %v374
    %vm442 = vcmp.eq.f32.partialorder %v441, 8.507059e+37
    %v443 = vand.u32 %v374, 2147483648
    %v444 = vor.u32 1.1754944e-38, %v443
    %v445 = vsel %vm442, %v444, %v440
    %v446 = vmul.f32 1.0, %v445
    %v447 = vrcp.pop %v375
    %v448 = vmul.f32 %v375, %v447
    %v449 = vsub.f32 1.0, %v448
    %v450 = vmul.f32 %v447, %v449
    %v451 = vadd.f32 %v447, %v450
    %vm452 = vweird.f32 %v375
    %vm453 = vweird.f32 %v447
    %vm454 = vmor %vm452, %vm453
    %v455 = vsel %vm454, %v447, %v451
    %v456 = vand.u32 2147483647, %v375
    %vm457 = vcmp.eq.f32.partialorder %v456, 8.507059e+37
    %v458 = vand.u32 %v375, 2147483648
    %v459 = vor.u32 1.1754944e-38, %v458
    %v460 = vsel %vm457, %v459, %v455
    %v461 = vmul.f32 1.0, %v460
    %v462 = vrcp.pop %v376
    %v463 = vmul.f32 %v376, %v462
    %v464 = vsub.f32 1.0, %v463
    %v465 = vmul.f32 %v462, %v464
    %v466 = vadd.f32 %v462, %v465
    %vm467 = vweird.f32 %v376
    %vm468 = vweird.f32 %v462
    %vm469 = vmor %vm467, %vm468
    %v470 = vsel %vm469, %v462, %v466
    %v471 = vand.u32 2147483647, %v376
    %vm472 = vcmp.eq.f32.partialorder %v471, 8.507059e+37
    %v473 = vand.u32 %v376, 2147483648
    %v474 = vor.u32 1.1754944e-38, %v473
    %v475 = vsel %vm472, %v474, %v470
    %v476 = vmul.f32 1.0, %v475
    %v477 = vrcp.pop %v377
    %v478 = vmul.f32 %v377, %v477
    %v479 = vsub.f32 1.0, %v478
    %v480 = vmul.f32 %v477, %v479
    %v481 = vadd.f32 %v477, %v480
    %vm482 = vweird.f32 %v377
    %vm483 = vweird.f32 %v477
    %vm484 = vmor %vm482, %vm483
    %v485 = vsel %vm484, %v477, %v481
    %v486 = vand.u32 2147483647, %v377
    %vm487 = vcmp.eq.f32.partialorder %v486, 8.507059e+37
    %v488 = vand.u32 %v377, 2147483648
    %v489 = vor.u32 1.1754944e-38, %v488
    %v490 = vsel %vm487, %v489, %v485
    %v491 = vmul.f32 1.0, %v490
    %v492 = vrcp.pop %v378
    %v493 = vmul.f32 %v378, %v492
    %v494 = vsub.f32 1.0, %v493
    %v495 = vmul.f32 %v492, %v494
    %v496 = vadd.f32 %v492, %v495
    %vm497 = vweird.f32 %v378
    %vm498 = vweird.f32 %v492
    %vm499 = vmor %vm497, %vm498
    %v500 = vsel %vm499, %v492, %v496
    %v501 = vand.u32 2147483647, %v378
    %vm502 = vcmp.eq.f32.partialorder %v501, 8.507059e+37
    %v503 = vand.u32 %v378, 2147483648
    %v504 = vor.u32 1.1754944e-38, %v503
    %v505 = vsel %vm502, %v504, %v500
    %v506 = vmul.f32 1.0, %v505
    %v507 = vrcp.pop %v379
    %v508 = vmul.f32 %v379, %v507
    %v509 = vsub.f32 1.0, %v508
    %v510 = vmul.f32 %v507, %v509
    %v511 = vadd.f32 %v507, %v510
    %vm512 = vweird.f32 %v379
    %vm513 = vweird.f32 %v507
    %vm514 = vmor %vm512, %vm513
    %v515 = vsel %vm514, %v507, %v511
    %v516 = vand.u32 2147483647, %v379
    %vm517 = vcmp.eq.f32.partialorder %v516, 8.507059e+37
    %v518 = vand.u32 %v379, 2147483648
    %v519 = vor.u32 1.1754944e-38, %v518
    %v520 = vsel %vm517, %v519, %v515
    %v521 = vmul.f32 1.0, %v520
    %v522 = vrcp.pop %v380
    %v523 = vmul.f32 %v380, %v522
    %v524 = vsub.f32 1.0, %v523
    %v525 = vmul.f32 %v522, %v524
    %v526 = vadd.f32 %v522, %v525
    %vm527 = vweird.f32 %v380
    %vm528 = vweird.f32 %v522
    %vm529 = vmor %vm527, %vm528
    %v530 = vsel %vm529, %v522, %v526
    %v531 = vand.u32 2147483647, %v380
    %vm532 = vcmp.eq.f32.partialorder %v531, 8.507059e+37
    %v533 = vand.u32 %v380, 2147483648
    %v534 = vor.u32 1.1754944e-38, %v533
    %v535 = vsel %vm532, %v534, %v530
    %v536 = vmul.f32 1.0, %v535
    %v537 = vrcp.pop %v381
    %v538 = vmul.f32 %v381, %v537
    %v539 = vsub.f32 1.0, %v538
    %v540 = vmul.f32 %v537, %v539
    %v541 = vadd.f32 %v537, %v540
    %vm542 = vweird.f32 %v381
    %vm543 = vweird.f32 %v537
    %vm544 = vmor %vm542, %vm543
    %v545 = vsel %vm544, %v537, %v541
    %v546 = vand.u32 2147483647, %v381
    %vm547 = vcmp.eq.f32.partialorder %v546, 8.507059e+37
    %v548 = vand.u32 %v381, 2147483648
    %v549 = vor.u32 1.1754944e-38, %v548
    %v550 = vsel %vm547, %v549, %v545
    %v551 = vmul.f32 1.0, %v550
    %v552 = vrcp.pop %v382
    %v553 = vmul.f32 %v382, %v552
    %v554 = vsub.f32 1.0, %v553
    %v555 = vmul.f32 %v552, %v554
    %v556 = vadd.f32 %v552, %v555
    %vm557 = vweird.f32 %v382
    %vm558 = vweird.f32 %v552
    %vm559 = vmor %vm557, %vm558
    %v560 = vsel %vm559, %v552, %v556
    %v561 = vand.u32 2147483647, %v382
    %vm562 = vcmp.eq.f32.partialorder %v561, 8.507059e+37
    %v563 = vand.u32 %v382, 2147483648
    %v564 = vor.u32 1.1754944e-38, %v563
    %v565 = vsel %vm562, %v564, %v560
    %v566 = vmul.f32 1.0, %v565
    %v567 = vrcp.pop %v383
    %v568 = vmul.f32 %v383, %v567
    %v569 = vsub.f32 1.0, %v568
    %v570 = vmul.f32 %v567, %v569
    %v571 = vadd.f32 %v567, %v570
    %vm572 = vweird.f32 %v383
    %vm573 = vweird.f32 %v567
    %vm574 = vmor %vm572, %vm573
    %v575 = vsel %vm574, %v567, %v571
    %v576 = vand.u32 2147483647, %v383
    %vm577 = vcmp.eq.f32.partialorder %v576, 8.507059e+37
    %v578 = vand.u32 %v383, 2147483648
    %v579 = vor.u32 1.1754944e-38, %v578
    %v580 = vsel %vm577, %v579, %v575
    %v581 = vmul.f32 1.0, %v580
    %v582 = vrcp.pop %v384
    %v583 = vmul.f32 %v384, %v582
    %v584 = vsub.f32 1.0, %v583
    %v585 = vmul.f32 %v582, %v584
    %v586 = vadd.f32 %v582, %v585
    %vm587 = vweird.f32 %v384
    %vm588 = vweird.f32 %v582
    %vm589 = vmor %vm587, %vm588
    %v590 = vsel %vm589, %v582, %v586
    %v591 = vand.u32 2147483647, %v384
    %vm592 = vcmp.eq.f32.partialorder %v591, 8.507059e+37
    %v593 = vand.u32 %v384, 2147483648
    %v594 = vor.u32 1.1754944e-38, %v593
    %v595 = vsel %vm592, %v594, %v590
    %v596 = vmul.f32 1.0, %v595
    %v597 = vrcp.pop %v385
    %v598 = vmul.f32 %v385, %v597
    %v599 = vsub.f32 1.0, %v598
    %v600 = vmul.f32 %v597, %v599
    %v601 = vadd.f32 %v597, %v600
    %vm602 = vweird.f32 %v385
    %vm603 = vweird.f32 %v597
    %vm604 = vmor %vm602, %vm603
    %v605 = vsel %vm604, %v597, %v601
    %v606 = vand.u32 2147483647, %v385
    %vm607 = vcmp.eq.f32.partialorder %v606, 8.507059e+37
    %v608 = vand.u32 %v385, 2147483648
    %v609 = vor.u32 1.1754944e-38, %v608
    %v610 = vsel %vm607, %v609, %v605
    %v611 = vmul.f32 1.0, %v610
    %v612 = vrcp.pop %v386
    %v613 = vmul.f32 %v386, %v612
    %v614 = vsub.f32 1.0, %v613
    %v615 = vmul.f32 %v612, %v614
    %v616 = vadd.f32 %v612, %v615
    %vm617 = vweird.f32 %v386
    %vm618 = vweird.f32 %v612
    %vm619 = vmor %vm617, %vm618
    %v620 = vsel %vm619, %v612, %v616
    %v621 = vand.u32 2147483647, %v386
    %vm622 = vcmp.eq.f32.partialorder %v621, 8.507059e+37
    %v623 = vand.u32 %v386, 2147483648
    %v624 = vor.u32 1.1754944e-38, %v623
    %v625 = vsel %vm622, %v624, %v620
    %v626 = vmul.f32 1.0, %v625
    %v627 = vld [vmem:[%s4] sm:$0x1]
    %v628 = vperm.slane %v627, 0
    %vm629 = vcmp.eq.s32.totalorder %v628, %v241
    %v630 = vsel %vm629, 1.0, 0.0
    %v631 = vld [vmem:[%s0] sm:$0xff]
    %v632 = vld [vmem:[%s0 + $0x8] sm:$0xff]
    %v633 = vld [vmem:[%s0 + $0x10] sm:$0xff]
    %v634 = vld [vmem:[%s0 + $0x18] sm:$0xff]
    %v635 = vld [vmem:[%s0 + $0x20] sm:$0xff]
    %v636 = vld [vmem:[%s0 + $0x28] sm:$0xff]
    %v637 = vld [vmem:[%s0 + $0x30] sm:$0xff]
    %v638 = vld [vmem:[%s0 + $0x38] sm:$0xff]
    %v639 = vld [vmem:[%s0 + $0x40] sm:$0xff]
    %v640 = vld [vmem:[%s0 + $0x48] sm:$0xff]
    %v641 = vld [vmem:[%s0 + $0x50] sm:$0xff]
    %v642 = vld [vmem:[%s0 + $0x58] sm:$0xff]
    %v643 = vld [vmem:[%s0 + $0x60] sm:$0xff]
    %v644 = vld [vmem:[%s0 + $0x68] sm:$0xff]
    %v645 = vld [vmem:[%s0 + $0x70] sm:$0xff]
    %v646 = vld [vmem:[%s0 + $0x78] sm:$0xff]
    %v647 = vld [vmem:[#allocation2] sm:$0xff]
    %v648 = vld [vmem:[#allocation2 + $0x8] sm:$0x1]
    %v649 = vperm.slane %v648, 0
    %vm650 = vcmask 64512
    %v652 = vsel %vm650, %v631, 0
    %v655 = vsel %vm650, %v632, 0
    %v658 = vsel %vm650, %v633, 0
    %v661 = vsel %vm650, %v634, 0
    %v664 = vsel %vm650, %v635, 0
    %v667 = vsel %vm650, %v636, 0
    %v670 = vsel %vm650, %v637, 0
    %v673 = vsel %vm650, %v638, 0
    %v676 = vsel %vm650, %v639, 0
    %v679 = vsel %vm650, %v640, 0
    %v682 = vsel %vm650, %v641, 0
    %v685 = vsel %vm650, %v642, 0
    %v688 = vsel %vm650, %v643, 0
    %v691 = vsel %vm650, %v644, 0
    %v694 = vsel %vm650, %v645, 0
    %v697 = vsel %vm650, %v646, 0
    %699 = vmatpush.msra.mxu0 0.0
    %700 = vmatpush.msra.mxu0 0.0
    %701 = vmatpush.msra.mxu0 0.0
    %702 = vmatpush.msra.mxu0 0.0
    %703 = vmatpush.msra.mxu0 0.0
    %704 = vmatpush.msra.mxu0 0.0
    %705 = vmatpush.msra.mxu0 0.0
    %706 = vmatpush.msra.mxu0 0.0
    %707 = vmatpush.msra.mxu0 0.0
    %708 = vmatpush.msra.mxu0 0.0
    %709 = vmatpush.msra.mxu0 0.0
    %710 = vmatpush.msra.mxu0 0.0
    %711 = vmatpush.msra.mxu0 0.0
    %712 = vmatpush.msra.mxu0 0.0
    %713 = vmatpush.msra.mxu0 0.0
    %714 = vmatpush.msra.mxu0 %v647
    %715 = vmatmul.f32.gmra.mxu0 %v652
    %v716 = vpop.f32.mrf.mxu0
    %v717 = vadd.f32 %v649, %v716
    %718 = vmatmul.f32.gmra.mxu0 %v655
    %v719 = vpop.f32.mrf.mxu0
    %v720 = vadd.f32 %v649, %v719
    %721 = vmatmul.f32.gmra.mxu0 %v658
    %v722 = vpop.f32.mrf.mxu0
    %v723 = vadd.f32 %v649, %v722
    %724 = vmatmul.f32.gmra.mxu0 %v661
    %v725 = vpop.f32.mrf.mxu0
    %v726 = vadd.f32 %v649, %v725
    %727 = vmatmul.f32.gmra.mxu0 %v664
    %v728 = vpop.f32.mrf.mxu0
    %v729 = vadd.f32 %v649, %v728
    %730 = vmatmul.f32.gmra.mxu0 %v667
    %v731 = vpop.f32.mrf.mxu0
    %v732 = vadd.f32 %v649, %v731
    %733 = vmatmul.f32.gmra.mxu0 %v670
    %v734 = vpop.f32.mrf.mxu0
    %v735 = vadd.f32 %v649, %v734
    %736 = vmatmul.f32.gmra.mxu0 %v673
    %v737 = vpop.f32.mrf.mxu0
    %v738 = vadd.f32 %v649, %v737
    %739 = vmatmul.f32.gmra.mxu0 %v676
    %v740 = vpop.f32.mrf.mxu0
    %v741 = vadd.f32 %v649, %v740
    %742 = vmatmul.f32.gmra.mxu0 %v679
    %v743 = vpop.f32.mrf.mxu0
    %v744 = vadd.f32 %v649, %v743
    %745 = vmatmul.f32.gmra.mxu0 %v682
    %v746 = vpop.f32.mrf.mxu0
    %v747 = vadd.f32 %v649, %v746
    %748 = vmatmul.f32.gmra.mxu0 %v685
    %v749 = vpop.f32.mrf.mxu0
    %v750 = vadd.f32 %v649, %v749
    %751 = vmatmul.f32.gmra.mxu0 %v688
    %v752 = vpop.f32.mrf.mxu0
    %v753 = vadd.f32 %v649, %v752
    %754 = vmatmul.f32.gmra.mxu0 %v691
    %v755 = vpop.f32.mrf.mxu0
    %v756 = vadd.f32 %v649, %v755
    %757 = vmatmul.f32.gmra.mxu0 %v694
    %v758 = vpop.f32.mrf.mxu0
    %v759 = vadd.f32 %v649, %v758
    %760 = vmatmul.f32.gmra.mxu0 %v697
    %v761 = vpop.f32.mrf.mxu0
    %v762 = vadd.f32 %v649, %v761
    %763 = vdwg.mxu0
    %vm764 = vcmp.ge.f32.partialorder %v717, 0.0
    %vm765 = vcmp.ge.f32.partialorder %v720, 0.0
    %vm766 = vcmp.ge.f32.partialorder %v723, 0.0
    %vm767 = vcmp.ge.f32.partialorder %v726, 0.0
    %vm768 = vcmp.ge.f32.partialorder %v729, 0.0
    %vm769 = vcmp.ge.f32.partialorder %v732, 0.0
    %vm770 = vcmp.ge.f32.partialorder %v735, 0.0
    %vm771 = vcmp.ge.f32.partialorder %v738, 0.0
    %vm772 = vcmp.ge.f32.partialorder %v741, 0.0
    %vm773 = vcmp.ge.f32.partialorder %v744, 0.0
    %vm774 = vcmp.ge.f32.partialorder %v747, 0.0
    %vm775 = vcmp.ge.f32.partialorder %v750, 0.0
    %vm776 = vcmp.ge.f32.partialorder %v753, 0.0
    %vm777 = vcmp.ge.f32.partialorder %v756, 0.0
    %vm778 = vcmp.ge.f32.partialorder %v759, 0.0
    %vm779 = vcmp.ge.f32.partialorder %v762, 0.0
    %v780 = vmul.f32 %v717, 0.01
    %v781 = vmul.f32 %v720, 0.01
    %v782 = vmul.f32 %v723, 0.01
    %v783 = vmul.f32 %v726, 0.01
    %v784 = vmul.f32 %v729, 0.01
    %v785 = vmul.f32 %v732, 0.01
    %v786 = vmul.f32 %v735, 0.01
    %v787 = vmul.f32 %v738, 0.01
    %v788 = vmul.f32 %v741, 0.01
    %v789 = vmul.f32 %v744, 0.01
    %v790 = vmul.f32 %v747, 0.01
    %v791 = vmul.f32 %v750, 0.01
    %v792 = vmul.f32 %v753, 0.01
    %v793 = vmul.f32 %v756, 0.01
    %v794 = vmul.f32 %v759, 0.01
    %v795 = vmul.f32 %v762, 0.01
    %v796 = vsel %vm764, %v717, %v780
    %v797 = vsel %vm765, %v720, %v781
    %v798 = vsel %vm766, %v723, %v782
    %v799 = vsel %vm767, %v726, %v783
    %v800 = vsel %vm768, %v729, %v784
    %v801 = vsel %vm769, %v732, %v785
    %v802 = vsel %vm770, %v735, %v786
    %v803 = vsel %vm771, %v738, %v787
    %v804 = vsel %vm772, %v741, %v788
    %v805 = vsel %vm773, %v744, %v789
    %v806 = vsel %vm774, %v747, %v790
    %v807 = vsel %vm775, %v750, %v791
    %v808 = vsel %vm776, %v753, %v792
    %v809 = vsel %vm777, %v756, %v793
    %v810 = vsel %vm778, %v759, %v794
    %v811 = vsel %vm779, %v762, %v795
    %v812 = vld [vmem:[%s1] sm:$0xff]
    %v813 = vld [vmem:[%s1 + $0x8] sm:$0xff]
    %v814 = vld [vmem:[%s1 + $0x10] sm:$0xff]
    %v815 = vld [vmem:[%s1 + $0x18] sm:$0xff]
    %v816 = vld [vmem:[%s1 + $0x20] sm:$0xff]
    %v817 = vld [vmem:[%s1 + $0x28] sm:$0xff]
    %v818 = vld [vmem:[%s1 + $0x30] sm:$0xff]
    %v819 = vld [vmem:[%s1 + $0x38] sm:$0xff]
    %v820 = vld [vmem:[%s1 + $0x40] sm:$0xff]
    %v821 = vld [vmem:[%s1 + $0x48] sm:$0xff]
    %v822 = vld [vmem:[%s1 + $0x50] sm:$0xff]
    %v823 = vld [vmem:[%s1 + $0x58] sm:$0xff]
    %v824 = vld [vmem:[%s1 + $0x60] sm:$0xff]
    %v825 = vld [vmem:[%s1 + $0x68] sm:$0xff]
    %v826 = vld [vmem:[%s1 + $0x70] sm:$0xff]
    %v827 = vld [vmem:[%s1 + $0x78] sm:$0xff]
    %v828 = vld [vmem:[%s1 + $0x80] sm:$0xff]
    %v829 = vld [vmem:[%s1 + $0x88] sm:$0xff]
    %v830 = vld [vmem:[%s1 + $0x90] sm:$0xff]
    %v831 = vld [vmem:[%s1 + $0x98] sm:$0xff]
    %v832 = vld [vmem:[%s1 + $0xa0] sm:$0xff]
    %v833 = vld [vmem:[%s1 + $0xa8] sm:$0xff]
    %v834 = vld [vmem:[%s1 + $0xb0] sm:$0xff]
    %v835 = vld [vmem:[%s1 + $0xb8] sm:$0xff]
    %v836 = vld [vmem:[%s1 + $0xc0] sm:$0xff]
    %v837 = vld [vmem:[%s1 + $0xc8] sm:$0xff]
    %v838 = vld [vmem:[%s1 + $0xd0] sm:$0xff]
    %v839 = vld [vmem:[%s1 + $0xd8] sm:$0xff]
    %v840 = vld [vmem:[%s1 + $0xe0] sm:$0xff]
    %v841 = vld [vmem:[%s1 + $0xe8] sm:$0xff]
    %v842 = vld [vmem:[%s1 + $0xf0] sm:$0xff]
    %v843 = vld [vmem:[%s1 + $0xf8] sm:$0xff]
    %v844 = vld [vmem:[#allocation2 + $0x10] sm:$0xf]
    %v845 = vld [vmem:[#allocation2 + $0x18] sm:$0x1]
    %v846 = vperm.slane %v845, 0
    %vm847 = vcmask 31744
    %v849 = vsel %vm847, %v812, 0
    %v852 = vsel %vm847, %v813, 0
    %v855 = vsel %vm847, %v814, 0
    %v858 = vsel %vm847, %v815, 0
    %v861 = vsel %vm847, %v816, 0
    %v864 = vsel %vm847, %v817, 0
    %v867 = vsel %vm847, %v818, 0
    %v870 = vsel %vm847, %v819, 0
    %v873 = vsel %vm847, %v820, 0
    %v876 = vsel %vm847, %v821, 0
    %v879 = vsel %vm847, %v822, 0
    %v882 = vsel %vm847, %v823, 0
    %v885 = vsel %vm847, %v824, 0
    %v888 = vsel %vm847, %v825, 0
    %v891 = vsel %vm847, %v826, 0
    %v894 = vsel %vm847, %v827, 0
    %v897 = vsel %vm847, %v828, 0
    %v900 = vsel %vm847, %v829, 0
    %v903 = vsel %vm847, %v830, 0
    %v906 = vsel %vm847, %v831, 0
    %v909 = vsel %vm847, %v832, 0
    %v912 = vsel %vm847, %v833, 0
    %v915 = vsel %vm847, %v834, 0
    %v918 = vsel %vm847, %v835, 0
    %v921 = vsel %vm847, %v836, 0
    %v924 = vsel %vm847, %v837, 0
    %v927 = vsel %vm847, %v838, 0
    %v930 = vsel %vm847, %v839, 0
    %v933 = vsel %vm847, %v840, 0
    %v936 = vsel %vm847, %v841, 0
    %v939 = vsel %vm847, %v842, 0
    %v942 = vsel %vm847, %v843, 0
    %vm944 = vcmask 1043456
    %v946 = vsel %vm944, %v844, 0
    %948 = vmatpush.msra.mxu0 0.0
    %949 = vmatpush.msra.mxu0 0.0
    %950 = vmatpush.msra.mxu0 0.0
    %951 = vmatpush.msra.mxu0 0.0
    %952 = vmatpush.msra.mxu0 0.0
    %953 = vmatpush.msra.mxu0 0.0
    %954 = vmatpush.msra.mxu0 0.0
    %955 = vmatpush.msra.mxu0 0.0
    %956 = vmatpush.msra.mxu0 0.0
    %957 = vmatpush.msra.mxu0 0.0
    %958 = vmatpush.msra.mxu0 0.0
    %959 = vmatpush.msra.mxu0 0.0
    %960 = vmatpush.msra.mxu0 0.0
    %961 = vmatpush.msra.mxu0 0.0
    %962 = vmatpush.msra.mxu0 0.0
    %963 = vmatpush.msra.mxu0 %v946
    %964 = vmatmul.f32.gmra.mxu0 %v849
    %v965 = vpop.f32.mrf.mxu0
    %v966 = vadd.f32 %v846, %v965
    %967 = vmatmul.f32.gmra.mxu0 %v852
    %v968 = vpop.f32.mrf.mxu0
    %v969 = vadd.f32 %v846, %v968
    %970 = vmatmul.f32.gmra.mxu0 %v855
    %v971 = vpop.f32.mrf.mxu0
    %v972 = vadd.f32 %v846, %v971
    %973 = vmatmul.f32.gmra.mxu0 %v858
    %v974 = vpop.f32.mrf.mxu0
    %v975 = vadd.f32 %v846, %v974
    %976 = vmatmul.f32.gmra.mxu0 %v861
    %v977 = vpop.f32.mrf.mxu0
    %v978 = vadd.f32 %v846, %v977
    %979 = vmatmul.f32.gmra.mxu0 %v864
    %v980 = vpop.f32.mrf.mxu0
    %v981 = vadd.f32 %v846, %v980
    %982 = vmatmul.f32.gmra.mxu0 %v867
    %v983 = vpop.f32.mrf.mxu0
    %v984 = vadd.f32 %v846, %v983
    %985 = vmatmul.f32.gmra.mxu0 %v870
    %v986 = vpop.f32.mrf.mxu0
    %v987 = vadd.f32 %v846, %v986
    %988 = vmatmul.f32.gmra.mxu0 %v873
    %v989 = vpop.f32.mrf.mxu0
    %v990 = vadd.f32 %v846, %v989
    %991 = vmatmul.f32.gmra.mxu0 %v876
    %v992 = vpop.f32.mrf.mxu0
    %v993 = vadd.f32 %v846, %v992
    %994 = vmatmul.f32.gmra.mxu0 %v879
    %v995 = vpop.f32.mrf.mxu0
    %v996 = vadd.f32 %v846, %v995
    %997 = vmatmul.f32.gmra.mxu0 %v882
    %v998 = vpop.f32.mrf.mxu0
    %v999 = vadd.f32 %v846, %v998
    %1000 = vmatmul.f32.gmra.mxu0 %v885
    %v1001 = vpop.f32.mrf.mxu0
    %v1002 = vadd.f32 %v846, %v1001
    %1003 = vmatmul.f32.gmra.mxu0 %v888
    %v1004 = vpop.f32.mrf.mxu0
    %v1005 = vadd.f32 %v846, %v1004
    %1006 = vmatmul.f32.gmra.mxu0 %v891
    %v1007 = vpop.f32.mrf.mxu0
    %v1008 = vadd.f32 %v846, %v1007
    %1009 = vmatmul.f32.gmra.mxu0 %v894
    %v1010 = vpop.f32.mrf.mxu0
    %v1011 = vadd.f32 %v846, %v1010
    %1012 = vmatmul.f32.gmra.mxu0 %v897
    %v1013 = vpop.f32.mrf.mxu0
    %v1014 = vadd.f32 %v846, %v1013
    %1015 = vmatmul.f32.gmra.mxu0 %v900
    %v1016 = vpop.f32.mrf.mxu0
    %v1017 = vadd.f32 %v846, %v1016
    %1018 = vmatmul.f32.gmra.mxu0 %v903
    %v1019 = vpop.f32.mrf.mxu0
    %v1020 = vadd.f32 %v846, %v1019
    %1021 = vmatmul.f32.gmra.mxu0 %v906
    %v1022 = vpop.f32.mrf.mxu0
    %v1023 = vadd.f32 %v846, %v1022
    %1024 = vmatmul.f32.gmra.mxu0 %v909
    %v1025 = vpop.f32.mrf.mxu0
    %v1026 = vadd.f32 %v846, %v1025
    %1027 = vmatmul.f32.gmra.mxu0 %v912
    %v1028 = vpop.f32.mrf.mxu0
    %v1029 = vadd.f32 %v846, %v1028
    %1030 = vmatmul.f32.gmra.mxu0 %v915
    %v1031 = vpop.f32.mrf.mxu0
    %v1032 = vadd.f32 %v846, %v1031
    %1033 = vmatmul.f32.gmra.mxu0 %v918
    %v1034 = vpop.f32.mrf.mxu0
    %v1035 = vadd.f32 %v846, %v1034
    %1036 = vmatmul.f32.gmra.mxu0 %v921
    %v1037 = vpop.f32.mrf.mxu0
    %v1038 = vadd.f32 %v846, %v1037
    %1039 = vmatmul.f32.gmra.mxu0 %v924
    %v1040 = vpop.f32.mrf.mxu0
    %v1041 = vadd.f32 %v846, %v1040
    %1042 = vmatmul.f32.gmra.mxu0 %v927
    %v1043 = vpop.f32.mrf.mxu0
    %v1044 = vadd.f32 %v846, %v1043
    %1045 = vmatmul.f32.gmra.mxu0 %v930
    %v1046 = vpop.f32.mrf.mxu0
    %v1047 = vadd.f32 %v846, %v1046
    %1048 = vmatmul.f32.gmra.mxu0 %v933
    %v1049 = vpop.f32.mrf.mxu0
    %v1050 = vadd.f32 %v846, %v1049
    %1051 = vmatmul.f32.gmra.mxu0 %v936
    %v1052 = vpop.f32.mrf.mxu0
    %v1053 = vadd.f32 %v846, %v1052
    %1054 = vmatmul.f32.gmra.mxu0 %v939
    %v1055 = vpop.f32.mrf.mxu0
    %v1056 = vadd.f32 %v846, %v1055
    %1057 = vmatmul.f32.gmra.mxu0 %v942
    %v1058 = vpop.f32.mrf.mxu0
    %v1059 = vadd.f32 %v846, %v1058
    %1060 = vdwg.mxu0
    %vm1061 = vcmp.ge.f32.partialorder %v966, 0.0
    %vm1062 = vcmp.ge.f32.partialorder %v969, 0.0
    %vm1063 = vcmp.ge.f32.partialorder %v972, 0.0
    %vm1064 = vcmp.ge.f32.partialorder %v975, 0.0
    %vm1065 = vcmp.ge.f32.partialorder %v978, 0.0
    %vm1066 = vcmp.ge.f32.partialorder %v981, 0.0
    %vm1067 = vcmp.ge.f32.partialorder %v984, 0.0
    %vm1068 = vcmp.ge.f32.partialorder %v987, 0.0
    %vm1069 = vcmp.ge.f32.partialorder %v990, 0.0
    %vm1070 = vcmp.ge.f32.partialorder %v993, 0.0
    %vm1071 = vcmp.ge.f32.partialorder %v996, 0.0
    %vm1072 = vcmp.ge.f32.partialorder %v999, 0.0
    %vm1073 = vcmp.ge.f32.partialorder %v1002, 0.0
    %vm1074 = vcmp.ge.f32.partialorder %v1005, 0.0
    %vm1075 = vcmp.ge.f32.partialorder %v1008, 0.0
    %vm1076 = vcmp.ge.f32.partialorder %v1011, 0.0
    %vm1077 = vcmp.ge.f32.partialorder %v1014, 0.0
    %vm1078 = vcmp.ge.f32.partialorder %v1017, 0.0
    %vm1079 = vcmp.ge.f32.partialorder %v1020, 0.0
    %vm1080 = vcmp.ge.f32.partialorder %v1023, 0.0
    %vm1081 = vcmp.ge.f32.partialorder %v1026, 0.0
    %vm1082 = vcmp.ge.f32.partialorder %v1029, 0.0
    %vm1083 = vcmp.ge.f32.partialorder %v1032, 0.0
    %vm1084 = vcmp.ge.f32.partialorder %v1035, 0.0
    %vm1085 = vcmp.ge.f32.partialorder %v1038, 0.0
    %vm1086 = vcmp.ge.f32.partialorder %v1041, 0.0
    %vm1087 = vcmp.ge.f32.partialorder %v1044, 0.0
    %vm1088 = vcmp.ge.f32.partialorder %v1047, 0.0
    %vm1089 = vcmp.ge.f32.partialorder %v1050, 0.0
    %vm1090 = vcmp.ge.f32.partialorder %v1053, 0.0
    %vm1091 = vcmp.ge.f32.partialorder %v1056, 0.0
    %vm1092 = vcmp.ge.f32.partialorder %v1059, 0.0
    %v1093 = vmul.f32 %v966, 0.01
    %v1094 = vmul.f32 %v969, 0.01
    %v1095 = vmul.f32 %v972, 0.01
    %v1096 = vmul.f32 %v975, 0.01
    %v1097 = vmul.f32 %v978, 0.01
    %v1098 = vmul.f32 %v981, 0.01
    %v1099 = vmul.f32 %v984, 0.01
    %v1100 = vmul.f32 %v987, 0.01
    %v1101 = vmul.f32 %v990, 0.01
    %v1102 = vmul.f32 %v993, 0.01
    %v1103 = vmul.f32 %v996, 0.01
    %v1104 = vmul.f32 %v999, 0.01
    %v1105 = vmul.f32 %v1002, 0.01
    %v1106 = vmul.f32 %v1005, 0.01
    %v1107 = vmul.f32 %v1008, 0.01
    %v1108 = vmul.f32 %v1011, 0.01
    %v1109 = vmul.f32 %v1014, 0.01
    %v1110 = vmul.f32 %v1017, 0.01
    %v1111 = vmul.f32 %v1020, 0.01
    %v1112 = vmul.f32 %v1023, 0.01
    %v1113 = vmul.f32 %v1026, 0.01
    %v1114 = vmul.f32 %v1029, 0.01
    %v1115 = vmul.f32 %v1032, 0.01
    %v1116 = vmul.f32 %v1035, 0.01
    %v1117 = vmul.f32 %v1038, 0.01
    %v1118 = vmul.f32 %v1041, 0.01
    %v1119 = vmul.f32 %v1044, 0.01
    %v1120 = vmul.f32 %v1047, 0.01
    %v1121 = vmul.f32 %v1050, 0.01
    %v1122 = vmul.f32 %v1053, 0.01
    %v1123 = vmul.f32 %v1056, 0.01
    %v1124 = vmul.f32 %v1059, 0.01
    %v1125 = vsel %vm1061, %v966, %v1093
    %v1126 = vsel %vm1062, %v969, %v1094
    %v1127 = vsel %vm1063, %v972, %v1095
    %v1128 = vsel %vm1064, %v975, %v1096
    %v1129 = vsel %vm1065, %v978, %v1097
    %v1130 = vsel %vm1066, %v981, %v1098
    %v1131 = vsel %vm1067, %v984, %v1099
    %v1132 = vsel %vm1068, %v987, %v1100
    %v1133 = vsel %vm1069, %v990, %v1101
    %v1134 = vsel %vm1070, %v993, %v1102
    %v1135 = vsel %vm1071, %v996, %v1103
    %v1136 = vsel %vm1072, %v999, %v1104
    %v1137 = vsel %vm1073, %v1002, %v1105
    %v1138 = vsel %vm1074, %v1005, %v1106
    %v1139 = vsel %vm1075, %v1008, %v1107
    %v1140 = vsel %vm1076, %v1011, %v1108
    %v1141 = vsel %vm1077, %v1014, %v1109
    %v1142 = vsel %vm1078, %v1017, %v1110
    %v1143 = vsel %vm1079, %v1020, %v1111
    %v1144 = vsel %vm1080, %v1023, %v1112
    %v1145 = vsel %vm1081, %v1026, %v1113
    %v1146 = vsel %vm1082, %v1029, %v1114
    %v1147 = vsel %vm1083, %v1032, %v1115
    %v1148 = vsel %vm1084, %v1035, %v1116
    %v1149 = vsel %vm1085, %v1038, %v1117
    %v1150 = vsel %vm1086, %v1041, %v1118
    %v1151 = vsel %vm1087, %v1044, %v1119
    %v1152 = vsel %vm1088, %v1047, %v1120
    %v1153 = vsel %vm1089, %v1050, %v1121
    %v1154 = vsel %vm1090, %v1053, %v1122
    %v1155 = vsel %vm1091, %v1056, %v1123
    %v1156 = vsel %vm1092, %v1059, %v1124
    %v1157 = vsel %vm650, %v1125, 1.0
    %v1158 = vsel %vm650, %v1126, 1.0
    %v1159 = vsel %vm650, %v1127, 1.0
    %v1160 = vsel %vm650, %v1128, 1.0
    %v1161 = vsel %vm650, %v1129, 1.0
    %v1162 = vsel %vm650, %v1130, 1.0
    %v1163 = vsel %vm650, %v1131, 1.0
    %v1164 = vsel %vm650, %v1132, 1.0
    %v1165 = vsel %vm650, %v1133, 1.0
    %v1166 = vsel %vm650, %v1134, 1.0
    %v1167 = vsel %vm650, %v1135, 1.0
    %v1168 = vsel %vm650, %v1136, 1.0
    %v1169 = vsel %vm650, %v1137, 1.0
    %v1170 = vsel %vm650, %v1138, 1.0
    %v1171 = vsel %vm650, %v1139, 1.0
    %v1172 = vsel %vm650, %v1140, 1.0
    %v1173 = vsel %vm650, %v1141, 1.0
    %v1174 = vsel %vm650, %v1142, 1.0
    %v1175 = vsel %vm650, %v1143, 1.0
    %v1176 = vsel %vm650, %v1144, 1.0
    %v1177 = vsel %vm650, %v1145, 1.0
    %v1178 = vsel %vm650, %v1146, 1.0
    %v1179 = vsel %vm650, %v1147, 1.0
    %v1180 = vsel %vm650, %v1148, 1.0
    %v1181 = vsel %vm650, %v1149, 1.0
    %v1182 = vsel %vm650, %v1150, 1.0
    %v1183 = vsel %vm650, %v1151, 1.0
    %v1184 = vsel %vm650, %v1152, 1.0
    %v1185 = vsel %vm650, %v1153, 1.0
    %v1186 = vsel %vm650, %v1154, 1.0
    %v1187 = vsel %vm650, %v1155, 1.0
    %v1188 = vsel %vm650, %v1156, 1.0
    %v1189 = vadd.s32 %v78, 128
    %v1190 = vmul.u32 %v241, 16
    %v1191 = vmul.u32 %v242, 16
    %vm1192 = vcmp.ge.s32.totalorder %v78, %v1190
    %vm1193 = vcmp.ge.s32.totalorder %v1189, %v1190
    %vm1194 = vcmp.ge.s32.totalorder %v78, %v1191
    %vm1195 = vcmp.ge.s32.totalorder %v1189, %v1191
    %v1196 = vadd.s32 %v241, 1
    %v1197 = vadd.s32 %v242, 1
    %v1198 = vmul.u32 %v1196, 16
    %v1199 = vmul.u32 %v1197, 16
    %vm1200 = vcmp.lt.s32.totalorder %v78, %v1198
    %vm1201 = vcmp.lt.s32.totalorder %v1189, %v1198
    %vm1202 = vcmp.lt.s32.totalorder %v78, %v1199
    %vm1203 = vcmp.lt.s32.totalorder %v1189, %v1199
    %vm1204 = vmand %vm1192, %vm1200
    %vm1205 = vmand %vm1193, %vm1201
    %vm1206 = vmand %vm1194, %vm1202
    %vm1207 = vmand %vm1195, %vm1203
    %v1208 = vsel %vm1204, 1.0, 0.0
    %v1209 = vsel %vm1205, 1.0, 0.0
    %v1210 = vsel %vm1206, 1.0, 0.0
    %v1211 = vsel %vm1207, 1.0, 0.0
    %vm1212 = vcmask 72704
    %v1214 = vsel %vm1212, %v1157, 0
    %v1217 = vsel %vm1212, %v1158, 0
    %v1220 = vsel %vm1212, %v1159, 0
    %v1223 = vsel %vm1212, %v1160, 0
    %v1226 = vsel %vm1212, %v1161, 0
    %v1229 = vsel %vm1212, %v1162, 0
    %v1232 = vsel %vm1212, %v1163, 0
    %v1235 = vsel %vm1212, %v1164, 0
    %v1238 = vsel %vm1212, %v1165, 0
    %v1241 = vsel %vm1212, %v1166, 0
    %v1244 = vsel %vm1212, %v1167, 0
    %v1247 = vsel %vm1212, %v1168, 0
    %v1250 = vsel %vm1212, %v1169, 0
    %v1253 = vsel %vm1212, %v1170, 0
    %v1256 = vsel %vm1212, %v1171, 0
    %v1259 = vsel %vm1212, %v1172, 0
    %v1262 = vsel %vm1212, %v1173, 0
    %v1265 = vsel %vm1212, %v1174, 0
    %v1268 = vsel %vm1212, %v1175, 0
    %v1271 = vsel %vm1212, %v1176, 0
    %v1274 = vsel %vm1212, %v1177, 0
    %v1277 = vsel %vm1212, %v1178, 0
    %v1280 = vsel %vm1212, %v1179, 0
    %v1283 = vsel %vm1212, %v1180, 0
    %v1286 = vsel %vm1212, %v1181, 0
    %v1289 = vsel %vm1212, %v1182, 0
    %v1292 = vsel %vm1212, %v1183, 0
    %v1295 = vsel %vm1212, %v1184, 0
    %v1298 = vsel %vm1212, %v1185, 0
    %v1301 = vsel %vm1212, %v1186, 0
    %v1304 = vsel %vm1212, %v1187, 0
    %v1307 = vsel %vm1212, %v1188, 0
    %vm1309 = vcmask 1040384
    %v1311 = vsel %vm1309, %v1210, 0
    %v1314 = vsel %vm1309, %v1211, 0
    %1316 = vmatpush.msra.mxu0 0.0
    %1317 = vmatpush.msra.mxu0 0.0
    %1318 = vmatpush.msra.mxu0 0.0
    %1319 = vmatpush.msra.mxu0 0.0
    %1320 = vmatpush.msra.mxu0 0.0
    %1321 = vmatpush.msra.mxu0 0.0
    %1322 = vmatpush.msra.mxu0 0.0
    %1323 = vmatpush.msra.mxu0 0.0
    %1324 = vmatpush.msra.mxu0 0.0
    %1325 = vmatpush.msra.mxu0 0.0
    %1326 = vmatpush.msra.mxu0 0.0
    %1327 = vmatpush.msra.mxu0 0.0
    %1328 = vmatpush.msra.mxu0 0.0
    %1329 = vmatpush.msra.mxu0 0.0
    %1330 = vmatpush.msra.mxu0 %v1311
    %1331 = vmatpush.msra.mxu0 %v1208
    %1332 = vmatmul.f32.gmra.mxu0 %v1214
    %v1333 = vpop.f32.mrf.mxu0
    %v1334 = vadd.f32 0.0, %v1333
    %1335 = vmatmul.f32.gmra.mxu0 %v1217
    %v1336 = vpop.f32.mrf.mxu0
    %v1337 = vadd.f32 0.0, %v1336
    %1338 = vmatmul.f32.gmra.mxu0 %v1220
    %v1339 = vpop.f32.mrf.mxu0
    %v1340 = vadd.f32 0.0, %v1339
    %1341 = vmatmul.f32.gmra.mxu0 %v1223
    %v1342 = vpop.f32.mrf.mxu0
    %v1343 = vadd.f32 0.0, %v1342
    %1344 = vmatmul.f32.gmra.mxu0 %v1226
    %v1345 = vpop.f32.mrf.mxu0
    %v1346 = vadd.f32 0.0, %v1345
    %1347 = vmatmul.f32.gmra.mxu0 %v1229
    %v1348 = vpop.f32.mrf.mxu0
    %v1349 = vadd.f32 0.0, %v1348
    %1350 = vmatmul.f32.gmra.mxu0 %v1232
    %v1351 = vpop.f32.mrf.mxu0
    %v1352 = vadd.f32 0.0, %v1351
    %1353 = vmatmul.f32.gmra.mxu0 %v1235
    %v1354 = vpop.f32.mrf.mxu0
    %v1355 = vadd.f32 0.0, %v1354
    %1356 = vmatmul.f32.gmra.mxu0 %v1238
    %v1357 = vpop.f32.mrf.mxu0
    %v1358 = vadd.f32 0.0, %v1357
    %1359 = vmatmul.f32.gmra.mxu0 %v1241
    %v1360 = vpop.f32.mrf.mxu0
    %v1361 = vadd.f32 0.0, %v1360
    %1362 = vmatmul.f32.gmra.mxu0 %v1244
    %v1363 = vpop.f32.mrf.mxu0
    %v1364 = vadd.f32 0.0, %v1363
    %1365 = vmatmul.f32.gmra.mxu0 %v1247
    %v1366 = vpop.f32.mrf.mxu0
    %v1367 = vadd.f32 0.0, %v1366
    %1368 = vmatmul.f32.gmra.mxu0 %v1250
    %v1369 = vpop.f32.mrf.mxu0
    %v1370 = vadd.f32 0.0, %v1369
    %1371 = vmatmul.f32.gmra.mxu0 %v1253
    %v1372 = vpop.f32.mrf.mxu0
    %v1373 = vadd.f32 0.0, %v1372
    %1374 = vmatmul.f32.gmra.mxu0 %v1256
    %v1375 = vpop.f32.mrf.mxu0
    %v1376 = vadd.f32 0.0, %v1375
    %1377 = vmatmul.f32.gmra.mxu0 %v1259
    %v1378 = vpop.f32.mrf.mxu0
    %v1379 = vadd.f32 0.0, %v1378
    %1380 = vmatmul.f32.gmra.mxu0 %v1262
    %v1381 = vpop.f32.mrf.mxu0
    %v1382 = vadd.f32 0.0, %v1381
    %1383 = vmatmul.f32.gmra.mxu0 %v1265
    %v1384 = vpop.f32.mrf.mxu0
    %v1385 = vadd.f32 0.0, %v1384
    %1386 = vmatmul.f32.gmra.mxu0 %v1268
    %v1387 = vpop.f32.mrf.mxu0
    %v1388 = vadd.f32 0.0, %v1387
    %1389 = vmatmul.f32.gmra.mxu0 %v1271
    %v1390 = vpop.f32.mrf.mxu0
    %v1391 = vadd.f32 0.0, %v1390
    %1392 = vmatmul.f32.gmra.mxu0 %v1274
    %v1393 = vpop.f32.mrf.mxu0
    %v1394 = vadd.f32 0.0, %v1393
    %1395 = vmatmul.f32.gmra.mxu0 %v1277
    %v1396 = vpop.f32.mrf.mxu0
    %v1397 = vadd.f32 0.0, %v1396
    %1398 = vmatmul.f32.gmra.mxu0 %v1280
    %v1399 = vpop.f32.mrf.mxu0
    %v1400 = vadd.f32 0.0, %v1399
    %1401 = vmatmul.f32.gmra.mxu0 %v1283
    %v1402 = vpop.f32.mrf.mxu0
    %v1403 = vadd.f32 0.0, %v1402
    %1404 = vmatmul.f32.gmra.mxu0 %v1286
    %v1405 = vpop.f32.mrf.mxu0
    %v1406 = vadd.f32 0.0, %v1405
    %1407 = vmatmul.f32.gmra.mxu0 %v1289
    %v1408 = vpop.f32.mrf.mxu0
    %v1409 = vadd.f32 0.0, %v1408
    %1410 = vmatmul.f32.gmra.mxu0 %v1292
    %v1411 = vpop.f32.mrf.mxu0
    %v1412 = vadd.f32 0.0, %v1411
    %1413 = vmatmul.f32.gmra.mxu0 %v1295
    %v1414 = vpop.f32.mrf.mxu0
    %v1415 = vadd.f32 0.0, %v1414
    %1416 = vmatmul.f32.gmra.mxu0 %v1298
    %v1417 = vpop.f32.mrf.mxu0
    %v1418 = vadd.f32 0.0, %v1417
    %1419 = vmatmul.f32.gmra.mxu0 %v1301
    %v1420 = vpop.f32.mrf.mxu0
    %v1421 = vadd.f32 0.0, %v1420
    %1422 = vmatmul.f32.gmra.mxu0 %v1304
    %v1423 = vpop.f32.mrf.mxu0
    %v1424 = vadd.f32 0.0, %v1423
    %1425 = vmatmul.f32.gmra.mxu0 %v1307
    %v1426 = vpop.f32.mrf.mxu0
    %v1427 = vadd.f32 0.0, %v1426
    %1428 = vdwg.mxu0
    %1429 = vmatpush.msra.mxu0 0.0
    %1430 = vmatpush.msra.mxu0 0.0
    %1431 = vmatpush.msra.mxu0 0.0
    %1432 = vmatpush.msra.mxu0 0.0
    %1433 = vmatpush.msra.mxu0 0.0
    %1434 = vmatpush.msra.mxu0 0.0
    %1435 = vmatpush.msra.mxu0 0.0
    %1436 = vmatpush.msra.mxu0 0.0
    %1437 = vmatpush.msra.mxu0 0.0
    %1438 = vmatpush.msra.mxu0 0.0
    %1439 = vmatpush.msra.mxu0 0.0
    %1440 = vmatpush.msra.mxu0 0.0
    %1441 = vmatpush.msra.mxu0 0.0
    %1442 = vmatpush.msra.mxu0 0.0
    %1443 = vmatpush.msra.mxu0 %v1314
    %1444 = vmatpush.msra.mxu0 %v1209
    %1445 = vmatmul.f32.gmra.mxu0 %v1214
    %v1446 = vpop.f32.mrf.mxu0
    %v1447 = vadd.f32 0.0, %v1446
    %1448 = vmatmul.f32.gmra.mxu0 %v1217
    %v1449 = vpop.f32.mrf.mxu0
    %v1450 = vadd.f32 0.0, %v1449
    %1451 = vmatmul.f32.gmra.mxu0 %v1220
    %v1452 = vpop.f32.mrf.mxu0
    %v1453 = vadd.f32 0.0, %v1452
    %1454 = vmatmul.f32.gmra.mxu0 %v1223
    %v1455 = vpop.f32.mrf.mxu0
    %v1456 = vadd.f32 0.0, %v1455
    %1457 = vmatmul.f32.gmra.mxu0 %v1226
    %v1458 = vpop.f32.mrf.mxu0
    %v1459 = vadd.f32 0.0, %v1458
    %1460 = vmatmul.f32.gmra.mxu0 %v1229
    %v1461 = vpop.f32.mrf.mxu0
    %v1462 = vadd.f32 0.0, %v1461
    %1463 = vmatmul.f32.gmra.mxu0 %v1232
    %v1464 = vpop.f32.mrf.mxu0
    %v1465 = vadd.f32 0.0, %v1464
    %1466 = vmatmul.f32.gmra.mxu0 %v1235
    %v1467 = vpop.f32.mrf.mxu0
    %v1468 = vadd.f32 0.0, %v1467
    %1469 = vmatmul.f32.gmra.mxu0 %v1238
    %v1470 = vpop.f32.mrf.mxu0
    %v1471 = vadd.f32 0.0, %v1470
    %1472 = vmatmul.f32.gmra.mxu0 %v1241
    %v1473 = vpop.f32.mrf.mxu0
    %v1474 = vadd.f32 0.0, %v1473
    %1475 = vmatmul.f32.gmra.mxu0 %v1244
    %v1476 = vpop.f32.mrf.mxu0
    %v1477 = vadd.f32 0.0, %v1476
    %1478 = vmatmul.f32.gmra.mxu0 %v1247
    %v1479 = vpop.f32.mrf.mxu0
    %v1480 = vadd.f32 0.0, %v1479
    %1481 = vmatmul.f32.gmra.mxu0 %v1250
    %v1482 = vpop.f32.mrf.mxu0
    %v1483 = vadd.f32 0.0, %v1482
    %1484 = vmatmul.f32.gmra.mxu0 %v1253
    %v1485 = vpop.f32.mrf.mxu0
    %v1486 = vadd.f32 0.0, %v1485
    %1487 = vmatmul.f32.gmra.mxu0 %v1256
    %v1488 = vpop.f32.mrf.mxu0
    %v1489 = vadd.f32 0.0, %v1488
    %1490 = vmatmul.f32.gmra.mxu0 %v1259
    %v1491 = vpop.f32.mrf.mxu0
    %v1492 = vadd.f32 0.0, %v1491
    %1493 = vmatmul.f32.gmra.mxu0 %v1262
    %v1494 = vpop.f32.mrf.mxu0
    %v1495 = vadd.f32 0.0, %v1494
    %1496 = vmatmul.f32.gmra.mxu0 %v1265
    %v1497 = vpop.f32.mrf.mxu0
    %v1498 = vadd.f32 0.0, %v1497
    %1499 = vmatmul.f32.gmra.mxu0 %v1268
    %v1500 = vpop.f32.mrf.mxu0
    %v1501 = vadd.f32 0.0, %v1500
    %1502 = vmatmul.f32.gmra.mxu0 %v1271
    %v1503 = vpop.f32.mrf.mxu0
    %v1504 = vadd.f32 0.0, %v1503
    %1505 = vmatmul.f32.gmra.mxu0 %v1274
    %v1506 = vpop.f32.mrf.mxu0
    %v1507 = vadd.f32 0.0, %v1506
    %1508 = vmatmul.f32.gmra.mxu0 %v1277
    %v1509 = vpop.f32.mrf.mxu0
    %v1510 = vadd.f32 0.0, %v1509
    %1511 = vmatmul.f32.gmra.mxu0 %v1280
    %v1512 = vpop.f32.mrf.mxu0
    %v1513 = vadd.f32 0.0, %v1512
    %1514 = vmatmul.f32.gmra.mxu0 %v1283
    %v1515 = vpop.f32.mrf.mxu0
    %v1516 = vadd.f32 0.0, %v1515
    %1517 = vmatmul.f32.gmra.mxu0 %v1286
    %v1518 = vpop.f32.mrf.mxu0
    %v1519 = vadd.f32 0.0, %v1518
    %1520 = vmatmul.f32.gmra.mxu0 %v1289
    %v1521 = vpop.f32.mrf.mxu0
    %v1522 = vadd.f32 0.0, %v1521
    %1523 = vmatmul.f32.gmra.mxu0 %v1292
    %v1524 = vpop.f32.mrf.mxu0
    %v1525 = vadd.f32 0.0, %v1524
    %1526 = vmatmul.f32.gmra.mxu0 %v1295
    %v1527 = vpop.f32.mrf.mxu0
    %v1528 = vadd.f32 0.0, %v1527
    %1529 = vmatmul.f32.gmra.mxu0 %v1298
    %v1530 = vpop.f32.mrf.mxu0
    %v1531 = vadd.f32 0.0, %v1530
    %1532 = vmatmul.f32.gmra.mxu0 %v1301
    %v1533 = vpop.f32.mrf.mxu0
    %v1534 = vadd.f32 0.0, %v1533
    %1535 = vmatmul.f32.gmra.mxu0 %v1304
    %v1536 = vpop.f32.mrf.mxu0
    %v1537 = vadd.f32 0.0, %v1536
    %1538 = vmatmul.f32.gmra.mxu0 %v1307
    %v1539 = vpop.f32.mrf.mxu0
    %v1540 = vadd.f32 0.0, %v1539
    %1541 = vdwg.mxu0
    %v1542 = vld [vmem:[#allocation2 + $0x20] sm:$0xff]
    %v1543 = vld [vmem:[#allocation2 + $0x28] sm:$0xff]
    %v1544 = vld [vmem:[#allocation2 + $0x30] sm:$0xff]
    %v1545 = vld [vmem:[#allocation2 + $0x38] sm:$0xff]
    %v1546 = vld [vmem:[#allocation2 + $0x40] sm:$0xff]
    %v1547 = vld [vmem:[#allocation2 + $0x48] sm:$0xff]
    %v1548 = vld [vmem:[#allocation2 + $0x50] sm:$0xff]
    %v1549 = vld [vmem:[#allocation2 + $0x58] sm:$0xff]
    %v1550 = vld [vmem:[#allocation2 + $0x60] sm:$0xff]
    %v1551 = vld [vmem:[#allocation2 + $0x68] sm:$0xff]
    %v1552 = vld [vmem:[#allocation2 + $0x70] sm:$0xff]
    %v1553 = vld [vmem:[#allocation2 + $0x78] sm:$0xff]
    %v1554 = vld [vmem:[#allocation2 + $0x80] sm:$0xff]
    %v1555 = vld [vmem:[#allocation2 + $0x88] sm:$0xff]
    %v1556 = vld [vmem:[#allocation2 + $0x90] sm:$0xff]
    %v1557 = vld [vmem:[#allocation2 + $0x98] sm:$0xff]
    %v1558 = vld [vmem:[#allocation2 + $0xa0] sm:$0xff]
    %v1559 = vld [vmem:[#allocation2 + $0xa8] sm:$0xff]
    %v1560 = vld [vmem:[#allocation2 + $0xb0] sm:$0xff]
    %v1561 = vld [vmem:[#allocation2 + $0xb8] sm:$0xff]
    %v1562 = vld [vmem:[#allocation2 + $0xc0] sm:$0x1]
    %v1563 = vld [vmem:[#allocation2 + $0xc8] sm:$0xff]
    %v1564 = vld [vmem:[#allocation2 + $0xd0] sm:$0xff]
    %v1565 = vld [vmem:[#allocation2 + $0xd8] sm:$0xff]
    %v1566 = vld [vmem:[#allocation2 + $0xe0] sm:$0xff]
    %v1567 = vld [vmem:[#allocation2 + $0xe8] sm:$0x1]
    %1568 = vmatpush.msra.mxu0 %v811
    %1569 = vmatpush.msra.mxu0 %v810
    %1570 = vmatpush.msra.mxu0 %v809
    %1571 = vmatpush.msra.mxu0 %v808
    %1572 = vmatpush.msra.mxu0 %v807
    %1573 = vmatpush.msra.mxu0 %v806
    %1574 = vmatpush.msra.mxu0 %v805
    %1575 = vmatpush.msra.mxu0 %v804
    %1576 = vmatpush.msra.mxu0 %v803
    %1577 = vmatpush.msra.mxu0 %v802
    %1578 = vmatpush.msra.mxu0 %v801
    %1579 = vmatpush.msra.mxu0 %v800
    %1580 = vmatpush.msra.mxu0 %v799
    %1581 = vmatpush.msra.mxu0 %v798
    %1582 = vmatpush.msra.mxu0 %v797
    %1583 = vmatpush.msra.mxu0 %v796
    %1584 = vmatmul.f32.gmra.mxu0 %v207
    %v1585 = vpop.f32.mrf.mxu0
    %v1586 = vadd.f32 0.0, %v1585
    %1587 = vmatmul.f32.gmra.mxu0 %v208
    %v1588 = vpop.f32.mrf.mxu0
    %v1589 = vadd.f32 0.0, %v1588
    %1590 = vmatmul.f32.gmra.mxu0 %v209
    %v1591 = vpop.f32.mrf.mxu0
    %v1592 = vadd.f32 0.0, %v1591
    %1593 = vmatmul.f32.gmra.mxu0 %v210
    %v1594 = vpop.f32.mrf.mxu0
    %v1595 = vadd.f32 0.0, %v1594
    %1596 = vmatmul.f32.gmra.mxu0 %v211
    %v1597 = vpop.f32.mrf.mxu0
    %v1598 = vadd.f32 0.0, %v1597
    %1599 = vmatmul.f32.gmra.mxu0 %v212
    %v1600 = vpop.f32.mrf.mxu0
    %v1601 = vadd.f32 0.0, %v1600
    %1602 = vmatmul.f32.gmra.mxu0 %v213
    %v1603 = vpop.f32.mrf.mxu0
    %v1604 = vadd.f32 0.0, %v1603
    %1605 = vmatmul.f32.gmra.mxu0 %v214
    %v1606 = vpop.f32.mrf.mxu0
    %v1607 = vadd.f32 0.0, %v1606
    %1608 = vmatmul.f32.gmra.mxu0 %v215
    %v1609 = vpop.f32.mrf.mxu0
    %v1610 = vadd.f32 0.0, %v1609
    %1611 = vmatmul.f32.gmra.mxu0 %v216
    %v1612 = vpop.f32.mrf.mxu0
    %v1613 = vadd.f32 0.0, %v1612
    %1614 = vmatmul.f32.gmra.mxu0 %v217
    %v1615 = vpop.f32.mrf.mxu0
    %v1616 = vadd.f32 0.0, %v1615
    %1617 = vmatmul.f32.gmra.mxu0 %v218
    %v1618 = vpop.f32.mrf.mxu0
    %v1619 = vadd.f32 0.0, %v1618
    %1620 = vmatmul.f32.gmra.mxu0 %v219
    %v1621 = vpop.f32.mrf.mxu0
    %v1622 = vadd.f32 0.0, %v1621
    %1623 = vmatmul.f32.gmra.mxu0 %v220
    %v1624 = vpop.f32.mrf.mxu0
    %v1625 = vadd.f32 0.0, %v1624
    %1626 = vmatmul.f32.gmra.mxu0 %v221
    %v1627 = vpop.f32.mrf.mxu0
    %v1628 = vadd.f32 0.0, %v1627
    %1629 = vmatmul.f32.gmra.mxu0 %v222
    %v1630 = vpop.f32.mrf.mxu0
    %v1631 = vadd.f32 0.0, %v1630
    %1632 = vmatmul.f32.gmra.mxu0 %v223
    %v1633 = vpop.f32.mrf.mxu0
    %v1634 = vadd.f32 0.0, %v1633
    %1635 = vmatmul.f32.gmra.mxu0 %v224
    %v1636 = vpop.f32.mrf.mxu0
    %v1637 = vadd.f32 0.0, %v1636
    %1638 = vmatmul.f32.gmra.mxu0 %v225
    %v1639 = vpop.f32.mrf.mxu0
    %v1640 = vadd.f32 0.0, %v1639
    %1641 = vmatmul.f32.gmra.mxu0 %v226
    %v1642 = vpop.f32.mrf.mxu0
    %v1643 = vadd.f32 0.0, %v1642
    %1644 = vmatmul.f32.gmra.mxu0 %v227
    %v1645 = vpop.f32.mrf.mxu0
    %v1646 = vadd.f32 0.0, %v1645
    %1647 = vmatmul.f32.gmra.mxu0 %v228
    %v1648 = vpop.f32.mrf.mxu0
    %v1649 = vadd.f32 0.0, %v1648
    %1650 = vmatmul.f32.gmra.mxu0 %v229
    %v1651 = vpop.f32.mrf.mxu0
    %v1652 = vadd.f32 0.0, %v1651
    %1653 = vmatmul.f32.gmra.mxu0 %v230
    %v1654 = vpop.f32.mrf.mxu0
    %v1655 = vadd.f32 0.0, %v1654
    %1656 = vmatmul.f32.gmra.mxu0 %v231
    %v1657 = vpop.f32.mrf.mxu0
    %v1658 = vadd.f32 0.0, %v1657
    %1659 = vmatmul.f32.gmra.mxu0 %v232
    %v1660 = vpop.f32.mrf.mxu0
    %v1661 = vadd.f32 0.0, %v1660
    %1662 = vmatmul.f32.gmra.mxu0 %v233
    %v1663 = vpop.f32.mrf.mxu0
    %v1664 = vadd.f32 0.0, %v1663
    %1665 = vmatmul.f32.gmra.mxu0 %v234
    %v1666 = vpop.f32.mrf.mxu0
    %v1667 = vadd.f32 0.0, %v1666
    %1668 = vmatmul.f32.gmra.mxu0 %v235
    %v1669 = vpop.f32.mrf.mxu0
    %v1670 = vadd.f32 0.0, %v1669
    %1671 = vmatmul.f32.gmra.mxu0 %v236
    %v1672 = vpop.f32.mrf.mxu0
    %v1673 = vadd.f32 0.0, %v1672
    %1674 = vmatmul.f32.gmra.mxu0 %v237
    %v1675 = vpop.f32.mrf.mxu0
    %v1676 = vadd.f32 0.0, %v1675
    %1677 = vmatmul.f32.gmra.mxu0 %v238
    %v1678 = vpop.f32.mrf.mxu0
    %v1679 = vadd.f32 0.0, %v1678
    %1680 = vdwg.mxu0
    %1713 = vrot.lane.b32.xlu0 %v1586, 16
    %v1714 = vpop.permute.xlu0 %1713
    %1715 = vrot.lane.b32.xlu0 %v1589, 16
    %v1716 = vpop.permute.xlu0 %1715
    %1717 = vrot.lane.b32.xlu0 %v1592, 16
    %v1718 = vpop.permute.xlu0 %1717
    %1719 = vrot.lane.b32.xlu0 %v1595, 16
    %v1720 = vpop.permute.xlu0 %1719
    %1721 = vrot.lane.b32.xlu0 %v1598, 16
    %v1722 = vpop.permute.xlu0 %1721
    %1723 = vrot.lane.b32.xlu0 %v1601, 16
    %v1724 = vpop.permute.xlu0 %1723
    %1725 = vrot.lane.b32.xlu0 %v1604, 16
    %v1726 = vpop.permute.xlu0 %1725
    %1727 = vrot.lane.b32.xlu0 %v1607, 16
    %v1728 = vpop.permute.xlu0 %1727
    %1729 = vrot.lane.b32.xlu0 %v1610, 16
    %v1730 = vpop.permute.xlu0 %1729
    %1731 = vrot.lane.b32.xlu0 %v1613, 16
    %v1732 = vpop.permute.xlu0 %1731
    %1733 = vrot.lane.b32.xlu0 %v1616, 16
    %v1734 = vpop.permute.xlu0 %1733
    %1735 = vrot.lane.b32.xlu0 %v1619, 16
    %v1736 = vpop.permute.xlu0 %1735
    %1737 = vrot.lane.b32.xlu0 %v1622, 16
    %v1738 = vpop.permute.xlu0 %1737
    %1739 = vrot.lane.b32.xlu0 %v1625, 16
    %v1740 = vpop.permute.xlu0 %1739
    %1741 = vrot.lane.b32.xlu0 %v1628, 16
    %v1742 = vpop.permute.xlu0 %1741
    %1743 = vrot.lane.b32.xlu0 %v1631, 16
    %v1744 = vpop.permute.xlu0 %1743
    %1745 = vrot.lane.b32.xlu0 %v1634, 16
    %v1746 = vpop.permute.xlu0 %1745
    %1747 = vrot.lane.b32.xlu0 %v1637, 16
    %v1748 = vpop.permute.xlu0 %1747
    %1749 = vrot.lane.b32.xlu0 %v1640, 16
    %v1750 = vpop.permute.xlu0 %1749
    %1751 = vrot.lane.b32.xlu0 %v1643, 16
    %v1752 = vpop.permute.xlu0 %1751
    %1753 = vrot.lane.b32.xlu0 %v1646, 16
    %v1754 = vpop.permute.xlu0 %1753
    %1755 = vrot.lane.b32.xlu0 %v1649, 16
    %v1756 = vpop.permute.xlu0 %1755
    %1757 = vrot.lane.b32.xlu0 %v1652, 16
    %v1758 = vpop.permute.xlu0 %1757
    %1759 = vrot.lane.b32.xlu0 %v1655, 16
    %v1760 = vpop.permute.xlu0 %1759
    %1761 = vrot.lane.b32.xlu0 %v1658, 16
    %v1762 = vpop.permute.xlu0 %1761
    %1763 = vrot.lane.b32.xlu0 %v1661, 16
    %v1764 = vpop.permute.xlu0 %1763
    %1765 = vrot.lane.b32.xlu0 %v1664, 16
    %v1766 = vpop.permute.xlu0 %1765
    %1767 = vrot.lane.b32.xlu0 %v1667, 16
    %v1768 = vpop.permute.xlu0 %1767
    %1769 = vrot.lane.b32.xlu0 %v1670, 16
    %v1770 = vpop.permute.xlu0 %1769
    %1771 = vrot.lane.b32.xlu0 %v1673, 16
    %v1772 = vpop.permute.xlu0 %1771
    %1773 = vrot.lane.b32.xlu0 %v1676, 16
    %v1774 = vpop.permute.xlu0 %1773
    %1775 = vrot.lane.b32.xlu0 %v1679, 16
    %v1776 = vpop.permute.xlu0 %1775
    %1809 = vrot.lane.b32.xlu0 %v1586, 32
    %v1810 = vpop.permute.xlu0 %1809
    %1811 = vrot.lane.b32.xlu0 %v1589, 32
    %v1812 = vpop.permute.xlu0 %1811
    %1813 = vrot.lane.b32.xlu0 %v1592, 32
    %v1814 = vpop.permute.xlu0 %1813
    %1815 = vrot.lane.b32.xlu0 %v1595, 32
    %v1816 = vpop.permute.xlu0 %1815
    %1817 = vrot.lane.b32.xlu0 %v1598, 32
    %v1818 = vpop.permute.xlu0 %1817
    %1819 = vrot.lane.b32.xlu0 %v1601, 32
    %v1820 = vpop.permute.xlu0 %1819
    %1821 = vrot.lane.b32.xlu0 %v1604, 32
    %v1822 = vpop.permute.xlu0 %1821
    %1823 = vrot.lane.b32.xlu0 %v1607, 32
    %v1824 = vpop.permute.xlu0 %1823
    %1825 = vrot.lane.b32.xlu0 %v1610, 32
    %v1826 = vpop.permute.xlu0 %1825
    %1827 = vrot.lane.b32.xlu0 %v1613, 32
    %v1828 = vpop.permute.xlu0 %1827
    %1829 = vrot.lane.b32.xlu0 %v1616, 32
    %v1830 = vpop.permute.xlu0 %1829
    %1831 = vrot.lane.b32.xlu0 %v1619, 32
    %v1832 = vpop.permute.xlu0 %1831
    %1833 = vrot.lane.b32.xlu0 %v1622, 32
    %v1834 = vpop.permute.xlu0 %1833
    %1835 = vrot.lane.b32.xlu0 %v1625, 32
    %v1836 = vpop.permute.xlu0 %1835
    %1837 = vrot.lane.b32.xlu0 %v1628, 32
    %v1838 = vpop.permute.xlu0 %1837
    %1839 = vrot.lane.b32.xlu0 %v1631, 32
    %v1840 = vpop.permute.xlu0 %1839
    %1841 = vrot.lane.b32.xlu0 %v1634, 32
    %v1842 = vpop.permute.xlu0 %1841
    %1843 = vrot.lane.b32.xlu0 %v1637, 32
    %v1844 = vpop.permute.xlu0 %1843
    %1845 = vrot.lane.b32.xlu0 %v1640, 32
    %v1846 = vpop.permute.xlu0 %1845
    %1847 = vrot.lane.b32.xlu0 %v1643, 32
    %v1848 = vpop.permute.xlu0 %1847
    %1849 = vrot.lane.b32.xlu0 %v1646, 32
    %v1850 = vpop.permute.xlu0 %1849
    %1851 = vrot.lane.b32.xlu0 %v1649, 32
    %v1852 = vpop.permute.xlu0 %1851
    %1853 = vrot.lane.b32.xlu0 %v1652, 32
    %v1854 = vpop.permute.xlu0 %1853
    %1855 = vrot.lane.b32.xlu0 %v1655, 32
    %v1856 = vpop.permute.xlu0 %1855
    %1857 = vrot.lane.b32.xlu0 %v1658, 32
    %v1858 = vpop.permute.xlu0 %1857
    %1859 = vrot.lane.b32.xlu0 %v1661, 32
    %v1860 = vpop.permute.xlu0 %1859
    %1861 = vrot.lane.b32.xlu0 %v1664, 32
    %v1862 = vpop.permute.xlu0 %1861
    %1863 = vrot.lane.b32.xlu0 %v1667, 32
    %v1864 = vpop.permute.xlu0 %1863
    %1865 = vrot.lane.b32.xlu0 %v1670, 32
    %v1866 = vpop.permute.xlu0 %1865
    %1867 = vrot.lane.b32.xlu0 %v1673, 32
    %v1868 = vpop.permute.xlu0 %1867
    %1869 = vrot.lane.b32.xlu0 %v1676, 32
    %v1870 = vpop.permute.xlu0 %1869
    %1871 = vrot.lane.b32.xlu0 %v1679, 32
    %v1872 = vpop.permute.xlu0 %1871
    %1905 = vrot.lane.b32.xlu0 %v1586, 48
    %v1906 = vpop.permute.xlu0 %1905
    %1907 = vrot.lane.b32.xlu0 %v1589, 48
    %v1908 = vpop.permute.xlu0 %1907
    %1909 = vrot.lane.b32.xlu0 %v1592, 48
    %v1910 = vpop.permute.xlu0 %1909
    %1911 = vrot.lane.b32.xlu0 %v1595, 48
    %v1912 = vpop.permute.xlu0 %1911
    %1913 = vrot.lane.b32.xlu0 %v1598, 48
    %v1914 = vpop.permute.xlu0 %1913
    %1915 = vrot.lane.b32.xlu0 %v1601, 48
    %v1916 = vpop.permute.xlu0 %1915
    %1917 = vrot.lane.b32.xlu0 %v1604, 48
    %v1918 = vpop.permute.xlu0 %1917
    %1919 = vrot.lane.b32.xlu0 %v1607, 48
    %v1920 = vpop.permute.xlu0 %1919
    %1921 = vrot.lane.b32.xlu0 %v1610, 48
    %v1922 = vpop.permute.xlu0 %1921
    %1923 = vrot.lane.b32.xlu0 %v1613, 48
    %v1924 = vpop.permute.xlu0 %1923
    %1925 = vrot.lane.b32.xlu0 %v1616, 48
    %v1926 = vpop.permute.xlu0 %1925
    %1927 = vrot.lane.b32.xlu0 %v1619, 48
    %v1928 = vpop.permute.xlu0 %1927
    %1929 = vrot.lane.b32.xlu0 %v1622, 48
    %v1930 = vpop.permute.xlu0 %1929
    %1931 = vrot.lane.b32.xlu0 %v1625, 48
    %v1932 = vpop.permute.xlu0 %1931
    %1933 = vrot.lane.b32.xlu0 %v1628, 48
    %v1934 = vpop.permute.xlu0 %1933
    %1935 = vrot.lane.b32.xlu0 %v1631, 48
    %v1936 = vpop.permute.xlu0 %1935
    %1937 = vrot.lane.b32.xlu0 %v1634, 48
    %v1938 = vpop.permute.xlu0 %1937
    %1939 = vrot.lane.b32.xlu0 %v1637, 48
    %v1940 = vpop.permute.xlu0 %1939
    %1941 = vrot.lane.b32.xlu0 %v1640, 48
    %v1942 = vpop.permute.xlu0 %1941
    %1943 = vrot.lane.b32.xlu0 %v1643, 48
    %v1944 = vpop.permute.xlu0 %1943
    %1945 = vrot.lane.b32.xlu0 %v1646, 48
    %v1946 = vpop.permute.xlu0 %1945
    %1947 = vrot.lane.b32.xlu0 %v1649, 48
    %v1948 = vpop.permute.xlu0 %1947
    %1949 = vrot.lane.b32.xlu0 %v1652, 48
    %v1950 = vpop.permute.xlu0 %1949
    %1951 = vrot.lane.b32.xlu0 %v1655, 48
    %v1952 = vpop.permute.xlu0 %1951
    %1953 = vrot.lane.b32.xlu0 %v1658, 48
    %v1954 = vpop.permute.xlu0 %1953
    %1955 = vrot.lane.b32.xlu0 %v1661, 48
    %v1956 = vpop.permute.xlu0 %1955
    %1957 = vrot.lane.b32.xlu0 %v1664, 48
    %v1958 = vpop.permute.xlu0 %1957
    %1959 = vrot.lane.b32.xlu0 %v1667, 48
    %v1960 = vpop.permute.xlu0 %1959
    %1961 = vrot.lane.b32.xlu0 %v1670, 48
    %v1962 = vpop.permute.xlu0 %1961
    %1963 = vrot.lane.b32.xlu0 %v1673, 48
    %v1964 = vpop.permute.xlu0 %1963
    %1965 = vrot.lane.b32.xlu0 %v1676, 48
    %v1966 = vpop.permute.xlu0 %1965
    %1967 = vrot.lane.b32.xlu0 %v1679, 48
    %v1968 = vpop.permute.xlu0 %1967
    %2001 = vrot.lane.b32.xlu0 %v1586, 64
    %v2002 = vpop.permute.xlu0 %2001
    %2003 = vrot.lane.b32.xlu0 %v1589, 64
    %v2004 = vpop.permute.xlu0 %2003
    %2005 = vrot.lane.b32.xlu0 %v1592, 64
    %v2006 = vpop.permute.xlu0 %2005
    %2007 = vrot.lane.b32.xlu0 %v1595, 64
    %v2008 = vpop.permute.xlu0 %2007
    %2009 = vrot.lane.b32.xlu0 %v1598, 64
    %v2010 = vpop.permute.xlu0 %2009
    %2011 = vrot.lane.b32.xlu0 %v1601, 64
    %v2012 = vpop.permute.xlu0 %2011
    %2013 = vrot.lane.b32.xlu0 %v1604, 64
    %v2014 = vpop.permute.xlu0 %2013
    %2015 = vrot.lane.b32.xlu0 %v1607, 64
    %v2016 = vpop.permute.xlu0 %2015
    %2017 = vrot.lane.b32.xlu0 %v1610, 64
    %v2018 = vpop.permute.xlu0 %2017
    %2019 = vrot.lane.b32.xlu0 %v1613, 64
    %v2020 = vpop.permute.xlu0 %2019
    %2021 = vrot.lane.b32.xlu0 %v1616, 64
    %v2022 = vpop.permute.xlu0 %2021
    %2023 = vrot.lane.b32.xlu0 %v1619, 64
    %v2024 = vpop.permute.xlu0 %2023
    %2025 = vrot.lane.b32.xlu0 %v1622, 64
    %v2026 = vpop.permute.xlu0 %2025
    %2027 = vrot.lane.b32.xlu0 %v1625, 64
    %v2028 = vpop.permute.xlu0 %2027
    %2029 = vrot.lane.b32.xlu0 %v1628, 64
    %v2030 = vpop.permute.xlu0 %2029
    %2031 = vrot.lane.b32.xlu0 %v1631, 64
    %v2032 = vpop.permute.xlu0 %2031
    %2033 = vrot.lane.b32.xlu0 %v1634, 64
    %v2034 = vpop.permute.xlu0 %2033
    %2035 = vrot.lane.b32.xlu0 %v1637, 64
    %v2036 = vpop.permute.xlu0 %2035
    %2037 = vrot.lane.b32.xlu0 %v1640, 64
    %v2038 = vpop.permute.xlu0 %2037
    %2039 = vrot.lane.b32.xlu0 %v1643, 64
    %v2040 = vpop.permute.xlu0 %2039
    %2041 = vrot.lane.b32.xlu0 %v1646, 64
    %v2042 = vpop.permute.xlu0 %2041
    %2043 = vrot.lane.b32.xlu0 %v1649, 64
    %v2044 = vpop.permute.xlu0 %2043
    %2045 = vrot.lane.b32.xlu0 %v1652, 64
    %v2046 = vpop.permute.xlu0 %2045
    %2047 = vrot.lane.b32.xlu0 %v1655, 64
    %v2048 = vpop.permute.xlu0 %2047
    %2049 = vrot.lane.b32.xlu0 %v1658, 64
    %v2050 = vpop.permute.xlu0 %2049
    %2051 = vrot.lane.b32.xlu0 %v1661, 64
    %v2052 = vpop.permute.xlu0 %2051
    %2053 = vrot.lane.b32.xlu0 %v1664, 64
    %v2054 = vpop.permute.xlu0 %2053
    %2055 = vrot.lane.b32.xlu0 %v1667, 64
    %v2056 = vpop.permute.xlu0 %2055
    %2057 = vrot.lane.b32.xlu0 %v1670, 64
    %v2058 = vpop.permute.xlu0 %2057
    %2059 = vrot.lane.b32.xlu0 %v1673, 64
    %v2060 = vpop.permute.xlu0 %2059
    %2061 = vrot.lane.b32.xlu0 %v1676, 64
    %v2062 = vpop.permute.xlu0 %2061
    %2063 = vrot.lane.b32.xlu0 %v1679, 64
    %v2064 = vpop.permute.xlu0 %2063
    %2097 = vrot.lane.b32.xlu0 %v1586, 80
    %v2098 = vpop.permute.xlu0 %2097
    %2099 = vrot.lane.b32.xlu0 %v1589, 80
    %v2100 = vpop.permute.xlu0 %2099
    %2101 = vrot.lane.b32.xlu0 %v1592, 80
    %v2102 = vpop.permute.xlu0 %2101
    %2103 = vrot.lane.b32.xlu0 %v1595, 80
    %v2104 = vpop.permute.xlu0 %2103
    %2105 = vrot.lane.b32.xlu0 %v1598, 80
    %v2106 = vpop.permute.xlu0 %2105
    %2107 = vrot.lane.b32.xlu0 %v1601, 80
    %v2108 = vpop.permute.xlu0 %2107
    %2109 = vrot.lane.b32.xlu0 %v1604, 80
    %v2110 = vpop.permute.xlu0 %2109
    %2111 = vrot.lane.b32.xlu0 %v1607, 80
    %v2112 = vpop.permute.xlu0 %2111
    %2113 = vrot.lane.b32.xlu0 %v1610, 80
    %v2114 = vpop.permute.xlu0 %2113
    %2115 = vrot.lane.b32.xlu0 %v1613, 80
    %v2116 = vpop.permute.xlu0 %2115
    %2117 = vrot.lane.b32.xlu0 %v1616, 80
    %v2118 = vpop.permute.xlu0 %2117
    %2119 = vrot.lane.b32.xlu0 %v1619, 80
    %v2120 = vpop.permute.xlu0 %2119
    %2121 = vrot.lane.b32.xlu0 %v1622, 80
    %v2122 = vpop.permute.xlu0 %2121
    %2123 = vrot.lane.b32.xlu0 %v1625, 80
    %v2124 = vpop.permute.xlu0 %2123
    %2125 = vrot.lane.b32.xlu0 %v1628, 80
    %v2126 = vpop.permute.xlu0 %2125
    %2127 = vrot.lane.b32.xlu0 %v1631, 80
    %v2128 = vpop.permute.xlu0 %2127
    %2129 = vrot.lane.b32.xlu0 %v1634, 80
    %v2130 = vpop.permute.xlu0 %2129
    %2131 = vrot.lane.b32.xlu0 %v1637, 80
    %v2132 = vpop.permute.xlu0 %2131
    %2133 = vrot.lane.b32.xlu0 %v1640, 80
    %v2134 = vpop.permute.xlu0 %2133
    %2135 = vrot.lane.b32.xlu0 %v1643, 80
    %v2136 = vpop.permute.xlu0 %2135
    %2137 = vrot.lane.b32.xlu0 %v1646, 80
    %v2138 = vpop.permute.xlu0 %2137
    %2139 = vrot.lane.b32.xlu0 %v1649, 80
    %v2140 = vpop.permute.xlu0 %2139
    %2141 = vrot.lane.b32.xlu0 %v1652, 80
    %v2142 = vpop.permute.xlu0 %2141
    %2143 = vrot.lane.b32.xlu0 %v1655, 80
    %v2144 = vpop.permute.xlu0 %2143
    %2145 = vrot.lane.b32.xlu0 %v1658, 80
    %v2146 = vpop.permute.xlu0 %2145
    %2147 = vrot.lane.b32.xlu0 %v1661, 80
    %v2148 = vpop.permute.xlu0 %2147
    %2149 = vrot.lane.b32.xlu0 %v1664, 80
    %v2150 = vpop.permute.xlu0 %2149
    %2151 = vrot.lane.b32.xlu0 %v1667, 80
    %v2152 = vpop.permute.xlu0 %2151
    %2153 = vrot.lane.b32.xlu0 %v1670, 80
    %v2154 = vpop.permute.xlu0 %2153
    %2155 = vrot.lane.b32.xlu0 %v1673, 80
    %v2156 = vpop.permute.xlu0 %2155
    %2157 = vrot.lane.b32.xlu0 %v1676, 80
    %v2158 = vpop.permute.xlu0 %2157
    %2159 = vrot.lane.b32.xlu0 %v1679, 80
    %v2160 = vpop.permute.xlu0 %2159
    %2193 = vrot.lane.b32.xlu0 %v1586, 96
    %v2194 = vpop.permute.xlu0 %2193
    %2195 = vrot.lane.b32.xlu0 %v1589, 96
    %v2196 = vpop.permute.xlu0 %2195
    %2197 = vrot.lane.b32.xlu0 %v1592, 96
    %v2198 = vpop.permute.xlu0 %2197
    %2199 = vrot.lane.b32.xlu0 %v1595, 96
    %v2200 = vpop.permute.xlu0 %2199
    %2201 = vrot.lane.b32.xlu0 %v1598, 96
    %v2202 = vpop.permute.xlu0 %2201
    %2203 = vrot.lane.b32.xlu0 %v1601, 96
    %v2204 = vpop.permute.xlu0 %2203
    %2205 = vrot.lane.b32.xlu0 %v1604, 96
    %v2206 = vpop.permute.xlu0 %2205
    %2207 = vrot.lane.b32.xlu0 %v1607, 96
    %v2208 = vpop.permute.xlu0 %2207
    %2209 = vrot.lane.b32.xlu0 %v1610, 96
    %v2210 = vpop.permute.xlu0 %2209
    %2211 = vrot.lane.b32.xlu0 %v1613, 96
    %v2212 = vpop.permute.xlu0 %2211
    %2213 = vrot.lane.b32.xlu0 %v1616, 96
    %v2214 = vpop.permute.xlu0 %2213
    %2215 = vrot.lane.b32.xlu0 %v1619, 96
    %v2216 = vpop.permute.xlu0 %2215
    %2217 = vrot.lane.b32.xlu0 %v1622, 96
    %v2218 = vpop.permute.xlu0 %2217
    %2219 = vrot.lane.b32.xlu0 %v1625, 96
    %v2220 = vpop.permute.xlu0 %2219
    %2221 = vrot.lane.b32.xlu0 %v1628, 96
    %v2222 = vpop.permute.xlu0 %2221
    %2223 = vrot.lane.b32.xlu0 %v1631, 96
    %v2224 = vpop.permute.xlu0 %2223
    %2225 = vrot.lane.b32.xlu0 %v1634, 96
    %v2226 = vpop.permute.xlu0 %2225
    %2227 = vrot.lane.b32.xlu0 %v1637, 96
    %v2228 = vpop.permute.xlu0 %2227
    %2229 = vrot.lane.b32.xlu0 %v1640, 96
    %v2230 = vpop.permute.xlu0 %2229
    %2231 = vrot.lane.b32.xlu0 %v1643, 96
    %v2232 = vpop.permute.xlu0 %2231
    %2233 = vrot.lane.b32.xlu0 %v1646, 96
    %v2234 = vpop.permute.xlu0 %2233
    %2235 = vrot.lane.b32.xlu0 %v1649, 96
    %v2236 = vpop.permute.xlu0 %2235
    %2237 = vrot.lane.b32.xlu0 %v1652, 96
    %v2238 = vpop.permute.xlu0 %2237
    %2239 = vrot.lane.b32.xlu0 %v1655, 96
    %v2240 = vpop.permute.xlu0 %2239
    %2241 = vrot.lane.b32.xlu0 %v1658, 96
    %v2242 = vpop.permute.xlu0 %2241
    %2243 = vrot.lane.b32.xlu0 %v1661, 96
    %v2244 = vpop.permute.xlu0 %2243
    %2245 = vrot.lane.b32.xlu0 %v1664, 96
    %v2246 = vpop.permute.xlu0 %2245
    %2247 = vrot.lane.b32.xlu0 %v1667, 96
    %v2248 = vpop.permute.xlu0 %2247
    %2249 = vrot.lane.b32.xlu0 %v1670, 96
    %v2250 = vpop.permute.xlu0 %2249
    %2251 = vrot.lane.b32.xlu0 %v1673, 96
    %v2252 = vpop.permute.xlu0 %2251
    %2253 = vrot.lane.b32.xlu0 %v1676, 96
    %v2254 = vpop.permute.xlu0 %2253
    %2255 = vrot.lane.b32.xlu0 %v1679, 96
    %v2256 = vpop.permute.xlu0 %2255
    %2289 = vrot.lane.b32.xlu0 %v1586, 112
    %v2290 = vpop.permute.xlu0 %2289
    %2291 = vrot.lane.b32.xlu0 %v1589, 112
    %v2292 = vpop.permute.xlu0 %2291
    %2293 = vrot.lane.b32.xlu0 %v1592, 112
    %v2294 = vpop.permute.xlu0 %2293
    %2295 = vrot.lane.b32.xlu0 %v1595, 112
    %v2296 = vpop.permute.xlu0 %2295
    %2297 = vrot.lane.b32.xlu0 %v1598, 112
    %v2298 = vpop.permute.xlu0 %2297
    %2299 = vrot.lane.b32.xlu0 %v1601, 112
    %v2300 = vpop.permute.xlu0 %2299
    %2301 = vrot.lane.b32.xlu0 %v1604, 112
    %v2302 = vpop.permute.xlu0 %2301
    %2303 = vrot.lane.b32.xlu0 %v1607, 112
    %v2304 = vpop.permute.xlu0 %2303
    %2305 = vrot.lane.b32.xlu0 %v1610, 112
    %v2306 = vpop.permute.xlu0 %2305
    %2307 = vrot.lane.b32.xlu0 %v1613, 112
    %v2308 = vpop.permute.xlu0 %2307
    %2309 = vrot.lane.b32.xlu0 %v1616, 112
    %v2310 = vpop.permute.xlu0 %2309
    %2311 = vrot.lane.b32.xlu0 %v1619, 112
    %v2312 = vpop.permute.xlu0 %2311
    %2313 = vrot.lane.b32.xlu0 %v1622, 112
    %v2314 = vpop.permute.xlu0 %2313
    %2315 = vrot.lane.b32.xlu0 %v1625, 112
    %v2316 = vpop.permute.xlu0 %2315
    %2317 = vrot.lane.b32.xlu0 %v1628, 112
    %v2318 = vpop.permute.xlu0 %2317
    %2319 = vrot.lane.b32.xlu0 %v1631, 112
    %v2320 = vpop.permute.xlu0 %2319
    %2321 = vrot.lane.b32.xlu0 %v1634, 112
    %v2322 = vpop.permute.xlu0 %2321
    %2323 = vrot.lane.b32.xlu0 %v1637, 112
    %v2324 = vpop.permute.xlu0 %2323
    %2325 = vrot.lane.b32.xlu0 %v1640, 112
    %v2326 = vpop.permute.xlu0 %2325
    %2327 = vrot.lane.b32.xlu0 %v1643, 112
    %v2328 = vpop.permute.xlu0 %2327
    %2329 = vrot.lane.b32.xlu0 %v1646, 112
    %v2330 = vpop.permute.xlu0 %2329
    %2331 = vrot.lane.b32.xlu0 %v1649, 112
    %v2332 = vpop.permute.xlu0 %2331
    %2333 = vrot.lane.b32.xlu0 %v1652, 112
    %v2334 = vpop.permute.xlu0 %2333
    %2335 = vrot.lane.b32.xlu0 %v1655, 112
    %v2336 = vpop.permute.xlu0 %2335
    %2337 = vrot.lane.b32.xlu0 %v1658, 112
    %v2338 = vpop.permute.xlu0 %2337
    %2339 = vrot.lane.b32.xlu0 %v1661, 112
    %v2340 = vpop.permute.xlu0 %2339
    %2341 = vrot.lane.b32.xlu0 %v1664, 112
    %v2342 = vpop.permute.xlu0 %2341
    %2343 = vrot.lane.b32.xlu0 %v1667, 112
    %v2344 = vpop.permute.xlu0 %2343
    %2345 = vrot.lane.b32.xlu0 %v1670, 112
    %v2346 = vpop.permute.xlu0 %2345
    %2347 = vrot.lane.b32.xlu0 %v1673, 112
    %v2348 = vpop.permute.xlu0 %2347
    %2349 = vrot.lane.b32.xlu0 %v1676, 112
    %v2350 = vpop.permute.xlu0 %2349
    %2351 = vrot.lane.b32.xlu0 %v1679, 112
    %v2352 = vpop.permute.xlu0 %2351
    %vm2385 = vcmask 130048
    %v2386 = vsel %vm2385, %v1586, %v1714
    %v2387 = vsel %vm2385, %v1589, %v1716
    %v2388 = vsel %vm2385, %v1592, %v1718
    %v2389 = vsel %vm2385, %v1595, %v1720
    %v2390 = vsel %vm2385, %v1598, %v1722
    %v2391 = vsel %vm2385, %v1601, %v1724
    %v2392 = vsel %vm2385, %v1604, %v1726
    %v2393 = vsel %vm2385, %v1607, %v1728
    %v2394 = vsel %vm2385, %v1610, %v1730
    %v2395 = vsel %vm2385, %v1613, %v1732
    %v2396 = vsel %vm2385, %v1616, %v1734
    %v2397 = vsel %vm2385, %v1619, %v1736
    %v2398 = vsel %vm2385, %v1622, %v1738
    %v2399 = vsel %vm2385, %v1625, %v1740
    %v2400 = vsel %vm2385, %v1628, %v1742
    %v2401 = vsel %vm2385, %v1631, %v1744
    %v2402 = vsel %vm2385, %v1634, %v1746
    %v2403 = vsel %vm2385, %v1637, %v1748
    %v2404 = vsel %vm2385, %v1640, %v1750
    %v2405 = vsel %vm2385, %v1643, %v1752
    %v2406 = vsel %vm2385, %v1646, %v1754
    %v2407 = vsel %vm2385, %v1649, %v1756
    %v2408 = vsel %vm2385, %v1652, %v1758
    %v2409 = vsel %vm2385, %v1655, %v1760
    %v2410 = vsel %vm2385, %v1658, %v1762
    %v2411 = vsel %vm2385, %v1661, %v1764
    %v2412 = vsel %vm2385, %v1664, %v1766
    %v2413 = vsel %vm2385, %v1667, %v1768
    %v2414 = vsel %vm2385, %v1670, %v1770
    %v2415 = vsel %vm2385, %v1673, %v1772
    %v2416 = vsel %vm2385, %v1676, %v1774
    %v2417 = vsel %vm2385, %v1679, %v1776
    %vm2418 = vcmask 261120
    %v2419 = vsel %vm2418, %v2386, %v1810
    %v2420 = vsel %vm2418, %v2387, %v1812
    %v2421 = vsel %vm2418, %v2388, %v1814
    %v2422 = vsel %vm2418, %v2389, %v1816
    %v2423 = vsel %vm2418, %v2390, %v1818
    %v2424 = vsel %vm2418, %v2391, %v1820
    %v2425 = vsel %vm2418, %v2392, %v1822
    %v2426 = vsel %vm2418, %v2393, %v1824
    %v2427 = vsel %vm2418, %v2394, %v1826
    %v2428 = vsel %vm2418, %v2395, %v1828
    %v2429 = vsel %vm2418, %v2396, %v1830
    %v2430 = vsel %vm2418, %v2397, %v1832
    %v2431 = vsel %vm2418, %v2398, %v1834
    %v2432 = vsel %vm2418, %v2399, %v1836
    %v2433 = vsel %vm2418, %v2400, %v1838
    %v2434 = vsel %vm2418, %v2401, %v1840
    %v2435 = vsel %vm2418, %v2402, %v1842
    %v2436 = vsel %vm2418, %v2403, %v1844
    %v2437 = vsel %vm2418, %v2404, %v1846
    %v2438 = vsel %vm2418, %v2405, %v1848
    %v2439 = vsel %vm2418, %v2406, %v1850
    %v2440 = vsel %vm2418, %v2407, %v1852
    %v2441 = vsel %vm2418, %v2408, %v1854
    %v2442 = vsel %vm2418, %v2409, %v1856
    %v2443 = vsel %vm2418, %v2410, %v1858
    %v2444 = vsel %vm2418, %v2411, %v1860
    %v2445 = vsel %vm2418, %v2412, %v1862
    %v2446 = vsel %vm2418, %v2413, %v1864
    %v2447 = vsel %vm2418, %v2414, %v1866
    %v2448 = vsel %vm2418, %v2415, %v1868
    %v2449 = vsel %vm2418, %v2416, %v1870
    %v2450 = vsel %vm2418, %v2417, %v1872
    %vm2451 = vcmask 392192
    %v2452 = vsel %vm2451, %v2419, %v1906
    %v2453 = vsel %vm2451, %v2420, %v1908
    %v2454 = vsel %vm2451, %v2421, %v1910
    %v2455 = vsel %vm2451, %v2422, %v1912
    %v2456 = vsel %vm2451, %v2423, %v1914
    %v2457 = vsel %vm2451, %v2424, %v1916
    %v2458 = vsel %vm2451, %v2425, %v1918
    %v2459 = vsel %vm2451, %v2426, %v1920
    %v2460 = vsel %vm2451, %v2427, %v1922
    %v2461 = vsel %vm2451, %v2428, %v1924
    %v2462 = vsel %vm2451, %v2429, %v1926
    %v2463 = vsel %vm2451, %v2430, %v1928
    %v2464 = vsel %vm2451, %v2431, %v1930
    %v2465 = vsel %vm2451, %v2432, %v1932
    %v2466 = vsel %vm2451, %v2433, %v1934
    %v2467 = vsel %vm2451, %v2434, %v1936
    %v2468 = vsel %vm2451, %v2435, %v1938
    %v2469 = vsel %vm2451, %v2436, %v1940
    %v2470 = vsel %vm2451, %v2437, %v1942
    %v2471 = vsel %vm2451, %v2438, %v1944
    %v2472 = vsel %vm2451, %v2439, %v1946
    %v2473 = vsel %vm2451, %v2440, %v1948
    %v2474 = vsel %vm2451, %v2441, %v1950
    %v2475 = vsel %vm2451, %v2442, %v1952
    %v2476 = vsel %vm2451, %v2443, %v1954
    %v2477 = vsel %vm2451, %v2444, %v1956
    %v2478 = vsel %vm2451, %v2445, %v1958
    %v2479 = vsel %vm2451, %v2446, %v1960
    %v2480 = vsel %vm2451, %v2447, %v1962
    %v2481 = vsel %vm2451, %v2448, %v1964
    %v2482 = vsel %vm2451, %v2449, %v1966
    %v2483 = vsel %vm2451, %v2450, %v1968
    %vm2484 = vcmask 523264
    %v2485 = vsel %vm2484, %v2452, %v2002
    %v2486 = vsel %vm2484, %v2453, %v2004
    %v2487 = vsel %vm2484, %v2454, %v2006
    %v2488 = vsel %vm2484, %v2455, %v2008
    %v2489 = vsel %vm2484, %v2456, %v2010
    %v2490 = vsel %vm2484, %v2457, %v2012
    %v2491 = vsel %vm2484, %v2458, %v2014
    %v2492 = vsel %vm2484, %v2459, %v2016
    %v2493 = vsel %vm2484, %v2460, %v2018
    %v2494 = vsel %vm2484, %v2461, %v2020
    %v2495 = vsel %vm2484, %v2462, %v2022
    %v2496 = vsel %vm2484, %v2463, %v2024
    %v2497 = vsel %vm2484, %v2464, %v2026
    %v2498 = vsel %vm2484, %v2465, %v2028
    %v2499 = vsel %vm2484, %v2466, %v2030
    %v2500 = vsel %vm2484, %v2467, %v2032
    %v2501 = vsel %vm2484, %v2468, %v2034
    %v2502 = vsel %vm2484, %v2469, %v2036
    %v2503 = vsel %vm2484, %v2470, %v2038
    %v2504 = vsel %vm2484, %v2471, %v2040
    %v2505 = vsel %vm2484, %v2472, %v2042
    %v2506 = vsel %vm2484, %v2473, %v2044
    %v2507 = vsel %vm2484, %v2474, %v2046
    %v2508 = vsel %vm2484, %v2475, %v2048
    %v2509 = vsel %vm2484, %v2476, %v2050
    %v2510 = vsel %vm2484, %v2477, %v2052
    %v2511 = vsel %vm2484, %v2478, %v2054
    %v2512 = vsel %vm2484, %v2479, %v2056
    %v2513 = vsel %vm2484, %v2480, %v2058
    %v2514 = vsel %vm2484, %v2481, %v2060
    %v2515 = vsel %vm2484, %v2482, %v2062
    %v2516 = vsel %vm2484, %v2483, %v2064
    %vm2517 = vcmask 654336
    %v2518 = vsel %vm2517, %v2485, %v2098
    %v2519 = vsel %vm2517, %v2486, %v2100
    %v2520 = vsel %vm2517, %v2487, %v2102
    %v2521 = vsel %vm2517, %v2488, %v2104
    %v2522 = vsel %vm2517, %v2489, %v2106
    %v2523 = vsel %vm2517, %v2490, %v2108
    %v2524 = vsel %vm2517, %v2491, %v2110
    %v2525 = vsel %vm2517, %v2492, %v2112
    %v2526 = vsel %vm2517, %v2493, %v2114
    %v2527 = vsel %vm2517, %v2494, %v2116
    %v2528 = vsel %vm2517, %v2495, %v2118
    %v2529 = vsel %vm2517, %v2496, %v2120
    %v2530 = vsel %vm2517, %v2497, %v2122
    %v2531 = vsel %vm2517, %v2498, %v2124
    %v2532 = vsel %vm2517, %v2499, %v2126
    %v2533 = vsel %vm2517, %v2500, %v2128
    %v2534 = vsel %vm2517, %v2501, %v2130
    %v2535 = vsel %vm2517, %v2502, %v2132
    %v2536 = vsel %vm2517, %v2503, %v2134
    %v2537 = vsel %vm2517, %v2504, %v2136
    %v2538 = vsel %vm2517, %v2505, %v2138
    %v2539 = vsel %vm2517, %v2506, %v2140
    %v2540 = vsel %vm2517, %v2507, %v2142
    %v2541 = vsel %vm2517, %v2508, %v2144
    %v2542 = vsel %vm2517, %v2509, %v2146
    %v2543 = vsel %vm2517, %v2510, %v2148
    %v2544 = vsel %vm2517, %v2511, %v2150
    %v2545 = vsel %vm2517, %v2512, %v2152
    %v2546 = vsel %vm2517, %v2513, %v2154
    %v2547 = vsel %vm2517, %v2514, %v2156
    %v2548 = vsel %vm2517, %v2515, %v2158
    %v2549 = vsel %vm2517, %v2516, %v2160
    %vm2550 = vcmask 785408
    %v2551 = vsel %vm2550, %v2518, %v2194
    %v2552 = vsel %vm2550, %v2519, %v2196
    %v2553 = vsel %vm2550, %v2520, %v2198
    %v2554 = vsel %vm2550, %v2521, %v2200
    %v2555 = vsel %vm2550, %v2522, %v2202
    %v2556 = vsel %vm2550, %v2523, %v2204
    %v2557 = vsel %vm2550, %v2524, %v2206
    %v2558 = vsel %vm2550, %v2525, %v2208
    %v2559 = vsel %vm2550, %v2526, %v2210
    %v2560 = vsel %vm2550, %v2527, %v2212
    %v2561 = vsel %vm2550, %v2528, %v2214
    %v2562 = vsel %vm2550, %v2529, %v2216
    %v2563 = vsel %vm2550, %v2530, %v2218
    %v2564 = vsel %vm2550, %v2531, %v2220
    %v2565 = vsel %vm2550, %v2532, %v2222
    %v2566 = vsel %vm2550, %v2533, %v2224
    %v2567 = vsel %vm2550, %v2534, %v2226
    %v2568 = vsel %vm2550, %v2535, %v2228
    %v2569 = vsel %vm2550, %v2536, %v2230
    %v2570 = vsel %vm2550, %v2537, %v2232
    %v2571 = vsel %vm2550, %v2538, %v2234
    %v2572 = vsel %vm2550, %v2539, %v2236
    %v2573 = vsel %vm2550, %v2540, %v2238
    %v2574 = vsel %vm2550, %v2541, %v2240
    %v2575 = vsel %vm2550, %v2542, %v2242
    %v2576 = vsel %vm2550, %v2543, %v2244
    %v2577 = vsel %vm2550, %v2544, %v2246
    %v2578 = vsel %vm2550, %v2545, %v2248
    %v2579 = vsel %vm2550, %v2546, %v2250
    %v2580 = vsel %vm2550, %v2547, %v2252
    %v2581 = vsel %vm2550, %v2548, %v2254
    %v2582 = vsel %vm2550, %v2549, %v2256
    %vm2583 = vcmask 916480
    %v2584 = vsel %vm2583, %v2551, %v2290
    %v2585 = vsel %vm2583, %v2552, %v2292
    %v2586 = vsel %vm2583, %v2553, %v2294
    %v2587 = vsel %vm2583, %v2554, %v2296
    %v2588 = vsel %vm2583, %v2555, %v2298
    %v2589 = vsel %vm2583, %v2556, %v2300
    %v2590 = vsel %vm2583, %v2557, %v2302
    %v2591 = vsel %vm2583, %v2558, %v2304
    %v2592 = vsel %vm2583, %v2559, %v2306
    %v2593 = vsel %vm2583, %v2560, %v2308
    %v2594 = vsel %vm2583, %v2561, %v2310
    %v2595 = vsel %vm2583, %v2562, %v2312
    %v2596 = vsel %vm2583, %v2563, %v2314
    %v2597 = vsel %vm2583, %v2564, %v2316
    %v2598 = vsel %vm2583, %v2565, %v2318
    %v2599 = vsel %vm2583, %v2566, %v2320
    %v2600 = vsel %vm2583, %v2567, %v2322
    %v2601 = vsel %vm2583, %v2568, %v2324
    %v2602 = vsel %vm2583, %v2569, %v2326
    %v2603 = vsel %vm2583, %v2570, %v2328
    %v2604 = vsel %vm2583, %v2571, %v2330
    %v2605 = vsel %vm2583, %v2572, %v2332
    %v2606 = vsel %vm2583, %v2573, %v2334
    %v2607 = vsel %vm2583, %v2574, %v2336
    %v2608 = vsel %vm2583, %v2575, %v2338
    %v2609 = vsel %vm2583, %v2576, %v2340
    %v2610 = vsel %vm2583, %v2577, %v2342
    %v2611 = vsel %vm2583, %v2578, %v2344
    %v2612 = vsel %vm2583, %v2579, %v2346
    %v2613 = vsel %vm2583, %v2580, %v2348
    %v2614 = vsel %vm2583, %v2581, %v2350
    %v2615 = vsel %vm2583, %v2582, %v2352
    %v2616 = vmul.f32 %v1334, %v2584
    %v2617 = vmul.f32 %v1447, %v1586
    %v2618 = vmul.f32 %v1337, %v2585
    %v2619 = vmul.f32 %v1450, %v1589
    %v2620 = vmul.f32 %v1340, %v2586
    %v2621 = vmul.f32 %v1453, %v1592
    %v2622 = vmul.f32 %v1343, %v2587
    %v2623 = vmul.f32 %v1456, %v1595
    %v2624 = vmul.f32 %v1346, %v2588
    %v2625 = vmul.f32 %v1459, %v1598
    %v2626 = vmul.f32 %v1349, %v2589
    %v2627 = vmul.f32 %v1462, %v1601
    %v2628 = vmul.f32 %v1352, %v2590
    %v2629 = vmul.f32 %v1465, %v1604
    %v2630 = vmul.f32 %v1355, %v2591
    %v2631 = vmul.f32 %v1468, %v1607
    %v2632 = vmul.f32 %v1358, %v2592
    %v2633 = vmul.f32 %v1471, %v1610
    %v2634 = vmul.f32 %v1361, %v2593
    %v2635 = vmul.f32 %v1474, %v1613
    %v2636 = vmul.f32 %v1364, %v2594
    %v2637 = vmul.f32 %v1477, %v1616
    %v2638 = vmul.f32 %v1367, %v2595
    %v2639 = vmul.f32 %v1480, %v1619
    %v2640 = vmul.f32 %v1370, %v2596
    %v2641 = vmul.f32 %v1483, %v1622
    %v2642 = vmul.f32 %v1373, %v2597
    %v2643 = vmul.f32 %v1486, %v1625
    %v2644 = vmul.f32 %v1376, %v2598
    %v2645 = vmul.f32 %v1489, %v1628
    %v2646 = vmul.f32 %v1379, %v2599
    %v2647 = vmul.f32 %v1492, %v1631
    %v2648 = vmul.f32 %v1382, %v2600
    %v2649 = vmul.f32 %v1495, %v1634
    %v2650 = vmul.f32 %v1385, %v2601
    %v2651 = vmul.f32 %v1498, %v1637
    %v2652 = vmul.f32 %v1388, %v2602
    %v2653 = vmul.f32 %v1501, %v1640
    %v2654 = vmul.f32 %v1391, %v2603
    %v2655 = vmul.f32 %v1504, %v1643
    %v2656 = vmul.f32 %v1394, %v2604
    %v2657 = vmul.f32 %v1507, %v1646
    %v2658 = vmul.f32 %v1397, %v2605
    %v2659 = vmul.f32 %v1510, %v1649
    %v2660 = vmul.f32 %v1400, %v2606
    %v2661 = vmul.f32 %v1513, %v1652
    %v2662 = vmul.f32 %v1403, %v2607
    %v2663 = vmul.f32 %v1516, %v1655
    %v2664 = vmul.f32 %v1406, %v2608
    %v2665 = vmul.f32 %v1519, %v1658
    %v2666 = vmul.f32 %v1409, %v2609
    %v2667 = vmul.f32 %v1522, %v1661
    %v2668 = vmul.f32 %v1412, %v2610
    %v2669 = vmul.f32 %v1525, %v1664
    %v2670 = vmul.f32 %v1415, %v2611
    %v2671 = vmul.f32 %v1528, %v1667
    %v2672 = vmul.f32 %v1418, %v2612
    %v2673 = vmul.f32 %v1531, %v1670
    %v2674 = vmul.f32 %v1421, %v2613
    %v2675 = vmul.f32 %v1534, %v1673
    %v2676 = vmul.f32 %v1424, %v2614
    %v2677 = vmul.f32 %v1537, %v1676
    %v2678 = vmul.f32 %v1427, %v2615
    %v2679 = vmul.f32 %v1540, %v1679
    %v2681 = vsel %vm2385, %v2617, 0
    %v2684 = vsel %vm2385, %v2619, 0
    %v2687 = vsel %vm2385, %v2621, 0
    %v2690 = vsel %vm2385, %v2623, 0
    %v2693 = vsel %vm2385, %v2625, 0
    %v2696 = vsel %vm2385, %v2627, 0
    %v2699 = vsel %vm2385, %v2629, 0
    %v2702 = vsel %vm2385, %v2631, 0
    %v2705 = vsel %vm2385, %v2633, 0
    %v2708 = vsel %vm2385, %v2635, 0
    %v2711 = vsel %vm2385, %v2637, 0
    %v2714 = vsel %vm2385, %v2639, 0
    %v2717 = vsel %vm2385, %v2641, 0
    %v2720 = vsel %vm2385, %v2643, 0
    %v2723 = vsel %vm2385, %v2645, 0
    %v2726 = vsel %vm2385, %v2647, 0
    %v2729 = vsel %vm2385, %v2649, 0
    %v2732 = vsel %vm2385, %v2651, 0
    %v2735 = vsel %vm2385, %v2653, 0
    %v2738 = vsel %vm2385, %v2655, 0
    %v2741 = vsel %vm2385, %v2657, 0
    %v2744 = vsel %vm2385, %v2659, 0
    %v2747 = vsel %vm2385, %v2661, 0
    %v2750 = vsel %vm2385, %v2663, 0
    %v2753 = vsel %vm2385, %v2665, 0
    %v2756 = vsel %vm2385, %v2667, 0
    %v2759 = vsel %vm2385, %v2669, 0
    %v2762 = vsel %vm2385, %v2671, 0
    %v2765 = vsel %vm2385, %v2673, 0
    %v2768 = vsel %vm2385, %v2675, 0
    %v2771 = vsel %vm2385, %v2677, 0
    %v2774 = vsel %vm2385, %v2679, 0
    %2776 = vmatpush.msra.mxu0 %v1557
    %2777 = vmatpush.msra.mxu0 %v1556
    %2778 = vmatpush.msra.mxu0 %v1555
    %2779 = vmatpush.msra.mxu0 %v1554
    %2780 = vmatpush.msra.mxu0 %v1553
    %2781 = vmatpush.msra.mxu0 %v1552
    %2782 = vmatpush.msra.mxu0 %v1551
    %2783 = vmatpush.msra.mxu0 %v1550
    %2784 = vmatpush.msra.mxu0 %v1549
    %2785 = vmatpush.msra.mxu0 %v1548
    %2786 = vmatpush.msra.mxu0 %v1547
    %2787 = vmatpush.msra.mxu0 %v1546
    %2788 = vmatpush.msra.mxu0 %v1545
    %2789 = vmatpush.msra.mxu0 %v1544
    %2790 = vmatpush.msra.mxu0 %v1543
    %2791 = vmatpush.msra.mxu0 %v1542
    %2792 = vmatmul.f32.gmra.mxu0 %v2616
    %v2793 = vpop.f32.mrf.mxu0
    %v2794 = vadd.f32 0.0, %v2793
    %2795 = vmatmul.f32.gmra.mxu0 %v2618
    %v2796 = vpop.f32.mrf.mxu0
    %v2797 = vadd.f32 0.0, %v2796
    %2798 = vmatmul.f32.gmra.mxu0 %v2620
    %v2799 = vpop.f32.mrf.mxu0
    %v2800 = vadd.f32 0.0, %v2799
    %2801 = vmatmul.f32.gmra.mxu0 %v2622
    %v2802 = vpop.f32.mrf.mxu0
    %v2803 = vadd.f32 0.0, %v2802
    %2804 = vmatmul.f32.gmra.mxu0 %v2624
    %v2805 = vpop.f32.mrf.mxu0
    %v2806 = vadd.f32 0.0, %v2805
    %2807 = vmatmul.f32.gmra.mxu0 %v2626
    %v2808 = vpop.f32.mrf.mxu0
    %v2809 = vadd.f32 0.0, %v2808
    %2810 = vmatmul.f32.gmra.mxu0 %v2628
    %v2811 = vpop.f32.mrf.mxu0
    %v2812 = vadd.f32 0.0, %v2811
    %2813 = vmatmul.f32.gmra.mxu0 %v2630
    %v2814 = vpop.f32.mrf.mxu0
    %v2815 = vadd.f32 0.0, %v2814
    %2816 = vmatmul.f32.gmra.mxu0 %v2632
    %v2817 = vpop.f32.mrf.mxu0
    %v2818 = vadd.f32 0.0, %v2817
    %2819 = vmatmul.f32.gmra.mxu0 %v2634
    %v2820 = vpop.f32.mrf.mxu0
    %v2821 = vadd.f32 0.0, %v2820
    %2822 = vmatmul.f32.gmra.mxu0 %v2636
    %v2823 = vpop.f32.mrf.mxu0
    %v2824 = vadd.f32 0.0, %v2823
    %2825 = vmatmul.f32.gmra.mxu0 %v2638
    %v2826 = vpop.f32.mrf.mxu0
    %v2827 = vadd.f32 0.0, %v2826
    %2828 = vmatmul.f32.gmra.mxu0 %v2640
    %v2829 = vpop.f32.mrf.mxu0
    %v2830 = vadd.f32 0.0, %v2829
    %2831 = vmatmul.f32.gmra.mxu0 %v2642
    %v2832 = vpop.f32.mrf.mxu0
    %v2833 = vadd.f32 0.0, %v2832
    %2834 = vmatmul.f32.gmra.mxu0 %v2644
    %v2835 = vpop.f32.mrf.mxu0
    %v2836 = vadd.f32 0.0, %v2835
    %2837 = vmatmul.f32.gmra.mxu0 %v2646
    %v2838 = vpop.f32.mrf.mxu0
    %v2839 = vadd.f32 0.0, %v2838
    %2840 = vmatmul.f32.gmra.mxu0 %v2648
    %v2841 = vpop.f32.mrf.mxu0
    %v2842 = vadd.f32 0.0, %v2841
    %2843 = vmatmul.f32.gmra.mxu0 %v2650
    %v2844 = vpop.f32.mrf.mxu0
    %v2845 = vadd.f32 0.0, %v2844
    %2846 = vmatmul.f32.gmra.mxu0 %v2652
    %v2847 = vpop.f32.mrf.mxu0
    %v2848 = vadd.f32 0.0, %v2847
    %2849 = vmatmul.f32.gmra.mxu0 %v2654
    %v2850 = vpop.f32.mrf.mxu0
    %v2851 = vadd.f32 0.0, %v2850
    %2852 = vmatmul.f32.gmra.mxu0 %v2656
    %v2853 = vpop.f32.mrf.mxu0
    %v2854 = vadd.f32 0.0, %v2853
    %2855 = vmatmul.f32.gmra.mxu0 %v2658
    %v2856 = vpop.f32.mrf.mxu0
    %v2857 = vadd.f32 0.0, %v2856
    %2858 = vmatmul.f32.gmra.mxu0 %v2660
    %v2859 = vpop.f32.mrf.mxu0
    %v2860 = vadd.f32 0.0, %v2859
    %2861 = vmatmul.f32.gmra.mxu0 %v2662
    %v2862 = vpop.f32.mrf.mxu0
    %v2863 = vadd.f32 0.0, %v2862
    %2864 = vmatmul.f32.gmra.mxu0 %v2664
    %v2865 = vpop.f32.mrf.mxu0
    %v2866 = vadd.f32 0.0, %v2865
    %2867 = vmatmul.f32.gmra.mxu0 %v2666
    %v2868 = vpop.f32.mrf.mxu0
    %v2869 = vadd.f32 0.0, %v2868
    %2870 = vmatmul.f32.gmra.mxu0 %v2668
    %v2871 = vpop.f32.mrf.mxu0
    %v2872 = vadd.f32 0.0, %v2871
    %2873 = vmatmul.f32.gmra.mxu0 %v2670
    %v2874 = vpop.f32.mrf.mxu0
    %v2875 = vadd.f32 0.0, %v2874
    %2876 = vmatmul.f32.gmra.mxu0 %v2672
    %v2877 = vpop.f32.mrf.mxu0
    %v2878 = vadd.f32 0.0, %v2877
    %2879 = vmatmul.f32.gmra.mxu0 %v2674
    %v2880 = vpop.f32.mrf.mxu0
    %v2881 = vadd.f32 0.0, %v2880
    %2882 = vmatmul.f32.gmra.mxu0 %v2676
    %v2883 = vpop.f32.mrf.mxu0
    %v2884 = vadd.f32 0.0, %v2883
    %2885 = vmatmul.f32.gmra.mxu0 %v2678
    %v2886 = vpop.f32.mrf.mxu0
    %v2887 = vadd.f32 0.0, %v2886
    %2888 = vdwg.mxu0
    %2889 = vmatpush.msra.mxu0 0.0
    %2890 = vmatpush.msra.mxu0 0.0
    %2891 = vmatpush.msra.mxu0 0.0
    %2892 = vmatpush.msra.mxu0 0.0
    %2893 = vmatpush.msra.mxu0 0.0
    %2894 = vmatpush.msra.mxu0 0.0
    %2895 = vmatpush.msra.mxu0 0.0
    %2896 = vmatpush.msra.mxu0 0.0
    %2897 = vmatpush.msra.mxu0 0.0
    %2898 = vmatpush.msra.mxu0 0.0
    %2899 = vmatpush.msra.mxu0 0.0
    %2900 = vmatpush.msra.mxu0 0.0
    %2901 = vmatpush.msra.mxu0 0.0
    %2902 = vmatpush.msra.mxu0 0.0
    %2903 = vmatpush.msra.mxu0 %v1559
    %2904 = vmatpush.msra.mxu0 %v1558
    %2905 = vmatmul.f32.gmra.mxu0 %v2681
    %v2906 = vpop.f32.mrf.mxu0
    %v2907 = vadd.f32 %v2794, %v2906
    %2908 = vmatmul.f32.gmra.mxu0 %v2684
    %v2909 = vpop.f32.mrf.mxu0
    %v2910 = vadd.f32 %v2797, %v2909
    %2911 = vmatmul.f32.gmra.mxu0 %v2687
    %v2912 = vpop.f32.mrf.mxu0
    %v2913 = vadd.f32 %v2800, %v2912
    %2914 = vmatmul.f32.gmra.mxu0 %v2690
    %v2915 = vpop.f32.mrf.mxu0
    %v2916 = vadd.f32 %v2803, %v2915
    %2917 = vmatmul.f32.gmra.mxu0 %v2693
    %v2918 = vpop.f32.mrf.mxu0
    %v2919 = vadd.f32 %v2806, %v2918
    %2920 = vmatmul.f32.gmra.mxu0 %v2696
    %v2921 = vpop.f32.mrf.mxu0
    %v2922 = vadd.f32 %v2809, %v2921
    %2923 = vmatmul.f32.gmra.mxu0 %v2699
    %v2924 = vpop.f32.mrf.mxu0
    %v2925 = vadd.f32 %v2812, %v2924
    %2926 = vmatmul.f32.gmra.mxu0 %v2702
    %v2927 = vpop.f32.mrf.mxu0
    %v2928 = vadd.f32 %v2815, %v2927
    %2929 = vmatmul.f32.gmra.mxu0 %v2705
    %v2930 = vpop.f32.mrf.mxu0
    %v2931 = vadd.f32 %v2818, %v2930
    %2932 = vmatmul.f32.gmra.mxu0 %v2708
    %v2933 = vpop.f32.mrf.mxu0
    %v2934 = vadd.f32 %v2821, %v2933
    %2935 = vmatmul.f32.gmra.mxu0 %v2711
    %v2936 = vpop.f32.mrf.mxu0
    %v2937 = vadd.f32 %v2824, %v2936
    %2938 = vmatmul.f32.gmra.mxu0 %v2714
    %v2939 = vpop.f32.mrf.mxu0
    %v2940 = vadd.f32 %v2827, %v2939
    %2941 = vmatmul.f32.gmra.mxu0 %v2717
    %v2942 = vpop.f32.mrf.mxu0
    %v2943 = vadd.f32 %v2830, %v2942
    %2944 = vmatmul.f32.gmra.mxu0 %v2720
    %v2945 = vpop.f32.mrf.mxu0
    %v2946 = vadd.f32 %v2833, %v2945
    %2947 = vmatmul.f32.gmra.mxu0 %v2723
    %v2948 = vpop.f32.mrf.mxu0
    %v2949 = vadd.f32 %v2836, %v2948
    %2950 = vmatmul.f32.gmra.mxu0 %v2726
    %v2951 = vpop.f32.mrf.mxu0
    %v2952 = vadd.f32 %v2839, %v2951
    %2953 = vmatmul.f32.gmra.mxu0 %v2729
    %v2954 = vpop.f32.mrf.mxu0
    %v2955 = vadd.f32 %v2842, %v2954
    %2956 = vmatmul.f32.gmra.mxu0 %v2732
    %v2957 = vpop.f32.mrf.mxu0
    %v2958 = vadd.f32 %v2845, %v2957
    %2959 = vmatmul.f32.gmra.mxu0 %v2735
    %v2960 = vpop.f32.mrf.mxu0
    %v2961 = vadd.f32 %v2848, %v2960
    %2962 = vmatmul.f32.gmra.mxu0 %v2738
    %v2963 = vpop.f32.mrf.mxu0
    %v2964 = vadd.f32 %v2851, %v2963
    %2965 = vmatmul.f32.gmra.mxu0 %v2741
    %v2966 = vpop.f32.mrf.mxu0
    %v2967 = vadd.f32 %v2854, %v2966
    %2968 = vmatmul.f32.gmra.mxu0 %v2744
    %v2969 = vpop.f32.mrf.mxu0
    %v2970 = vadd.f32 %v2857, %v2969
    %2971 = vmatmul.f32.gmra.mxu0 %v2747
    %v2972 = vpop.f32.mrf.mxu0
    %v2973 = vadd.f32 %v2860, %v2972
    %2974 = vmatmul.f32.gmra.mxu0 %v2750
    %v2975 = vpop.f32.mrf.mxu0
    %v2976 = vadd.f32 %v2863, %v2975
    %2977 = vmatmul.f32.gmra.mxu0 %v2753
    %v2978 = vpop.f32.mrf.mxu0
    %v2979 = vadd.f32 %v2866, %v2978
    %2980 = vmatmul.f32.gmra.mxu0 %v2756
    %v2981 = vpop.f32.mrf.mxu0
    %v2982 = vadd.f32 %v2869, %v2981
    %2983 = vmatmul.f32.gmra.mxu0 %v2759
    %v2984 = vpop.f32.mrf.mxu0
    %v2985 = vadd.f32 %v2872, %v2984
    %2986 = vmatmul.f32.gmra.mxu0 %v2762
    %v2987 = vpop.f32.mrf.mxu0
    %v2988 = vadd.f32 %v2875, %v2987
    %2989 = vmatmul.f32.gmra.mxu0 %v2765
    %v2990 = vpop.f32.mrf.mxu0
    %v2991 = vadd.f32 %v2878, %v2990
    %2992 = vmatmul.f32.gmra.mxu0 %v2768
    %v2993 = vpop.f32.mrf.mxu0
    %v2994 = vadd.f32 %v2881, %v2993
    %2995 = vmatmul.f32.gmra.mxu0 %v2771
    %v2996 = vpop.f32.mrf.mxu0
    %v2997 = vadd.f32 %v2884, %v2996
    %2998 = vmatmul.f32.gmra.mxu0 %v2774
    %v2999 = vpop.f32.mrf.mxu0
    %v3000 = vadd.f32 %v2887, %v2999
    %3001 = vdwg.mxu0
    %3002 = vmatpush.msra.mxu0 %v2952
    %3003 = vmatpush.msra.mxu0 %v2949
    %3004 = vmatpush.msra.mxu0 %v2946
    %3005 = vmatpush.msra.mxu0 %v2943
    %3006 = vmatpush.msra.mxu0 %v2940
    %3007 = vmatpush.msra.mxu0 %v2937
    %3008 = vmatpush.msra.mxu0 %v2934
    %3009 = vmatpush.msra.mxu0 %v2931
    %3010 = vmatpush.msra.mxu0 %v2928
    %3011 = vmatpush.msra.mxu0 %v2925
    %3012 = vmatpush.msra.mxu0 %v2922
    %3013 = vmatpush.msra.mxu0 %v2919
    %3014 = vmatpush.msra.mxu0 %v2916
    %3015 = vmatpush.msra.mxu0 %v2913
    %3016 = vmatpush.msra.mxu0 %v2910
    %3017 = vmatpush.msra.mxu0 %v2907
    %3018 = vmatmul.f32.gmra.mxu0 %v291
    %v3019 = vpop.f32.mrf.mxu0
    %v3020 = vadd.f32 0.0, %v3019
    %3021 = vmatmul.f32.gmra.mxu0 %v293
    %v3022 = vpop.f32.mrf.mxu0
    %v3023 = vadd.f32 0.0, %v3022
    %3024 = vmatmul.f32.gmra.mxu0 %v295
    %v3025 = vpop.f32.mrf.mxu0
    %v3026 = vadd.f32 0.0, %v3025
    %3027 = vmatmul.f32.gmra.mxu0 %v297
    %v3028 = vpop.f32.mrf.mxu0
    %v3029 = vadd.f32 0.0, %v3028
    %3030 = vmatmul.f32.gmra.mxu0 %v299
    %v3031 = vpop.f32.mrf.mxu0
    %v3032 = vadd.f32 0.0, %v3031
    %3033 = vmatmul.f32.gmra.mxu0 %v301
    %v3034 = vpop.f32.mrf.mxu0
    %v3035 = vadd.f32 0.0, %v3034
    %3036 = vmatmul.f32.gmra.mxu0 %v303
    %v3037 = vpop.f32.mrf.mxu0
    %v3038 = vadd.f32 0.0, %v3037
    %3039 = vmatmul.f32.gmra.mxu0 %v305
    %v3040 = vpop.f32.mrf.mxu0
    %v3041 = vadd.f32 0.0, %v3040
    %3042 = vmatmul.f32.gmra.mxu0 %v307
    %v3043 = vpop.f32.mrf.mxu0
    %v3044 = vadd.f32 0.0, %v3043
    %3045 = vmatmul.f32.gmra.mxu0 %v309
    %v3046 = vpop.f32.mrf.mxu0
    %v3047 = vadd.f32 0.0, %v3046
    %3048 = vmatmul.f32.gmra.mxu0 %v311
    %v3049 = vpop.f32.mrf.mxu0
    %v3050 = vadd.f32 0.0, %v3049
    %3051 = vmatmul.f32.gmra.mxu0 %v313
    %v3052 = vpop.f32.mrf.mxu0
    %v3053 = vadd.f32 0.0, %v3052
    %3054 = vmatmul.f32.gmra.mxu0 %v315
    %v3055 = vpop.f32.mrf.mxu0
    %v3056 = vadd.f32 0.0, %v3055
    %3057 = vmatmul.f32.gmra.mxu0 %v317
    %v3058 = vpop.f32.mrf.mxu0
    %v3059 = vadd.f32 0.0, %v3058
    %3060 = vmatmul.f32.gmra.mxu0 %v319
    %v3061 = vpop.f32.mrf.mxu0
    %v3062 = vadd.f32 0.0, %v3061
    %3063 = vmatmul.f32.gmra.mxu0 %v321
    %v3064 = vpop.f32.mrf.mxu0
    %v3065 = vadd.f32 0.0, %v3064
    %3066 = vdwg.mxu0
    %3067 = vmatpush.msra.mxu0 %v3000
    %3068 = vmatpush.msra.mxu0 %v2997
    %3069 = vmatpush.msra.mxu0 %v2994
    %3070 = vmatpush.msra.mxu0 %v2991
    %3071 = vmatpush.msra.mxu0 %v2988
    %3072 = vmatpush.msra.mxu0 %v2985
    %3073 = vmatpush.msra.mxu0 %v2982
    %3074 = vmatpush.msra.mxu0 %v2979
    %3075 = vmatpush.msra.mxu0 %v2976
    %3076 = vmatpush.msra.mxu0 %v2973
    %3077 = vmatpush.msra.mxu0 %v2970
    %3078 = vmatpush.msra.mxu0 %v2967
    %3079 = vmatpush.msra.mxu0 %v2964
    %3080 = vmatpush.msra.mxu0 %v2961
    %3081 = vmatpush.msra.mxu0 %v2958
    %3082 = vmatpush.msra.mxu0 %v2955
    %3083 = vmatmul.f32.gmra.mxu0 %v292
    %v3084 = vpop.f32.mrf.mxu0
    %v3085 = vadd.f32 %v3020, %v3084
    %3086 = vmatmul.f32.gmra.mxu0 %v294
    %v3087 = vpop.f32.mrf.mxu0
    %v3088 = vadd.f32 %v3023, %v3087
    %3089 = vmatmul.f32.gmra.mxu0 %v296
    %v3090 = vpop.f32.mrf.mxu0
    %v3091 = vadd.f32 %v3026, %v3090
    %3092 = vmatmul.f32.gmra.mxu0 %v298
    %v3093 = vpop.f32.mrf.mxu0
    %v3094 = vadd.f32 %v3029, %v3093
    %3095 = vmatmul.f32.gmra.mxu0 %v300
    %v3096 = vpop.f32.mrf.mxu0
    %v3097 = vadd.f32 %v3032, %v3096
    %3098 = vmatmul.f32.gmra.mxu0 %v302
    %v3099 = vpop.f32.mrf.mxu0
    %v3100 = vadd.f32 %v3035, %v3099
    %3101 = vmatmul.f32.gmra.mxu0 %v304
    %v3102 = vpop.f32.mrf.mxu0
    %v3103 = vadd.f32 %v3038, %v3102
    %3104 = vmatmul.f32.gmra.mxu0 %v306
    %v3105 = vpop.f32.mrf.mxu0
    %v3106 = vadd.f32 %v3041, %v3105
    %3107 = vmatmul.f32.gmra.mxu0 %v308
    %v3108 = vpop.f32.mrf.mxu0
    %v3109 = vadd.f32 %v3044, %v3108
    %3110 = vmatmul.f32.gmra.mxu0 %v310
    %v3111 = vpop.f32.mrf.mxu0
    %v3112 = vadd.f32 %v3047, %v3111
    %3113 = vmatmul.f32.gmra.mxu0 %v312
    %v3114 = vpop.f32.mrf.mxu0
    %v3115 = vadd.f32 %v3050, %v3114
    %3116 = vmatmul.f32.gmra.mxu0 %v314
    %v3117 = vpop.f32.mrf.mxu0
    %v3118 = vadd.f32 %v3053, %v3117
    %3119 = vmatmul.f32.gmra.mxu0 %v316
    %v3120 = vpop.f32.mrf.mxu0
    %v3121 = vadd.f32 %v3056, %v3120
    %3122 = vmatmul.f32.gmra.mxu0 %v318
    %v3123 = vpop.f32.mrf.mxu0
    %v3124 = vadd.f32 %v3059, %v3123
    %3125 = vmatmul.f32.gmra.mxu0 %v320
    %v3126 = vpop.f32.mrf.mxu0
    %v3127 = vadd.f32 %v3062, %v3126
    %3128 = vmatmul.f32.gmra.mxu0 %v322
    %v3129 = vpop.f32.mrf.mxu0
    %v3130 = vadd.f32 %v3065, %v3129
    %3131 = vdwg.mxu0
    %v3132 = vmul.f32 %v3085, %v401
    %v3133 = vmul.f32 %v3088, %v416
    %v3134 = vmul.f32 %v3091, %v431
    %v3135 = vmul.f32 %v3094, %v446
    %v3136 = vmul.f32 %v3097, %v461
    %v3137 = vmul.f32 %v3100, %v476
    %v3138 = vmul.f32 %v3103, %v491
    %v3139 = vmul.f32 %v3106, %v506
    %v3140 = vmul.f32 %v3109, %v521
    %v3141 = vmul.f32 %v3112, %v536
    %v3142 = vmul.f32 %v3115, %v551
    %v3143 = vmul.f32 %v3118, %v566
    %v3144 = vmul.f32 %v3121, %v581
    %v3145 = vmul.f32 %v3124, %v596
    %v3146 = vmul.f32 %v3127, %v611
    %v3147 = vmul.f32 %v3130, %v626
    %v3149 = vsel %vm2385, %v796, 0
    %v3152 = vsel %vm2385, %v797, 0
    %v3155 = vsel %vm2385, %v798, 0
    %v3158 = vsel %vm2385, %v799, 0
    %v3161 = vsel %vm2385, %v800, 0
    %v3164 = vsel %vm2385, %v801, 0
    %v3167 = vsel %vm2385, %v802, 0
    %v3170 = vsel %vm2385, %v803, 0
    %v3173 = vsel %vm2385, %v804, 0
    %v3176 = vsel %vm2385, %v805, 0
    %v3179 = vsel %vm2385, %v806, 0
    %v3182 = vsel %vm2385, %v807, 0
    %v3185 = vsel %vm2385, %v808, 0
    %v3188 = vsel %vm2385, %v809, 0
    %v3191 = vsel %vm2385, %v810, 0
    %v3194 = vsel %vm2385, %v811, 0
    %3196 = vmatpush.msra.mxu0 0.0
    %3197 = vmatpush.msra.mxu0 0.0
    %3198 = vmatpush.msra.mxu0 0.0
    %3199 = vmatpush.msra.mxu0 0.0
    %3200 = vmatpush.msra.mxu0 0.0
    %3201 = vmatpush.msra.mxu0 0.0
    %3202 = vmatpush.msra.mxu0 0.0
    %3203 = vmatpush.msra.mxu0 0.0
    %3204 = vmatpush.msra.mxu0 0.0
    %3205 = vmatpush.msra.mxu0 0.0
    %3206 = vmatpush.msra.mxu0 0.0
    %3207 = vmatpush.msra.mxu0 0.0
    %3208 = vmatpush.msra.mxu0 0.0
    %3209 = vmatpush.msra.mxu0 0.0
    %3210 = vmatpush.msra.mxu0 %v1561
    %3211 = vmatpush.msra.mxu0 %v1560
    %3212 = vmatmul.f32.gmra.mxu0 %v3149
    %v3213 = vpop.f32.mrf.mxu0
    %v3214 = vadd.f32 0.0, %v3213
    %3215 = vmatmul.f32.gmra.mxu0 %v3152
    %v3216 = vpop.f32.mrf.mxu0
    %v3217 = vadd.f32 0.0, %v3216
    %3218 = vmatmul.f32.gmra.mxu0 %v3155
    %v3219 = vpop.f32.mrf.mxu0
    %v3220 = vadd.f32 0.0, %v3219
    %3221 = vmatmul.f32.gmra.mxu0 %v3158
    %v3222 = vpop.f32.mrf.mxu0
    %v3223 = vadd.f32 0.0, %v3222
    %3224 = vmatmul.f32.gmra.mxu0 %v3161
    %v3225 = vpop.f32.mrf.mxu0
    %v3226 = vadd.f32 0.0, %v3225
    %3227 = vmatmul.f32.gmra.mxu0 %v3164
    %v3228 = vpop.f32.mrf.mxu0
    %v3229 = vadd.f32 0.0, %v3228
    %3230 = vmatmul.f32.gmra.mxu0 %v3167
    %v3231 = vpop.f32.mrf.mxu0
    %v3232 = vadd.f32 0.0, %v3231
    %3233 = vmatmul.f32.gmra.mxu0 %v3170
    %v3234 = vpop.f32.mrf.mxu0
    %v3235 = vadd.f32 0.0, %v3234
    %3236 = vmatmul.f32.gmra.mxu0 %v3173
    %v3237 = vpop.f32.mrf.mxu0
    %v3238 = vadd.f32 0.0, %v3237
    %3239 = vmatmul.f32.gmra.mxu0 %v3176
    %v3240 = vpop.f32.mrf.mxu0
    %v3241 = vadd.f32 0.0, %v3240
    %3242 = vmatmul.f32.gmra.mxu0 %v3179
    %v3243 = vpop.f32.mrf.mxu0
    %v3244 = vadd.f32 0.0, %v3243
    %3245 = vmatmul.f32.gmra.mxu0 %v3182
    %v3246 = vpop.f32.mrf.mxu0
    %v3247 = vadd.f32 0.0, %v3246
    %3248 = vmatmul.f32.gmra.mxu0 %v3185
    %v3249 = vpop.f32.mrf.mxu0
    %v3250 = vadd.f32 0.0, %v3249
    %3251 = vmatmul.f32.gmra.mxu0 %v3188
    %v3252 = vpop.f32.mrf.mxu0
    %v3253 = vadd.f32 0.0, %v3252
    %3254 = vmatmul.f32.gmra.mxu0 %v3191
    %v3255 = vpop.f32.mrf.mxu0
    %v3256 = vadd.f32 0.0, %v3255
    %3257 = vmatmul.f32.gmra.mxu0 %v3194
    %v3258 = vpop.f32.mrf.mxu0
    %v3259 = vadd.f32 0.0, %v3258
    %3260 = vdwg.mxu0
    %v3261 = vadd.f32 %v3132, %v3214
    %v3262 = vadd.f32 %v3133, %v3217
    %v3263 = vadd.f32 %v3134, %v3220
    %v3264 = vadd.f32 %v3135, %v3223
    %v3265 = vadd.f32 %v3136, %v3226
    %v3266 = vadd.f32 %v3137, %v3229
    %v3267 = vadd.f32 %v3138, %v3232
    %v3268 = vadd.f32 %v3139, %v3235
    %v3269 = vadd.f32 %v3140, %v3238
    %v3270 = vadd.f32 %v3141, %v3241
    %v3271 = vadd.f32 %v3142, %v3244
    %v3272 = vadd.f32 %v3143, %v3247
    %v3273 = vadd.f32 %v3144, %v3250
    %v3274 = vadd.f32 %v3145, %v3253
    %v3275 = vadd.f32 %v3146, %v3256
    %v3276 = vadd.f32 %v3147, %v3259
    %v3277 = vperm.slane %v1562, 0
    %v3278 = vadd.f32 %v3261, %v3277
    %v3279 = vadd.f32 %v3262, %v3277
    %v3280 = vadd.f32 %v3263, %v3277
    %v3281 = vadd.f32 %v3264, %v3277
    %v3282 = vadd.f32 %v3265, %v3277
    %v3283 = vadd.f32 %v3266, %v3277
    %v3284 = vadd.f32 %v3267, %v3277
    %v3285 = vadd.f32 %v3268, %v3277
    %v3286 = vadd.f32 %v3269, %v3277
    %v3287 = vadd.f32 %v3270, %v3277
    %v3288 = vadd.f32 %v3271, %v3277
    %v3289 = vadd.f32 %v3272, %v3277
    %v3290 = vadd.f32 %v3273, %v3277
    %v3291 = vadd.f32 %v3274, %v3277
    %v3292 = vadd.f32 %v3275, %v3277
    %v3293 = vadd.f32 %v3276, %v3277
    %vm3294 = vcmp.ge.f32.partialorder %v3278, 0.0
    %vm3295 = vcmp.ge.f32.partialorder %v3279, 0.0
    %vm3296 = vcmp.ge.f32.partialorder %v3280, 0.0
    %vm3297 = vcmp.ge.f32.partialorder %v3281, 0.0
    %vm3298 = vcmp.ge.f32.partialorder %v3282, 0.0
    %vm3299 = vcmp.ge.f32.partialorder %v3283, 0.0
    %vm3300 = vcmp.ge.f32.partialorder %v3284, 0.0
    %vm3301 = vcmp.ge.f32.partialorder %v3285, 0.0
    %vm3302 = vcmp.ge.f32.partialorder %v3286, 0.0
    %vm3303 = vcmp.ge.f32.partialorder %v3287, 0.0
    %vm3304 = vcmp.ge.f32.partialorder %v3288, 0.0
    %vm3305 = vcmp.ge.f32.partialorder %v3289, 0.0
    %vm3306 = vcmp.ge.f32.partialorder %v3290, 0.0
    %vm3307 = vcmp.ge.f32.partialorder %v3291, 0.0
    %vm3308 = vcmp.ge.f32.partialorder %v3292, 0.0
    %vm3309 = vcmp.ge.f32.partialorder %v3293, 0.0
    %v3310 = vmul.f32 %v3278, 0.01
    %v3311 = vmul.f32 %v3279, 0.01
    %v3312 = vmul.f32 %v3280, 0.01
    %v3313 = vmul.f32 %v3281, 0.01
    %v3314 = vmul.f32 %v3282, 0.01
    %v3315 = vmul.f32 %v3283, 0.01
    %v3316 = vmul.f32 %v3284, 0.01
    %v3317 = vmul.f32 %v3285, 0.01
    %v3318 = vmul.f32 %v3286, 0.01
    %v3319 = vmul.f32 %v3287, 0.01
    %v3320 = vmul.f32 %v3288, 0.01
    %v3321 = vmul.f32 %v3289, 0.01
    %v3322 = vmul.f32 %v3290, 0.01
    %v3323 = vmul.f32 %v3291, 0.01
    %v3324 = vmul.f32 %v3292, 0.01
    %v3325 = vmul.f32 %v3293, 0.01
    %v3326 = vsel %vm3294, %v3278, %v3310
    %v3327 = vsel %vm3295, %v3279, %v3311
    %v3328 = vsel %vm3296, %v3280, %v3312
    %v3329 = vsel %vm3297, %v3281, %v3313
    %v3330 = vsel %vm3298, %v3282, %v3314
    %v3331 = vsel %vm3299, %v3283, %v3315
    %v3332 = vsel %vm3300, %v3284, %v3316
    %v3333 = vsel %vm3301, %v3285, %v3317
    %v3334 = vsel %vm3302, %v3286, %v3318
    %v3335 = vsel %vm3303, %v3287, %v3319
    %v3336 = vsel %vm3304, %v3288, %v3320
    %v3337 = vsel %vm3305, %v3289, %v3321
    %v3338 = vsel %vm3306, %v3290, %v3322
    %v3339 = vsel %vm3307, %v3291, %v3323
    %v3340 = vsel %vm3308, %v3292, %v3324
    %v3341 = vsel %vm3309, %v3293, %v3325
    %3342 = vrot.lane.b32.xlu0 %v796, 16
    %v3343 = vpop.permute.xlu0 %3342
    %3344 = vrot.lane.b32.xlu0 %v797, 16
    %v3345 = vpop.permute.xlu0 %3344
    %3346 = vrot.lane.b32.xlu0 %v798, 16
    %v3347 = vpop.permute.xlu0 %3346
    %3348 = vrot.lane.b32.xlu0 %v799, 16
    %v3349 = vpop.permute.xlu0 %3348
    %3350 = vrot.lane.b32.xlu0 %v800, 16
    %v3351 = vpop.permute.xlu0 %3350
    %3352 = vrot.lane.b32.xlu0 %v801, 16
    %v3353 = vpop.permute.xlu0 %3352
    %3354 = vrot.lane.b32.xlu0 %v802, 16
    %v3355 = vpop.permute.xlu0 %3354
    %3356 = vrot.lane.b32.xlu0 %v803, 16
    %v3357 = vpop.permute.xlu0 %3356
    %3358 = vrot.lane.b32.xlu0 %v804, 16
    %v3359 = vpop.permute.xlu0 %3358
    %3360 = vrot.lane.b32.xlu0 %v805, 16
    %v3361 = vpop.permute.xlu0 %3360
    %3362 = vrot.lane.b32.xlu0 %v806, 16
    %v3363 = vpop.permute.xlu0 %3362
    %3364 = vrot.lane.b32.xlu0 %v807, 16
    %v3365 = vpop.permute.xlu0 %3364
    %3366 = vrot.lane.b32.xlu0 %v808, 16
    %v3367 = vpop.permute.xlu0 %3366
    %3368 = vrot.lane.b32.xlu0 %v809, 16
    %v3369 = vpop.permute.xlu0 %3368
    %3370 = vrot.lane.b32.xlu0 %v810, 16
    %v3371 = vpop.permute.xlu0 %3370
    %3372 = vrot.lane.b32.xlu0 %v811, 16
    %v3373 = vpop.permute.xlu0 %3372
    %v3390 = vsel %vm2385, %v3326, %v3343
    %v3391 = vsel %vm2385, %v3327, %v3345
    %v3392 = vsel %vm2385, %v3328, %v3347
    %v3393 = vsel %vm2385, %v3329, %v3349
    %v3394 = vsel %vm2385, %v3330, %v3351
    %v3395 = vsel %vm2385, %v3331, %v3353
    %v3396 = vsel %vm2385, %v3332, %v3355
    %v3397 = vsel %vm2385, %v3333, %v3357
    %v3398 = vsel %vm2385, %v3334, %v3359
    %v3399 = vsel %vm2385, %v3335, %v3361
    %v3400 = vsel %vm2385, %v3336, %v3363
    %v3401 = vsel %vm2385, %v3337, %v3365
    %v3402 = vsel %vm2385, %v3338, %v3367
    %v3403 = vsel %vm2385, %v3339, %v3369
    %v3404 = vsel %vm2385, %v3340, %v3371
    %v3405 = vsel %vm2385, %v3341, %v3373
    %v3406 = vperm.slane %v1567, 0
    %v3408 = vsel %vm2418, %v3390, 0
    %v3411 = vsel %vm2418, %v3391, 0
    %v3414 = vsel %vm2418, %v3392, 0
    %v3417 = vsel %vm2418, %v3393, 0
    %v3420 = vsel %vm2418, %v3394, 0
    %v3423 = vsel %vm2418, %v3395, 0
    %v3426 = vsel %vm2418, %v3396, 0
    %v3429 = vsel %vm2418, %v3397, 0
    %v3432 = vsel %vm2418, %v3398, 0
    %v3435 = vsel %vm2418, %v3399, 0
    %v3438 = vsel %vm2418, %v3400, 0
    %v3441 = vsel %vm2418, %v3401, 0
    %v3444 = vsel %vm2418, %v3402, 0
    %v3447 = vsel %vm2418, %v3403, 0
    %v3450 = vsel %vm2418, %v3404, 0
    %v3453 = vsel %vm2418, %v3405, 0
    %3455 = vmatpush.msra.mxu0 0.0
    %3456 = vmatpush.msra.mxu0 0.0
    %3457 = vmatpush.msra.mxu0 0.0
    %3458 = vmatpush.msra.mxu0 0.0
    %3459 = vmatpush.msra.mxu0 0.0
    %3460 = vmatpush.msra.mxu0 0.0
    %3461 = vmatpush.msra.mxu0 0.0
    %3462 = vmatpush.msra.mxu0 0.0
    %3463 = vmatpush.msra.mxu0 0.0
    %3464 = vmatpush.msra.mxu0 0.0
    %3465 = vmatpush.msra.mxu0 0.0
    %3466 = vmatpush.msra.mxu0 0.0
    %3467 = vmatpush.msra.mxu0 %v1566
    %3468 = vmatpush.msra.mxu0 %v1565
    %3469 = vmatpush.msra.mxu0 %v1564
    %3470 = vmatpush.msra.mxu0 %v1563
    %3471 = vmatmul.f32.gmra.mxu0 %v3408
    %v3472 = vpop.f32.mrf.mxu0
    %v3473 = vadd.f32 %v3406, %v3472
    %3474 = vmatmul.f32.gmra.mxu0 %v3411
    %v3475 = vpop.f32.mrf.mxu0
    %v3476 = vadd.f32 %v3406, %v3475
    %3477 = vmatmul.f32.gmra.mxu0 %v3414
    %v3478 = vpop.f32.mrf.mxu0
    %v3479 = vadd.f32 %v3406, %v3478
    %3480 = vmatmul.f32.gmra.mxu0 %v3417
    %v3481 = vpop.f32.mrf.mxu0
    %v3482 = vadd.f32 %v3406, %v3481
    %3483 = vmatmul.f32.gmra.mxu0 %v3420
    %v3484 = vpop.f32.mrf.mxu0
    %v3485 = vadd.f32 %v3406, %v3484
    %3486 = vmatmul.f32.gmra.mxu0 %v3423
    %v3487 = vpop.f32.mrf.mxu0
    %v3488 = vadd.f32 %v3406, %v3487
    %3489 = vmatmul.f32.gmra.mxu0 %v3426
    %v3490 = vpop.f32.mrf.mxu0
    %v3491 = vadd.f32 %v3406, %v3490
    %3492 = vmatmul.f32.gmra.mxu0 %v3429
    %v3493 = vpop.f32.mrf.mxu0
    %v3494 = vadd.f32 %v3406, %v3493
    %3495 = vmatmul.f32.gmra.mxu0 %v3432
    %v3496 = vpop.f32.mrf.mxu0
    %v3497 = vadd.f32 %v3406, %v3496
    %3498 = vmatmul.f32.gmra.mxu0 %v3435
    %v3499 = vpop.f32.mrf.mxu0
    %v3500 = vadd.f32 %v3406, %v3499
    %3501 = vmatmul.f32.gmra.mxu0 %v3438
    %v3502 = vpop.f32.mrf.mxu0
    %v3503 = vadd.f32 %v3406, %v3502
    %3504 = vmatmul.f32.gmra.mxu0 %v3441
    %v3505 = vpop.f32.mrf.mxu0
    %v3506 = vadd.f32 %v3406, %v3505
    %3507 = vmatmul.f32.gmra.mxu0 %v3444
    %v3508 = vpop.f32.mrf.mxu0
    %v3509 = vadd.f32 %v3406, %v3508
    %3510 = vmatmul.f32.gmra.mxu0 %v3447
    %v3511 = vpop.f32.mrf.mxu0
    %v3512 = vadd.f32 %v3406, %v3511
    %3513 = vmatmul.f32.gmra.mxu0 %v3450
    %v3514 = vpop.f32.mrf.mxu0
    %v3515 = vadd.f32 %v3406, %v3514
    %3516 = vmatmul.f32.gmra.mxu0 %v3453
    %v3517 = vpop.f32.mrf.mxu0
    %v3518 = vadd.f32 %v3406, %v3517
    %3519 = vdwg.mxu0
    %v3520 = vsub.f32 0.0, %v3473
    %v3521 = vsub.f32 0.0, %v3476
    %v3522 = vsub.f32 0.0, %v3479
    %v3523 = vsub.f32 0.0, %v3482
    %v3524 = vsub.f32 0.0, %v3485
    %v3525 = vsub.f32 0.0, %v3488
    %v3526 = vsub.f32 0.0, %v3491
    %v3527 = vsub.f32 0.0, %v3494
    %v3528 = vsub.f32 0.0, %v3497
    %v3529 = vsub.f32 0.0, %v3500
    %v3530 = vsub.f32 0.0, %v3503
    %v3531 = vsub.f32 0.0, %v3506
    %v3532 = vsub.f32 0.0, %v3509
    %v3533 = vsub.f32 0.0, %v3512
    %v3534 = vsub.f32 0.0, %v3515
    %v3535 = vsub.f32 0.0, %v3518
    %v3536 = vmul.f32 %v3520, 1.442695
    %v3537 = vpow.pop %v3536
    %v3538 = vmul.f32 %v3521, 1.442695
    %v3539 = vpow.pop %v3538
    %v3540 = vmul.f32 %v3522, 1.442695
    %v3541 = vpow.pop %v3540
    %v3542 = vmul.f32 %v3523, 1.442695
    %v3543 = vpow.pop %v3542
    %v3544 = vmul.f32 %v3524, 1.442695
    %v3545 = vpow.pop %v3544
    %v3546 = vmul.f32 %v3525, 1.442695
    %v3547 = vpow.pop %v3546
    %v3548 = vmul.f32 %v3526, 1.442695
    %v3549 = vpow.pop %v3548
    %v3550 = vmul.f32 %v3527, 1.442695
    %v3551 = vpow.pop %v3550
    %v3552 = vmul.f32 %v3528, 1.442695
    %v3553 = vpow.pop %v3552
    %v3554 = vmul.f32 %v3529, 1.442695
    %v3555 = vpow.pop %v3554
    %v3556 = vmul.f32 %v3530, 1.442695
    %v3557 = vpow.pop %v3556
    %v3558 = vmul.f32 %v3531, 1.442695
    %v3559 = vpow.pop %v3558
    %v3560 = vmul.f32 %v3532, 1.442695
    %v3561 = vpow.pop %v3560
    %v3562 = vmul.f32 %v3533, 1.442695
    %v3563 = vpow.pop %v3562
    %v3564 = vmul.f32 %v3534, 1.442695
    %v3565 = vpow.pop %v3564
    %v3566 = vmul.f32 %v3535, 1.442695
    %v3567 = vpow.pop %v3566
    %v3568 = vadd.f32 %v3537, 1.0
    %v3569 = vadd.f32 %v3539, 1.0
    %v3570 = vadd.f32 %v3541, 1.0
    %v3571 = vadd.f32 %v3543, 1.0
    %v3572 = vadd.f32 %v3545, 1.0
    %v3573 = vadd.f32 %v3547, 1.0
    %v3574 = vadd.f32 %v3549, 1.0
    %v3575 = vadd.f32 %v3551, 1.0
    %v3576 = vadd.f32 %v3553, 1.0
    %v3577 = vadd.f32 %v3555, 1.0
    %v3578 = vadd.f32 %v3557, 1.0
    %v3579 = vadd.f32 %v3559, 1.0
    %v3580 = vadd.f32 %v3561, 1.0
    %v3581 = vadd.f32 %v3563, 1.0
    %v3582 = vadd.f32 %v3565, 1.0
    %v3583 = vadd.f32 %v3567, 1.0
    %v3584 = vrcp.pop %v3568
    %v3585 = vrcp.pop %v3569
    %v3586 = vrcp.pop %v3570
    %v3587 = vrcp.pop %v3571
    %v3588 = vrcp.pop %v3572
    %v3589 = vrcp.pop %v3573
    %v3590 = vrcp.pop %v3574
    %v3591 = vrcp.pop %v3575
    %v3592 = vrcp.pop %v3576
    %v3593 = vrcp.pop %v3577
    %v3594 = vrcp.pop %v3578
    %v3595 = vrcp.pop %v3579
    %v3596 = vrcp.pop %v3580
    %v3597 = vrcp.pop %v3581
    %v3598 = vrcp.pop %v3582
    %v3599 = vrcp.pop %v3583
    %3616 = vrot.lane.b32.xlu0 %v3473, 80
    %v3617 = vpop.permute.xlu0 %3616
    %3618 = vrot.lane.b32.xlu0 %v3476, 80
    %v3619 = vpop.permute.xlu0 %3618
    %3620 = vrot.lane.b32.xlu0 %v3479, 80
    %v3621 = vpop.permute.xlu0 %3620
    %3622 = vrot.lane.b32.xlu0 %v3482, 80
    %v3623 = vpop.permute.xlu0 %3622
    %3624 = vrot.lane.b32.xlu0 %v3485, 80
    %v3625 = vpop.permute.xlu0 %3624
    %3626 = vrot.lane.b32.xlu0 %v3488, 80
    %v3627 = vpop.permute.xlu0 %3626
    %3628 = vrot.lane.b32.xlu0 %v3491, 80
    %v3629 = vpop.permute.xlu0 %3628
    %3630 = vrot.lane.b32.xlu0 %v3494, 80
    %v3631 = vpop.permute.xlu0 %3630
    %3632 = vrot.lane.b32.xlu0 %v3497, 80
    %v3633 = vpop.permute.xlu0 %3632
    %3634 = vrot.lane.b32.xlu0 %v3500, 80
    %v3635 = vpop.permute.xlu0 %3634
    %3636 = vrot.lane.b32.xlu0 %v3503, 80
    %v3637 = vpop.permute.xlu0 %3636
    %3638 = vrot.lane.b32.xlu0 %v3506, 80
    %v3639 = vpop.permute.xlu0 %3638
    %3640 = vrot.lane.b32.xlu0 %v3509, 80
    %v3641 = vpop.permute.xlu0 %3640
    %3642 = vrot.lane.b32.xlu0 %v3512, 80
    %v3643 = vpop.permute.xlu0 %3642
    %3644 = vrot.lane.b32.xlu0 %v3515, 80
    %v3645 = vpop.permute.xlu0 %3644
    %3646 = vrot.lane.b32.xlu0 %v3518, 80
    %v3647 = vpop.permute.xlu0 %3646
    %v3664 = vmul.f32 %v3584, %v3617
    %v3665 = vmul.f32 %v3585, %v3619
    %v3666 = vmul.f32 %v3586, %v3621
    %v3667 = vmul.f32 %v3587, %v3623
    %v3668 = vmul.f32 %v3588, %v3625
    %v3669 = vmul.f32 %v3589, %v3627
    %v3670 = vmul.f32 %v3590, %v3629
    %v3671 = vmul.f32 %v3591, %v3631
    %v3672 = vmul.f32 %v3592, %v3633
    %v3673 = vmul.f32 %v3593, %v3635
    %v3674 = vmul.f32 %v3594, %v3637
    %v3675 = vmul.f32 %v3595, %v3639
    %v3676 = vmul.f32 %v3596, %v3641
    %v3677 = vmul.f32 %v3597, %v3643
    %v3678 = vmul.f32 %v3598, %v3645
    %v3679 = vmul.f32 %v3599, %v3647
    %3696 = vrot.lane.b32.xlu0 %v3664, 32
    %v3697 = vpop.permute.xlu0 %3696
    %3698 = vrot.lane.b32.xlu0 %v3665, 32
    %v3699 = vpop.permute.xlu0 %3698
    %3700 = vrot.lane.b32.xlu0 %v3666, 32
    %v3701 = vpop.permute.xlu0 %3700
    %3702 = vrot.lane.b32.xlu0 %v3667, 32
    %v3703 = vpop.permute.xlu0 %3702
    %3704 = vrot.lane.b32.xlu0 %v3668, 32
    %v3705 = vpop.permute.xlu0 %3704
    %3706 = vrot.lane.b32.xlu0 %v3669, 32
    %v3707 = vpop.permute.xlu0 %3706
    %3708 = vrot.lane.b32.xlu0 %v3670, 32
    %v3709 = vpop.permute.xlu0 %3708
    %3710 = vrot.lane.b32.xlu0 %v3671, 32
    %v3711 = vpop.permute.xlu0 %3710
    %3712 = vrot.lane.b32.xlu0 %v3672, 32
    %v3713 = vpop.permute.xlu0 %3712
    %3714 = vrot.lane.b32.xlu0 %v3673, 32
    %v3715 = vpop.permute.xlu0 %3714
    %3716 = vrot.lane.b32.xlu0 %v3674, 32
    %v3717 = vpop.permute.xlu0 %3716
    %3718 = vrot.lane.b32.xlu0 %v3675, 32
    %v3719 = vpop.permute.xlu0 %3718
    %3720 = vrot.lane.b32.xlu0 %v3676, 32
    %v3721 = vpop.permute.xlu0 %3720
    %3722 = vrot.lane.b32.xlu0 %v3677, 32
    %v3723 = vpop.permute.xlu0 %3722
    %3724 = vrot.lane.b32.xlu0 %v3678, 32
    %v3725 = vpop.permute.xlu0 %3724
    %3726 = vrot.lane.b32.xlu0 %v3679, 32
    %v3727 = vpop.permute.xlu0 %3726
    %v3744 = vadd.f32 %v3473, %v3697
    %v3745 = vadd.f32 %v3476, %v3699
    %v3746 = vadd.f32 %v3479, %v3701
    %v3747 = vadd.f32 %v3482, %v3703
    %v3748 = vadd.f32 %v3485, %v3705
    %v3749 = vadd.f32 %v3488, %v3707
    %v3750 = vadd.f32 %v3491, %v3709
    %v3751 = vadd.f32 %v3494, %v3711
    %v3752 = vadd.f32 %v3497, %v3713
    %v3753 = vadd.f32 %v3500, %v3715
    %v3754 = vadd.f32 %v3503, %v3717
    %v3755 = vadd.f32 %v3506, %v3719
    %v3756 = vadd.f32 %v3509, %v3721
    %v3757 = vadd.f32 %v3512, %v3723
    %v3758 = vadd.f32 %v3515, %v3725
    %v3759 = vadd.f32 %v3518, %v3727
    %v3760 = vtanh.pop %v3744
    %v3761 = vtanh.pop %v3745
    %v3762 = vtanh.pop %v3746
    %v3763 = vtanh.pop %v3747
    %v3764 = vtanh.pop %v3748
    %v3765 = vtanh.pop %v3749
    %v3766 = vtanh.pop %v3750
    %v3767 = vtanh.pop %v3751
    %v3768 = vtanh.pop %v3752
    %v3769 = vtanh.pop %v3753
    %v3770 = vtanh.pop %v3754
    %v3771 = vtanh.pop %v3755
    %v3772 = vtanh.pop %v3756
    %v3773 = vtanh.pop %v3757
    %v3774 = vtanh.pop %v3758
    %v3775 = vtanh.pop %v3759
    %v3776 = vsub.f32 1.0, %v3584
    %v3777 = vsub.f32 1.0, %v3585
    %v3778 = vsub.f32 1.0, %v3586
    %v3779 = vsub.f32 1.0, %v3587
    %v3780 = vsub.f32 1.0, %v3588
    %v3781 = vsub.f32 1.0, %v3589
    %v3782 = vsub.f32 1.0, %v3590
    %v3783 = vsub.f32 1.0, %v3591
    %v3784 = vsub.f32 1.0, %v3592
    %v3785 = vsub.f32 1.0, %v3593
    %v3786 = vsub.f32 1.0, %v3594
    %v3787 = vsub.f32 1.0, %v3595
    %v3788 = vsub.f32 1.0, %v3596
    %v3789 = vsub.f32 1.0, %v3597
    %v3790 = vsub.f32 1.0, %v3598
    %v3791 = vsub.f32 1.0, %v3599
    %3808 = vrot.lane.b32.xlu0 %v3760, 112
    %v3809 = vpop.permute.xlu0 %3808
    %3810 = vrot.lane.b32.xlu0 %v3761, 112
    %v3811 = vpop.permute.xlu0 %3810
    %3812 = vrot.lane.b32.xlu0 %v3762, 112
    %v3813 = vpop.permute.xlu0 %3812
    %3814 = vrot.lane.b32.xlu0 %v3763, 112
    %v3815 = vpop.permute.xlu0 %3814
    %3816 = vrot.lane.b32.xlu0 %v3764, 112
    %v3817 = vpop.permute.xlu0 %3816
    %3818 = vrot.lane.b32.xlu0 %v3765, 112
    %v3819 = vpop.permute.xlu0 %3818
    %3820 = vrot.lane.b32.xlu0 %v3766, 112
    %v3821 = vpop.permute.xlu0 %3820
    %3822 = vrot.lane.b32.xlu0 %v3767, 112
    %v3823 = vpop.permute.xlu0 %3822
    %3824 = vrot.lane.b32.xlu0 %v3768, 112
    %v3825 = vpop.permute.xlu0 %3824
    %3826 = vrot.lane.b32.xlu0 %v3769, 112
    %v3827 = vpop.permute.xlu0 %3826
    %3828 = vrot.lane.b32.xlu0 %v3770, 112
    %v3829 = vpop.permute.xlu0 %3828
    %3830 = vrot.lane.b32.xlu0 %v3771, 112
    %v3831 = vpop.permute.xlu0 %3830
    %3832 = vrot.lane.b32.xlu0 %v3772, 112
    %v3833 = vpop.permute.xlu0 %3832
    %3834 = vrot.lane.b32.xlu0 %v3773, 112
    %v3835 = vpop.permute.xlu0 %3834
    %3836 = vrot.lane.b32.xlu0 %v3774, 112
    %v3837 = vpop.permute.xlu0 %3836
    %3838 = vrot.lane.b32.xlu0 %v3775, 112
    %v3839 = vpop.permute.xlu0 %3838
    %v3856 = vmul.f32 %v3776, %v3809
    %v3857 = vmul.f32 %v3777, %v3811
    %v3858 = vmul.f32 %v3778, %v3813
    %v3859 = vmul.f32 %v3779, %v3815
    %v3860 = vmul.f32 %v3780, %v3817
    %v3861 = vmul.f32 %v3781, %v3819
    %v3862 = vmul.f32 %v3782, %v3821
    %v3863 = vmul.f32 %v3783, %v3823
    %v3864 = vmul.f32 %v3784, %v3825
    %v3865 = vmul.f32 %v3785, %v3827
    %v3866 = vmul.f32 %v3786, %v3829
    %v3867 = vmul.f32 %v3787, %v3831
    %v3868 = vmul.f32 %v3788, %v3833
    %v3869 = vmul.f32 %v3789, %v3835
    %v3870 = vmul.f32 %v3790, %v3837
    %v3871 = vmul.f32 %v3791, %v3839
    %v3872 = vmul.f32 %v3584, %v3343
    %v3873 = vmul.f32 %v3585, %v3345
    %v3874 = vmul.f32 %v3586, %v3347
    %v3875 = vmul.f32 %v3587, %v3349
    %v3876 = vmul.f32 %v3588, %v3351
    %v3877 = vmul.f32 %v3589, %v3353
    %v3878 = vmul.f32 %v3590, %v3355
    %v3879 = vmul.f32 %v3591, %v3357
    %v3880 = vmul.f32 %v3592, %v3359
    %v3881 = vmul.f32 %v3593, %v3361
    %v3882 = vmul.f32 %v3594, %v3363
    %v3883 = vmul.f32 %v3595, %v3365
    %v3884 = vmul.f32 %v3596, %v3367
    %v3885 = vmul.f32 %v3597, %v3369
    %v3886 = vmul.f32 %v3598, %v3371
    %v3887 = vmul.f32 %v3599, %v3373
    %v3888 = vadd.f32 %v3856, %v3872
    %v3889 = vadd.f32 %v3857, %v3873
    %v3890 = vadd.f32 %v3858, %v3874
    %v3891 = vadd.f32 %v3859, %v3875
    %v3892 = vadd.f32 %v3860, %v3876
    %v3893 = vadd.f32 %v3861, %v3877
    %v3894 = vadd.f32 %v3862, %v3878
    %v3895 = vadd.f32 %v3863, %v3879
    %v3896 = vadd.f32 %v3864, %v3880
    %v3897 = vadd.f32 %v3865, %v3881
    %v3898 = vadd.f32 %v3866, %v3882
    %v3899 = vadd.f32 %v3867, %v3883
    %v3900 = vadd.f32 %v3868, %v3884
    %v3901 = vadd.f32 %v3869, %v3885
    %v3902 = vadd.f32 %v3870, %v3886
    %v3903 = vadd.f32 %v3871, %v3887
    %3920 = vrot.lane.b32.xlu0 %v3888, 112
    %v3921 = vpop.permute.xlu0 %3920
    %3922 = vrot.lane.b32.xlu0 %v3889, 112
    %v3923 = vpop.permute.xlu0 %3922
    %3924 = vrot.lane.b32.xlu0 %v3890, 112
    %v3925 = vpop.permute.xlu0 %3924
    %3926 = vrot.lane.b32.xlu0 %v3891, 112
    %v3927 = vpop.permute.xlu0 %3926
    %3928 = vrot.lane.b32.xlu0 %v3892, 112
    %v3929 = vpop.permute.xlu0 %3928
    %3930 = vrot.lane.b32.xlu0 %v3893, 112
    %v3931 = vpop.permute.xlu0 %3930
    %3932 = vrot.lane.b32.xlu0 %v3894, 112
    %v3933 = vpop.permute.xlu0 %3932
    %3934 = vrot.lane.b32.xlu0 %v3895, 112
    %v3935 = vpop.permute.xlu0 %3934
    %3936 = vrot.lane.b32.xlu0 %v3896, 112
    %v3937 = vpop.permute.xlu0 %3936
    %3938 = vrot.lane.b32.xlu0 %v3897, 112
    %v3939 = vpop.permute.xlu0 %3938
    %3940 = vrot.lane.b32.xlu0 %v3898, 112
    %v3941 = vpop.permute.xlu0 %3940
    %3942 = vrot.lane.b32.xlu0 %v3899, 112
    %v3943 = vpop.permute.xlu0 %3942
    %3944 = vrot.lane.b32.xlu0 %v3900, 112
    %v3945 = vpop.permute.xlu0 %3944
    %3946 = vrot.lane.b32.xlu0 %v3901, 112
    %v3947 = vpop.permute.xlu0 %3946
    %3948 = vrot.lane.b32.xlu0 %v3902, 112
    %v3949 = vpop.permute.xlu0 %3948
    %3950 = vrot.lane.b32.xlu0 %v3903, 112
    %v3951 = vpop.permute.xlu0 %3950
    %3968 = vmatpush.msra.mxu0 %v3951
    %3969 = vmatpush.msra.mxu0 %v3949
    %3970 = vmatpush.msra.mxu0 %v3947
    %3971 = vmatpush.msra.mxu0 %v3945
    %3972 = vmatpush.msra.mxu0 %v3943
    %3973 = vmatpush.msra.mxu0 %v3941
    %3974 = vmatpush.msra.mxu0 %v3939
    %3975 = vmatpush.msra.mxu0 %v3937
    %3976 = vmatpush.msra.mxu0 %v3935
    %3977 = vmatpush.msra.mxu0 %v3933
    %3978 = vmatpush.msra.mxu0 %v3931
    %3979 = vmatpush.msra.mxu0 %v3929
    %3980 = vmatpush.msra.mxu0 %v3927
    %3981 = vmatpush.msra.mxu0 %v3925
    %3982 = vmatpush.msra.mxu0 %v3923
    %3983 = vmatpush.msra.mxu0 %v3921
    %3984 = vmatmul.f32.gmra.mxu0 %v207
    %v3985 = vpop.f32.mrf.mxu0
    %v3986 = vadd.f32 0.0, %v3985
    %3987 = vmatmul.f32.gmra.mxu0 %v208
    %v3988 = vpop.f32.mrf.mxu0
    %v3989 = vadd.f32 0.0, %v3988
    %3990 = vmatmul.f32.gmra.mxu0 %v209
    %v3991 = vpop.f32.mrf.mxu0
    %v3992 = vadd.f32 0.0, %v3991
    %3993 = vmatmul.f32.gmra.mxu0 %v210
    %v3994 = vpop.f32.mrf.mxu0
    %v3995 = vadd.f32 0.0, %v3994
    %3996 = vmatmul.f32.gmra.mxu0 %v211
    %v3997 = vpop.f32.mrf.mxu0
    %v3998 = vadd.f32 0.0, %v3997
    %3999 = vmatmul.f32.gmra.mxu0 %v212
    %v4000 = vpop.f32.mrf.mxu0
    %v4001 = vadd.f32 0.0, %v4000
    %4002 = vmatmul.f32.gmra.mxu0 %v213
    %v4003 = vpop.f32.mrf.mxu0
    %v4004 = vadd.f32 0.0, %v4003
    %4005 = vmatmul.f32.gmra.mxu0 %v214
    %v4006 = vpop.f32.mrf.mxu0
    %v4007 = vadd.f32 0.0, %v4006
    %4008 = vmatmul.f32.gmra.mxu0 %v215
    %v4009 = vpop.f32.mrf.mxu0
    %v4010 = vadd.f32 0.0, %v4009
    %4011 = vmatmul.f32.gmra.mxu0 %v216
    %v4012 = vpop.f32.mrf.mxu0
    %v4013 = vadd.f32 0.0, %v4012
    %4014 = vmatmul.f32.gmra.mxu0 %v217
    %v4015 = vpop.f32.mrf.mxu0
    %v4016 = vadd.f32 0.0, %v4015
    %4017 = vmatmul.f32.gmra.mxu0 %v218
    %v4018 = vpop.f32.mrf.mxu0
    %v4019 = vadd.f32 0.0, %v4018
    %4020 = vmatmul.f32.gmra.mxu0 %v219
    %v4021 = vpop.f32.mrf.mxu0
    %v4022 = vadd.f32 0.0, %v4021
    %4023 = vmatmul.f32.gmra.mxu0 %v220
    %v4024 = vpop.f32.mrf.mxu0
    %v4025 = vadd.f32 0.0, %v4024
    %4026 = vmatmul.f32.gmra.mxu0 %v221
    %v4027 = vpop.f32.mrf.mxu0
    %v4028 = vadd.f32 0.0, %v4027
    %4029 = vmatmul.f32.gmra.mxu0 %v222
    %v4030 = vpop.f32.mrf.mxu0
    %v4031 = vadd.f32 0.0, %v4030
    %4032 = vmatmul.f32.gmra.mxu0 %v223
    %v4033 = vpop.f32.mrf.mxu0
    %v4034 = vadd.f32 0.0, %v4033
    %4035 = vmatmul.f32.gmra.mxu0 %v224
    %v4036 = vpop.f32.mrf.mxu0
    %v4037 = vadd.f32 0.0, %v4036
    %4038 = vmatmul.f32.gmra.mxu0 %v225
    %v4039 = vpop.f32.mrf.mxu0
    %v4040 = vadd.f32 0.0, %v4039
    %4041 = vmatmul.f32.gmra.mxu0 %v226
    %v4042 = vpop.f32.mrf.mxu0
    %v4043 = vadd.f32 0.0, %v4042
    %4044 = vmatmul.f32.gmra.mxu0 %v227
    %v4045 = vpop.f32.mrf.mxu0
    %v4046 = vadd.f32 0.0, %v4045
    %4047 = vmatmul.f32.gmra.mxu0 %v228
    %v4048 = vpop.f32.mrf.mxu0
    %v4049 = vadd.f32 0.0, %v4048
    %4050 = vmatmul.f32.gmra.mxu0 %v229
    %v4051 = vpop.f32.mrf.mxu0
    %v4052 = vadd.f32 0.0, %v4051
    %4053 = vmatmul.f32.gmra.mxu0 %v230
    %v4054 = vpop.f32.mrf.mxu0
    %v4055 = vadd.f32 0.0, %v4054
    %4056 = vmatmul.f32.gmra.mxu0 %v231
    %v4057 = vpop.f32.mrf.mxu0
    %v4058 = vadd.f32 0.0, %v4057
    %4059 = vmatmul.f32.gmra.mxu0 %v232
    %v4060 = vpop.f32.mrf.mxu0
    %v4061 = vadd.f32 0.0, %v4060
    %4062 = vmatmul.f32.gmra.mxu0 %v233
    %v4063 = vpop.f32.mrf.mxu0
    %v4064 = vadd.f32 0.0, %v4063
    %4065 = vmatmul.f32.gmra.mxu0 %v234
    %v4066 = vpop.f32.mrf.mxu0
    %v4067 = vadd.f32 0.0, %v4066
    %4068 = vmatmul.f32.gmra.mxu0 %v235
    %v4069 = vpop.f32.mrf.mxu0
    %v4070 = vadd.f32 0.0, %v4069
    %4071 = vmatmul.f32.gmra.mxu0 %v236
    %v4072 = vpop.f32.mrf.mxu0
    %v4073 = vadd.f32 0.0, %v4072
    %4074 = vmatmul.f32.gmra.mxu0 %v237
    %v4075 = vpop.f32.mrf.mxu0
    %v4076 = vadd.f32 0.0, %v4075
    %4077 = vmatmul.f32.gmra.mxu0 %v238
    %v4078 = vpop.f32.mrf.mxu0
    %v4079 = vadd.f32 0.0, %v4078
    %4080 = vdwg.mxu0
    %4113 = vrot.lane.b32.xlu0 %v3986, 16
    %v4114 = vpop.permute.xlu0 %4113
    %4115 = vrot.lane.b32.xlu0 %v3989, 16
    %v4116 = vpop.permute.xlu0 %4115
    %4117 = vrot.lane.b32.xlu0 %v3992, 16
    %v4118 = vpop.permute.xlu0 %4117
    %4119 = vrot.lane.b32.xlu0 %v3995, 16
    %v4120 = vpop.permute.xlu0 %4119
    %4121 = vrot.lane.b32.xlu0 %v3998, 16
    %v4122 = vpop.permute.xlu0 %4121
    %4123 = vrot.lane.b32.xlu0 %v4001, 16
    %v4124 = vpop.permute.xlu0 %4123
    %4125 = vrot.lane.b32.xlu0 %v4004, 16
    %v4126 = vpop.permute.xlu0 %4125
    %4127 = vrot.lane.b32.xlu0 %v4007, 16
    %v4128 = vpop.permute.xlu0 %4127
    %4129 = vrot.lane.b32.xlu0 %v4010, 16
    %v4130 = vpop.permute.xlu0 %4129
    %4131 = vrot.lane.b32.xlu0 %v4013, 16
    %v4132 = vpop.permute.xlu0 %4131
    %4133 = vrot.lane.b32.xlu0 %v4016, 16
    %v4134 = vpop.permute.xlu0 %4133
    %4135 = vrot.lane.b32.xlu0 %v4019, 16
    %v4136 = vpop.permute.xlu0 %4135
    %4137 = vrot.lane.b32.xlu0 %v4022, 16
    %v4138 = vpop.permute.xlu0 %4137
    %4139 = vrot.lane.b32.xlu0 %v4025, 16
    %v4140 = vpop.permute.xlu0 %4139
    %4141 = vrot.lane.b32.xlu0 %v4028, 16
    %v4142 = vpop.permute.xlu0 %4141
    %4143 = vrot.lane.b32.xlu0 %v4031, 16
    %v4144 = vpop.permute.xlu0 %4143
    %4145 = vrot.lane.b32.xlu0 %v4034, 16
    %v4146 = vpop.permute.xlu0 %4145
    %4147 = vrot.lane.b32.xlu0 %v4037, 16
    %v4148 = vpop.permute.xlu0 %4147
    %4149 = vrot.lane.b32.xlu0 %v4040, 16
    %v4150 = vpop.permute.xlu0 %4149
    %4151 = vrot.lane.b32.xlu0 %v4043, 16
    %v4152 = vpop.permute.xlu0 %4151
    %4153 = vrot.lane.b32.xlu0 %v4046, 16
    %v4154 = vpop.permute.xlu0 %4153
    %4155 = vrot.lane.b32.xlu0 %v4049, 16
    %v4156 = vpop.permute.xlu0 %4155
    %4157 = vrot.lane.b32.xlu0 %v4052, 16
    %v4158 = vpop.permute.xlu0 %4157
    %4159 = vrot.lane.b32.xlu0 %v4055, 16
    %v4160 = vpop.permute.xlu0 %4159
    %4161 = vrot.lane.b32.xlu0 %v4058, 16
    %v4162 = vpop.permute.xlu0 %4161
    %4163 = vrot.lane.b32.xlu0 %v4061, 16
    %v4164 = vpop.permute.xlu0 %4163
    %4165 = vrot.lane.b32.xlu0 %v4064, 16
    %v4166 = vpop.permute.xlu0 %4165
    %4167 = vrot.lane.b32.xlu0 %v4067, 16
    %v4168 = vpop.permute.xlu0 %4167
    %4169 = vrot.lane.b32.xlu0 %v4070, 16
    %v4170 = vpop.permute.xlu0 %4169
    %4171 = vrot.lane.b32.xlu0 %v4073, 16
    %v4172 = vpop.permute.xlu0 %4171
    %4173 = vrot.lane.b32.xlu0 %v4076, 16
    %v4174 = vpop.permute.xlu0 %4173
    %4175 = vrot.lane.b32.xlu0 %v4079, 16
    %v4176 = vpop.permute.xlu0 %4175
    %4209 = vrot.lane.b32.xlu0 %v3986, 32
    %v4210 = vpop.permute.xlu0 %4209
    %4211 = vrot.lane.b32.xlu0 %v3989, 32
    %v4212 = vpop.permute.xlu0 %4211
    %4213 = vrot.lane.b32.xlu0 %v3992, 32
    %v4214 = vpop.permute.xlu0 %4213
    %4215 = vrot.lane.b32.xlu0 %v3995, 32
    %v4216 = vpop.permute.xlu0 %4215
    %4217 = vrot.lane.b32.xlu0 %v3998, 32
    %v4218 = vpop.permute.xlu0 %4217
    %4219 = vrot.lane.b32.xlu0 %v4001, 32
    %v4220 = vpop.permute.xlu0 %4219
    %4221 = vrot.lane.b32.xlu0 %v4004, 32
    %v4222 = vpop.permute.xlu0 %4221
    %4223 = vrot.lane.b32.xlu0 %v4007, 32
    %v4224 = vpop.permute.xlu0 %4223
    %4225 = vrot.lane.b32.xlu0 %v4010, 32
    %v4226 = vpop.permute.xlu0 %4225
    %4227 = vrot.lane.b32.xlu0 %v4013, 32
    %v4228 = vpop.permute.xlu0 %4227
    %4229 = vrot.lane.b32.xlu0 %v4016, 32
    %v4230 = vpop.permute.xlu0 %4229
    %4231 = vrot.lane.b32.xlu0 %v4019, 32
    %v4232 = vpop.permute.xlu0 %4231
    %4233 = vrot.lane.b32.xlu0 %v4022, 32
    %v4234 = vpop.permute.xlu0 %4233
    %4235 = vrot.lane.b32.xlu0 %v4025, 32
    %v4236 = vpop.permute.xlu0 %4235
    %4237 = vrot.lane.b32.xlu0 %v4028, 32
    %v4238 = vpop.permute.xlu0 %4237
    %4239 = vrot.lane.b32.xlu0 %v4031, 32
    %v4240 = vpop.permute.xlu0 %4239
    %4241 = vrot.lane.b32.xlu0 %v4034, 32
    %v4242 = vpop.permute.xlu0 %4241
    %4243 = vrot.lane.b32.xlu0 %v4037, 32
    %v4244 = vpop.permute.xlu0 %4243
    %4245 = vrot.lane.b32.xlu0 %v4040, 32
    %v4246 = vpop.permute.xlu0 %4245
    %4247 = vrot.lane.b32.xlu0 %v4043, 32
    %v4248 = vpop.permute.xlu0 %4247
    %4249 = vrot.lane.b32.xlu0 %v4046, 32
    %v4250 = vpop.permute.xlu0 %4249
    %4251 = vrot.lane.b32.xlu0 %v4049, 32
    %v4252 = vpop.permute.xlu0 %4251
    %4253 = vrot.lane.b32.xlu0 %v4052, 32
    %v4254 = vpop.permute.xlu0 %4253
    %4255 = vrot.lane.b32.xlu0 %v4055, 32
    %v4256 = vpop.permute.xlu0 %4255
    %4257 = vrot.lane.b32.xlu0 %v4058, 32
    %v4258 = vpop.permute.xlu0 %4257
    %4259 = vrot.lane.b32.xlu0 %v4061, 32
    %v4260 = vpop.permute.xlu0 %4259
    %4261 = vrot.lane.b32.xlu0 %v4064, 32
    %v4262 = vpop.permute.xlu0 %4261
    %4263 = vrot.lane.b32.xlu0 %v4067, 32
    %v4264 = vpop.permute.xlu0 %4263
    %4265 = vrot.lane.b32.xlu0 %v4070, 32
    %v4266 = vpop.permute.xlu0 %4265
    %4267 = vrot.lane.b32.xlu0 %v4073, 32
    %v4268 = vpop.permute.xlu0 %4267
    %4269 = vrot.lane.b32.xlu0 %v4076, 32
    %v4270 = vpop.permute.xlu0 %4269
    %4271 = vrot.lane.b32.xlu0 %v4079, 32
    %v4272 = vpop.permute.xlu0 %4271
    %4305 = vrot.lane.b32.xlu0 %v3986, 48
    %v4306 = vpop.permute.xlu0 %4305
    %4307 = vrot.lane.b32.xlu0 %v3989, 48
    %v4308 = vpop.permute.xlu0 %4307
    %4309 = vrot.lane.b32.xlu0 %v3992, 48
    %v4310 = vpop.permute.xlu0 %4309
    %4311 = vrot.lane.b32.xlu0 %v3995, 48
    %v4312 = vpop.permute.xlu0 %4311
    %4313 = vrot.lane.b32.xlu0 %v3998, 48
    %v4314 = vpop.permute.xlu0 %4313
    %4315 = vrot.lane.b32.xlu0 %v4001, 48
    %v4316 = vpop.permute.xlu0 %4315
    %4317 = vrot.lane.b32.xlu0 %v4004, 48
    %v4318 = vpop.permute.xlu0 %4317
    %4319 = vrot.lane.b32.xlu0 %v4007, 48
    %v4320 = vpop.permute.xlu0 %4319
    %4321 = vrot.lane.b32.xlu0 %v4010, 48
    %v4322 = vpop.permute.xlu0 %4321
    %4323 = vrot.lane.b32.xlu0 %v4013, 48
    %v4324 = vpop.permute.xlu0 %4323
    %4325 = vrot.lane.b32.xlu0 %v4016, 48
    %v4326 = vpop.permute.xlu0 %4325
    %4327 = vrot.lane.b32.xlu0 %v4019, 48
    %v4328 = vpop.permute.xlu0 %4327
    %4329 = vrot.lane.b32.xlu0 %v4022, 48
    %v4330 = vpop.permute.xlu0 %4329
    %4331 = vrot.lane.b32.xlu0 %v4025, 48
    %v4332 = vpop.permute.xlu0 %4331
    %4333 = vrot.lane.b32.xlu0 %v4028, 48
    %v4334 = vpop.permute.xlu0 %4333
    %4335 = vrot.lane.b32.xlu0 %v4031, 48
    %v4336 = vpop.permute.xlu0 %4335
    %4337 = vrot.lane.b32.xlu0 %v4034, 48
    %v4338 = vpop.permute.xlu0 %4337
    %4339 = vrot.lane.b32.xlu0 %v4037, 48
    %v4340 = vpop.permute.xlu0 %4339
    %4341 = vrot.lane.b32.xlu0 %v4040, 48
    %v4342 = vpop.permute.xlu0 %4341
    %4343 = vrot.lane.b32.xlu0 %v4043, 48
    %v4344 = vpop.permute.xlu0 %4343
    %4345 = vrot.lane.b32.xlu0 %v4046, 48
    %v4346 = vpop.permute.xlu0 %4345
    %4347 = vrot.lane.b32.xlu0 %v4049, 48
    %v4348 = vpop.permute.xlu0 %4347
    %4349 = vrot.lane.b32.xlu0 %v4052, 48
    %v4350 = vpop.permute.xlu0 %4349
    %4351 = vrot.lane.b32.xlu0 %v4055, 48
    %v4352 = vpop.permute.xlu0 %4351
    %4353 = vrot.lane.b32.xlu0 %v4058, 48
    %v4354 = vpop.permute.xlu0 %4353
    %4355 = vrot.lane.b32.xlu0 %v4061, 48
    %v4356 = vpop.permute.xlu0 %4355
    %4357 = vrot.lane.b32.xlu0 %v4064, 48
    %v4358 = vpop.permute.xlu0 %4357
    %4359 = vrot.lane.b32.xlu0 %v4067, 48
    %v4360 = vpop.permute.xlu0 %4359
    %4361 = vrot.lane.b32.xlu0 %v4070, 48
    %v4362 = vpop.permute.xlu0 %4361
    %4363 = vrot.lane.b32.xlu0 %v4073, 48
    %v4364 = vpop.permute.xlu0 %4363
    %4365 = vrot.lane.b32.xlu0 %v4076, 48
    %v4366 = vpop.permute.xlu0 %4365
    %4367 = vrot.lane.b32.xlu0 %v4079, 48
    %v4368 = vpop.permute.xlu0 %4367
    %4401 = vrot.lane.b32.xlu0 %v3986, 64
    %v4402 = vpop.permute.xlu0 %4401
    %4403 = vrot.lane.b32.xlu0 %v3989, 64
    %v4404 = vpop.permute.xlu0 %4403
    %4405 = vrot.lane.b32.xlu0 %v3992, 64
    %v4406 = vpop.permute.xlu0 %4405
    %4407 = vrot.lane.b32.xlu0 %v3995, 64
    %v4408 = vpop.permute.xlu0 %4407
    %4409 = vrot.lane.b32.xlu0 %v3998, 64
    %v4410 = vpop.permute.xlu0 %4409
    %4411 = vrot.lane.b32.xlu0 %v4001, 64
    %v4412 = vpop.permute.xlu0 %4411
    %4413 = vrot.lane.b32.xlu0 %v4004, 64
    %v4414 = vpop.permute.xlu0 %4413
    %4415 = vrot.lane.b32.xlu0 %v4007, 64
    %v4416 = vpop.permute.xlu0 %4415
    %4417 = vrot.lane.b32.xlu0 %v4010, 64
    %v4418 = vpop.permute.xlu0 %4417
    %4419 = vrot.lane.b32.xlu0 %v4013, 64
    %v4420 = vpop.permute.xlu0 %4419
    %4421 = vrot.lane.b32.xlu0 %v4016, 64
    %v4422 = vpop.permute.xlu0 %4421
    %4423 = vrot.lane.b32.xlu0 %v4019, 64
    %v4424 = vpop.permute.xlu0 %4423
    %4425 = vrot.lane.b32.xlu0 %v4022, 64
    %v4426 = vpop.permute.xlu0 %4425
    %4427 = vrot.lane.b32.xlu0 %v4025, 64
    %v4428 = vpop.permute.xlu0 %4427
    %4429 = vrot.lane.b32.xlu0 %v4028, 64
    %v4430 = vpop.permute.xlu0 %4429
    %4431 = vrot.lane.b32.xlu0 %v4031, 64
    %v4432 = vpop.permute.xlu0 %4431
    %4433 = vrot.lane.b32.xlu0 %v4034, 64
    %v4434 = vpop.permute.xlu0 %4433
    %4435 = vrot.lane.b32.xlu0 %v4037, 64
    %v4436 = vpop.permute.xlu0 %4435
    %4437 = vrot.lane.b32.xlu0 %v4040, 64
    %v4438 = vpop.permute.xlu0 %4437
    %4439 = vrot.lane.b32.xlu0 %v4043, 64
    %v4440 = vpop.permute.xlu0 %4439
    %4441 = vrot.lane.b32.xlu0 %v4046, 64
    %v4442 = vpop.permute.xlu0 %4441
    %4443 = vrot.lane.b32.xlu0 %v4049, 64
    %v4444 = vpop.permute.xlu0 %4443
    %4445 = vrot.lane.b32.xlu0 %v4052, 64
    %v4446 = vpop.permute.xlu0 %4445
    %4447 = vrot.lane.b32.xlu0 %v4055, 64
    %v4448 = vpop.permute.xlu0 %4447
    %4449 = vrot.lane.b32.xlu0 %v4058, 64
    %v4450 = vpop.permute.xlu0 %4449
    %4451 = vrot.lane.b32.xlu0 %v4061, 64
    %v4452 = vpop.permute.xlu0 %4451
    %4453 = vrot.lane.b32.xlu0 %v4064, 64
    %v4454 = vpop.permute.xlu0 %4453
    %4455 = vrot.lane.b32.xlu0 %v4067, 64
    %v4456 = vpop.permute.xlu0 %4455
    %4457 = vrot.lane.b32.xlu0 %v4070, 64
    %v4458 = vpop.permute.xlu0 %4457
    %4459 = vrot.lane.b32.xlu0 %v4073, 64
    %v4460 = vpop.permute.xlu0 %4459
    %4461 = vrot.lane.b32.xlu0 %v4076, 64
    %v4462 = vpop.permute.xlu0 %4461
    %4463 = vrot.lane.b32.xlu0 %v4079, 64
    %v4464 = vpop.permute.xlu0 %4463
    %4497 = vrot.lane.b32.xlu0 %v3986, 80
    %v4498 = vpop.permute.xlu0 %4497
    %4499 = vrot.lane.b32.xlu0 %v3989, 80
    %v4500 = vpop.permute.xlu0 %4499
    %4501 = vrot.lane.b32.xlu0 %v3992, 80
    %v4502 = vpop.permute.xlu0 %4501
    %4503 = vrot.lane.b32.xlu0 %v3995, 80
    %v4504 = vpop.permute.xlu0 %4503
    %4505 = vrot.lane.b32.xlu0 %v3998, 80
    %v4506 = vpop.permute.xlu0 %4505
    %4507 = vrot.lane.b32.xlu0 %v4001, 80
    %v4508 = vpop.permute.xlu0 %4507
    %4509 = vrot.lane.b32.xlu0 %v4004, 80
    %v4510 = vpop.permute.xlu0 %4509
    %4511 = vrot.lane.b32.xlu0 %v4007, 80
    %v4512 = vpop.permute.xlu0 %4511
    %4513 = vrot.lane.b32.xlu0 %v4010, 80
    %v4514 = vpop.permute.xlu0 %4513
    %4515 = vrot.lane.b32.xlu0 %v4013, 80
    %v4516 = vpop.permute.xlu0 %4515
    %4517 = vrot.lane.b32.xlu0 %v4016, 80
    %v4518 = vpop.permute.xlu0 %4517
    %4519 = vrot.lane.b32.xlu0 %v4019, 80
    %v4520 = vpop.permute.xlu0 %4519
    %4521 = vrot.lane.b32.xlu0 %v4022, 80
    %v4522 = vpop.permute.xlu0 %4521
    %4523 = vrot.lane.b32.xlu0 %v4025, 80
    %v4524 = vpop.permute.xlu0 %4523
    %4525 = vrot.lane.b32.xlu0 %v4028, 80
    %v4526 = vpop.permute.xlu0 %4525
    %4527 = vrot.lane.b32.xlu0 %v4031, 80
    %v4528 = vpop.permute.xlu0 %4527
    %4529 = vrot.lane.b32.xlu0 %v4034, 80
    %v4530 = vpop.permute.xlu0 %4529
    %4531 = vrot.lane.b32.xlu0 %v4037, 80
    %v4532 = vpop.permute.xlu0 %4531
    %4533 = vrot.lane.b32.xlu0 %v4040, 80
    %v4534 = vpop.permute.xlu0 %4533
    %4535 = vrot.lane.b32.xlu0 %v4043, 80
    %v4536 = vpop.permute.xlu0 %4535
    %4537 = vrot.lane.b32.xlu0 %v4046, 80
    %v4538 = vpop.permute.xlu0 %4537
    %4539 = vrot.lane.b32.xlu0 %v4049, 80
    %v4540 = vpop.permute.xlu0 %4539
    %4541 = vrot.lane.b32.xlu0 %v4052, 80
    %v4542 = vpop.permute.xlu0 %4541
    %4543 = vrot.lane.b32.xlu0 %v4055, 80
    %v4544 = vpop.permute.xlu0 %4543
    %4545 = vrot.lane.b32.xlu0 %v4058, 80
    %v4546 = vpop.permute.xlu0 %4545
    %4547 = vrot.lane.b32.xlu0 %v4061, 80
    %v4548 = vpop.permute.xlu0 %4547
    %4549 = vrot.lane.b32.xlu0 %v4064, 80
    %v4550 = vpop.permute.xlu0 %4549
    %4551 = vrot.lane.b32.xlu0 %v4067, 80
    %v4552 = vpop.permute.xlu0 %4551
    %4553 = vrot.lane.b32.xlu0 %v4070, 80
    %v4554 = vpop.permute.xlu0 %4553
    %4555 = vrot.lane.b32.xlu0 %v4073, 80
    %v4556 = vpop.permute.xlu0 %4555
    %4557 = vrot.lane.b32.xlu0 %v4076, 80
    %v4558 = vpop.permute.xlu0 %4557
    %4559 = vrot.lane.b32.xlu0 %v4079, 80
    %v4560 = vpop.permute.xlu0 %4559
    %4593 = vrot.lane.b32.xlu0 %v3986, 96
    %v4594 = vpop.permute.xlu0 %4593
    %4595 = vrot.lane.b32.xlu0 %v3989, 96
    %v4596 = vpop.permute.xlu0 %4595
    %4597 = vrot.lane.b32.xlu0 %v3992, 96
    %v4598 = vpop.permute.xlu0 %4597
    %4599 = vrot.lane.b32.xlu0 %v3995, 96
    %v4600 = vpop.permute.xlu0 %4599
    %4601 = vrot.lane.b32.xlu0 %v3998, 96
    %v4602 = vpop.permute.xlu0 %4601
    %4603 = vrot.lane.b32.xlu0 %v4001, 96
    %v4604 = vpop.permute.xlu0 %4603
    %4605 = vrot.lane.b32.xlu0 %v4004, 96
    %v4606 = vpop.permute.xlu0 %4605
    %4607 = vrot.lane.b32.xlu0 %v4007, 96
    %v4608 = vpop.permute.xlu0 %4607
    %4609 = vrot.lane.b32.xlu0 %v4010, 96
    %v4610 = vpop.permute.xlu0 %4609
    %4611 = vrot.lane.b32.xlu0 %v4013, 96
    %v4612 = vpop.permute.xlu0 %4611
    %4613 = vrot.lane.b32.xlu0 %v4016, 96
    %v4614 = vpop.permute.xlu0 %4613
    %4615 = vrot.lane.b32.xlu0 %v4019, 96
    %v4616 = vpop.permute.xlu0 %4615
    %4617 = vrot.lane.b32.xlu0 %v4022, 96
    %v4618 = vpop.permute.xlu0 %4617
    %4619 = vrot.lane.b32.xlu0 %v4025, 96
    %v4620 = vpop.permute.xlu0 %4619
    %4621 = vrot.lane.b32.xlu0 %v4028, 96
    %v4622 = vpop.permute.xlu0 %4621
    %4623 = vrot.lane.b32.xlu0 %v4031, 96
    %v4624 = vpop.permute.xlu0 %4623
    %4625 = vrot.lane.b32.xlu0 %v4034, 96
    %v4626 = vpop.permute.xlu0 %4625
    %4627 = vrot.lane.b32.xlu0 %v4037, 96
    %v4628 = vpop.permute.xlu0 %4627
    %4629 = vrot.lane.b32.xlu0 %v4040, 96
    %v4630 = vpop.permute.xlu0 %4629
    %4631 = vrot.lane.b32.xlu0 %v4043, 96
    %v4632 = vpop.permute.xlu0 %4631
    %4633 = vrot.lane.b32.xlu0 %v4046, 96
    %v4634 = vpop.permute.xlu0 %4633
    %4635 = vrot.lane.b32.xlu0 %v4049, 96
    %v4636 = vpop.permute.xlu0 %4635
    %4637 = vrot.lane.b32.xlu0 %v4052, 96
    %v4638 = vpop.permute.xlu0 %4637
    %4639 = vrot.lane.b32.xlu0 %v4055, 96
    %v4640 = vpop.permute.xlu0 %4639
    %4641 = vrot.lane.b32.xlu0 %v4058, 96
    %v4642 = vpop.permute.xlu0 %4641
    %4643 = vrot.lane.b32.xlu0 %v4061, 96
    %v4644 = vpop.permute.xlu0 %4643
    %4645 = vrot.lane.b32.xlu0 %v4064, 96
    %v4646 = vpop.permute.xlu0 %4645
    %4647 = vrot.lane.b32.xlu0 %v4067, 96
    %v4648 = vpop.permute.xlu0 %4647
    %4649 = vrot.lane.b32.xlu0 %v4070, 96
    %v4650 = vpop.permute.xlu0 %4649
    %4651 = vrot.lane.b32.xlu0 %v4073, 96
    %v4652 = vpop.permute.xlu0 %4651
    %4653 = vrot.lane.b32.xlu0 %v4076, 96
    %v4654 = vpop.permute.xlu0 %4653
    %4655 = vrot.lane.b32.xlu0 %v4079, 96
    %v4656 = vpop.permute.xlu0 %4655
    %4689 = vrot.lane.b32.xlu0 %v3986, 112
    %v4690 = vpop.permute.xlu0 %4689
    %4691 = vrot.lane.b32.xlu0 %v3989, 112
    %v4692 = vpop.permute.xlu0 %4691
    %4693 = vrot.lane.b32.xlu0 %v3992, 112
    %v4694 = vpop.permute.xlu0 %4693
    %4695 = vrot.lane.b32.xlu0 %v3995, 112
    %v4696 = vpop.permute.xlu0 %4695
    %4697 = vrot.lane.b32.xlu0 %v3998, 112
    %v4698 = vpop.permute.xlu0 %4697
    %4699 = vrot.lane.b32.xlu0 %v4001, 112
    %v4700 = vpop.permute.xlu0 %4699
    %4701 = vrot.lane.b32.xlu0 %v4004, 112
    %v4702 = vpop.permute.xlu0 %4701
    %4703 = vrot.lane.b32.xlu0 %v4007, 112
    %v4704 = vpop.permute.xlu0 %4703
    %4705 = vrot.lane.b32.xlu0 %v4010, 112
    %v4706 = vpop.permute.xlu0 %4705
    %4707 = vrot.lane.b32.xlu0 %v4013, 112
    %v4708 = vpop.permute.xlu0 %4707
    %4709 = vrot.lane.b32.xlu0 %v4016, 112
    %v4710 = vpop.permute.xlu0 %4709
    %4711 = vrot.lane.b32.xlu0 %v4019, 112
    %v4712 = vpop.permute.xlu0 %4711
    %4713 = vrot.lane.b32.xlu0 %v4022, 112
    %v4714 = vpop.permute.xlu0 %4713
    %4715 = vrot.lane.b32.xlu0 %v4025, 112
    %v4716 = vpop.permute.xlu0 %4715
    %4717 = vrot.lane.b32.xlu0 %v4028, 112
    %v4718 = vpop.permute.xlu0 %4717
    %4719 = vrot.lane.b32.xlu0 %v4031, 112
    %v4720 = vpop.permute.xlu0 %4719
    %4721 = vrot.lane.b32.xlu0 %v4034, 112
    %v4722 = vpop.permute.xlu0 %4721
    %4723 = vrot.lane.b32.xlu0 %v4037, 112
    %v4724 = vpop.permute.xlu0 %4723
    %4725 = vrot.lane.b32.xlu0 %v4040, 112
    %v4726 = vpop.permute.xlu0 %4725
    %4727 = vrot.lane.b32.xlu0 %v4043, 112
    %v4728 = vpop.permute.xlu0 %4727
    %4729 = vrot.lane.b32.xlu0 %v4046, 112
    %v4730 = vpop.permute.xlu0 %4729
    %4731 = vrot.lane.b32.xlu0 %v4049, 112
    %v4732 = vpop.permute.xlu0 %4731
    %4733 = vrot.lane.b32.xlu0 %v4052, 112
    %v4734 = vpop.permute.xlu0 %4733
    %4735 = vrot.lane.b32.xlu0 %v4055, 112
    %v4736 = vpop.permute.xlu0 %4735
    %4737 = vrot.lane.b32.xlu0 %v4058, 112
    %v4738 = vpop.permute.xlu0 %4737
    %4739 = vrot.lane.b32.xlu0 %v4061, 112
    %v4740 = vpop.permute.xlu0 %4739
    %4741 = vrot.lane.b32.xlu0 %v4064, 112
    %v4742 = vpop.permute.xlu0 %4741
    %4743 = vrot.lane.b32.xlu0 %v4067, 112
    %v4744 = vpop.permute.xlu0 %4743
    %4745 = vrot.lane.b32.xlu0 %v4070, 112
    %v4746 = vpop.permute.xlu0 %4745
    %4747 = vrot.lane.b32.xlu0 %v4073, 112
    %v4748 = vpop.permute.xlu0 %4747
    %4749 = vrot.lane.b32.xlu0 %v4076, 112
    %v4750 = vpop.permute.xlu0 %4749
    %4751 = vrot.lane.b32.xlu0 %v4079, 112
    %v4752 = vpop.permute.xlu0 %4751
    %v4785 = vsel %vm2385, %v3986, %v4114
    %v4786 = vsel %vm2385, %v3989, %v4116
    %v4787 = vsel %vm2385, %v3992, %v4118
    %v4788 = vsel %vm2385, %v3995, %v4120
    %v4789 = vsel %vm2385, %v3998, %v4122
    %v4790 = vsel %vm2385, %v4001, %v4124
    %v4791 = vsel %vm2385, %v4004, %v4126
    %v4792 = vsel %vm2385, %v4007, %v4128
    %v4793 = vsel %vm2385, %v4010, %v4130
    %v4794 = vsel %vm2385, %v4013, %v4132
    %v4795 = vsel %vm2385, %v4016, %v4134
    %v4796 = vsel %vm2385, %v4019, %v4136
    %v4797 = vsel %vm2385, %v4022, %v4138
    %v4798 = vsel %vm2385, %v4025, %v4140
    %v4799 = vsel %vm2385, %v4028, %v4142
    %v4800 = vsel %vm2385, %v4031, %v4144
    %v4801 = vsel %vm2385, %v4034, %v4146
    %v4802 = vsel %vm2385, %v4037, %v4148
    %v4803 = vsel %vm2385, %v4040, %v4150
    %v4804 = vsel %vm2385, %v4043, %v4152
    %v4805 = vsel %vm2385, %v4046, %v4154
    %v4806 = vsel %vm2385, %v4049, %v4156
    %v4807 = vsel %vm2385, %v4052, %v4158
    %v4808 = vsel %vm2385, %v4055, %v4160
    %v4809 = vsel %vm2385, %v4058, %v4162
    %v4810 = vsel %vm2385, %v4061, %v4164
    %v4811 = vsel %vm2385, %v4064, %v4166
    %v4812 = vsel %vm2385, %v4067, %v4168
    %v4813 = vsel %vm2385, %v4070, %v4170
    %v4814 = vsel %vm2385, %v4073, %v4172
    %v4815 = vsel %vm2385, %v4076, %v4174
    %v4816 = vsel %vm2385, %v4079, %v4176
    %v4817 = vsel %vm2418, %v4785, %v4210
    %v4818 = vsel %vm2418, %v4786, %v4212
    %v4819 = vsel %vm2418, %v4787, %v4214
    %v4820 = vsel %vm2418, %v4788, %v4216
    %v4821 = vsel %vm2418, %v4789, %v4218
    %v4822 = vsel %vm2418, %v4790, %v4220
    %v4823 = vsel %vm2418, %v4791, %v4222
    %v4824 = vsel %vm2418, %v4792, %v4224
    %v4825 = vsel %vm2418, %v4793, %v4226
    %v4826 = vsel %vm2418, %v4794, %v4228
    %v4827 = vsel %vm2418, %v4795, %v4230
    %v4828 = vsel %vm2418, %v4796, %v4232
    %v4829 = vsel %vm2418, %v4797, %v4234
    %v4830 = vsel %vm2418, %v4798, %v4236
    %v4831 = vsel %vm2418, %v4799, %v4238
    %v4832 = vsel %vm2418, %v4800, %v4240
    %v4833 = vsel %vm2418, %v4801, %v4242
    %v4834 = vsel %vm2418, %v4802, %v4244
    %v4835 = vsel %vm2418, %v4803, %v4246
    %v4836 = vsel %vm2418, %v4804, %v4248
    %v4837 = vsel %vm2418, %v4805, %v4250
    %v4838 = vsel %vm2418, %v4806, %v4252
    %v4839 = vsel %vm2418, %v4807, %v4254
    %v4840 = vsel %vm2418, %v4808, %v4256
    %v4841 = vsel %vm2418, %v4809, %v4258
    %v4842 = vsel %vm2418, %v4810, %v4260
    %v4843 = vsel %vm2418, %v4811, %v4262
    %v4844 = vsel %vm2418, %v4812, %v4264
    %v4845 = vsel %vm2418, %v4813, %v4266
    %v4846 = vsel %vm2418, %v4814, %v4268
    %v4847 = vsel %vm2418, %v4815, %v4270
    %v4848 = vsel %vm2418, %v4816, %v4272
    %v4849 = vsel %vm2451, %v4817, %v4306
    %v4850 = vsel %vm2451, %v4818, %v4308
    %v4851 = vsel %vm2451, %v4819, %v4310
    %v4852 = vsel %vm2451, %v4820, %v4312
    %v4853 = vsel %vm2451, %v4821, %v4314
    %v4854 = vsel %vm2451, %v4822, %v4316
    %v4855 = vsel %vm2451, %v4823, %v4318
    %v4856 = vsel %vm2451, %v4824, %v4320
    %v4857 = vsel %vm2451, %v4825, %v4322
    %v4858 = vsel %vm2451, %v4826, %v4324
    %v4859 = vsel %vm2451, %v4827, %v4326
    %v4860 = vsel %vm2451, %v4828, %v4328
    %v4861 = vsel %vm2451, %v4829, %v4330
    %v4862 = vsel %vm2451, %v4830, %v4332
    %v4863 = vsel %vm2451, %v4831, %v4334
    %v4864 = vsel %vm2451, %v4832, %v4336
    %v4865 = vsel %vm2451, %v4833, %v4338
    %v4866 = vsel %vm2451, %v4834, %v4340
    %v4867 = vsel %vm2451, %v4835, %v4342
    %v4868 = vsel %vm2451, %v4836, %v4344
    %v4869 = vsel %vm2451, %v4837, %v4346
    %v4870 = vsel %vm2451, %v4838, %v4348
    %v4871 = vsel %vm2451, %v4839, %v4350
    %v4872 = vsel %vm2451, %v4840, %v4352
    %v4873 = vsel %vm2451, %v4841, %v4354
    %v4874 = vsel %vm2451, %v4842, %v4356
    %v4875 = vsel %vm2451, %v4843, %v4358
    %v4876 = vsel %vm2451, %v4844, %v4360
    %v4877 = vsel %vm2451, %v4845, %v4362
    %v4878 = vsel %vm2451, %v4846, %v4364
    %v4879 = vsel %vm2451, %v4847, %v4366
    %v4880 = vsel %vm2451, %v4848, %v4368
    %v4881 = vsel %vm2484, %v4849, %v4402
    %v4882 = vsel %vm2484, %v4850, %v4404
    %v4883 = vsel %vm2484, %v4851, %v4406
    %v4884 = vsel %vm2484, %v4852, %v4408
    %v4885 = vsel %vm2484, %v4853, %v4410
    %v4886 = vsel %vm2484, %v4854, %v4412
    %v4887 = vsel %vm2484, %v4855, %v4414
    %v4888 = vsel %vm2484, %v4856, %v4416
    %v4889 = vsel %vm2484, %v4857, %v4418
    %v4890 = vsel %vm2484, %v4858, %v4420
    %v4891 = vsel %vm2484, %v4859, %v4422
    %v4892 = vsel %vm2484, %v4860, %v4424
    %v4893 = vsel %vm2484, %v4861, %v4426
    %v4894 = vsel %vm2484, %v4862, %v4428
    %v4895 = vsel %vm2484, %v4863, %v4430
    %v4896 = vsel %vm2484, %v4864, %v4432
    %v4897 = vsel %vm2484, %v4865, %v4434
    %v4898 = vsel %vm2484, %v4866, %v4436
    %v4899 = vsel %vm2484, %v4867, %v4438
    %v4900 = vsel %vm2484, %v4868, %v4440
    %v4901 = vsel %vm2484, %v4869, %v4442
    %v4902 = vsel %vm2484, %v4870, %v4444
    %v4903 = vsel %vm2484, %v4871, %v4446
    %v4904 = vsel %vm2484, %v4872, %v4448
    %v4905 = vsel %vm2484, %v4873, %v4450
    %v4906 = vsel %vm2484, %v4874, %v4452
    %v4907 = vsel %vm2484, %v4875, %v4454
    %v4908 = vsel %vm2484, %v4876, %v4456
    %v4909 = vsel %vm2484, %v4877, %v4458
    %v4910 = vsel %vm2484, %v4878, %v4460
    %v4911 = vsel %vm2484, %v4879, %v4462
    %v4912 = vsel %vm2484, %v4880, %v4464
    %v4913 = vsel %vm2517, %v4881, %v4498
    %v4914 = vsel %vm2517, %v4882, %v4500
    %v4915 = vsel %vm2517, %v4883, %v4502
    %v4916 = vsel %vm2517, %v4884, %v4504
    %v4917 = vsel %vm2517, %v4885, %v4506
    %v4918 = vsel %vm2517, %v4886, %v4508
    %v4919 = vsel %vm2517, %v4887, %v4510
    %v4920 = vsel %vm2517, %v4888, %v4512
    %v4921 = vsel %vm2517, %v4889, %v4514
    %v4922 = vsel %vm2517, %v4890, %v4516
    %v4923 = vsel %vm2517, %v4891, %v4518
    %v4924 = vsel %vm2517, %v4892, %v4520
    %v4925 = vsel %vm2517, %v4893, %v4522
    %v4926 = vsel %vm2517, %v4894, %v4524
    %v4927 = vsel %vm2517, %v4895, %v4526
    %v4928 = vsel %vm2517, %v4896, %v4528
    %v4929 = vsel %vm2517, %v4897, %v4530
    %v4930 = vsel %vm2517, %v4898, %v4532
    %v4931 = vsel %vm2517, %v4899, %v4534
    %v4932 = vsel %vm2517, %v4900, %v4536
    %v4933 = vsel %vm2517, %v4901, %v4538
    %v4934 = vsel %vm2517, %v4902, %v4540
    %v4935 = vsel %vm2517, %v4903, %v4542
    %v4936 = vsel %vm2517, %v4904, %v4544
    %v4937 = vsel %vm2517, %v4905, %v4546
    %v4938 = vsel %vm2517, %v4906, %v4548
    %v4939 = vsel %vm2517, %v4907, %v4550
    %v4940 = vsel %vm2517, %v4908, %v4552
    %v4941 = vsel %vm2517, %v4909, %v4554
    %v4942 = vsel %vm2517, %v4910, %v4556
    %v4943 = vsel %vm2517, %v4911, %v4558
    %v4944 = vsel %vm2517, %v4912, %v4560
    %v4945 = vsel %vm2550, %v4913, %v4594
    %v4946 = vsel %vm2550, %v4914, %v4596
    %v4947 = vsel %vm2550, %v4915, %v4598
    %v4948 = vsel %vm2550, %v4916, %v4600
    %v4949 = vsel %vm2550, %v4917, %v4602
    %v4950 = vsel %vm2550, %v4918, %v4604
    %v4951 = vsel %vm2550, %v4919, %v4606
    %v4952 = vsel %vm2550, %v4920, %v4608
    %v4953 = vsel %vm2550, %v4921, %v4610
    %v4954 = vsel %vm2550, %v4922, %v4612
    %v4955 = vsel %vm2550, %v4923, %v4614
    %v4956 = vsel %vm2550, %v4924, %v4616
    %v4957 = vsel %vm2550, %v4925, %v4618
    %v4958 = vsel %vm2550, %v4926, %v4620
    %v4959 = vsel %vm2550, %v4927, %v4622
    %v4960 = vsel %vm2550, %v4928, %v4624
    %v4961 = vsel %vm2550, %v4929, %v4626
    %v4962 = vsel %vm2550, %v4930, %v4628
    %v4963 = vsel %vm2550, %v4931, %v4630
    %v4964 = vsel %vm2550, %v4932, %v4632
    %v4965 = vsel %vm2550, %v4933, %v4634
    %v4966 = vsel %vm2550, %v4934, %v4636
    %v4967 = vsel %vm2550, %v4935, %v4638
    %v4968 = vsel %vm2550, %v4936, %v4640
    %v4969 = vsel %vm2550, %v4937, %v4642
    %v4970 = vsel %vm2550, %v4938, %v4644
    %v4971 = vsel %vm2550, %v4939, %v4646
    %v4972 = vsel %vm2550, %v4940, %v4648
    %v4973 = vsel %vm2550, %v4941, %v4650
    %v4974 = vsel %vm2550, %v4942, %v4652
    %v4975 = vsel %vm2550, %v4943, %v4654
    %v4976 = vsel %vm2550, %v4944, %v4656
    %v4977 = vsel %vm2583, %v4945, %v4690
    %v4978 = vsel %vm2583, %v4946, %v4692
    %v4979 = vsel %vm2583, %v4947, %v4694
    %v4980 = vsel %vm2583, %v4948, %v4696
    %v4981 = vsel %vm2583, %v4949, %v4698
    %v4982 = vsel %vm2583, %v4950, %v4700
    %v4983 = vsel %vm2583, %v4951, %v4702
    %v4984 = vsel %vm2583, %v4952, %v4704
    %v4985 = vsel %vm2583, %v4953, %v4706
    %v4986 = vsel %vm2583, %v4954, %v4708
    %v4987 = vsel %vm2583, %v4955, %v4710
    %v4988 = vsel %vm2583, %v4956, %v4712
    %v4989 = vsel %vm2583, %v4957, %v4714
    %v4990 = vsel %vm2583, %v4958, %v4716
    %v4991 = vsel %vm2583, %v4959, %v4718
    %v4992 = vsel %vm2583, %v4960, %v4720
    %v4993 = vsel %vm2583, %v4961, %v4722
    %v4994 = vsel %vm2583, %v4962, %v4724
    %v4995 = vsel %vm2583, %v4963, %v4726
    %v4996 = vsel %vm2583, %v4964, %v4728
    %v4997 = vsel %vm2583, %v4965, %v4730
    %v4998 = vsel %vm2583, %v4966, %v4732
    %v4999 = vsel %vm2583, %v4967, %v4734
    %v5000 = vsel %vm2583, %v4968, %v4736
    %v5001 = vsel %vm2583, %v4969, %v4738
    %v5002 = vsel %vm2583, %v4970, %v4740
    %v5003 = vsel %vm2583, %v4971, %v4742
    %v5004 = vsel %vm2583, %v4972, %v4744
    %v5005 = vsel %vm2583, %v4973, %v4746
    %v5006 = vsel %vm2583, %v4974, %v4748
    %v5007 = vsel %vm2583, %v4975, %v4750
    %v5008 = vsel %vm2583, %v4976, %v4752
    %v5009 = vmul.f32 %v1334, %v4977
    %v5010 = vmul.f32 %v1447, %v3986
    %v5011 = vmul.f32 %v1337, %v4978
    %v5012 = vmul.f32 %v1450, %v3989
    %v5013 = vmul.f32 %v1340, %v4979
    %v5014 = vmul.f32 %v1453, %v3992
    %v5015 = vmul.f32 %v1343, %v4980
    %v5016 = vmul.f32 %v1456, %v3995
    %v5017 = vmul.f32 %v1346, %v4981
    %v5018 = vmul.f32 %v1459, %v3998
    %v5019 = vmul.f32 %v1349, %v4982
    %v5020 = vmul.f32 %v1462, %v4001
    %v5021 = vmul.f32 %v1352, %v4983
    %v5022 = vmul.f32 %v1465, %v4004
    %v5023 = vmul.f32 %v1355, %v4984
    %v5024 = vmul.f32 %v1468, %v4007
    %v5025 = vmul.f32 %v1358, %v4985
    %v5026 = vmul.f32 %v1471, %v4010
    %v5027 = vmul.f32 %v1361, %v4986
    %v5028 = vmul.f32 %v1474, %v4013
    %v5029 = vmul.f32 %v1364, %v4987
    %v5030 = vmul.f32 %v1477, %v4016
    %v5031 = vmul.f32 %v1367, %v4988
    %v5032 = vmul.f32 %v1480, %v4019
    %v5033 = vmul.f32 %v1370, %v4989
    %v5034 = vmul.f32 %v1483, %v4022
    %v5035 = vmul.f32 %v1373, %v4990
    %v5036 = vmul.f32 %v1486, %v4025
    %v5037 = vmul.f32 %v1376, %v4991
    %v5038 = vmul.f32 %v1489, %v4028
    %v5039 = vmul.f32 %v1379, %v4992
    %v5040 = vmul.f32 %v1492, %v4031
    %v5041 = vmul.f32 %v1382, %v4993
    %v5042 = vmul.f32 %v1495, %v4034
    %v5043 = vmul.f32 %v1385, %v4994
    %v5044 = vmul.f32 %v1498, %v4037
    %v5045 = vmul.f32 %v1388, %v4995
    %v5046 = vmul.f32 %v1501, %v4040
    %v5047 = vmul.f32 %v1391, %v4996
    %v5048 = vmul.f32 %v1504, %v4043
    %v5049 = vmul.f32 %v1394, %v4997
    %v5050 = vmul.f32 %v1507, %v4046
    %v5051 = vmul.f32 %v1397, %v4998
    %v5052 = vmul.f32 %v1510, %v4049
    %v5053 = vmul.f32 %v1400, %v4999
    %v5054 = vmul.f32 %v1513, %v4052
    %v5055 = vmul.f32 %v1403, %v5000
    %v5056 = vmul.f32 %v1516, %v4055
    %v5057 = vmul.f32 %v1406, %v5001
    %v5058 = vmul.f32 %v1519, %v4058
    %v5059 = vmul.f32 %v1409, %v5002
    %v5060 = vmul.f32 %v1522, %v4061
    %v5061 = vmul.f32 %v1412, %v5003
    %v5062 = vmul.f32 %v1525, %v4064
    %v5063 = vmul.f32 %v1415, %v5004
    %v5064 = vmul.f32 %v1528, %v4067
    %v5065 = vmul.f32 %v1418, %v5005
    %v5066 = vmul.f32 %v1531, %v4070
    %v5067 = vmul.f32 %v1421, %v5006
    %v5068 = vmul.f32 %v1534, %v4073
    %v5069 = vmul.f32 %v1424, %v5007
    %v5070 = vmul.f32 %v1537, %v4076
    %v5071 = vmul.f32 %v1427, %v5008
    %v5072 = vmul.f32 %v1540, %v4079
    %v5074 = vsel %vm2385, %v5010, 0
    %v5077 = vsel %vm2385, %v5012, 0
    %v5080 = vsel %vm2385, %v5014, 0
    %v5083 = vsel %vm2385, %v5016, 0
    %v5086 = vsel %vm2385, %v5018, 0
    %v5089 = vsel %vm2385, %v5020, 0
    %v5092 = vsel %vm2385, %v5022, 0
    %v5095 = vsel %vm2385, %v5024, 0
    %v5098 = vsel %vm2385, %v5026, 0
    %v5101 = vsel %vm2385, %v5028, 0
    %v5104 = vsel %vm2385, %v5030, 0
    %v5107 = vsel %vm2385, %v5032, 0
    %v5110 = vsel %vm2385, %v5034, 0
    %v5113 = vsel %vm2385, %v5036, 0
    %v5116 = vsel %vm2385, %v5038, 0
    %v5119 = vsel %vm2385, %v5040, 0
    %v5122 = vsel %vm2385, %v5042, 0
    %v5125 = vsel %vm2385, %v5044, 0
    %v5128 = vsel %vm2385, %v5046, 0
    %v5131 = vsel %vm2385, %v5048, 0
    %v5134 = vsel %vm2385, %v5050, 0
    %v5137 = vsel %vm2385, %v5052, 0
    %v5140 = vsel %vm2385, %v5054, 0
    %v5143 = vsel %vm2385, %v5056, 0
    %v5146 = vsel %vm2385, %v5058, 0
    %v5149 = vsel %vm2385, %v5060, 0
    %v5152 = vsel %vm2385, %v5062, 0
    %v5155 = vsel %vm2385, %v5064, 0
    %v5158 = vsel %vm2385, %v5066, 0
    %v5161 = vsel %vm2385, %v5068, 0
    %v5164 = vsel %vm2385, %v5070, 0
    %v5167 = vsel %vm2385, %v5072, 0
    %5169 = vmatpush.msra.mxu0 %v1557
    %5170 = vmatpush.msra.mxu0 %v1556
    %5171 = vmatpush.msra.mxu0 %v1555
    %5172 = vmatpush.msra.mxu0 %v1554
    %5173 = vmatpush.msra.mxu0 %v1553
    %5174 = vmatpush.msra.mxu0 %v1552
    %5175 = vmatpush.msra.mxu0 %v1551
    %5176 = vmatpush.msra.mxu0 %v1550
    %5177 = vmatpush.msra.mxu0 %v1549
    %5178 = vmatpush.msra.mxu0 %v1548
    %5179 = vmatpush.msra.mxu0 %v1547
    %5180 = vmatpush.msra.mxu0 %v1546
    %5181 = vmatpush.msra.mxu0 %v1545
    %5182 = vmatpush.msra.mxu0 %v1544
    %5183 = vmatpush.msra.mxu0 %v1543
    %5184 = vmatpush.msra.mxu0 %v1542
    %5185 = vmatmul.f32.gmra.mxu0 %v5009
    %v5186 = vpop.f32.mrf.mxu0
    %v5187 = vadd.f32 0.0, %v5186
    %5188 = vmatmul.f32.gmra.mxu0 %v5011
    %v5189 = vpop.f32.mrf.mxu0
    %v5190 = vadd.f32 0.0, %v5189
    %5191 = vmatmul.f32.gmra.mxu0 %v5013
    %v5192 = vpop.f32.mrf.mxu0
    %v5193 = vadd.f32 0.0, %v5192
    %5194 = vmatmul.f32.gmra.mxu0 %v5015
    %v5195 = vpop.f32.mrf.mxu0
    %v5196 = vadd.f32 0.0, %v5195
    %5197 = vmatmul.f32.gmra.mxu0 %v5017
    %v5198 = vpop.f32.mrf.mxu0
    %v5199 = vadd.f32 0.0, %v5198
    %5200 = vmatmul.f32.gmra.mxu0 %v5019
    %v5201 = vpop.f32.mrf.mxu0
    %v5202 = vadd.f32 0.0, %v5201
    %5203 = vmatmul.f32.gmra.mxu0 %v5021
    %v5204 = vpop.f32.mrf.mxu0
    %v5205 = vadd.f32 0.0, %v5204
    %5206 = vmatmul.f32.gmra.mxu0 %v5023
    %v5207 = vpop.f32.mrf.mxu0
    %v5208 = vadd.f32 0.0, %v5207
    %5209 = vmatmul.f32.gmra.mxu0 %v5025
    %v5210 = vpop.f32.mrf.mxu0
    %v5211 = vadd.f32 0.0, %v5210
    %5212 = vmatmul.f32.gmra.mxu0 %v5027
    %v5213 = vpop.f32.mrf.mxu0
    %v5214 = vadd.f32 0.0, %v5213
    %5215 = vmatmul.f32.gmra.mxu0 %v5029
    %v5216 = vpop.f32.mrf.mxu0
    %v5217 = vadd.f32 0.0, %v5216
    %5218 = vmatmul.f32.gmra.mxu0 %v5031
    %v5219 = vpop.f32.mrf.mxu0
    %v5220 = vadd.f32 0.0, %v5219
    %5221 = vmatmul.f32.gmra.mxu0 %v5033
    %v5222 = vpop.f32.mrf.mxu0
    %v5223 = vadd.f32 0.0, %v5222
    %5224 = vmatmul.f32.gmra.mxu0 %v5035
    %v5225 = vpop.f32.mrf.mxu0
    %v5226 = vadd.f32 0.0, %v5225
    %5227 = vmatmul.f32.gmra.mxu0 %v5037
    %v5228 = vpop.f32.mrf.mxu0
    %v5229 = vadd.f32 0.0, %v5228
    %5230 = vmatmul.f32.gmra.mxu0 %v5039
    %v5231 = vpop.f32.mrf.mxu0
    %v5232 = vadd.f32 0.0, %v5231
    %5233 = vmatmul.f32.gmra.mxu0 %v5041
    %v5234 = vpop.f32.mrf.mxu0
    %v5235 = vadd.f32 0.0, %v5234
    %5236 = vmatmul.f32.gmra.mxu0 %v5043
    %v5237 = vpop.f32.mrf.mxu0
    %v5238 = vadd.f32 0.0, %v5237
    %5239 = vmatmul.f32.gmra.mxu0 %v5045
    %v5240 = vpop.f32.mrf.mxu0
    %v5241 = vadd.f32 0.0, %v5240
    %5242 = vmatmul.f32.gmra.mxu0 %v5047
    %v5243 = vpop.f32.mrf.mxu0
    %v5244 = vadd.f32 0.0, %v5243
    %5245 = vmatmul.f32.gmra.mxu0 %v5049
    %v5246 = vpop.f32.mrf.mxu0
    %v5247 = vadd.f32 0.0, %v5246
    %5248 = vmatmul.f32.gmra.mxu0 %v5051
    %v5249 = vpop.f32.mrf.mxu0
    %v5250 = vadd.f32 0.0, %v5249
    %5251 = vmatmul.f32.gmra.mxu0 %v5053
    %v5252 = vpop.f32.mrf.mxu0
    %v5253 = vadd.f32 0.0, %v5252
    %5254 = vmatmul.f32.gmra.mxu0 %v5055
    %v5255 = vpop.f32.mrf.mxu0
    %v5256 = vadd.f32 0.0, %v5255
    %5257 = vmatmul.f32.gmra.mxu0 %v5057
    %v5258 = vpop.f32.mrf.mxu0
    %v5259 = vadd.f32 0.0, %v5258
    %5260 = vmatmul.f32.gmra.mxu0 %v5059
    %v5261 = vpop.f32.mrf.mxu0
    %v5262 = vadd.f32 0.0, %v5261
    %5263 = vmatmul.f32.gmra.mxu0 %v5061
    %v5264 = vpop.f32.mrf.mxu0
    %v5265 = vadd.f32 0.0, %v5264
    %5266 = vmatmul.f32.gmra.mxu0 %v5063
    %v5267 = vpop.f32.mrf.mxu0
    %v5268 = vadd.f32 0.0, %v5267
    %5269 = vmatmul.f32.gmra.mxu0 %v5065
    %v5270 = vpop.f32.mrf.mxu0
    %v5271 = vadd.f32 0.0, %v5270
    %5272 = vmatmul.f32.gmra.mxu0 %v5067
    %v5273 = vpop.f32.mrf.mxu0
    %v5274 = vadd.f32 0.0, %v5273
    %5275 = vmatmul.f32.gmra.mxu0 %v5069
    %v5276 = vpop.f32.mrf.mxu0
    %v5277 = vadd.f32 0.0, %v5276
    %5278 = vmatmul.f32.gmra.mxu0 %v5071
    %v5279 = vpop.f32.mrf.mxu0
    %v5280 = vadd.f32 0.0, %v5279
    %5281 = vdwg.mxu0
    %5282 = vmatpush.msra.mxu0 0.0
    %5283 = vmatpush.msra.mxu0 0.0
    %5284 = vmatpush.msra.mxu0 0.0
    %5285 = vmatpush.msra.mxu0 0.0
    %5286 = vmatpush.msra.mxu0 0.0
    %5287 = vmatpush.msra.mxu0 0.0
    %5288 = vmatpush.msra.mxu0 0.0
    %5289 = vmatpush.msra.mxu0 0.0
    %5290 = vmatpush.msra.mxu0 0.0
    %5291 = vmatpush.msra.mxu0 0.0
    %5292 = vmatpush.msra.mxu0 0.0
    %5293 = vmatpush.msra.mxu0 0.0
    %5294 = vmatpush.msra.mxu0 0.0
    %5295 = vmatpush.msra.mxu0 0.0
    %5296 = vmatpush.msra.mxu0 %v1559
    %5297 = vmatpush.msra.mxu0 %v1558
    %5298 = vmatmul.f32.gmra.mxu0 %v5074
    %v5299 = vpop.f32.mrf.mxu0
    %v5300 = vadd.f32 %v5187, %v5299
    %5301 = vmatmul.f32.gmra.mxu0 %v5077
    %v5302 = vpop.f32.mrf.mxu0
    %v5303 = vadd.f32 %v5190, %v5302
    %5304 = vmatmul.f32.gmra.mxu0 %v5080
    %v5305 = vpop.f32.mrf.mxu0
    %v5306 = vadd.f32 %v5193, %v5305
    %5307 = vmatmul.f32.gmra.mxu0 %v5083
    %v5308 = vpop.f32.mrf.mxu0
    %v5309 = vadd.f32 %v5196, %v5308
    %5310 = vmatmul.f32.gmra.mxu0 %v5086
    %v5311 = vpop.f32.mrf.mxu0
    %v5312 = vadd.f32 %v5199, %v5311
    %5313 = vmatmul.f32.gmra.mxu0 %v5089
    %v5314 = vpop.f32.mrf.mxu0
    %v5315 = vadd.f32 %v5202, %v5314
    %5316 = vmatmul.f32.gmra.mxu0 %v5092
    %v5317 = vpop.f32.mrf.mxu0
    %v5318 = vadd.f32 %v5205, %v5317
    %5319 = vmatmul.f32.gmra.mxu0 %v5095
    %v5320 = vpop.f32.mrf.mxu0
    %v5321 = vadd.f32 %v5208, %v5320
    %5322 = vmatmul.f32.gmra.mxu0 %v5098
    %v5323 = vpop.f32.mrf.mxu0
    %v5324 = vadd.f32 %v5211, %v5323
    %5325 = vmatmul.f32.gmra.mxu0 %v5101
    %v5326 = vpop.f32.mrf.mxu0
    %v5327 = vadd.f32 %v5214, %v5326
    %5328 = vmatmul.f32.gmra.mxu0 %v5104
    %v5329 = vpop.f32.mrf.mxu0
    %v5330 = vadd.f32 %v5217, %v5329
    %5331 = vmatmul.f32.gmra.mxu0 %v5107
    %v5332 = vpop.f32.mrf.mxu0
    %v5333 = vadd.f32 %v5220, %v5332
    %5334 = vmatmul.f32.gmra.mxu0 %v5110
    %v5335 = vpop.f32.mrf.mxu0
    %v5336 = vadd.f32 %v5223, %v5335
    %5337 = vmatmul.f32.gmra.mxu0 %v5113
    %v5338 = vpop.f32.mrf.mxu0
    %v5339 = vadd.f32 %v5226, %v5338
    %5340 = vmatmul.f32.gmra.mxu0 %v5116
    %v5341 = vpop.f32.mrf.mxu0
    %v5342 = vadd.f32 %v5229, %v5341
    %5343 = vmatmul.f32.gmra.mxu0 %v5119
    %v5344 = vpop.f32.mrf.mxu0
    %v5345 = vadd.f32 %v5232, %v5344
    %5346 = vmatmul.f32.gmra.mxu0 %v5122
    %v5347 = vpop.f32.mrf.mxu0
    %v5348 = vadd.f32 %v5235, %v5347
    %5349 = vmatmul.f32.gmra.mxu0 %v5125
    %v5350 = vpop.f32.mrf.mxu0
    %v5351 = vadd.f32 %v5238, %v5350
    %5352 = vmatmul.f32.gmra.mxu0 %v5128
    %v5353 = vpop.f32.mrf.mxu0
    %v5354 = vadd.f32 %v5241, %v5353
    %5355 = vmatmul.f32.gmra.mxu0 %v5131
    %v5356 = vpop.f32.mrf.mxu0
    %v5357 = vadd.f32 %v5244, %v5356
    %5358 = vmatmul.f32.gmra.mxu0 %v5134
    %v5359 = vpop.f32.mrf.mxu0
    %v5360 = vadd.f32 %v5247, %v5359
    %5361 = vmatmul.f32.gmra.mxu0 %v5137
    %v5362 = vpop.f32.mrf.mxu0
    %v5363 = vadd.f32 %v5250, %v5362
    %5364 = vmatmul.f32.gmra.mxu0 %v5140
    %v5365 = vpop.f32.mrf.mxu0
    %v5366 = vadd.f32 %v5253, %v5365
    %5367 = vmatmul.f32.gmra.mxu0 %v5143
    %v5368 = vpop.f32.mrf.mxu0
    %v5369 = vadd.f32 %v5256, %v5368
    %5370 = vmatmul.f32.gmra.mxu0 %v5146
    %v5371 = vpop.f32.mrf.mxu0
    %v5372 = vadd.f32 %v5259, %v5371
    %5373 = vmatmul.f32.gmra.mxu0 %v5149
    %v5374 = vpop.f32.mrf.mxu0
    %v5375 = vadd.f32 %v5262, %v5374
    %5376 = vmatmul.f32.gmra.mxu0 %v5152
    %v5377 = vpop.f32.mrf.mxu0
    %v5378 = vadd.f32 %v5265, %v5377
    %5379 = vmatmul.f32.gmra.mxu0 %v5155
    %v5380 = vpop.f32.mrf.mxu0
    %v5381 = vadd.f32 %v5268, %v5380
    %5382 = vmatmul.f32.gmra.mxu0 %v5158
    %v5383 = vpop.f32.mrf.mxu0
    %v5384 = vadd.f32 %v5271, %v5383
    %5385 = vmatmul.f32.gmra.mxu0 %v5161
    %v5386 = vpop.f32.mrf.mxu0
    %v5387 = vadd.f32 %v5274, %v5386
    %5388 = vmatmul.f32.gmra.mxu0 %v5164
    %v5389 = vpop.f32.mrf.mxu0
    %v5390 = vadd.f32 %v5277, %v5389
    %5391 = vmatmul.f32.gmra.mxu0 %v5167
    %v5392 = vpop.f32.mrf.mxu0
    %v5393 = vadd.f32 %v5280, %v5392
    %5394 = vdwg.mxu0
    %5395 = vmatpush.msra.mxu0 %v5345
    %5396 = vmatpush.msra.mxu0 %v5342
    %5397 = vmatpush.msra.mxu0 %v5339
    %5398 = vmatpush.msra.mxu0 %v5336
    %5399 = vmatpush.msra.mxu0 %v5333
    %5400 = vmatpush.msra.mxu0 %v5330
    %5401 = vmatpush.msra.mxu0 %v5327
    %5402 = vmatpush.msra.mxu0 %v5324
    %5403 = vmatpush.msra.mxu0 %v5321
    %5404 = vmatpush.msra.mxu0 %v5318
    %5405 = vmatpush.msra.mxu0 %v5315
    %5406 = vmatpush.msra.mxu0 %v5312
    %5407 = vmatpush.msra.mxu0 %v5309
    %5408 = vmatpush.msra.mxu0 %v5306
    %5409 = vmatpush.msra.mxu0 %v5303
    %5410 = vmatpush.msra.mxu0 %v5300
    %5411 = vmatmul.f32.gmra.mxu0 %v291
    %v5412 = vpop.f32.mrf.mxu0
    %v5413 = vadd.f32 0.0, %v5412
    %5414 = vmatmul.f32.gmra.mxu0 %v293
    %v5415 = vpop.f32.mrf.mxu0
    %v5416 = vadd.f32 0.0, %v5415
    %5417 = vmatmul.f32.gmra.mxu0 %v295
    %v5418 = vpop.f32.mrf.mxu0
    %v5419 = vadd.f32 0.0, %v5418
    %5420 = vmatmul.f32.gmra.mxu0 %v297
    %v5421 = vpop.f32.mrf.mxu0
    %v5422 = vadd.f32 0.0, %v5421
    %5423 = vmatmul.f32.gmra.mxu0 %v299
    %v5424 = vpop.f32.mrf.mxu0
    %v5425 = vadd.f32 0.0, %v5424
    %5426 = vmatmul.f32.gmra.mxu0 %v301
    %v5427 = vpop.f32.mrf.mxu0
    %v5428 = vadd.f32 0.0, %v5427
    %5429 = vmatmul.f32.gmra.mxu0 %v303
    %v5430 = vpop.f32.mrf.mxu0
    %v5431 = vadd.f32 0.0, %v5430
    %5432 = vmatmul.f32.gmra.mxu0 %v305
    %v5433 = vpop.f32.mrf.mxu0
    %v5434 = vadd.f32 0.0, %v5433
    %5435 = vmatmul.f32.gmra.mxu0 %v307
    %v5436 = vpop.f32.mrf.mxu0
    %v5437 = vadd.f32 0.0, %v5436
    %5438 = vmatmul.f32.gmra.mxu0 %v309
    %v5439 = vpop.f32.mrf.mxu0
    %v5440 = vadd.f32 0.0, %v5439
    %5441 = vmatmul.f32.gmra.mxu0 %v311
    %v5442 = vpop.f32.mrf.mxu0
    %v5443 = vadd.f32 0.0, %v5442
    %5444 = vmatmul.f32.gmra.mxu0 %v313
    %v5445 = vpop.f32.mrf.mxu0
    %v5446 = vadd.f32 0.0, %v5445
    %5447 = vmatmul.f32.gmra.mxu0 %v315
    %v5448 = vpop.f32.mrf.mxu0
    %v5449 = vadd.f32 0.0, %v5448
    %5450 = vmatmul.f32.gmra.mxu0 %v317
    %v5451 = vpop.f32.mrf.mxu0
    %v5452 = vadd.f32 0.0, %v5451
    %5453 = vmatmul.f32.gmra.mxu0 %v319
    %v5454 = vpop.f32.mrf.mxu0
    %v5455 = vadd.f32 0.0, %v5454
    %5456 = vmatmul.f32.gmra.mxu0 %v321
    %v5457 = vpop.f32.mrf.mxu0
    %v5458 = vadd.f32 0.0, %v5457
    %5459 = vdwg.mxu0
    %5460 = vmatpush.msra.mxu0 %v5393
    %5461 = vmatpush.msra.mxu0 %v5390
    %5462 = vmatpush.msra.mxu0 %v5387
    %5463 = vmatpush.msra.mxu0 %v5384
    %5464 = vmatpush.msra.mxu0 %v5381
    %5465 = vmatpush.msra.mxu0 %v5378
    %5466 = vmatpush.msra.mxu0 %v5375
    %5467 = vmatpush.msra.mxu0 %v5372
    %5468 = vmatpush.msra.mxu0 %v5369
    %5469 = vmatpush.msra.mxu0 %v5366
    %5470 = vmatpush.msra.mxu0 %v5363
    %5471 = vmatpush.msra.mxu0 %v5360
    %5472 = vmatpush.msra.mxu0 %v5357
    %5473 = vmatpush.msra.mxu0 %v5354
    %5474 = vmatpush.msra.mxu0 %v5351
    %5475 = vmatpush.msra.mxu0 %v5348
    %5476 = vmatmul.f32.gmra.mxu0 %v292
    %v5477 = vpop.f32.mrf.mxu0
    %v5478 = vadd.f32 %v5413, %v5477
    %5479 = vmatmul.f32.gmra.mxu0 %v294
    %v5480 = vpop.f32.mrf.mxu0
    %v5481 = vadd.f32 %v5416, %v5480
    %5482 = vmatmul.f32.gmra.mxu0 %v296
    %v5483 = vpop.f32.mrf.mxu0
    %v5484 = vadd.f32 %v5419, %v5483
    %5485 = vmatmul.f32.gmra.mxu0 %v298
    %v5486 = vpop.f32.mrf.mxu0
    %v5487 = vadd.f32 %v5422, %v5486
    %5488 = vmatmul.f32.gmra.mxu0 %v300
    %v5489 = vpop.f32.mrf.mxu0
    %v5490 = vadd.f32 %v5425, %v5489
    %5491 = vmatmul.f32.gmra.mxu0 %v302
    %v5492 = vpop.f32.mrf.mxu0
    %v5493 = vadd.f32 %v5428, %v5492
    %5494 = vmatmul.f32.gmra.mxu0 %v304
    %v5495 = vpop.f32.mrf.mxu0
    %v5496 = vadd.f32 %v5431, %v5495
    %5497 = vmatmul.f32.gmra.mxu0 %v306
    %v5498 = vpop.f32.mrf.mxu0
    %v5499 = vadd.f32 %v5434, %v5498
    %5500 = vmatmul.f32.gmra.mxu0 %v308
    %v5501 = vpop.f32.mrf.mxu0
    %v5502 = vadd.f32 %v5437, %v5501
    %5503 = vmatmul.f32.gmra.mxu0 %v310
    %v5504 = vpop.f32.mrf.mxu0
    %v5505 = vadd.f32 %v5440, %v5504
    %5506 = vmatmul.f32.gmra.mxu0 %v312
    %v5507 = vpop.f32.mrf.mxu0
    %v5508 = vadd.f32 %v5443, %v5507
    %5509 = vmatmul.f32.gmra.mxu0 %v314
    %v5510 = vpop.f32.mrf.mxu0
    %v5511 = vadd.f32 %v5446, %v5510
    %5512 = vmatmul.f32.gmra.mxu0 %v316
    %v5513 = vpop.f32.mrf.mxu0
    %v5514 = vadd.f32 %v5449, %v5513
    %5515 = vmatmul.f32.gmra.mxu0 %v318
    %v5516 = vpop.f32.mrf.mxu0
    %v5517 = vadd.f32 %v5452, %v5516
    %5518 = vmatmul.f32.gmra.mxu0 %v320
    %v5519 = vpop.f32.mrf.mxu0
    %v5520 = vadd.f32 %v5455, %v5519
    %5521 = vmatmul.f32.gmra.mxu0 %v322
    %v5522 = vpop.f32.mrf.mxu0
    %v5523 = vadd.f32 %v5458, %v5522
    %5524 = vdwg.mxu0
    %v5525 = vmul.f32 %v5478, %v401
    %v5526 = vmul.f32 %v5481, %v416
    %v5527 = vmul.f32 %v5484, %v431
    %v5528 = vmul.f32 %v5487, %v446
    %v5529 = vmul.f32 %v5490, %v461
    %v5530 = vmul.f32 %v5493, %v476
    %v5531 = vmul.f32 %v5496, %v491
    %v5532 = vmul.f32 %v5499, %v506
    %v5533 = vmul.f32 %v5502, %v521
    %v5534 = vmul.f32 %v5505, %v536
    %v5535 = vmul.f32 %v5508, %v551
    %v5536 = vmul.f32 %v5511, %v566
    %v5537 = vmul.f32 %v5514, %v581
    %v5538 = vmul.f32 %v5517, %v596
    %v5539 = vmul.f32 %v5520, %v611
    %v5540 = vmul.f32 %v5523, %v626
    %v5541 = vsel %vm2385, %v3921, 0
    %v5543 = vsel %vm2385, %v3923, 0
    %v5545 = vsel %vm2385, %v3925, 0
    %v5547 = vsel %vm2385, %v3927, 0
    %v5549 = vsel %vm2385, %v3929, 0
    %v5551 = vsel %vm2385, %v3931, 0
    %v5553 = vsel %vm2385, %v3933, 0
    %v5555 = vsel %vm2385, %v3935, 0
    %v5557 = vsel %vm2385, %v3937, 0
    %v5559 = vsel %vm2385, %v3939, 0
    %v5561 = vsel %vm2385, %v3941, 0
    %v5563 = vsel %vm2385, %v3943, 0
    %v5565 = vsel %vm2385, %v3945, 0
    %v5567 = vsel %vm2385, %v3947, 0
    %v5569 = vsel %vm2385, %v3949, 0
    %v5571 = vsel %vm2385, %v3951, 0
    %5573 = vmatpush.msra.mxu0 0.0
    %5574 = vmatpush.msra.mxu0 0.0
    %5575 = vmatpush.msra.mxu0 0.0
    %5576 = vmatpush.msra.mxu0 0.0
    %5577 = vmatpush.msra.mxu0 0.0
    %5578 = vmatpush.msra.mxu0 0.0
    %5579 = vmatpush.msra.mxu0 0.0
    %5580 = vmatpush.msra.mxu0 0.0
    %5581 = vmatpush.msra.mxu0 0.0
    %5582 = vmatpush.msra.mxu0 0.0
    %5583 = vmatpush.msra.mxu0 0.0
    %5584 = vmatpush.msra.mxu0 0.0
    %5585 = vmatpush.msra.mxu0 0.0
    %5586 = vmatpush.msra.mxu0 0.0
    %5587 = vmatpush.msra.mxu0 %v1561
    %5588 = vmatpush.msra.mxu0 %v1560
    %5589 = vmatmul.f32.gmra.mxu0 %v5541
    %v5590 = vpop.f32.mrf.mxu0
    %v5591 = vadd.f32 0.0, %v5590
    %5592 = vmatmul.f32.gmra.mxu0 %v5543
    %v5593 = vpop.f32.mrf.mxu0
    %v5594 = vadd.f32 0.0, %v5593
    %5595 = vmatmul.f32.gmra.mxu0 %v5545
    %v5596 = vpop.f32.mrf.mxu0
    %v5597 = vadd.f32 0.0, %v5596
    %5598 = vmatmul.f32.gmra.mxu0 %v5547
    %v5599 = vpop.f32.mrf.mxu0
    %v5600 = vadd.f32 0.0, %v5599
    %5601 = vmatmul.f32.gmra.mxu0 %v5549
    %v5602 = vpop.f32.mrf.mxu0
    %v5603 = vadd.f32 0.0, %v5602
    %5604 = vmatmul.f32.gmra.mxu0 %v5551
    %v5605 = vpop.f32.mrf.mxu0
    %v5606 = vadd.f32 0.0, %v5605
    %5607 = vmatmul.f32.gmra.mxu0 %v5553
    %v5608 = vpop.f32.mrf.mxu0
    %v5609 = vadd.f32 0.0, %v5608
    %5610 = vmatmul.f32.gmra.mxu0 %v5555
    %v5611 = vpop.f32.mrf.mxu0
    %v5612 = vadd.f32 0.0, %v5611
    %5613 = vmatmul.f32.gmra.mxu0 %v5557
    %v5614 = vpop.f32.mrf.mxu0
    %v5615 = vadd.f32 0.0, %v5614
    %5616 = vmatmul.f32.gmra.mxu0 %v5559
    %v5617 = vpop.f32.mrf.mxu0
    %v5618 = vadd.f32 0.0, %v5617
    %5619 = vmatmul.f32.gmra.mxu0 %v5561
    %v5620 = vpop.f32.mrf.mxu0
    %v5621 = vadd.f32 0.0, %v5620
    %5622 = vmatmul.f32.gmra.mxu0 %v5563
    %v5623 = vpop.f32.mrf.mxu0
    %v5624 = vadd.f32 0.0, %v5623
    %5625 = vmatmul.f32.gmra.mxu0 %v5565
    %v5626 = vpop.f32.mrf.mxu0
    %v5627 = vadd.f32 0.0, %v5626
    %5628 = vmatmul.f32.gmra.mxu0 %v5567
    %v5629 = vpop.f32.mrf.mxu0
    %v5630 = vadd.f32 0.0, %v5629
    %5631 = vmatmul.f32.gmra.mxu0 %v5569
    %v5632 = vpop.f32.mrf.mxu0
    %v5633 = vadd.f32 0.0, %v5632
    %5634 = vmatmul.f32.gmra.mxu0 %v5571
    %v5635 = vpop.f32.mrf.mxu0
    %v5636 = vadd.f32 0.0, %v5635
    %5637 = vdwg.mxu0
    %v5638 = vadd.f32 %v5525, %v5591
    %v5639 = vadd.f32 %v5526, %v5594
    %v5640 = vadd.f32 %v5527, %v5597
    %v5641 = vadd.f32 %v5528, %v5600
    %v5642 = vadd.f32 %v5529, %v5603
    %v5643 = vadd.f32 %v5530, %v5606
    %v5644 = vadd.f32 %v5531, %v5609
    %v5645 = vadd.f32 %v5532, %v5612
    %v5646 = vadd.f32 %v5533, %v5615
    %v5647 = vadd.f32 %v5534, %v5618
    %v5648 = vadd.f32 %v5535, %v5621
    %v5649 = vadd.f32 %v5536, %v5624
    %v5650 = vadd.f32 %v5537, %v5627
    %v5651 = vadd.f32 %v5538, %v5630
    %v5652 = vadd.f32 %v5539, %v5633
    %v5653 = vadd.f32 %v5540, %v5636
    %v5654 = vadd.f32 %v5638, %v3277
    %v5655 = vadd.f32 %v5639, %v3277
    %v5656 = vadd.f32 %v5640, %v3277
    %v5657 = vadd.f32 %v5641, %v3277
    %v5658 = vadd.f32 %v5642, %v3277
    %v5659 = vadd.f32 %v5643, %v3277
    %v5660 = vadd.f32 %v5644, %v3277
    %v5661 = vadd.f32 %v5645, %v3277
    %v5662 = vadd.f32 %v5646, %v3277
    %v5663 = vadd.f32 %v5647, %v3277
    %v5664 = vadd.f32 %v5648, %v3277
    %v5665 = vadd.f32 %v5649, %v3277
    %v5666 = vadd.f32 %v5650, %v3277
    %v5667 = vadd.f32 %v5651, %v3277
    %v5668 = vadd.f32 %v5652, %v3277
    %v5669 = vadd.f32 %v5653, %v3277
    %vm5670 = vcmp.ge.f32.partialorder %v5654, 0.0
    %vm5671 = vcmp.ge.f32.partialorder %v5655, 0.0
    %vm5672 = vcmp.ge.f32.partialorder %v5656, 0.0
    %vm5673 = vcmp.ge.f32.partialorder %v5657, 0.0
    %vm5674 = vcmp.ge.f32.partialorder %v5658, 0.0
    %vm5675 = vcmp.ge.f32.partialorder %v5659, 0.0
    %vm5676 = vcmp.ge.f32.partialorder %v5660, 0.0
    %vm5677 = vcmp.ge.f32.partialorder %v5661, 0.0
    %vm5678 = vcmp.ge.f32.partialorder %v5662, 0.0
    %vm5679 = vcmp.ge.f32.partialorder %v5663, 0.0
    %vm5680 = vcmp.ge.f32.partialorder %v5664, 0.0
    %vm5681 = vcmp.ge.f32.partialorder %v5665, 0.0
    %vm5682 = vcmp.ge.f32.partialorder %v5666, 0.0
    %vm5683 = vcmp.ge.f32.partialorder %v5667, 0.0
    %vm5684 = vcmp.ge.f32.partialorder %v5668, 0.0
    %vm5685 = vcmp.ge.f32.partialorder %v5669, 0.0
    %v5686 = vmul.f32 %v5654, 0.01
    %v5687 = vmul.f32 %v5655, 0.01
    %v5688 = vmul.f32 %v5656, 0.01
    %v5689 = vmul.f32 %v5657, 0.01
    %v5690 = vmul.f32 %v5658, 0.01
    %v5691 = vmul.f32 %v5659, 0.01
    %v5692 = vmul.f32 %v5660, 0.01
    %v5693 = vmul.f32 %v5661, 0.01
    %v5694 = vmul.f32 %v5662, 0.01
    %v5695 = vmul.f32 %v5663, 0.01
    %v5696 = vmul.f32 %v5664, 0.01
    %v5697 = vmul.f32 %v5665, 0.01
    %v5698 = vmul.f32 %v5666, 0.01
    %v5699 = vmul.f32 %v5667, 0.01
    %v5700 = vmul.f32 %v5668, 0.01
    %v5701 = vmul.f32 %v5669, 0.01
    %v5702 = vsel %vm5670, %v5654, %v5686
    %v5703 = vsel %vm5671, %v5655, %v5687
    %v5704 = vsel %vm5672, %v5656, %v5688
    %v5705 = vsel %vm5673, %v5657, %v5689
    %v5706 = vsel %vm5674, %v5658, %v5690
    %v5707 = vsel %vm5675, %v5659, %v5691
    %v5708 = vsel %vm5676, %v5660, %v5692
    %v5709 = vsel %vm5677, %v5661, %v5693
    %v5710 = vsel %vm5678, %v5662, %v5694
    %v5711 = vsel %vm5679, %v5663, %v5695
    %v5712 = vsel %vm5680, %v5664, %v5696
    %v5713 = vsel %vm5681, %v5665, %v5697
    %v5714 = vsel %vm5682, %v5666, %v5698
    %v5715 = vsel %vm5683, %v5667, %v5699
    %v5716 = vsel %vm5684, %v5668, %v5700
    %v5717 = vsel %vm5685, %v5669, %v5701
    %v5718 = vsel %vm2385, %v5702, %v3888
    %v5719 = vsel %vm2385, %v5703, %v3889
    %v5720 = vsel %vm2385, %v5704, %v3890
    %v5721 = vsel %vm2385, %v5705, %v3891
    %v5722 = vsel %vm2385, %v5706, %v3892
    %v5723 = vsel %vm2385, %v5707, %v3893
    %v5724 = vsel %vm2385, %v5708, %v3894
    %v5725 = vsel %vm2385, %v5709, %v3895
    %v5726 = vsel %vm2385, %v5710, %v3896
    %v5727 = vsel %vm2385, %v5711, %v3897
    %v5728 = vsel %vm2385, %v5712, %v3898
    %v5729 = vsel %vm2385, %v5713, %v3899
    %v5730 = vsel %vm2385, %v5714, %v3900
    %v5731 = vsel %vm2385, %v5715, %v3901
    %v5732 = vsel %vm2385, %v5716, %v3902
    %v5733 = vsel %vm2385, %v5717, %v3903
    %v5735 = vsel %vm2418, %v5718, 0
    %v5738 = vsel %vm2418, %v5719, 0
    %v5741 = vsel %vm2418, %v5720, 0
    %v5744 = vsel %vm2418, %v5721, 0
    %v5747 = vsel %vm2418, %v5722, 0
    %v5750 = vsel %vm2418, %v5723, 0
    %v5753 = vsel %vm2418, %v5724, 0
    %v5756 = vsel %vm2418, %v5725, 0
    %v5759 = vsel %vm2418, %v5726, 0
    %v5762 = vsel %vm2418, %v5727, 0
    %v5765 = vsel %vm2418, %v5728, 0
    %v5768 = vsel %vm2418, %v5729, 0
    %v5771 = vsel %vm2418, %v5730, 0
    %v5774 = vsel %vm2418, %v5731, 0
    %v5777 = vsel %vm2418, %v5732, 0
    %v5780 = vsel %vm2418, %v5733, 0
    %5782 = vmatpush.msra.mxu0 0.0
    %5783 = vmatpush.msra.mxu0 0.0
    %5784 = vmatpush.msra.mxu0 0.0
    %5785 = vmatpush.msra.mxu0 0.0
    %5786 = vmatpush.msra.mxu0 0.0
    %5787 = vmatpush.msra.mxu0 0.0
    %5788 = vmatpush.msra.mxu0 0.0
    %5789 = vmatpush.msra.mxu0 0.0
    %5790 = vmatpush.msra.mxu0 0.0
    %5791 = vmatpush.msra.mxu0 0.0
    %5792 = vmatpush.msra.mxu0 0.0
    %5793 = vmatpush.msra.mxu0 0.0
    %5794 = vmatpush.msra.mxu0 %v1566
    %5795 = vmatpush.msra.mxu0 %v1565
    %5796 = vmatpush.msra.mxu0 %v1564
    %5797 = vmatpush.msra.mxu0 %v1563
    %5798 = vmatmul.f32.gmra.mxu0 %v5735
    %v5799 = vpop.f32.mrf.mxu0
    %v5800 = vadd.f32 %v3406, %v5799
    %5801 = vmatmul.f32.gmra.mxu0 %v5738
    %v5802 = vpop.f32.mrf.mxu0
    %v5803 = vadd.f32 %v3406, %v5802
    %5804 = vmatmul.f32.gmra.mxu0 %v5741
    %v5805 = vpop.f32.mrf.mxu0
    %v5806 = vadd.f32 %v3406, %v5805
    %5807 = vmatmul.f32.gmra.mxu0 %v5744
    %v5808 = vpop.f32.mrf.mxu0
    %v5809 = vadd.f32 %v3406, %v5808
    %5810 = vmatmul.f32.gmra.mxu0 %v5747
    %v5811 = vpop.f32.mrf.mxu0
    %v5812 = vadd.f32 %v3406, %v5811
    %5813 = vmatmul.f32.gmra.mxu0 %v5750
    %v5814 = vpop.f32.mrf.mxu0
    %v5815 = vadd.f32 %v3406, %v5814
    %5816 = vmatmul.f32.gmra.mxu0 %v5753
    %v5817 = vpop.f32.mrf.mxu0
    %v5818 = vadd.f32 %v3406, %v5817
    %5819 = vmatmul.f32.gmra.mxu0 %v5756
    %v5820 = vpop.f32.mrf.mxu0
    %v5821 = vadd.f32 %v3406, %v5820
    %5822 = vmatmul.f32.gmra.mxu0 %v5759
    %v5823 = vpop.f32.mrf.mxu0
    %v5824 = vadd.f32 %v3406, %v5823
    %5825 = vmatmul.f32.gmra.mxu0 %v5762
    %v5826 = vpop.f32.mrf.mxu0
    %v5827 = vadd.f32 %v3406, %v5826
    %5828 = vmatmul.f32.gmra.mxu0 %v5765
    %v5829 = vpop.f32.mrf.mxu0
    %v5830 = vadd.f32 %v3406, %v5829
    %5831 = vmatmul.f32.gmra.mxu0 %v5768
    %v5832 = vpop.f32.mrf.mxu0
    %v5833 = vadd.f32 %v3406, %v5832
    %5834 = vmatmul.f32.gmra.mxu0 %v5771
    %v5835 = vpop.f32.mrf.mxu0
    %v5836 = vadd.f32 %v3406, %v5835
    %5837 = vmatmul.f32.gmra.mxu0 %v5774
    %v5838 = vpop.f32.mrf.mxu0
    %v5839 = vadd.f32 %v3406, %v5838
    %5840 = vmatmul.f32.gmra.mxu0 %v5777
    %v5841 = vpop.f32.mrf.mxu0
    %v5842 = vadd.f32 %v3406, %v5841
    %5843 = vmatmul.f32.gmra.mxu0 %v5780
    %v5844 = vpop.f32.mrf.mxu0
    %v5845 = vadd.f32 %v3406, %v5844
    %5846 = vdwg.mxu0
    %v5847 = vsub.f32 0.0, %v5800
    %v5848 = vsub.f32 0.0, %v5803
    %v5849 = vsub.f32 0.0, %v5806
    %v5850 = vsub.f32 0.0, %v5809
    %v5851 = vsub.f32 0.0, %v5812
    %v5852 = vsub.f32 0.0, %v5815
    %v5853 = vsub.f32 0.0, %v5818
    %v5854 = vsub.f32 0.0, %v5821
    %v5855 = vsub.f32 0.0, %v5824
    %v5856 = vsub.f32 0.0, %v5827
    %v5857 = vsub.f32 0.0, %v5830
    %v5858 = vsub.f32 0.0, %v5833
    %v5859 = vsub.f32 0.0, %v5836
    %v5860 = vsub.f32 0.0, %v5839
    %v5861 = vsub.f32 0.0, %v5842
    %v5862 = vsub.f32 0.0, %v5845
    %v5863 = vmul.f32 %v5847, 1.442695
    %v5864 = vpow.pop %v5863
    %v5865 = vmul.f32 %v5848, 1.442695
    %v5866 = vpow.pop %v5865
    %v5867 = vmul.f32 %v5849, 1.442695
    %v5868 = vpow.pop %v5867
    %v5869 = vmul.f32 %v5850, 1.442695
    %v5870 = vpow.pop %v5869
    %v5871 = vmul.f32 %v5851, 1.442695
    %v5872 = vpow.pop %v5871
    %v5873 = vmul.f32 %v5852, 1.442695
    %v5874 = vpow.pop %v5873
    %v5875 = vmul.f32 %v5853, 1.442695
    %v5876 = vpow.pop %v5875
    %v5877 = vmul.f32 %v5854, 1.442695
    %v5878 = vpow.pop %v5877
    %v5879 = vmul.f32 %v5855, 1.442695
    %v5880 = vpow.pop %v5879
    %v5881 = vmul.f32 %v5856, 1.442695
    %v5882 = vpow.pop %v5881
    %v5883 = vmul.f32 %v5857, 1.442695
    %v5884 = vpow.pop %v5883
    %v5885 = vmul.f32 %v5858, 1.442695
    %v5886 = vpow.pop %v5885
    %v5887 = vmul.f32 %v5859, 1.442695
    %v5888 = vpow.pop %v5887
    %v5889 = vmul.f32 %v5860, 1.442695
    %v5890 = vpow.pop %v5889
    %v5891 = vmul.f32 %v5861, 1.442695
    %v5892 = vpow.pop %v5891
    %v5893 = vmul.f32 %v5862, 1.442695
    %v5894 = vpow.pop %v5893
    %v5895 = vadd.f32 %v5864, 1.0
    %v5896 = vadd.f32 %v5866, 1.0
    %v5897 = vadd.f32 %v5868, 1.0
    %v5898 = vadd.f32 %v5870, 1.0
    %v5899 = vadd.f32 %v5872, 1.0
    %v5900 = vadd.f32 %v5874, 1.0
    %v5901 = vadd.f32 %v5876, 1.0
    %v5902 = vadd.f32 %v5878, 1.0
    %v5903 = vadd.f32 %v5880, 1.0
    %v5904 = vadd.f32 %v5882, 1.0
    %v5905 = vadd.f32 %v5884, 1.0
    %v5906 = vadd.f32 %v5886, 1.0
    %v5907 = vadd.f32 %v5888, 1.0
    %v5908 = vadd.f32 %v5890, 1.0
    %v5909 = vadd.f32 %v5892, 1.0
    %v5910 = vadd.f32 %v5894, 1.0
    %v5911 = vrcp.pop %v5895
    %v5912 = vrcp.pop %v5896
    %v5913 = vrcp.pop %v5897
    %v5914 = vrcp.pop %v5898
    %v5915 = vrcp.pop %v5899
    %v5916 = vrcp.pop %v5900
    %v5917 = vrcp.pop %v5901
    %v5918 = vrcp.pop %v5902
    %v5919 = vrcp.pop %v5903
    %v5920 = vrcp.pop %v5904
    %v5921 = vrcp.pop %v5905
    %v5922 = vrcp.pop %v5906
    %v5923 = vrcp.pop %v5907
    %v5924 = vrcp.pop %v5908
    %v5925 = vrcp.pop %v5909
    %v5926 = vrcp.pop %v5910
    %5943 = vrot.lane.b32.xlu0 %v5800, 80
    %v5944 = vpop.permute.xlu0 %5943
    %5945 = vrot.lane.b32.xlu0 %v5803, 80
    %v5946 = vpop.permute.xlu0 %5945
    %5947 = vrot.lane.b32.xlu0 %v5806, 80
    %v5948 = vpop.permute.xlu0 %5947
    %5949 = vrot.lane.b32.xlu0 %v5809, 80
    %v5950 = vpop.permute.xlu0 %5949
    %5951 = vrot.lane.b32.xlu0 %v5812, 80
    %v5952 = vpop.permute.xlu0 %5951
    %5953 = vrot.lane.b32.xlu0 %v5815, 80
    %v5954 = vpop.permute.xlu0 %5953
    %5955 = vrot.lane.b32.xlu0 %v5818, 80
    %v5956 = vpop.permute.xlu0 %5955
    %5957 = vrot.lane.b32.xlu0 %v5821, 80
    %v5958 = vpop.permute.xlu0 %5957
    %5959 = vrot.lane.b32.xlu0 %v5824, 80
    %v5960 = vpop.permute.xlu0 %5959
    %5961 = vrot.lane.b32.xlu0 %v5827, 80
    %v5962 = vpop.permute.xlu0 %5961
    %5963 = vrot.lane.b32.xlu0 %v5830, 80
    %v5964 = vpop.permute.xlu0 %5963
    %5965 = vrot.lane.b32.xlu0 %v5833, 80
    %v5966 = vpop.permute.xlu0 %5965
    %5967 = vrot.lane.b32.xlu0 %v5836, 80
    %v5968 = vpop.permute.xlu0 %5967
    %5969 = vrot.lane.b32.xlu0 %v5839, 80
    %v5970 = vpop.permute.xlu0 %5969
    %5971 = vrot.lane.b32.xlu0 %v5842, 80
    %v5972 = vpop.permute.xlu0 %5971
    %5973 = vrot.lane.b32.xlu0 %v5845, 80
    %v5974 = vpop.permute.xlu0 %5973
    %v5991 = vmul.f32 %v5911, %v5944
    %v5992 = vmul.f32 %v5912, %v5946
    %v5993 = vmul.f32 %v5913, %v5948
    %v5994 = vmul.f32 %v5914, %v5950
    %v5995 = vmul.f32 %v5915, %v5952
    %v5996 = vmul.f32 %v5916, %v5954
    %v5997 = vmul.f32 %v5917, %v5956
    %v5998 = vmul.f32 %v5918, %v5958
    %v5999 = vmul.f32 %v5919, %v5960
    %v6000 = vmul.f32 %v5920, %v5962
    %v6001 = vmul.f32 %v5921, %v5964
    %v6002 = vmul.f32 %v5922, %v5966
    %v6003 = vmul.f32 %v5923, %v5968
    %v6004 = vmul.f32 %v5924, %v5970
    %v6005 = vmul.f32 %v5925, %v5972
    %v6006 = vmul.f32 %v5926, %v5974
    %6023 = vrot.lane.b32.xlu0 %v5991, 32
    %v6024 = vpop.permute.xlu0 %6023
    %6025 = vrot.lane.b32.xlu0 %v5992, 32
    %v6026 = vpop.permute.xlu0 %6025
    %6027 = vrot.lane.b32.xlu0 %v5993, 32
    %v6028 = vpop.permute.xlu0 %6027
    %6029 = vrot.lane.b32.xlu0 %v5994, 32
    %v6030 = vpop.permute.xlu0 %6029
    %6031 = vrot.lane.b32.xlu0 %v5995, 32
    %v6032 = vpop.permute.xlu0 %6031
    %6033 = vrot.lane.b32.xlu0 %v5996, 32
    %v6034 = vpop.permute.xlu0 %6033
    %6035 = vrot.lane.b32.xlu0 %v5997, 32
    %v6036 = vpop.permute.xlu0 %6035
    %6037 = vrot.lane.b32.xlu0 %v5998, 32
    %v6038 = vpop.permute.xlu0 %6037
    %6039 = vrot.lane.b32.xlu0 %v5999, 32
    %v6040 = vpop.permute.xlu0 %6039
    %6041 = vrot.lane.b32.xlu0 %v6000, 32
    %v6042 = vpop.permute.xlu0 %6041
    %6043 = vrot.lane.b32.xlu0 %v6001, 32
    %v6044 = vpop.permute.xlu0 %6043
    %6045 = vrot.lane.b32.xlu0 %v6002, 32
    %v6046 = vpop.permute.xlu0 %6045
    %6047 = vrot.lane.b32.xlu0 %v6003, 32
    %v6048 = vpop.permute.xlu0 %6047
    %6049 = vrot.lane.b32.xlu0 %v6004, 32
    %v6050 = vpop.permute.xlu0 %6049
    %6051 = vrot.lane.b32.xlu0 %v6005, 32
    %v6052 = vpop.permute.xlu0 %6051
    %6053 = vrot.lane.b32.xlu0 %v6006, 32
    %v6054 = vpop.permute.xlu0 %6053
    %v6071 = vadd.f32 %v5800, %v6024
    %v6072 = vadd.f32 %v5803, %v6026
    %v6073 = vadd.f32 %v5806, %v6028
    %v6074 = vadd.f32 %v5809, %v6030
    %v6075 = vadd.f32 %v5812, %v6032
    %v6076 = vadd.f32 %v5815, %v6034
    %v6077 = vadd.f32 %v5818, %v6036
    %v6078 = vadd.f32 %v5821, %v6038
    %v6079 = vadd.f32 %v5824, %v6040
    %v6080 = vadd.f32 %v5827, %v6042
    %v6081 = vadd.f32 %v5830, %v6044
    %v6082 = vadd.f32 %v5833, %v6046
    %v6083 = vadd.f32 %v5836, %v6048
    %v6084 = vadd.f32 %v5839, %v6050
    %v6085 = vadd.f32 %v5842, %v6052
    %v6086 = vadd.f32 %v5845, %v6054
    %v6087 = vtanh.pop %v6071
    %v6088 = vtanh.pop %v6072
    %v6089 = vtanh.pop %v6073
    %v6090 = vtanh.pop %v6074
    %v6091 = vtanh.pop %v6075
    %v6092 = vtanh.pop %v6076
    %v6093 = vtanh.pop %v6077
    %v6094 = vtanh.pop %v6078
    %v6095 = vtanh.pop %v6079
    %v6096 = vtanh.pop %v6080
    %v6097 = vtanh.pop %v6081
    %v6098 = vtanh.pop %v6082
    %v6099 = vtanh.pop %v6083
    %v6100 = vtanh.pop %v6084
    %v6101 = vtanh.pop %v6085
    %v6102 = vtanh.pop %v6086
    %v6103 = vsub.f32 1.0, %v5911
    %v6104 = vsub.f32 1.0, %v5912
    %v6105 = vsub.f32 1.0, %v5913
    %v6106 = vsub.f32 1.0, %v5914
    %v6107 = vsub.f32 1.0, %v5915
    %v6108 = vsub.f32 1.0, %v5916
    %v6109 = vsub.f32 1.0, %v5917
    %v6110 = vsub.f32 1.0, %v5918
    %v6111 = vsub.f32 1.0, %v5919
    %v6112 = vsub.f32 1.0, %v5920
    %v6113 = vsub.f32 1.0, %v5921
    %v6114 = vsub.f32 1.0, %v5922
    %v6115 = vsub.f32 1.0, %v5923
    %v6116 = vsub.f32 1.0, %v5924
    %v6117 = vsub.f32 1.0, %v5925
    %v6118 = vsub.f32 1.0, %v5926
    %6135 = vrot.lane.b32.xlu0 %v6087, 112
    %v6136 = vpop.permute.xlu0 %6135
    %6137 = vrot.lane.b32.xlu0 %v6088, 112
    %v6138 = vpop.permute.xlu0 %6137
    %6139 = vrot.lane.b32.xlu0 %v6089, 112
    %v6140 = vpop.permute.xlu0 %6139
    %6141 = vrot.lane.b32.xlu0 %v6090, 112
    %v6142 = vpop.permute.xlu0 %6141
    %6143 = vrot.lane.b32.xlu0 %v6091, 112
    %v6144 = vpop.permute.xlu0 %6143
    %6145 = vrot.lane.b32.xlu0 %v6092, 112
    %v6146 = vpop.permute.xlu0 %6145
    %6147 = vrot.lane.b32.xlu0 %v6093, 112
    %v6148 = vpop.permute.xlu0 %6147
    %6149 = vrot.lane.b32.xlu0 %v6094, 112
    %v6150 = vpop.permute.xlu0 %6149
    %6151 = vrot.lane.b32.xlu0 %v6095, 112
    %v6152 = vpop.permute.xlu0 %6151
    %6153 = vrot.lane.b32.xlu0 %v6096, 112
    %v6154 = vpop.permute.xlu0 %6153
    %6155 = vrot.lane.b32.xlu0 %v6097, 112
    %v6156 = vpop.permute.xlu0 %6155
    %6157 = vrot.lane.b32.xlu0 %v6098, 112
    %v6158 = vpop.permute.xlu0 %6157
    %6159 = vrot.lane.b32.xlu0 %v6099, 112
    %v6160 = vpop.permute.xlu0 %6159
    %6161 = vrot.lane.b32.xlu0 %v6100, 112
    %v6162 = vpop.permute.xlu0 %6161
    %6163 = vrot.lane.b32.xlu0 %v6101, 112
    %v6164 = vpop.permute.xlu0 %6163
    %6165 = vrot.lane.b32.xlu0 %v6102, 112
    %v6166 = vpop.permute.xlu0 %6165
    %v6183 = vmul.f32 %v6103, %v6136
    %v6184 = vmul.f32 %v6104, %v6138
    %v6185 = vmul.f32 %v6105, %v6140
    %v6186 = vmul.f32 %v6106, %v6142
    %v6187 = vmul.f32 %v6107, %v6144
    %v6188 = vmul.f32 %v6108, %v6146
    %v6189 = vmul.f32 %v6109, %v6148
    %v6190 = vmul.f32 %v6110, %v6150
    %v6191 = vmul.f32 %v6111, %v6152
    %v6192 = vmul.f32 %v6112, %v6154
    %v6193 = vmul.f32 %v6113, %v6156
    %v6194 = vmul.f32 %v6114, %v6158
    %v6195 = vmul.f32 %v6115, %v6160
    %v6196 = vmul.f32 %v6116, %v6162
    %v6197 = vmul.f32 %v6117, %v6164
    %v6198 = vmul.f32 %v6118, %v6166
    %v6199 = vmul.f32 %v5911, %v3888
    %v6200 = vmul.f32 %v5912, %v3889
    %v6201 = vmul.f32 %v5913, %v3890
    %v6202 = vmul.f32 %v5914, %v3891
    %v6203 = vmul.f32 %v5915, %v3892
    %v6204 = vmul.f32 %v5916, %v3893
    %v6205 = vmul.f32 %v5917, %v3894
    %v6206 = vmul.f32 %v5918, %v3895
    %v6207 = vmul.f32 %v5919, %v3896
    %v6208 = vmul.f32 %v5920, %v3897
    %v6209 = vmul.f32 %v5921, %v3898
    %v6210 = vmul.f32 %v5922, %v3899
    %v6211 = vmul.f32 %v5923, %v3900
    %v6212 = vmul.f32 %v5924, %v3901
    %v6213 = vmul.f32 %v5925, %v3902
    %v6214 = vmul.f32 %v5926, %v3903
    %v6215 = vadd.f32 %v6183, %v6199
    %v6216 = vadd.f32 %v6184, %v6200
    %v6217 = vadd.f32 %v6185, %v6201
    %v6218 = vadd.f32 %v6186, %v6202
    %v6219 = vadd.f32 %v6187, %v6203
    %v6220 = vadd.f32 %v6188, %v6204
    %v6221 = vadd.f32 %v6189, %v6205
    %v6222 = vadd.f32 %v6190, %v6206
    %v6223 = vadd.f32 %v6191, %v6207
    %v6224 = vadd.f32 %v6192, %v6208
    %v6225 = vadd.f32 %v6193, %v6209
    %v6226 = vadd.f32 %v6194, %v6210
    %v6227 = vadd.f32 %v6195, %v6211
    %v6228 = vadd.f32 %v6196, %v6212
    %v6229 = vadd.f32 %v6197, %v6213
    %v6230 = vadd.f32 %v6198, %v6214
    %6247 = vrot.lane.b32.xlu0 %v6215, 112
    %v6248 = vpop.permute.xlu0 %6247
    %6249 = vrot.lane.b32.xlu0 %v6216, 112
    %v6250 = vpop.permute.xlu0 %6249
    %6251 = vrot.lane.b32.xlu0 %v6217, 112
    %v6252 = vpop.permute.xlu0 %6251
    %6253 = vrot.lane.b32.xlu0 %v6218, 112
    %v6254 = vpop.permute.xlu0 %6253
    %6255 = vrot.lane.b32.xlu0 %v6219, 112
    %v6256 = vpop.permute.xlu0 %6255
    %6257 = vrot.lane.b32.xlu0 %v6220, 112
    %v6258 = vpop.permute.xlu0 %6257
    %6259 = vrot.lane.b32.xlu0 %v6221, 112
    %v6260 = vpop.permute.xlu0 %6259
    %6261 = vrot.lane.b32.xlu0 %v6222, 112
    %v6262 = vpop.permute.xlu0 %6261
    %6263 = vrot.lane.b32.xlu0 %v6223, 112
    %v6264 = vpop.permute.xlu0 %6263
    %6265 = vrot.lane.b32.xlu0 %v6224, 112
    %v6266 = vpop.permute.xlu0 %6265
    %6267 = vrot.lane.b32.xlu0 %v6225, 112
    %v6268 = vpop.permute.xlu0 %6267
    %6269 = vrot.lane.b32.xlu0 %v6226, 112
    %v6270 = vpop.permute.xlu0 %6269
    %6271 = vrot.lane.b32.xlu0 %v6227, 112
    %v6272 = vpop.permute.xlu0 %6271
    %6273 = vrot.lane.b32.xlu0 %v6228, 112
    %v6274 = vpop.permute.xlu0 %6273
    %6275 = vrot.lane.b32.xlu0 %v6229, 112
    %v6276 = vpop.permute.xlu0 %6275
    %6277 = vrot.lane.b32.xlu0 %v6230, 112
    %v6278 = vpop.permute.xlu0 %6277
    %6295 = vmatpush.msra.mxu0 %v6278
    %6296 = vmatpush.msra.mxu0 %v6276
    %6297 = vmatpush.msra.mxu0 %v6274
    %6298 = vmatpush.msra.mxu0 %v6272
    %6299 = vmatpush.msra.mxu0 %v6270
    %6300 = vmatpush.msra.mxu0 %v6268
    %6301 = vmatpush.msra.mxu0 %v6266
    %6302 = vmatpush.msra.mxu0 %v6264
    %6303 = vmatpush.msra.mxu0 %v6262
    %6304 = vmatpush.msra.mxu0 %v6260
    %6305 = vmatpush.msra.mxu0 %v6258
    %6306 = vmatpush.msra.mxu0 %v6256
    %6307 = vmatpush.msra.mxu0 %v6254
    %6308 = vmatpush.msra.mxu0 %v6252
    %6309 = vmatpush.msra.mxu0 %v6250
    %6310 = vmatpush.msra.mxu0 %v6248
    %6311 = vmatmul.f32.gmra.mxu0 %v207
    %v6312 = vpop.f32.mrf.mxu0
    %v6313 = vadd.f32 0.0, %v6312
    %6314 = vmatmul.f32.gmra.mxu0 %v208
    %v6315 = vpop.f32.mrf.mxu0
    %v6316 = vadd.f32 0.0, %v6315
    %6317 = vmatmul.f32.gmra.mxu0 %v209
    %v6318 = vpop.f32.mrf.mxu0
    %v6319 = vadd.f32 0.0, %v6318
    %6320 = vmatmul.f32.gmra.mxu0 %v210
    %v6321 = vpop.f32.mrf.mxu0
    %v6322 = vadd.f32 0.0, %v6321
    %6323 = vmatmul.f32.gmra.mxu0 %v211
    %v6324 = vpop.f32.mrf.mxu0
    %v6325 = vadd.f32 0.0, %v6324
    %6326 = vmatmul.f32.gmra.mxu0 %v212
    %v6327 = vpop.f32.mrf.mxu0
    %v6328 = vadd.f32 0.0, %v6327
    %6329 = vmatmul.f32.gmra.mxu0 %v213
    %v6330 = vpop.f32.mrf.mxu0
    %v6331 = vadd.f32 0.0, %v6330
    %6332 = vmatmul.f32.gmra.mxu0 %v214
    %v6333 = vpop.f32.mrf.mxu0
    %v6334 = vadd.f32 0.0, %v6333
    %6335 = vmatmul.f32.gmra.mxu0 %v215
    %v6336 = vpop.f32.mrf.mxu0
    %v6337 = vadd.f32 0.0, %v6336
    %6338 = vmatmul.f32.gmra.mxu0 %v216
    %v6339 = vpop.f32.mrf.mxu0
    %v6340 = vadd.f32 0.0, %v6339
    %6341 = vmatmul.f32.gmra.mxu0 %v217
    %v6342 = vpop.f32.mrf.mxu0
    %v6343 = vadd.f32 0.0, %v6342
    %6344 = vmatmul.f32.gmra.mxu0 %v218
    %v6345 = vpop.f32.mrf.mxu0
    %v6346 = vadd.f32 0.0, %v6345
    %6347 = vmatmul.f32.gmra.mxu0 %v219
    %v6348 = vpop.f32.mrf.mxu0
    %v6349 = vadd.f32 0.0, %v6348
    %6350 = vmatmul.f32.gmra.mxu0 %v220
    %v6351 = vpop.f32.mrf.mxu0
    %v6352 = vadd.f32 0.0, %v6351
    %6353 = vmatmul.f32.gmra.mxu0 %v221
    %v6354 = vpop.f32.mrf.mxu0
    %v6355 = vadd.f32 0.0, %v6354
    %6356 = vmatmul.f32.gmra.mxu0 %v222
    %v6357 = vpop.f32.mrf.mxu0
    %v6358 = vadd.f32 0.0, %v6357
    %6359 = vmatmul.f32.gmra.mxu0 %v223
    %v6360 = vpop.f32.mrf.mxu0
    %v6361 = vadd.f32 0.0, %v6360
    %6362 = vmatmul.f32.gmra.mxu0 %v224
    %v6363 = vpop.f32.mrf.mxu0
    %v6364 = vadd.f32 0.0, %v6363
    %6365 = vmatmul.f32.gmra.mxu0 %v225
    %v6366 = vpop.f32.mrf.mxu0
    %v6367 = vadd.f32 0.0, %v6366
    %6368 = vmatmul.f32.gmra.mxu0 %v226
    %v6369 = vpop.f32.mrf.mxu0
    %v6370 = vadd.f32 0.0, %v6369
    %6371 = vmatmul.f32.gmra.mxu0 %v227
    %v6372 = vpop.f32.mrf.mxu0
    %v6373 = vadd.f32 0.0, %v6372
    %6374 = vmatmul.f32.gmra.mxu0 %v228
    %v6375 = vpop.f32.mrf.mxu0
    %v6376 = vadd.f32 0.0, %v6375
    %6377 = vmatmul.f32.gmra.mxu0 %v229
    %v6378 = vpop.f32.mrf.mxu0
    %v6379 = vadd.f32 0.0, %v6378
    %6380 = vmatmul.f32.gmra.mxu0 %v230
    %v6381 = vpop.f32.mrf.mxu0
    %v6382 = vadd.f32 0.0, %v6381
    %6383 = vmatmul.f32.gmra.mxu0 %v231
    %v6384 = vpop.f32.mrf.mxu0
    %v6385 = vadd.f32 0.0, %v6384
    %6386 = vmatmul.f32.gmra.mxu0 %v232
    %v6387 = vpop.f32.mrf.mxu0
    %v6388 = vadd.f32 0.0, %v6387
    %6389 = vmatmul.f32.gmra.mxu0 %v233
    %v6390 = vpop.f32.mrf.mxu0
    %v6391 = vadd.f32 0.0, %v6390
    %6392 = vmatmul.f32.gmra.mxu0 %v234
    %v6393 = vpop.f32.mrf.mxu0
    %v6394 = vadd.f32 0.0, %v6393
    %6395 = vmatmul.f32.gmra.mxu0 %v235
    %v6396 = vpop.f32.mrf.mxu0
    %v6397 = vadd.f32 0.0, %v6396
    %6398 = vmatmul.f32.gmra.mxu0 %v236
    %v6399 = vpop.f32.mrf.mxu0
    %v6400 = vadd.f32 0.0, %v6399
    %6401 = vmatmul.f32.gmra.mxu0 %v237
    %v6402 = vpop.f32.mrf.mxu0
    %v6403 = vadd.f32 0.0, %v6402
    %6404 = vmatmul.f32.gmra.mxu0 %v238
    %v6405 = vpop.f32.mrf.mxu0
    %v6406 = vadd.f32 0.0, %v6405
    %6407 = vdwg.mxu0
    %6440 = vrot.lane.b32.xlu0 %v6313, 16
    %v6441 = vpop.permute.xlu0 %6440
    %6442 = vrot.lane.b32.xlu0 %v6316, 16
    %v6443 = vpop.permute.xlu0 %6442
    %6444 = vrot.lane.b32.xlu0 %v6319, 16
    %v6445 = vpop.permute.xlu0 %6444
    %6446 = vrot.lane.b32.xlu0 %v6322, 16
    %v6447 = vpop.permute.xlu0 %6446
    %6448 = vrot.lane.b32.xlu0 %v6325, 16
    %v6449 = vpop.permute.xlu0 %6448
    %6450 = vrot.lane.b32.xlu0 %v6328, 16
    %v6451 = vpop.permute.xlu0 %6450
    %6452 = vrot.lane.b32.xlu0 %v6331, 16
    %v6453 = vpop.permute.xlu0 %6452
    %6454 = vrot.lane.b32.xlu0 %v6334, 16
    %v6455 = vpop.permute.xlu0 %6454
    %6456 = vrot.lane.b32.xlu0 %v6337, 16
    %v6457 = vpop.permute.xlu0 %6456
    %6458 = vrot.lane.b32.xlu0 %v6340, 16
    %v6459 = vpop.permute.xlu0 %6458
    %6460 = vrot.lane.b32.xlu0 %v6343, 16
    %v6461 = vpop.permute.xlu0 %6460
    %6462 = vrot.lane.b32.xlu0 %v6346, 16
    %v6463 = vpop.permute.xlu0 %6462
    %6464 = vrot.lane.b32.xlu0 %v6349, 16
    %v6465 = vpop.permute.xlu0 %6464
    %6466 = vrot.lane.b32.xlu0 %v6352, 16
    %v6467 = vpop.permute.xlu0 %6466
    %6468 = vrot.lane.b32.xlu0 %v6355, 16
    %v6469 = vpop.permute.xlu0 %6468
    %6470 = vrot.lane.b32.xlu0 %v6358, 16
    %v6471 = vpop.permute.xlu0 %6470
    %6472 = vrot.lane.b32.xlu0 %v6361, 16
    %v6473 = vpop.permute.xlu0 %6472
    %6474 = vrot.lane.b32.xlu0 %v6364, 16
    %v6475 = vpop.permute.xlu0 %6474
    %6476 = vrot.lane.b32.xlu0 %v6367, 16
    %v6477 = vpop.permute.xlu0 %6476
    %6478 = vrot.lane.b32.xlu0 %v6370, 16
    %v6479 = vpop.permute.xlu0 %6478
    %6480 = vrot.lane.b32.xlu0 %v6373, 16
    %v6481 = vpop.permute.xlu0 %6480
    %6482 = vrot.lane.b32.xlu0 %v6376, 16
    %v6483 = vpop.permute.xlu0 %6482
    %6484 = vrot.lane.b32.xlu0 %v6379, 16
    %v6485 = vpop.permute.xlu0 %6484
    %6486 = vrot.lane.b32.xlu0 %v6382, 16
    %v6487 = vpop.permute.xlu0 %6486
    %6488 = vrot.lane.b32.xlu0 %v6385, 16
    %v6489 = vpop.permute.xlu0 %6488
    %6490 = vrot.lane.b32.xlu0 %v6388, 16
    %v6491 = vpop.permute.xlu0 %6490
    %6492 = vrot.lane.b32.xlu0 %v6391, 16
    %v6493 = vpop.permute.xlu0 %6492
    %6494 = vrot.lane.b32.xlu0 %v6394, 16
    %v6495 = vpop.permute.xlu0 %6494
    %6496 = vrot.lane.b32.xlu0 %v6397, 16
    %v6497 = vpop.permute.xlu0 %6496
    %6498 = vrot.lane.b32.xlu0 %v6400, 16
    %v6499 = vpop.permute.xlu0 %6498
    %6500 = vrot.lane.b32.xlu0 %v6403, 16
    %v6501 = vpop.permute.xlu0 %6500
    %6502 = vrot.lane.b32.xlu0 %v6406, 16
    %v6503 = vpop.permute.xlu0 %6502
    %6536 = vrot.lane.b32.xlu0 %v6313, 32
    %v6537 = vpop.permute.xlu0 %6536
    %6538 = vrot.lane.b32.xlu0 %v6316, 32
    %v6539 = vpop.permute.xlu0 %6538
    %6540 = vrot.lane.b32.xlu0 %v6319, 32
    %v6541 = vpop.permute.xlu0 %6540
    %6542 = vrot.lane.b32.xlu0 %v6322, 32
    %v6543 = vpop.permute.xlu0 %6542
    %6544 = vrot.lane.b32.xlu0 %v6325, 32
    %v6545 = vpop.permute.xlu0 %6544
    %6546 = vrot.lane.b32.xlu0 %v6328, 32
    %v6547 = vpop.permute.xlu0 %6546
    %6548 = vrot.lane.b32.xlu0 %v6331, 32
    %v6549 = vpop.permute.xlu0 %6548
    %6550 = vrot.lane.b32.xlu0 %v6334, 32
    %v6551 = vpop.permute.xlu0 %6550
    %6552 = vrot.lane.b32.xlu0 %v6337, 32
    %v6553 = vpop.permute.xlu0 %6552
    %6554 = vrot.lane.b32.xlu0 %v6340, 32
    %v6555 = vpop.permute.xlu0 %6554
    %6556 = vrot.lane.b32.xlu0 %v6343, 32
    %v6557 = vpop.permute.xlu0 %6556
    %6558 = vrot.lane.b32.xlu0 %v6346, 32
    %v6559 = vpop.permute.xlu0 %6558
    %6560 = vrot.lane.b32.xlu0 %v6349, 32
    %v6561 = vpop.permute.xlu0 %6560
    %6562 = vrot.lane.b32.xlu0 %v6352, 32
    %v6563 = vpop.permute.xlu0 %6562
    %6564 = vrot.lane.b32.xlu0 %v6355, 32
    %v6565 = vpop.permute.xlu0 %6564
    %6566 = vrot.lane.b32.xlu0 %v6358, 32
    %v6567 = vpop.permute.xlu0 %6566
    %6568 = vrot.lane.b32.xlu0 %v6361, 32
    %v6569 = vpop.permute.xlu0 %6568
    %6570 = vrot.lane.b32.xlu0 %v6364, 32
    %v6571 = vpop.permute.xlu0 %6570
    %6572 = vrot.lane.b32.xlu0 %v6367, 32
    %v6573 = vpop.permute.xlu0 %6572
    %6574 = vrot.lane.b32.xlu0 %v6370, 32
    %v6575 = vpop.permute.xlu0 %6574
    %6576 = vrot.lane.b32.xlu0 %v6373, 32
    %v6577 = vpop.permute.xlu0 %6576
    %6578 = vrot.lane.b32.xlu0 %v6376, 32
    %v6579 = vpop.permute.xlu0 %6578
    %6580 = vrot.lane.b32.xlu0 %v6379, 32
    %v6581 = vpop.permute.xlu0 %6580
    %6582 = vrot.lane.b32.xlu0 %v6382, 32
    %v6583 = vpop.permute.xlu0 %6582
    %6584 = vrot.lane.b32.xlu0 %v6385, 32
    %v6585 = vpop.permute.xlu0 %6584
    %6586 = vrot.lane.b32.xlu0 %v6388, 32
    %v6587 = vpop.permute.xlu0 %6586
    %6588 = vrot.lane.b32.xlu0 %v6391, 32
    %v6589 = vpop.permute.xlu0 %6588
    %6590 = vrot.lane.b32.xlu0 %v6394, 32
    %v6591 = vpop.permute.xlu0 %6590
    %6592 = vrot.lane.b32.xlu0 %v6397, 32
    %v6593 = vpop.permute.xlu0 %6592
    %6594 = vrot.lane.b32.xlu0 %v6400, 32
    %v6595 = vpop.permute.xlu0 %6594
    %6596 = vrot.lane.b32.xlu0 %v6403, 32
    %v6597 = vpop.permute.xlu0 %6596
    %6598 = vrot.lane.b32.xlu0 %v6406, 32
    %v6599 = vpop.permute.xlu0 %6598
    %6632 = vrot.lane.b32.xlu0 %v6313, 48
    %v6633 = vpop.permute.xlu0 %6632
    %6634 = vrot.lane.b32.xlu0 %v6316, 48
    %v6635 = vpop.permute.xlu0 %6634
    %6636 = vrot.lane.b32.xlu0 %v6319, 48
    %v6637 = vpop.permute.xlu0 %6636
    %6638 = vrot.lane.b32.xlu0 %v6322, 48
    %v6639 = vpop.permute.xlu0 %6638
    %6640 = vrot.lane.b32.xlu0 %v6325, 48
    %v6641 = vpop.permute.xlu0 %6640
    %6642 = vrot.lane.b32.xlu0 %v6328, 48
    %v6643 = vpop.permute.xlu0 %6642
    %6644 = vrot.lane.b32.xlu0 %v6331, 48
    %v6645 = vpop.permute.xlu0 %6644
    %6646 = vrot.lane.b32.xlu0 %v6334, 48
    %v6647 = vpop.permute.xlu0 %6646
    %6648 = vrot.lane.b32.xlu0 %v6337, 48
    %v6649 = vpop.permute.xlu0 %6648
    %6650 = vrot.lane.b32.xlu0 %v6340, 48
    %v6651 = vpop.permute.xlu0 %6650
    %6652 = vrot.lane.b32.xlu0 %v6343, 48
    %v6653 = vpop.permute.xlu0 %6652
    %6654 = vrot.lane.b32.xlu0 %v6346, 48
    %v6655 = vpop.permute.xlu0 %6654
    %6656 = vrot.lane.b32.xlu0 %v6349, 48
    %v6657 = vpop.permute.xlu0 %6656
    %6658 = vrot.lane.b32.xlu0 %v6352, 48
    %v6659 = vpop.permute.xlu0 %6658
    %6660 = vrot.lane.b32.xlu0 %v6355, 48
    %v6661 = vpop.permute.xlu0 %6660
    %6662 = vrot.lane.b32.xlu0 %v6358, 48
    %v6663 = vpop.permute.xlu0 %6662
    %6664 = vrot.lane.b32.xlu0 %v6361, 48
    %v6665 = vpop.permute.xlu0 %6664
    %6666 = vrot.lane.b32.xlu0 %v6364, 48
    %v6667 = vpop.permute.xlu0 %6666
    %6668 = vrot.lane.b32.xlu0 %v6367, 48
    %v6669 = vpop.permute.xlu0 %6668
    %6670 = vrot.lane.b32.xlu0 %v6370, 48
    %v6671 = vpop.permute.xlu0 %6670
    %6672 = vrot.lane.b32.xlu0 %v6373, 48
    %v6673 = vpop.permute.xlu0 %6672
    %6674 = vrot.lane.b32.xlu0 %v6376, 48
    %v6675 = vpop.permute.xlu0 %6674
    %6676 = vrot.lane.b32.xlu0 %v6379, 48
    %v6677 = vpop.permute.xlu0 %6676
    %6678 = vrot.lane.b32.xlu0 %v6382, 48
    %v6679 = vpop.permute.xlu0 %6678
    %6680 = vrot.lane.b32.xlu0 %v6385, 48
    %v6681 = vpop.permute.xlu0 %6680
    %6682 = vrot.lane.b32.xlu0 %v6388, 48
    %v6683 = vpop.permute.xlu0 %6682
    %6684 = vrot.lane.b32.xlu0 %v6391, 48
    %v6685 = vpop.permute.xlu0 %6684
    %6686 = vrot.lane.b32.xlu0 %v6394, 48
    %v6687 = vpop.permute.xlu0 %6686
    %6688 = vrot.lane.b32.xlu0 %v6397, 48
    %v6689 = vpop.permute.xlu0 %6688
    %6690 = vrot.lane.b32.xlu0 %v6400, 48
    %v6691 = vpop.permute.xlu0 %6690
    %6692 = vrot.lane.b32.xlu0 %v6403, 48
    %v6693 = vpop.permute.xlu0 %6692
    %6694 = vrot.lane.b32.xlu0 %v6406, 48
    %v6695 = vpop.permute.xlu0 %6694
    %6728 = vrot.lane.b32.xlu0 %v6313, 64
    %v6729 = vpop.permute.xlu0 %6728
    %6730 = vrot.lane.b32.xlu0 %v6316, 64
    %v6731 = vpop.permute.xlu0 %6730
    %6732 = vrot.lane.b32.xlu0 %v6319, 64
    %v6733 = vpop.permute.xlu0 %6732
    %6734 = vrot.lane.b32.xlu0 %v6322, 64
    %v6735 = vpop.permute.xlu0 %6734
    %6736 = vrot.lane.b32.xlu0 %v6325, 64
    %v6737 = vpop.permute.xlu0 %6736
    %6738 = vrot.lane.b32.xlu0 %v6328, 64
    %v6739 = vpop.permute.xlu0 %6738
    %6740 = vrot.lane.b32.xlu0 %v6331, 64
    %v6741 = vpop.permute.xlu0 %6740
    %6742 = vrot.lane.b32.xlu0 %v6334, 64
    %v6743 = vpop.permute.xlu0 %6742
    %6744 = vrot.lane.b32.xlu0 %v6337, 64
    %v6745 = vpop.permute.xlu0 %6744
    %6746 = vrot.lane.b32.xlu0 %v6340, 64
    %v6747 = vpop.permute.xlu0 %6746
    %6748 = vrot.lane.b32.xlu0 %v6343, 64
    %v6749 = vpop.permute.xlu0 %6748
    %6750 = vrot.lane.b32.xlu0 %v6346, 64
    %v6751 = vpop.permute.xlu0 %6750
    %6752 = vrot.lane.b32.xlu0 %v6349, 64
    %v6753 = vpop.permute.xlu0 %6752
    %6754 = vrot.lane.b32.xlu0 %v6352, 64
    %v6755 = vpop.permute.xlu0 %6754
    %6756 = vrot.lane.b32.xlu0 %v6355, 64
    %v6757 = vpop.permute.xlu0 %6756
    %6758 = vrot.lane.b32.xlu0 %v6358, 64
    %v6759 = vpop.permute.xlu0 %6758
    %6760 = vrot.lane.b32.xlu0 %v6361, 64
    %v6761 = vpop.permute.xlu0 %6760
    %6762 = vrot.lane.b32.xlu0 %v6364, 64
    %v6763 = vpop.permute.xlu0 %6762
    %6764 = vrot.lane.b32.xlu0 %v6367, 64
    %v6765 = vpop.permute.xlu0 %6764
    %6766 = vrot.lane.b32.xlu0 %v6370, 64
    %v6767 = vpop.permute.xlu0 %6766
    %6768 = vrot.lane.b32.xlu0 %v6373, 64
    %v6769 = vpop.permute.xlu0 %6768
    %6770 = vrot.lane.b32.xlu0 %v6376, 64
    %v6771 = vpop.permute.xlu0 %6770
    %6772 = vrot.lane.b32.xlu0 %v6379, 64
    %v6773 = vpop.permute.xlu0 %6772
    %6774 = vrot.lane.b32.xlu0 %v6382, 64
    %v6775 = vpop.permute.xlu0 %6774
    %6776 = vrot.lane.b32.xlu0 %v6385, 64
    %v6777 = vpop.permute.xlu0 %6776
    %6778 = vrot.lane.b32.xlu0 %v6388, 64
    %v6779 = vpop.permute.xlu0 %6778
    %6780 = vrot.lane.b32.xlu0 %v6391, 64
    %v6781 = vpop.permute.xlu0 %6780
    %6782 = vrot.lane.b32.xlu0 %v6394, 64
    %v6783 = vpop.permute.xlu0 %6782
    %6784 = vrot.lane.b32.xlu0 %v6397, 64
    %v6785 = vpop.permute.xlu0 %6784
    %6786 = vrot.lane.b32.xlu0 %v6400, 64
    %v6787 = vpop.permute.xlu0 %6786
    %6788 = vrot.lane.b32.xlu0 %v6403, 64
    %v6789 = vpop.permute.xlu0 %6788
    %6790 = vrot.lane.b32.xlu0 %v6406, 64
    %v6791 = vpop.permute.xlu0 %6790
    %6824 = vrot.lane.b32.xlu0 %v6313, 80
    %v6825 = vpop.permute.xlu0 %6824
    %6826 = vrot.lane.b32.xlu0 %v6316, 80
    %v6827 = vpop.permute.xlu0 %6826
    %6828 = vrot.lane.b32.xlu0 %v6319, 80
    %v6829 = vpop.permute.xlu0 %6828
    %6830 = vrot.lane.b32.xlu0 %v6322, 80
    %v6831 = vpop.permute.xlu0 %6830
    %6832 = vrot.lane.b32.xlu0 %v6325, 80
    %v6833 = vpop.permute.xlu0 %6832
    %6834 = vrot.lane.b32.xlu0 %v6328, 80
    %v6835 = vpop.permute.xlu0 %6834
    %6836 = vrot.lane.b32.xlu0 %v6331, 80
    %v6837 = vpop.permute.xlu0 %6836
    %6838 = vrot.lane.b32.xlu0 %v6334, 80
    %v6839 = vpop.permute.xlu0 %6838
    %6840 = vrot.lane.b32.xlu0 %v6337, 80
    %v6841 = vpop.permute.xlu0 %6840
    %6842 = vrot.lane.b32.xlu0 %v6340, 80
    %v6843 = vpop.permute.xlu0 %6842
    %6844 = vrot.lane.b32.xlu0 %v6343, 80
    %v6845 = vpop.permute.xlu0 %6844
    %6846 = vrot.lane.b32.xlu0 %v6346, 80
    %v6847 = vpop.permute.xlu0 %6846
    %6848 = vrot.lane.b32.xlu0 %v6349, 80
    %v6849 = vpop.permute.xlu0 %6848
    %6850 = vrot.lane.b32.xlu0 %v6352, 80
    %v6851 = vpop.permute.xlu0 %6850
    %6852 = vrot.lane.b32.xlu0 %v6355, 80
    %v6853 = vpop.permute.xlu0 %6852
    %6854 = vrot.lane.b32.xlu0 %v6358, 80
    %v6855 = vpop.permute.xlu0 %6854
    %6856 = vrot.lane.b32.xlu0 %v6361, 80
    %v6857 = vpop.permute.xlu0 %6856
    %6858 = vrot.lane.b32.xlu0 %v6364, 80
    %v6859 = vpop.permute.xlu0 %6858
    %6860 = vrot.lane.b32.xlu0 %v6367, 80
    %v6861 = vpop.permute.xlu0 %6860
    %6862 = vrot.lane.b32.xlu0 %v6370, 80
    %v6863 = vpop.permute.xlu0 %6862
    %6864 = vrot.lane.b32.xlu0 %v6373, 80
    %v6865 = vpop.permute.xlu0 %6864
    %6866 = vrot.lane.b32.xlu0 %v6376, 80
    %v6867 = vpop.permute.xlu0 %6866
    %6868 = vrot.lane.b32.xlu0 %v6379, 80
    %v6869 = vpop.permute.xlu0 %6868
    %6870 = vrot.lane.b32.xlu0 %v6382, 80
    %v6871 = vpop.permute.xlu0 %6870
    %6872 = vrot.lane.b32.xlu0 %v6385, 80
    %v6873 = vpop.permute.xlu0 %6872
    %6874 = vrot.lane.b32.xlu0 %v6388, 80
    %v6875 = vpop.permute.xlu0 %6874
    %6876 = vrot.lane.b32.xlu0 %v6391, 80
    %v6877 = vpop.permute.xlu0 %6876
    %6878 = vrot.lane.b32.xlu0 %v6394, 80
    %v6879 = vpop.permute.xlu0 %6878
    %6880 = vrot.lane.b32.xlu0 %v6397, 80
    %v6881 = vpop.permute.xlu0 %6880
    %6882 = vrot.lane.b32.xlu0 %v6400, 80
    %v6883 = vpop.permute.xlu0 %6882
    %6884 = vrot.lane.b32.xlu0 %v6403, 80
    %v6885 = vpop.permute.xlu0 %6884
    %6886 = vrot.lane.b32.xlu0 %v6406, 80
    %v6887 = vpop.permute.xlu0 %6886
    %6920 = vrot.lane.b32.xlu0 %v6313, 96
    %v6921 = vpop.permute.xlu0 %6920
    %6922 = vrot.lane.b32.xlu0 %v6316, 96
    %v6923 = vpop.permute.xlu0 %6922
    %6924 = vrot.lane.b32.xlu0 %v6319, 96
    %v6925 = vpop.permute.xlu0 %6924
    %6926 = vrot.lane.b32.xlu0 %v6322, 96
    %v6927 = vpop.permute.xlu0 %6926
    %6928 = vrot.lane.b32.xlu0 %v6325, 96
    %v6929 = vpop.permute.xlu0 %6928
    %6930 = vrot.lane.b32.xlu0 %v6328, 96
    %v6931 = vpop.permute.xlu0 %6930
    %6932 = vrot.lane.b32.xlu0 %v6331, 96
    %v6933 = vpop.permute.xlu0 %6932
    %6934 = vrot.lane.b32.xlu0 %v6334, 96
    %v6935 = vpop.permute.xlu0 %6934
    %6936 = vrot.lane.b32.xlu0 %v6337, 96
    %v6937 = vpop.permute.xlu0 %6936
    %6938 = vrot.lane.b32.xlu0 %v6340, 96
    %v6939 = vpop.permute.xlu0 %6938
    %6940 = vrot.lane.b32.xlu0 %v6343, 96
    %v6941 = vpop.permute.xlu0 %6940
    %6942 = vrot.lane.b32.xlu0 %v6346, 96
    %v6943 = vpop.permute.xlu0 %6942
    %6944 = vrot.lane.b32.xlu0 %v6349, 96
    %v6945 = vpop.permute.xlu0 %6944
    %6946 = vrot.lane.b32.xlu0 %v6352, 96
    %v6947 = vpop.permute.xlu0 %6946
    %6948 = vrot.lane.b32.xlu0 %v6355, 96
    %v6949 = vpop.permute.xlu0 %6948
    %6950 = vrot.lane.b32.xlu0 %v6358, 96
    %v6951 = vpop.permute.xlu0 %6950
    %6952 = vrot.lane.b32.xlu0 %v6361, 96
    %v6953 = vpop.permute.xlu0 %6952
    %6954 = vrot.lane.b32.xlu0 %v6364, 96
    %v6955 = vpop.permute.xlu0 %6954
    %6956 = vrot.lane.b32.xlu0 %v6367, 96
    %v6957 = vpop.permute.xlu0 %6956
    %6958 = vrot.lane.b32.xlu0 %v6370, 96
    %v6959 = vpop.permute.xlu0 %6958
    %6960 = vrot.lane.b32.xlu0 %v6373, 96
    %v6961 = vpop.permute.xlu0 %6960
    %6962 = vrot.lane.b32.xlu0 %v6376, 96
    %v6963 = vpop.permute.xlu0 %6962
    %6964 = vrot.lane.b32.xlu0 %v6379, 96
    %v6965 = vpop.permute.xlu0 %6964
    %6966 = vrot.lane.b32.xlu0 %v6382, 96
    %v6967 = vpop.permute.xlu0 %6966
    %6968 = vrot.lane.b32.xlu0 %v6385, 96
    %v6969 = vpop.permute.xlu0 %6968
    %6970 = vrot.lane.b32.xlu0 %v6388, 96
    %v6971 = vpop.permute.xlu0 %6970
    %6972 = vrot.lane.b32.xlu0 %v6391, 96
    %v6973 = vpop.permute.xlu0 %6972
    %6974 = vrot.lane.b32.xlu0 %v6394, 96
    %v6975 = vpop.permute.xlu0 %6974
    %6976 = vrot.lane.b32.xlu0 %v6397, 96
    %v6977 = vpop.permute.xlu0 %6976
    %6978 = vrot.lane.b32.xlu0 %v6400, 96
    %v6979 = vpop.permute.xlu0 %6978
    %6980 = vrot.lane.b32.xlu0 %v6403, 96
    %v6981 = vpop.permute.xlu0 %6980
    %6982 = vrot.lane.b32.xlu0 %v6406, 96
    %v6983 = vpop.permute.xlu0 %6982
    %7016 = vrot.lane.b32.xlu0 %v6313, 112
    %v7017 = vpop.permute.xlu0 %7016
    %7018 = vrot.lane.b32.xlu0 %v6316, 112
    %v7019 = vpop.permute.xlu0 %7018
    %7020 = vrot.lane.b32.xlu0 %v6319, 112
    %v7021 = vpop.permute.xlu0 %7020
    %7022 = vrot.lane.b32.xlu0 %v6322, 112
    %v7023 = vpop.permute.xlu0 %7022
    %7024 = vrot.lane.b32.xlu0 %v6325, 112
    %v7025 = vpop.permute.xlu0 %7024
    %7026 = vrot.lane.b32.xlu0 %v6328, 112
    %v7027 = vpop.permute.xlu0 %7026
    %7028 = vrot.lane.b32.xlu0 %v6331, 112
    %v7029 = vpop.permute.xlu0 %7028
    %7030 = vrot.lane.b32.xlu0 %v6334, 112
    %v7031 = vpop.permute.xlu0 %7030
    %7032 = vrot.lane.b32.xlu0 %v6337, 112
    %v7033 = vpop.permute.xlu0 %7032
    %7034 = vrot.lane.b32.xlu0 %v6340, 112
    %v7035 = vpop.permute.xlu0 %7034
    %7036 = vrot.lane.b32.xlu0 %v6343, 112
    %v7037 = vpop.permute.xlu0 %7036
    %7038 = vrot.lane.b32.xlu0 %v6346, 112
    %v7039 = vpop.permute.xlu0 %7038
    %7040 = vrot.lane.b32.xlu0 %v6349, 112
    %v7041 = vpop.permute.xlu0 %7040
    %7042 = vrot.lane.b32.xlu0 %v6352, 112
    %v7043 = vpop.permute.xlu0 %7042
    %7044 = vrot.lane.b32.xlu0 %v6355, 112
    %v7045 = vpop.permute.xlu0 %7044
    %7046 = vrot.lane.b32.xlu0 %v6358, 112
    %v7047 = vpop.permute.xlu0 %7046
    %7048 = vrot.lane.b32.xlu0 %v6361, 112
    %v7049 = vpop.permute.xlu0 %7048
    %7050 = vrot.lane.b32.xlu0 %v6364, 112
    %v7051 = vpop.permute.xlu0 %7050
    %7052 = vrot.lane.b32.xlu0 %v6367, 112
    %v7053 = vpop.permute.xlu0 %7052
    %7054 = vrot.lane.b32.xlu0 %v6370, 112
    %v7055 = vpop.permute.xlu0 %7054
    %7056 = vrot.lane.b32.xlu0 %v6373, 112
    %v7057 = vpop.permute.xlu0 %7056
    %7058 = vrot.lane.b32.xlu0 %v6376, 112
    %v7059 = vpop.permute.xlu0 %7058
    %7060 = vrot.lane.b32.xlu0 %v6379, 112
    %v7061 = vpop.permute.xlu0 %7060
    %7062 = vrot.lane.b32.xlu0 %v6382, 112
    %v7063 = vpop.permute.xlu0 %7062
    %7064 = vrot.lane.b32.xlu0 %v6385, 112
    %v7065 = vpop.permute.xlu0 %7064
    %7066 = vrot.lane.b32.xlu0 %v6388, 112
    %v7067 = vpop.permute.xlu0 %7066
    %7068 = vrot.lane.b32.xlu0 %v6391, 112
    %v7069 = vpop.permute.xlu0 %7068
    %7070 = vrot.lane.b32.xlu0 %v6394, 112
    %v7071 = vpop.permute.xlu0 %7070
    %7072 = vrot.lane.b32.xlu0 %v6397, 112
    %v7073 = vpop.permute.xlu0 %7072
    %7074 = vrot.lane.b32.xlu0 %v6400, 112
    %v7075 = vpop.permute.xlu0 %7074
    %7076 = vrot.lane.b32.xlu0 %v6403, 112
    %v7077 = vpop.permute.xlu0 %7076
    %7078 = vrot.lane.b32.xlu0 %v6406, 112
    %v7079 = vpop.permute.xlu0 %7078
    %v7112 = vsel %vm2385, %v6313, %v6441
    %v7113 = vsel %vm2385, %v6316, %v6443
    %v7114 = vsel %vm2385, %v6319, %v6445
    %v7115 = vsel %vm2385, %v6322, %v6447
    %v7116 = vsel %vm2385, %v6325, %v6449
    %v7117 = vsel %vm2385, %v6328, %v6451
    %v7118 = vsel %vm2385, %v6331, %v6453
    %v7119 = vsel %vm2385, %v6334, %v6455
    %v7120 = vsel %vm2385, %v6337, %v6457
    %v7121 = vsel %vm2385, %v6340, %v6459
    %v7122 = vsel %vm2385, %v6343, %v6461
    %v7123 = vsel %vm2385, %v6346, %v6463
    %v7124 = vsel %vm2385, %v6349, %v6465
    %v7125 = vsel %vm2385, %v6352, %v6467
    %v7126 = vsel %vm2385, %v6355, %v6469
    %v7127 = vsel %vm2385, %v6358, %v6471
    %v7128 = vsel %vm2385, %v6361, %v6473
    %v7129 = vsel %vm2385, %v6364, %v6475
    %v7130 = vsel %vm2385, %v6367, %v6477
    %v7131 = vsel %vm2385, %v6370, %v6479
    %v7132 = vsel %vm2385, %v6373, %v6481
    %v7133 = vsel %vm2385, %v6376, %v6483
    %v7134 = vsel %vm2385, %v6379, %v6485
    %v7135 = vsel %vm2385, %v6382, %v6487
    %v7136 = vsel %vm2385, %v6385, %v6489
    %v7137 = vsel %vm2385, %v6388, %v6491
    %v7138 = vsel %vm2385, %v6391, %v6493
    %v7139 = vsel %vm2385, %v6394, %v6495
    %v7140 = vsel %vm2385, %v6397, %v6497
    %v7141 = vsel %vm2385, %v6400, %v6499
    %v7142 = vsel %vm2385, %v6403, %v6501
    %v7143 = vsel %vm2385, %v6406, %v6503
    %v7144 = vsel %vm2418, %v7112, %v6537
    %v7145 = vsel %vm2418, %v7113, %v6539
    %v7146 = vsel %vm2418, %v7114, %v6541
    %v7147 = vsel %vm2418, %v7115, %v6543
    %v7148 = vsel %vm2418, %v7116, %v6545
    %v7149 = vsel %vm2418, %v7117, %v6547
    %v7150 = vsel %vm2418, %v7118, %v6549
    %v7151 = vsel %vm2418, %v7119, %v6551
    %v7152 = vsel %vm2418, %v7120, %v6553
    %v7153 = vsel %vm2418, %v7121, %v6555
    %v7154 = vsel %vm2418, %v7122, %v6557
    %v7155 = vsel %vm2418, %v7123, %v6559
    %v7156 = vsel %vm2418, %v7124, %v6561
    %v7157 = vsel %vm2418, %v7125, %v6563
    %v7158 = vsel %vm2418, %v7126, %v6565
    %v7159 = vsel %vm2418, %v7127, %v6567
    %v7160 = vsel %vm2418, %v7128, %v6569
    %v7161 = vsel %vm2418, %v7129, %v6571
    %v7162 = vsel %vm2418, %v7130, %v6573
    %v7163 = vsel %vm2418, %v7131, %v6575
    %v7164 = vsel %vm2418, %v7132, %v6577
    %v7165 = vsel %vm2418, %v7133, %v6579
    %v7166 = vsel %vm2418, %v7134, %v6581
    %v7167 = vsel %vm2418, %v7135, %v6583
    %v7168 = vsel %vm2418, %v7136, %v6585
    %v7169 = vsel %vm2418, %v7137, %v6587
    %v7170 = vsel %vm2418, %v7138, %v6589
    %v7171 = vsel %vm2418, %v7139, %v6591
    %v7172 = vsel %vm2418, %v7140, %v6593
    %v7173 = vsel %vm2418, %v7141, %v6595
    %v7174 = vsel %vm2418, %v7142, %v6597
    %v7175 = vsel %vm2418, %v7143, %v6599
    %v7176 = vsel %vm2451, %v7144, %v6633
    %v7177 = vsel %vm2451, %v7145, %v6635
    %v7178 = vsel %vm2451, %v7146, %v6637
    %v7179 = vsel %vm2451, %v7147, %v6639
    %v7180 = vsel %vm2451, %v7148, %v6641
    %v7181 = vsel %vm2451, %v7149, %v6643
    %v7182 = vsel %vm2451, %v7150, %v6645
    %v7183 = vsel %vm2451, %v7151, %v6647
    %v7184 = vsel %vm2451, %v7152, %v6649
    %v7185 = vsel %vm2451, %v7153, %v6651
    %v7186 = vsel %vm2451, %v7154, %v6653
    %v7187 = vsel %vm2451, %v7155, %v6655
    %v7188 = vsel %vm2451, %v7156, %v6657
    %v7189 = vsel %vm2451, %v7157, %v6659
    %v7190 = vsel %vm2451, %v7158, %v6661
    %v7191 = vsel %vm2451, %v7159, %v6663
    %v7192 = vsel %vm2451, %v7160, %v6665
    %v7193 = vsel %vm2451, %v7161, %v6667
    %v7194 = vsel %vm2451, %v7162, %v6669
    %v7195 = vsel %vm2451, %v7163, %v6671
    %v7196 = vsel %vm2451, %v7164, %v6673
    %v7197 = vsel %vm2451, %v7165, %v6675
    %v7198 = vsel %vm2451, %v7166, %v6677
    %v7199 = vsel %vm2451, %v7167, %v6679
    %v7200 = vsel %vm2451, %v7168, %v6681
    %v7201 = vsel %vm2451, %v7169, %v6683
    %v7202 = vsel %vm2451, %v7170, %v6685
    %v7203 = vsel %vm2451, %v7171, %v6687
    %v7204 = vsel %vm2451, %v7172, %v6689
    %v7205 = vsel %vm2451, %v7173, %v6691
    %v7206 = vsel %vm2451, %v7174, %v6693
    %v7207 = vsel %vm2451, %v7175, %v6695
    %v7208 = vsel %vm2484, %v7176, %v6729
    %v7209 = vsel %vm2484, %v7177, %v6731
    %v7210 = vsel %vm2484, %v7178, %v6733
    %v7211 = vsel %vm2484, %v7179, %v6735
    %v7212 = vsel %vm2484, %v7180, %v6737
    %v7213 = vsel %vm2484, %v7181, %v6739
    %v7214 = vsel %vm2484, %v7182, %v6741
    %v7215 = vsel %vm2484, %v7183, %v6743
    %v7216 = vsel %vm2484, %v7184, %v6745
    %v7217 = vsel %vm2484, %v7185, %v6747
    %v7218 = vsel %vm2484, %v7186, %v6749
    %v7219 = vsel %vm2484, %v7187, %v6751
    %v7220 = vsel %vm2484, %v7188, %v6753
    %v7221 = vsel %vm2484, %v7189, %v6755
    %v7222 = vsel %vm2484, %v7190, %v6757
    %v7223 = vsel %vm2484, %v7191, %v6759
    %v7224 = vsel %vm2484, %v7192, %v6761
    %v7225 = vsel %vm2484, %v7193, %v6763
    %v7226 = vsel %vm2484, %v7194, %v6765
    %v7227 = vsel %vm2484, %v7195, %v6767
    %v7228 = vsel %vm2484, %v7196, %v6769
    %v7229 = vsel %vm2484, %v7197, %v6771
    %v7230 = vsel %vm2484, %v7198, %v6773
    %v7231 = vsel %vm2484, %v7199, %v6775
    %v7232 = vsel %vm2484, %v7200, %v6777
    %v7233 = vsel %vm2484, %v7201, %v6779
    %v7234 = vsel %vm2484, %v7202, %v6781
    %v7235 = vsel %vm2484, %v7203, %v6783
    %v7236 = vsel %vm2484, %v7204, %v6785
    %v7237 = vsel %vm2484, %v7205, %v6787
    %v7238 = vsel %vm2484, %v7206, %v6789
    %v7239 = vsel %vm2484, %v7207, %v6791
    %v7240 = vsel %vm2517, %v7208, %v6825
    %v7241 = vsel %vm2517, %v7209, %v6827
    %v7242 = vsel %vm2517, %v7210, %v6829
    %v7243 = vsel %vm2517, %v7211, %v6831
    %v7244 = vsel %vm2517, %v7212, %v6833
    %v7245 = vsel %vm2517, %v7213, %v6835
    %v7246 = vsel %vm2517, %v7214, %v6837
    %v7247 = vsel %vm2517, %v7215, %v6839
    %v7248 = vsel %vm2517, %v7216, %v6841
    %v7249 = vsel %vm2517, %v7217, %v6843
    %v7250 = vsel %vm2517, %v7218, %v6845
    %v7251 = vsel %vm2517, %v7219, %v6847
    %v7252 = vsel %vm2517, %v7220, %v6849
    %v7253 = vsel %vm2517, %v7221, %v6851
    %v7254 = vsel %vm2517, %v7222, %v6853
    %v7255 = vsel %vm2517, %v7223, %v6855
    %v7256 = vsel %vm2517, %v7224, %v6857
    %v7257 = vsel %vm2517, %v7225, %v6859
    %v7258 = vsel %vm2517, %v7226, %v6861
    %v7259 = vsel %vm2517, %v7227, %v6863
    %v7260 = vsel %vm2517, %v7228, %v6865
    %v7261 = vsel %vm2517, %v7229, %v6867
    %v7262 = vsel %vm2517, %v7230, %v6869
    %v7263 = vsel %vm2517, %v7231, %v6871
    %v7264 = vsel %vm2517, %v7232, %v6873
    %v7265 = vsel %vm2517, %v7233, %v6875
    %v7266 = vsel %vm2517, %v7234, %v6877
    %v7267 = vsel %vm2517, %v7235, %v6879
    %v7268 = vsel %vm2517, %v7236, %v6881
    %v7269 = vsel %vm2517, %v7237, %v6883
    %v7270 = vsel %vm2517, %v7238, %v6885
    %v7271 = vsel %vm2517, %v7239, %v6887
    %v7272 = vsel %vm2550, %v7240, %v6921
    %v7273 = vsel %vm2550, %v7241, %v6923
    %v7274 = vsel %vm2550, %v7242, %v6925
    %v7275 = vsel %vm2550, %v7243, %v6927
    %v7276 = vsel %vm2550, %v7244, %v6929
    %v7277 = vsel %vm2550, %v7245, %v6931
    %v7278 = vsel %vm2550, %v7246, %v6933
    %v7279 = vsel %vm2550, %v7247, %v6935
    %v7280 = vsel %vm2550, %v7248, %v6937
    %v7281 = vsel %vm2550, %v7249, %v6939
    %v7282 = vsel %vm2550, %v7250, %v6941
    %v7283 = vsel %vm2550, %v7251, %v6943
    %v7284 = vsel %vm2550, %v7252, %v6945
    %v7285 = vsel %vm2550, %v7253, %v6947
    %v7286 = vsel %vm2550, %v7254, %v6949
    %v7287 = vsel %vm2550, %v7255, %v6951
    %v7288 = vsel %vm2550, %v7256, %v6953
    %v7289 = vsel %vm2550, %v7257, %v6955
    %v7290 = vsel %vm2550, %v7258, %v6957
    %v7291 = vsel %vm2550, %v7259, %v6959
    %v7292 = vsel %vm2550, %v7260, %v6961
    %v7293 = vsel %vm2550, %v7261, %v6963
    %v7294 = vsel %vm2550, %v7262, %v6965
    %v7295 = vsel %vm2550, %v7263, %v6967
    %v7296 = vsel %vm2550, %v7264, %v6969
    %v7297 = vsel %vm2550, %v7265, %v6971
    %v7298 = vsel %vm2550, %v7266, %v6973
    %v7299 = vsel %vm2550, %v7267, %v6975
    %v7300 = vsel %vm2550, %v7268, %v6977
    %v7301 = vsel %vm2550, %v7269, %v6979
    %v7302 = vsel %vm2550, %v7270, %v6981
    %v7303 = vsel %vm2550, %v7271, %v6983
    %v7304 = vsel %vm2583, %v7272, %v7017
    %v7305 = vsel %vm2583, %v7273, %v7019
    %v7306 = vsel %vm2583, %v7274, %v7021
    %v7307 = vsel %vm2583, %v7275, %v7023
    %v7308 = vsel %vm2583, %v7276, %v7025
    %v7309 = vsel %vm2583, %v7277, %v7027
    %v7310 = vsel %vm2583, %v7278, %v7029
    %v7311 = vsel %vm2583, %v7279, %v7031
    %v7312 = vsel %vm2583, %v7280, %v7033
    %v7313 = vsel %vm2583, %v7281, %v7035
    %v7314 = vsel %vm2583, %v7282, %v7037
    %v7315 = vsel %vm2583, %v7283, %v7039
    %v7316 = vsel %vm2583, %v7284, %v7041
    %v7317 = vsel %vm2583, %v7285, %v7043
    %v7318 = vsel %vm2583, %v7286, %v7045
    %v7319 = vsel %vm2583, %v7287, %v7047
    %v7320 = vsel %vm2583, %v7288, %v7049
    %v7321 = vsel %vm2583, %v7289, %v7051
    %v7322 = vsel %vm2583, %v7290, %v7053
    %v7323 = vsel %vm2583, %v7291, %v7055
    %v7324 = vsel %vm2583, %v7292, %v7057
    %v7325 = vsel %vm2583, %v7293, %v7059
    %v7326 = vsel %vm2583, %v7294, %v7061
    %v7327 = vsel %vm2583, %v7295, %v7063
    %v7328 = vsel %vm2583, %v7296, %v7065
    %v7329 = vsel %vm2583, %v7297, %v7067
    %v7330 = vsel %vm2583, %v7298, %v7069
    %v7331 = vsel %vm2583, %v7299, %v7071
    %v7332 = vsel %vm2583, %v7300, %v7073
    %v7333 = vsel %vm2583, %v7301, %v7075
    %v7334 = vsel %vm2583, %v7302, %v7077
    %v7335 = vsel %vm2583, %v7303, %v7079
    %v7336 = vmul.f32 %v1334, %v7304
    %v7337 = vmul.f32 %v1447, %v6313
    %v7338 = vmul.f32 %v1337, %v7305
    %v7339 = vmul.f32 %v1450, %v6316
    %v7340 = vmul.f32 %v1340, %v7306
    %v7341 = vmul.f32 %v1453, %v6319
    %v7342 = vmul.f32 %v1343, %v7307
    %v7343 = vmul.f32 %v1456, %v6322
    %v7344 = vmul.f32 %v1346, %v7308
    %v7345 = vmul.f32 %v1459, %v6325
    %v7346 = vmul.f32 %v1349, %v7309
    %v7347 = vmul.f32 %v1462, %v6328
    %v7348 = vmul.f32 %v1352, %v7310
    %v7349 = vmul.f32 %v1465, %v6331
    %v7350 = vmul.f32 %v1355, %v7311
    %v7351 = vmul.f32 %v1468, %v6334
    %v7352 = vmul.f32 %v1358, %v7312
    %v7353 = vmul.f32 %v1471, %v6337
    %v7354 = vmul.f32 %v1361, %v7313
    %v7355 = vmul.f32 %v1474, %v6340
    %v7356 = vmul.f32 %v1364, %v7314
    %v7357 = vmul.f32 %v1477, %v6343
    %v7358 = vmul.f32 %v1367, %v7315
    %v7359 = vmul.f32 %v1480, %v6346
    %v7360 = vmul.f32 %v1370, %v7316
    %v7361 = vmul.f32 %v1483, %v6349
    %v7362 = vmul.f32 %v1373, %v7317
    %v7363 = vmul.f32 %v1486, %v6352
    %v7364 = vmul.f32 %v1376, %v7318
    %v7365 = vmul.f32 %v1489, %v6355
    %v7366 = vmul.f32 %v1379, %v7319
    %v7367 = vmul.f32 %v1492, %v6358
    %v7368 = vmul.f32 %v1382, %v7320
    %v7369 = vmul.f32 %v1495, %v6361
    %v7370 = vmul.f32 %v1385, %v7321
    %v7371 = vmul.f32 %v1498, %v6364
    %v7372 = vmul.f32 %v1388, %v7322
    %v7373 = vmul.f32 %v1501, %v6367
    %v7374 = vmul.f32 %v1391, %v7323
    %v7375 = vmul.f32 %v1504, %v6370
    %v7376 = vmul.f32 %v1394, %v7324
    %v7377 = vmul.f32 %v1507, %v6373
    %v7378 = vmul.f32 %v1397, %v7325
    %v7379 = vmul.f32 %v1510, %v6376
    %v7380 = vmul.f32 %v1400, %v7326
    %v7381 = vmul.f32 %v1513, %v6379
    %v7382 = vmul.f32 %v1403, %v7327
    %v7383 = vmul.f32 %v1516, %v6382
    %v7384 = vmul.f32 %v1406, %v7328
    %v7385 = vmul.f32 %v1519, %v6385
    %v7386 = vmul.f32 %v1409, %v7329
    %v7387 = vmul.f32 %v1522, %v6388
    %v7388 = vmul.f32 %v1412, %v7330
    %v7389 = vmul.f32 %v1525, %v6391
    %v7390 = vmul.f32 %v1415, %v7331
    %v7391 = vmul.f32 %v1528, %v6394
    %v7392 = vmul.f32 %v1418, %v7332
    %v7393 = vmul.f32 %v1531, %v6397
    %v7394 = vmul.f32 %v1421, %v7333
    %v7395 = vmul.f32 %v1534, %v6400
    %v7396 = vmul.f32 %v1424, %v7334
    %v7397 = vmul.f32 %v1537, %v6403
    %v7398 = vmul.f32 %v1427, %v7335
    %v7399 = vmul.f32 %v1540, %v6406
    %v7401 = vsel %vm2385, %v7337, 0
    %v7404 = vsel %vm2385, %v7339, 0
    %v7407 = vsel %vm2385, %v7341, 0
    %v7410 = vsel %vm2385, %v7343, 0
    %v7413 = vsel %vm2385, %v7345, 0
    %v7416 = vsel %vm2385, %v7347, 0
    %v7419 = vsel %vm2385, %v7349, 0
    %v7422 = vsel %vm2385, %v7351, 0
    %v7425 = vsel %vm2385, %v7353, 0
    %v7428 = vsel %vm2385, %v7355, 0
    %v7431 = vsel %vm2385, %v7357, 0
    %v7434 = vsel %vm2385, %v7359, 0
    %v7437 = vsel %vm2385, %v7361, 0
    %v7440 = vsel %vm2385, %v7363, 0
    %v7443 = vsel %vm2385, %v7365, 0
    %v7446 = vsel %vm2385, %v7367, 0
    %v7449 = vsel %vm2385, %v7369, 0
    %v7452 = vsel %vm2385, %v7371, 0
    %v7455 = vsel %vm2385, %v7373, 0
    %v7458 = vsel %vm2385, %v7375, 0
    %v7461 = vsel %vm2385, %v7377, 0
    %v7464 = vsel %vm2385, %v7379, 0
    %v7467 = vsel %vm2385, %v7381, 0
    %v7470 = vsel %vm2385, %v7383, 0
    %v7473 = vsel %vm2385, %v7385, 0
    %v7476 = vsel %vm2385, %v7387, 0
    %v7479 = vsel %vm2385, %v7389, 0
    %v7482 = vsel %vm2385, %v7391, 0
    %v7485 = vsel %vm2385, %v7393, 0
    %v7488 = vsel %vm2385, %v7395, 0
    %v7491 = vsel %vm2385, %v7397, 0
    %v7494 = vsel %vm2385, %v7399, 0
    %7496 = vmatpush.msra.mxu0 %v1557
    %7497 = vmatpush.msra.mxu0 %v1556
    %7498 = vmatpush.msra.mxu0 %v1555
    %7499 = vmatpush.msra.mxu0 %v1554
    %7500 = vmatpush.msra.mxu0 %v1553
    %7501 = vmatpush.msra.mxu0 %v1552
    %7502 = vmatpush.msra.mxu0 %v1551
    %7503 = vmatpush.msra.mxu0 %v1550
    %7504 = vmatpush.msra.mxu0 %v1549
    %7505 = vmatpush.msra.mxu0 %v1548
    %7506 = vmatpush.msra.mxu0 %v1547
    %7507 = vmatpush.msra.mxu0 %v1546
    %7508 = vmatpush.msra.mxu0 %v1545
    %7509 = vmatpush.msra.mxu0 %v1544
    %7510 = vmatpush.msra.mxu0 %v1543
    %7511 = vmatpush.msra.mxu0 %v1542
    %7512 = vmatmul.f32.gmra.mxu0 %v7336
    %v7513 = vpop.f32.mrf.mxu0
    %v7514 = vadd.f32 0.0, %v7513
    %7515 = vmatmul.f32.gmra.mxu0 %v7338
    %v7516 = vpop.f32.mrf.mxu0
    %v7517 = vadd.f32 0.0, %v7516
    %7518 = vmatmul.f32.gmra.mxu0 %v7340
    %v7519 = vpop.f32.mrf.mxu0
    %v7520 = vadd.f32 0.0, %v7519
    %7521 = vmatmul.f32.gmra.mxu0 %v7342
    %v7522 = vpop.f32.mrf.mxu0
    %v7523 = vadd.f32 0.0, %v7522
    %7524 = vmatmul.f32.gmra.mxu0 %v7344
    %v7525 = vpop.f32.mrf.mxu0
    %v7526 = vadd.f32 0.0, %v7525
    %7527 = vmatmul.f32.gmra.mxu0 %v7346
    %v7528 = vpop.f32.mrf.mxu0
    %v7529 = vadd.f32 0.0, %v7528
    %7530 = vmatmul.f32.gmra.mxu0 %v7348
    %v7531 = vpop.f32.mrf.mxu0
    %v7532 = vadd.f32 0.0, %v7531
    %7533 = vmatmul.f32.gmra.mxu0 %v7350
    %v7534 = vpop.f32.mrf.mxu0
    %v7535 = vadd.f32 0.0, %v7534
    %7536 = vmatmul.f32.gmra.mxu0 %v7352
    %v7537 = vpop.f32.mrf.mxu0
    %v7538 = vadd.f32 0.0, %v7537
    %7539 = vmatmul.f32.gmra.mxu0 %v7354
    %v7540 = vpop.f32.mrf.mxu0
    %v7541 = vadd.f32 0.0, %v7540
    %7542 = vmatmul.f32.gmra.mxu0 %v7356
    %v7543 = vpop.f32.mrf.mxu0
    %v7544 = vadd.f32 0.0, %v7543
    %7545 = vmatmul.f32.gmra.mxu0 %v7358
    %v7546 = vpop.f32.mrf.mxu0
    %v7547 = vadd.f32 0.0, %v7546
    %7548 = vmatmul.f32.gmra.mxu0 %v7360
    %v7549 = vpop.f32.mrf.mxu0
    %v7550 = vadd.f32 0.0, %v7549
    %7551 = vmatmul.f32.gmra.mxu0 %v7362
    %v7552 = vpop.f32.mrf.mxu0
    %v7553 = vadd.f32 0.0, %v7552
    %7554 = vmatmul.f32.gmra.mxu0 %v7364
    %v7555 = vpop.f32.mrf.mxu0
    %v7556 = vadd.f32 0.0, %v7555
    %7557 = vmatmul.f32.gmra.mxu0 %v7366
    %v7558 = vpop.f32.mrf.mxu0
    %v7559 = vadd.f32 0.0, %v7558
    %7560 = vmatmul.f32.gmra.mxu0 %v7368
    %v7561 = vpop.f32.mrf.mxu0
    %v7562 = vadd.f32 0.0, %v7561
    %7563 = vmatmul.f32.gmra.mxu0 %v7370
    %v7564 = vpop.f32.mrf.mxu0
    %v7565 = vadd.f32 0.0, %v7564
    %7566 = vmatmul.f32.gmra.mxu0 %v7372
    %v7567 = vpop.f32.mrf.mxu0
    %v7568 = vadd.f32 0.0, %v7567
    %7569 = vmatmul.f32.gmra.mxu0 %v7374
    %v7570 = vpop.f32.mrf.mxu0
    %v7571 = vadd.f32 0.0, %v7570
    %7572 = vmatmul.f32.gmra.mxu0 %v7376
    %v7573 = vpop.f32.mrf.mxu0
    %v7574 = vadd.f32 0.0, %v7573
    %7575 = vmatmul.f32.gmra.mxu0 %v7378
    %v7576 = vpop.f32.mrf.mxu0
    %v7577 = vadd.f32 0.0, %v7576
    %7578 = vmatmul.f32.gmra.mxu0 %v7380
    %v7579 = vpop.f32.mrf.mxu0
    %v7580 = vadd.f32 0.0, %v7579
    %7581 = vmatmul.f32.gmra.mxu0 %v7382
    %v7582 = vpop.f32.mrf.mxu0
    %v7583 = vadd.f32 0.0, %v7582
    %7584 = vmatmul.f32.gmra.mxu0 %v7384
    %v7585 = vpop.f32.mrf.mxu0
    %v7586 = vadd.f32 0.0, %v7585
    %7587 = vmatmul.f32.gmra.mxu0 %v7386
    %v7588 = vpop.f32.mrf.mxu0
    %v7589 = vadd.f32 0.0, %v7588
    %7590 = vmatmul.f32.gmra.mxu0 %v7388
    %v7591 = vpop.f32.mrf.mxu0
    %v7592 = vadd.f32 0.0, %v7591
    %7593 = vmatmul.f32.gmra.mxu0 %v7390
    %v7594 = vpop.f32.mrf.mxu0
    %v7595 = vadd.f32 0.0, %v7594
    %7596 = vmatmul.f32.gmra.mxu0 %v7392
    %v7597 = vpop.f32.mrf.mxu0
    %v7598 = vadd.f32 0.0, %v7597
    %7599 = vmatmul.f32.gmra.mxu0 %v7394
    %v7600 = vpop.f32.mrf.mxu0
    %v7601 = vadd.f32 0.0, %v7600
    %7602 = vmatmul.f32.gmra.mxu0 %v7396
    %v7603 = vpop.f32.mrf.mxu0
    %v7604 = vadd.f32 0.0, %v7603
    %7605 = vmatmul.f32.gmra.mxu0 %v7398
    %v7606 = vpop.f32.mrf.mxu0
    %v7607 = vadd.f32 0.0, %v7606
    %7608 = vdwg.mxu0
    %7609 = vmatpush.msra.mxu0 0.0
    %7610 = vmatpush.msra.mxu0 0.0
    %7611 = vmatpush.msra.mxu0 0.0
    %7612 = vmatpush.msra.mxu0 0.0
    %7613 = vmatpush.msra.mxu0 0.0
    %7614 = vmatpush.msra.mxu0 0.0
    %7615 = vmatpush.msra.mxu0 0.0
    %7616 = vmatpush.msra.mxu0 0.0
    %7617 = vmatpush.msra.mxu0 0.0
    %7618 = vmatpush.msra.mxu0 0.0
    %7619 = vmatpush.msra.mxu0 0.0
    %7620 = vmatpush.msra.mxu0 0.0
    %7621 = vmatpush.msra.mxu0 0.0
    %7622 = vmatpush.msra.mxu0 0.0
    %7623 = vmatpush.msra.mxu0 %v1559
    %7624 = vmatpush.msra.mxu0 %v1558
    %7625 = vmatmul.f32.gmra.mxu0 %v7401
    %v7626 = vpop.f32.mrf.mxu0
    %v7627 = vadd.f32 %v7514, %v7626
    %7628 = vmatmul.f32.gmra.mxu0 %v7404
    %v7629 = vpop.f32.mrf.mxu0
    %v7630 = vadd.f32 %v7517, %v7629
    %7631 = vmatmul.f32.gmra.mxu0 %v7407
    %v7632 = vpop.f32.mrf.mxu0
    %v7633 = vadd.f32 %v7520, %v7632
    %7634 = vmatmul.f32.gmra.mxu0 %v7410
    %v7635 = vpop.f32.mrf.mxu0
    %v7636 = vadd.f32 %v7523, %v7635
    %7637 = vmatmul.f32.gmra.mxu0 %v7413
    %v7638 = vpop.f32.mrf.mxu0
    %v7639 = vadd.f32 %v7526, %v7638
    %7640 = vmatmul.f32.gmra.mxu0 %v7416
    %v7641 = vpop.f32.mrf.mxu0
    %v7642 = vadd.f32 %v7529, %v7641
    %7643 = vmatmul.f32.gmra.mxu0 %v7419
    %v7644 = vpop.f32.mrf.mxu0
    %v7645 = vadd.f32 %v7532, %v7644
    %7646 = vmatmul.f32.gmra.mxu0 %v7422
    %v7647 = vpop.f32.mrf.mxu0
    %v7648 = vadd.f32 %v7535, %v7647
    %7649 = vmatmul.f32.gmra.mxu0 %v7425
    %v7650 = vpop.f32.mrf.mxu0
    %v7651 = vadd.f32 %v7538, %v7650
    %7652 = vmatmul.f32.gmra.mxu0 %v7428
    %v7653 = vpop.f32.mrf.mxu0
    %v7654 = vadd.f32 %v7541, %v7653
    %7655 = vmatmul.f32.gmra.mxu0 %v7431
    %v7656 = vpop.f32.mrf.mxu0
    %v7657 = vadd.f32 %v7544, %v7656
    %7658 = vmatmul.f32.gmra.mxu0 %v7434
    %v7659 = vpop.f32.mrf.mxu0
    %v7660 = vadd.f32 %v7547, %v7659
    %7661 = vmatmul.f32.gmra.mxu0 %v7437
    %v7662 = vpop.f32.mrf.mxu0
    %v7663 = vadd.f32 %v7550, %v7662
    %7664 = vmatmul.f32.gmra.mxu0 %v7440
    %v7665 = vpop.f32.mrf.mxu0
    %v7666 = vadd.f32 %v7553, %v7665
    %7667 = vmatmul.f32.gmra.mxu0 %v7443
    %v7668 = vpop.f32.mrf.mxu0
    %v7669 = vadd.f32 %v7556, %v7668
    %7670 = vmatmul.f32.gmra.mxu0 %v7446
    %v7671 = vpop.f32.mrf.mxu0
    %v7672 = vadd.f32 %v7559, %v7671
    %7673 = vmatmul.f32.gmra.mxu0 %v7449
    %v7674 = vpop.f32.mrf.mxu0
    %v7675 = vadd.f32 %v7562, %v7674
    %7676 = vmatmul.f32.gmra.mxu0 %v7452
    %v7677 = vpop.f32.mrf.mxu0
    %v7678 = vadd.f32 %v7565, %v7677
    %7679 = vmatmul.f32.gmra.mxu0 %v7455
    %v7680 = vpop.f32.mrf.mxu0
    %v7681 = vadd.f32 %v7568, %v7680
    %7682 = vmatmul.f32.gmra.mxu0 %v7458
    %v7683 = vpop.f32.mrf.mxu0
    %v7684 = vadd.f32 %v7571, %v7683
    %7685 = vmatmul.f32.gmra.mxu0 %v7461
    %v7686 = vpop.f32.mrf.mxu0
    %v7687 = vadd.f32 %v7574, %v7686
    %7688 = vmatmul.f32.gmra.mxu0 %v7464
    %v7689 = vpop.f32.mrf.mxu0
    %v7690 = vadd.f32 %v7577, %v7689
    %7691 = vmatmul.f32.gmra.mxu0 %v7467
    %v7692 = vpop.f32.mrf.mxu0
    %v7693 = vadd.f32 %v7580, %v7692
    %7694 = vmatmul.f32.gmra.mxu0 %v7470
    %v7695 = vpop.f32.mrf.mxu0
    %v7696 = vadd.f32 %v7583, %v7695
    %7697 = vmatmul.f32.gmra.mxu0 %v7473
    %v7698 = vpop.f32.mrf.mxu0
    %v7699 = vadd.f32 %v7586, %v7698
    %7700 = vmatmul.f32.gmra.mxu0 %v7476
    %v7701 = vpop.f32.mrf.mxu0
    %v7702 = vadd.f32 %v7589, %v7701
    %7703 = vmatmul.f32.gmra.mxu0 %v7479
    %v7704 = vpop.f32.mrf.mxu0
    %v7705 = vadd.f32 %v7592, %v7704
    %7706 = vmatmul.f32.gmra.mxu0 %v7482
    %v7707 = vpop.f32.mrf.mxu0
    %v7708 = vadd.f32 %v7595, %v7707
    %7709 = vmatmul.f32.gmra.mxu0 %v7485
    %v7710 = vpop.f32.mrf.mxu0
    %v7711 = vadd.f32 %v7598, %v7710
    %7712 = vmatmul.f32.gmra.mxu0 %v7488
    %v7713 = vpop.f32.mrf.mxu0
    %v7714 = vadd.f32 %v7601, %v7713
    %7715 = vmatmul.f32.gmra.mxu0 %v7491
    %v7716 = vpop.f32.mrf.mxu0
    %v7717 = vadd.f32 %v7604, %v7716
    %7718 = vmatmul.f32.gmra.mxu0 %v7494
    %v7719 = vpop.f32.mrf.mxu0
    %v7720 = vadd.f32 %v7607, %v7719
    %7721 = vdwg.mxu0
    %7722 = vmatpush.msra.mxu0 %v7672
    %7723 = vmatpush.msra.mxu0 %v7669
    %7724 = vmatpush.msra.mxu0 %v7666
    %7725 = vmatpush.msra.mxu0 %v7663
    %7726 = vmatpush.msra.mxu0 %v7660
    %7727 = vmatpush.msra.mxu0 %v7657
    %7728 = vmatpush.msra.mxu0 %v7654
    %7729 = vmatpush.msra.mxu0 %v7651
    %7730 = vmatpush.msra.mxu0 %v7648
    %7731 = vmatpush.msra.mxu0 %v7645
    %7732 = vmatpush.msra.mxu0 %v7642
    %7733 = vmatpush.msra.mxu0 %v7639
    %7734 = vmatpush.msra.mxu0 %v7636
    %7735 = vmatpush.msra.mxu0 %v7633
    %7736 = vmatpush.msra.mxu0 %v7630
    %7737 = vmatpush.msra.mxu0 %v7627
    %7738 = vmatmul.f32.gmra.mxu0 %v291
    %v7739 = vpop.f32.mrf.mxu0
    %v7740 = vadd.f32 0.0, %v7739
    %7741 = vmatmul.f32.gmra.mxu0 %v293
    %v7742 = vpop.f32.mrf.mxu0
    %v7743 = vadd.f32 0.0, %v7742
    %7744 = vmatmul.f32.gmra.mxu0 %v295
    %v7745 = vpop.f32.mrf.mxu0
    %v7746 = vadd.f32 0.0, %v7745
    %7747 = vmatmul.f32.gmra.mxu0 %v297
    %v7748 = vpop.f32.mrf.mxu0
    %v7749 = vadd.f32 0.0, %v7748
    %7750 = vmatmul.f32.gmra.mxu0 %v299
    %v7751 = vpop.f32.mrf.mxu0
    %v7752 = vadd.f32 0.0, %v7751
    %7753 = vmatmul.f32.gmra.mxu0 %v301
    %v7754 = vpop.f32.mrf.mxu0
    %v7755 = vadd.f32 0.0, %v7754
    %7756 = vmatmul.f32.gmra.mxu0 %v303
    %v7757 = vpop.f32.mrf.mxu0
    %v7758 = vadd.f32 0.0, %v7757
    %7759 = vmatmul.f32.gmra.mxu0 %v305
    %v7760 = vpop.f32.mrf.mxu0
    %v7761 = vadd.f32 0.0, %v7760
    %7762 = vmatmul.f32.gmra.mxu0 %v307
    %v7763 = vpop.f32.mrf.mxu0
    %v7764 = vadd.f32 0.0, %v7763
    %7765 = vmatmul.f32.gmra.mxu0 %v309
    %v7766 = vpop.f32.mrf.mxu0
    %v7767 = vadd.f32 0.0, %v7766
    %7768 = vmatmul.f32.gmra.mxu0 %v311
    %v7769 = vpop.f32.mrf.mxu0
    %v7770 = vadd.f32 0.0, %v7769
    %7771 = vmatmul.f32.gmra.mxu0 %v313
    %v7772 = vpop.f32.mrf.mxu0
    %v7773 = vadd.f32 0.0, %v7772
    %7774 = vmatmul.f32.gmra.mxu0 %v315
    %v7775 = vpop.f32.mrf.mxu0
    %v7776 = vadd.f32 0.0, %v7775
    %7777 = vmatmul.f32.gmra.mxu0 %v317
    %v7778 = vpop.f32.mrf.mxu0
    %v7779 = vadd.f32 0.0, %v7778
    %7780 = vmatmul.f32.gmra.mxu0 %v319
    %v7781 = vpop.f32.mrf.mxu0
    %v7782 = vadd.f32 0.0, %v7781
    %7783 = vmatmul.f32.gmra.mxu0 %v321
    %v7784 = vpop.f32.mrf.mxu0
    %v7785 = vadd.f32 0.0, %v7784
    %7786 = vdwg.mxu0
    %7787 = vmatpush.msra.mxu0 %v7720
    %7788 = vmatpush.msra.mxu0 %v7717
    %7789 = vmatpush.msra.mxu0 %v7714
    %7790 = vmatpush.msra.mxu0 %v7711
    %7791 = vmatpush.msra.mxu0 %v7708
    %7792 = vmatpush.msra.mxu0 %v7705
    %7793 = vmatpush.msra.mxu0 %v7702
    %7794 = vmatpush.msra.mxu0 %v7699
    %7795 = vmatpush.msra.mxu0 %v7696
    %7796 = vmatpush.msra.mxu0 %v7693
    %7797 = vmatpush.msra.mxu0 %v7690
    %7798 = vmatpush.msra.mxu0 %v7687
    %7799 = vmatpush.msra.mxu0 %v7684
    %7800 = vmatpush.msra.mxu0 %v7681
    %7801 = vmatpush.msra.mxu0 %v7678
    %7802 = vmatpush.msra.mxu0 %v7675
    %7803 = vmatmul.f32.gmra.mxu0 %v292
    %v7804 = vpop.f32.mrf.mxu0
    %v7805 = vadd.f32 %v7740, %v7804
    %7806 = vmatmul.f32.gmra.mxu0 %v294
    %v7807 = vpop.f32.mrf.mxu0
    %v7808 = vadd.f32 %v7743, %v7807
    %7809 = vmatmul.f32.gmra.mxu0 %v296
    %v7810 = vpop.f32.mrf.mxu0
    %v7811 = vadd.f32 %v7746, %v7810
    %7812 = vmatmul.f32.gmra.mxu0 %v298
    %v7813 = vpop.f32.mrf.mxu0
    %v7814 = vadd.f32 %v7749, %v7813
    %7815 = vmatmul.f32.gmra.mxu0 %v300
    %v7816 = vpop.f32.mrf.mxu0
    %v7817 = vadd.f32 %v7752, %v7816
    %7818 = vmatmul.f32.gmra.mxu0 %v302
    %v7819 = vpop.f32.mrf.mxu0
    %v7820 = vadd.f32 %v7755, %v7819
    %7821 = vmatmul.f32.gmra.mxu0 %v304
    %v7822 = vpop.f32.mrf.mxu0
    %v7823 = vadd.f32 %v7758, %v7822
    %7824 = vmatmul.f32.gmra.mxu0 %v306
    %v7825 = vpop.f32.mrf.mxu0
    %v7826 = vadd.f32 %v7761, %v7825
    %7827 = vmatmul.f32.gmra.mxu0 %v308
    %v7828 = vpop.f32.mrf.mxu0
    %v7829 = vadd.f32 %v7764, %v7828
    %7830 = vmatmul.f32.gmra.mxu0 %v310
    %v7831 = vpop.f32.mrf.mxu0
    %v7832 = vadd.f32 %v7767, %v7831
    %7833 = vmatmul.f32.gmra.mxu0 %v312
    %v7834 = vpop.f32.mrf.mxu0
    %v7835 = vadd.f32 %v7770, %v7834
    %7836 = vmatmul.f32.gmra.mxu0 %v314
    %v7837 = vpop.f32.mrf.mxu0
    %v7838 = vadd.f32 %v7773, %v7837
    %7839 = vmatmul.f32.gmra.mxu0 %v316
    %v7840 = vpop.f32.mrf.mxu0
    %v7841 = vadd.f32 %v7776, %v7840
    %7842 = vmatmul.f32.gmra.mxu0 %v318
    %v7843 = vpop.f32.mrf.mxu0
    %v7844 = vadd.f32 %v7779, %v7843
    %7845 = vmatmul.f32.gmra.mxu0 %v320
    %v7846 = vpop.f32.mrf.mxu0
    %v7847 = vadd.f32 %v7782, %v7846
    %7848 = vmatmul.f32.gmra.mxu0 %v322
    %v7849 = vpop.f32.mrf.mxu0
    %v7850 = vadd.f32 %v7785, %v7849
    %7851 = vdwg.mxu0
    %v7852 = vmul.f32 %v7805, %v401
    %v7853 = vmul.f32 %v7808, %v416
    %v7854 = vmul.f32 %v7811, %v431
    %v7855 = vmul.f32 %v7814, %v446
    %v7856 = vmul.f32 %v7817, %v461
    %v7857 = vmul.f32 %v7820, %v476
    %v7858 = vmul.f32 %v7823, %v491
    %v7859 = vmul.f32 %v7826, %v506
    %v7860 = vmul.f32 %v7829, %v521
    %v7861 = vmul.f32 %v7832, %v536
    %v7862 = vmul.f32 %v7835, %v551
    %v7863 = vmul.f32 %v7838, %v566
    %v7864 = vmul.f32 %v7841, %v581
    %v7865 = vmul.f32 %v7844, %v596
    %v7866 = vmul.f32 %v7847, %v611
    %v7867 = vmul.f32 %v7850, %v626
    %v7868 = vsel %vm2385, %v6248, 0
    %v7870 = vsel %vm2385, %v6250, 0
    %v7872 = vsel %vm2385, %v6252, 0
    %v7874 = vsel %vm2385, %v6254, 0
    %v7876 = vsel %vm2385, %v6256, 0
    %v7878 = vsel %vm2385, %v6258, 0
    %v7880 = vsel %vm2385, %v6260, 0
    %v7882 = vsel %vm2385, %v6262, 0
    %v7884 = vsel %vm2385, %v6264, 0
    %v7886 = vsel %vm2385, %v6266, 0
    %v7888 = vsel %vm2385, %v6268, 0
    %v7890 = vsel %vm2385, %v6270, 0
    %v7892 = vsel %vm2385, %v6272, 0
    %v7894 = vsel %vm2385, %v6274, 0
    %v7896 = vsel %vm2385, %v6276, 0
    %v7898 = vsel %vm2385, %v6278, 0
    %7900 = vmatpush.msra.mxu0 0.0
    %7901 = vmatpush.msra.mxu0 0.0
    %7902 = vmatpush.msra.mxu0 0.0
    %7903 = vmatpush.msra.mxu0 0.0
    %7904 = vmatpush.msra.mxu0 0.0
    %7905 = vmatpush.msra.mxu0 0.0
    %7906 = vmatpush.msra.mxu0 0.0
    %7907 = vmatpush.msra.mxu0 0.0
    %7908 = vmatpush.msra.mxu0 0.0
    %7909 = vmatpush.msra.mxu0 0.0
    %7910 = vmatpush.msra.mxu0 0.0
    %7911 = vmatpush.msra.mxu0 0.0
    %7912 = vmatpush.msra.mxu0 0.0
    %7913 = vmatpush.msra.mxu0 0.0
    %7914 = vmatpush.msra.mxu0 %v1561
    %7915 = vmatpush.msra.mxu0 %v1560
    %7916 = vmatmul.f32.gmra.mxu0 %v7868
    %v7917 = vpop.f32.mrf.mxu0
    %v7918 = vadd.f32 0.0, %v7917
    %7919 = vmatmul.f32.gmra.mxu0 %v7870
    %v7920 = vpop.f32.mrf.mxu0
    %v7921 = vadd.f32 0.0, %v7920
    %7922 = vmatmul.f32.gmra.mxu0 %v7872
    %v7923 = vpop.f32.mrf.mxu0
    %v7924 = vadd.f32 0.0, %v7923
    %7925 = vmatmul.f32.gmra.mxu0 %v7874
    %v7926 = vpop.f32.mrf.mxu0
    %v7927 = vadd.f32 0.0, %v7926
    %7928 = vmatmul.f32.gmra.mxu0 %v7876
    %v7929 = vpop.f32.mrf.mxu0
    %v7930 = vadd.f32 0.0, %v7929
    %7931 = vmatmul.f32.gmra.mxu0 %v7878
    %v7932 = vpop.f32.mrf.mxu0
    %v7933 = vadd.f32 0.0, %v7932
    %7934 = vmatmul.f32.gmra.mxu0 %v7880
    %v7935 = vpop.f32.mrf.mxu0
    %v7936 = vadd.f32 0.0, %v7935
    %7937 = vmatmul.f32.gmra.mxu0 %v7882
    %v7938 = vpop.f32.mrf.mxu0
    %v7939 = vadd.f32 0.0, %v7938
    %7940 = vmatmul.f32.gmra.mxu0 %v7884
    %v7941 = vpop.f32.mrf.mxu0
    %v7942 = vadd.f32 0.0, %v7941
    %7943 = vmatmul.f32.gmra.mxu0 %v7886
    %v7944 = vpop.f32.mrf.mxu0
    %v7945 = vadd.f32 0.0, %v7944
    %7946 = vmatmul.f32.gmra.mxu0 %v7888
    %v7947 = vpop.f32.mrf.mxu0
    %v7948 = vadd.f32 0.0, %v7947
    %7949 = vmatmul.f32.gmra.mxu0 %v7890
    %v7950 = vpop.f32.mrf.mxu0
    %v7951 = vadd.f32 0.0, %v7950
    %7952 = vmatmul.f32.gmra.mxu0 %v7892
    %v7953 = vpop.f32.mrf.mxu0
    %v7954 = vadd.f32 0.0, %v7953
    %7955 = vmatmul.f32.gmra.mxu0 %v7894
    %v7956 = vpop.f32.mrf.mxu0
    %v7957 = vadd.f32 0.0, %v7956
    %7958 = vmatmul.f32.gmra.mxu0 %v7896
    %v7959 = vpop.f32.mrf.mxu0
    %v7960 = vadd.f32 0.0, %v7959
    %7961 = vmatmul.f32.gmra.mxu0 %v7898
    %v7962 = vpop.f32.mrf.mxu0
    %v7963 = vadd.f32 0.0, %v7962
    %7964 = vdwg.mxu0
    %v7965 = vadd.f32 %v7852, %v7918
    %v7966 = vadd.f32 %v7853, %v7921
    %v7967 = vadd.f32 %v7854, %v7924
    %v7968 = vadd.f32 %v7855, %v7927
    %v7969 = vadd.f32 %v7856, %v7930
    %v7970 = vadd.f32 %v7857, %v7933
    %v7971 = vadd.f32 %v7858, %v7936
    %v7972 = vadd.f32 %v7859, %v7939
    %v7973 = vadd.f32 %v7860, %v7942
    %v7974 = vadd.f32 %v7861, %v7945
    %v7975 = vadd.f32 %v7862, %v7948
    %v7976 = vadd.f32 %v7863, %v7951
    %v7977 = vadd.f32 %v7864, %v7954
    %v7978 = vadd.f32 %v7865, %v7957
    %v7979 = vadd.f32 %v7866, %v7960
    %v7980 = vadd.f32 %v7867, %v7963
    %v7981 = vadd.f32 %v7965, %v3277
    %v7982 = vadd.f32 %v7966, %v3277
    %v7983 = vadd.f32 %v7967, %v3277
    %v7984 = vadd.f32 %v7968, %v3277
    %v7985 = vadd.f32 %v7969, %v3277
    %v7986 = vadd.f32 %v7970, %v3277
    %v7987 = vadd.f32 %v7971, %v3277
    %v7988 = vadd.f32 %v7972, %v3277
    %v7989 = vadd.f32 %v7973, %v3277
    %v7990 = vadd.f32 %v7974, %v3277
    %v7991 = vadd.f32 %v7975, %v3277
    %v7992 = vadd.f32 %v7976, %v3277
    %v7993 = vadd.f32 %v7977, %v3277
    %v7994 = vadd.f32 %v7978, %v3277
    %v7995 = vadd.f32 %v7979, %v3277
    %v7996 = vadd.f32 %v7980, %v3277
    %vm7997 = vcmp.ge.f32.partialorder %v7981, 0.0
    %vm7998 = vcmp.ge.f32.partialorder %v7982, 0.0
    %vm7999 = vcmp.ge.f32.partialorder %v7983, 0.0
    %vm8000 = vcmp.ge.f32.partialorder %v7984, 0.0
    %vm8001 = vcmp.ge.f32.partialorder %v7985, 0.0
    %vm8002 = vcmp.ge.f32.partialorder %v7986, 0.0
    %vm8003 = vcmp.ge.f32.partialorder %v7987, 0.0
    %vm8004 = vcmp.ge.f32.partialorder %v7988, 0.0
    %vm8005 = vcmp.ge.f32.partialorder %v7989, 0.0
    %vm8006 = vcmp.ge.f32.partialorder %v7990, 0.0
    %vm8007 = vcmp.ge.f32.partialorder %v7991, 0.0
    %vm8008 = vcmp.ge.f32.partialorder %v7992, 0.0
    %vm8009 = vcmp.ge.f32.partialorder %v7993, 0.0
    %vm8010 = vcmp.ge.f32.partialorder %v7994, 0.0
    %vm8011 = vcmp.ge.f32.partialorder %v7995, 0.0
    %vm8012 = vcmp.ge.f32.partialorder %v7996, 0.0
    %v8013 = vmul.f32 %v7981, 0.01
    %v8014 = vmul.f32 %v7982, 0.01
    %v8015 = vmul.f32 %v7983, 0.01
    %v8016 = vmul.f32 %v7984, 0.01
    %v8017 = vmul.f32 %v7985, 0.01
    %v8018 = vmul.f32 %v7986, 0.01
    %v8019 = vmul.f32 %v7987, 0.01
    %v8020 = vmul.f32 %v7988, 0.01
    %v8021 = vmul.f32 %v7989, 0.01
    %v8022 = vmul.f32 %v7990, 0.01
    %v8023 = vmul.f32 %v7991, 0.01
    %v8024 = vmul.f32 %v7992, 0.01
    %v8025 = vmul.f32 %v7993, 0.01
    %v8026 = vmul.f32 %v7994, 0.01
    %v8027 = vmul.f32 %v7995, 0.01
    %v8028 = vmul.f32 %v7996, 0.01
    %v8029 = vsel %vm7997, %v7981, %v8013
    %v8030 = vsel %vm7998, %v7982, %v8014
    %v8031 = vsel %vm7999, %v7983, %v8015
    %v8032 = vsel %vm8000, %v7984, %v8016
    %v8033 = vsel %vm8001, %v7985, %v8017
    %v8034 = vsel %vm8002, %v7986, %v8018
    %v8035 = vsel %vm8003, %v7987, %v8019
    %v8036 = vsel %vm8004, %v7988, %v8020
    %v8037 = vsel %vm8005, %v7989, %v8021
    %v8038 = vsel %vm8006, %v7990, %v8022
    %v8039 = vsel %vm8007, %v7991, %v8023
    %v8040 = vsel %vm8008, %v7992, %v8024
    %v8041 = vsel %vm8009, %v7993, %v8025
    %v8042 = vsel %vm8010, %v7994, %v8026
    %v8043 = vsel %vm8011, %v7995, %v8027
    %v8044 = vsel %vm8012, %v7996, %v8028
    %v8045 = vsel %vm2385, %v8029, %v6215
    %v8046 = vsel %vm2385, %v8030, %v6216
    %v8047 = vsel %vm2385, %v8031, %v6217
    %v8048 = vsel %vm2385, %v8032, %v6218
    %v8049 = vsel %vm2385, %v8033, %v6219
    %v8050 = vsel %vm2385, %v8034, %v6220
    %v8051 = vsel %vm2385, %v8035, %v6221
    %v8052 = vsel %vm2385, %v8036, %v6222
    %v8053 = vsel %vm2385, %v8037, %v6223
    %v8054 = vsel %vm2385, %v8038, %v6224
    %v8055 = vsel %vm2385, %v8039, %v6225
    %v8056 = vsel %vm2385, %v8040, %v6226
    %v8057 = vsel %vm2385, %v8041, %v6227
    %v8058 = vsel %vm2385, %v8042, %v6228
    %v8059 = vsel %vm2385, %v8043, %v6229
    %v8060 = vsel %vm2385, %v8044, %v6230
    %v8062 = vsel %vm2418, %v8045, 0
    %v8065 = vsel %vm2418, %v8046, 0
    %v8068 = vsel %vm2418, %v8047, 0
    %v8071 = vsel %vm2418, %v8048, 0
    %v8074 = vsel %vm2418, %v8049, 0
    %v8077 = vsel %vm2418, %v8050, 0
    %v8080 = vsel %vm2418, %v8051, 0
    %v8083 = vsel %vm2418, %v8052, 0
    %v8086 = vsel %vm2418, %v8053, 0
    %v8089 = vsel %vm2418, %v8054, 0
    %v8092 = vsel %vm2418, %v8055, 0
    %v8095 = vsel %vm2418, %v8056, 0
    %v8098 = vsel %vm2418, %v8057, 0
    %v8101 = vsel %vm2418, %v8058, 0
    %v8104 = vsel %vm2418, %v8059, 0
    %v8107 = vsel %vm2418, %v8060, 0
    %8109 = vmatpush.msra.mxu0 0.0
    %8110 = vmatpush.msra.mxu0 0.0
    %8111 = vmatpush.msra.mxu0 0.0
    %8112 = vmatpush.msra.mxu0 0.0
    %8113 = vmatpush.msra.mxu0 0.0
    %8114 = vmatpush.msra.mxu0 0.0
    %8115 = vmatpush.msra.mxu0 0.0
    %8116 = vmatpush.msra.mxu0 0.0
    %8117 = vmatpush.msra.mxu0 0.0
    %8118 = vmatpush.msra.mxu0 0.0
    %8119 = vmatpush.msra.mxu0 0.0
    %8120 = vmatpush.msra.mxu0 0.0
    %8121 = vmatpush.msra.mxu0 %v1566
    %8122 = vmatpush.msra.mxu0 %v1565
    %8123 = vmatpush.msra.mxu0 %v1564
    %8124 = vmatpush.msra.mxu0 %v1563
    %8125 = vmatmul.f32.gmra.mxu0 %v8062
    %v8126 = vpop.f32.mrf.mxu0
    %v8127 = vadd.f32 %v3406, %v8126
    %8128 = vmatmul.f32.gmra.mxu0 %v8065
    %v8129 = vpop.f32.mrf.mxu0
    %v8130 = vadd.f32 %v3406, %v8129
    %8131 = vmatmul.f32.gmra.mxu0 %v8068
    %v8132 = vpop.f32.mrf.mxu0
    %v8133 = vadd.f32 %v3406, %v8132
    %8134 = vmatmul.f32.gmra.mxu0 %v8071
    %v8135 = vpop.f32.mrf.mxu0
    %v8136 = vadd.f32 %v3406, %v8135
    %8137 = vmatmul.f32.gmra.mxu0 %v8074
    %v8138 = vpop.f32.mrf.mxu0
    %v8139 = vadd.f32 %v3406, %v8138
    %8140 = vmatmul.f32.gmra.mxu0 %v8077
    %v8141 = vpop.f32.mrf.mxu0
    %v8142 = vadd.f32 %v3406, %v8141
    %8143 = vmatmul.f32.gmra.mxu0 %v8080
    %v8144 = vpop.f32.mrf.mxu0
    %v8145 = vadd.f32 %v3406, %v8144
    %8146 = vmatmul.f32.gmra.mxu0 %v8083
    %v8147 = vpop.f32.mrf.mxu0
    %v8148 = vadd.f32 %v3406, %v8147
    %8149 = vmatmul.f32.gmra.mxu0 %v8086
    %v8150 = vpop.f32.mrf.mxu0
    %v8151 = vadd.f32 %v3406, %v8150
    %8152 = vmatmul.f32.gmra.mxu0 %v8089
    %v8153 = vpop.f32.mrf.mxu0
    %v8154 = vadd.f32 %v3406, %v8153
    %8155 = vmatmul.f32.gmra.mxu0 %v8092
    %v8156 = vpop.f32.mrf.mxu0
    %v8157 = vadd.f32 %v3406, %v8156
    %8158 = vmatmul.f32.gmra.mxu0 %v8095
    %v8159 = vpop.f32.mrf.mxu0
    %v8160 = vadd.f32 %v3406, %v8159
    %8161 = vmatmul.f32.gmra.mxu0 %v8098
    %v8162 = vpop.f32.mrf.mxu0
    %v8163 = vadd.f32 %v3406, %v8162
    %8164 = vmatmul.f32.gmra.mxu0 %v8101
    %v8165 = vpop.f32.mrf.mxu0
    %v8166 = vadd.f32 %v3406, %v8165
    %8167 = vmatmul.f32.gmra.mxu0 %v8104
    %v8168 = vpop.f32.mrf.mxu0
    %v8169 = vadd.f32 %v3406, %v8168
    %8170 = vmatmul.f32.gmra.mxu0 %v8107
    %v8171 = vpop.f32.mrf.mxu0
    %v8172 = vadd.f32 %v3406, %v8171
    %8173 = vdwg.mxu0
    %v8174 = vsub.f32 0.0, %v8127
    %v8175 = vsub.f32 0.0, %v8130
    %v8176 = vsub.f32 0.0, %v8133
    %v8177 = vsub.f32 0.0, %v8136
    %v8178 = vsub.f32 0.0, %v8139
    %v8179 = vsub.f32 0.0, %v8142
    %v8180 = vsub.f32 0.0, %v8145
    %v8181 = vsub.f32 0.0, %v8148
    %v8182 = vsub.f32 0.0, %v8151
    %v8183 = vsub.f32 0.0, %v8154
    %v8184 = vsub.f32 0.0, %v8157
    %v8185 = vsub.f32 0.0, %v8160
    %v8186 = vsub.f32 0.0, %v8163
    %v8187 = vsub.f32 0.0, %v8166
    %v8188 = vsub.f32 0.0, %v8169
    %v8189 = vsub.f32 0.0, %v8172
    %v8190 = vmul.f32 %v8174, 1.442695
    %v8191 = vpow.pop %v8190
    %v8192 = vmul.f32 %v8175, 1.442695
    %v8193 = vpow.pop %v8192
    %v8194 = vmul.f32 %v8176, 1.442695
    %v8195 = vpow.pop %v8194
    %v8196 = vmul.f32 %v8177, 1.442695
    %v8197 = vpow.pop %v8196
    %v8198 = vmul.f32 %v8178, 1.442695
    %v8199 = vpow.pop %v8198
    %v8200 = vmul.f32 %v8179, 1.442695
    %v8201 = vpow.pop %v8200
    %v8202 = vmul.f32 %v8180, 1.442695
    %v8203 = vpow.pop %v8202
    %v8204 = vmul.f32 %v8181, 1.442695
    %v8205 = vpow.pop %v8204
    %v8206 = vmul.f32 %v8182, 1.442695
    %v8207 = vpow.pop %v8206
    %v8208 = vmul.f32 %v8183, 1.442695
    %v8209 = vpow.pop %v8208
    %v8210 = vmul.f32 %v8184, 1.442695
    %v8211 = vpow.pop %v8210
    %v8212 = vmul.f32 %v8185, 1.442695
    %v8213 = vpow.pop %v8212
    %v8214 = vmul.f32 %v8186, 1.442695
    %v8215 = vpow.pop %v8214
    %v8216 = vmul.f32 %v8187, 1.442695
    %v8217 = vpow.pop %v8216
    %v8218 = vmul.f32 %v8188, 1.442695
    %v8219 = vpow.pop %v8218
    %v8220 = vmul.f32 %v8189, 1.442695
    %v8221 = vpow.pop %v8220
    %v8222 = vadd.f32 %v8191, 1.0
    %v8223 = vadd.f32 %v8193, 1.0
    %v8224 = vadd.f32 %v8195, 1.0
    %v8225 = vadd.f32 %v8197, 1.0
    %v8226 = vadd.f32 %v8199, 1.0
    %v8227 = vadd.f32 %v8201, 1.0
    %v8228 = vadd.f32 %v8203, 1.0
    %v8229 = vadd.f32 %v8205, 1.0
    %v8230 = vadd.f32 %v8207, 1.0
    %v8231 = vadd.f32 %v8209, 1.0
    %v8232 = vadd.f32 %v8211, 1.0
    %v8233 = vadd.f32 %v8213, 1.0
    %v8234 = vadd.f32 %v8215, 1.0
    %v8235 = vadd.f32 %v8217, 1.0
    %v8236 = vadd.f32 %v8219, 1.0
    %v8237 = vadd.f32 %v8221, 1.0
    %v8238 = vrcp.pop %v8222
    %v8239 = vrcp.pop %v8223
    %v8240 = vrcp.pop %v8224
    %v8241 = vrcp.pop %v8225
    %v8242 = vrcp.pop %v8226
    %v8243 = vrcp.pop %v8227
    %v8244 = vrcp.pop %v8228
    %v8245 = vrcp.pop %v8229
    %v8246 = vrcp.pop %v8230
    %v8247 = vrcp.pop %v8231
    %v8248 = vrcp.pop %v8232
    %v8249 = vrcp.pop %v8233
    %v8250 = vrcp.pop %v8234
    %v8251 = vrcp.pop %v8235
    %v8252 = vrcp.pop %v8236
    %v8253 = vrcp.pop %v8237
    %8270 = vrot.lane.b32.xlu0 %v8127, 80
    %v8271 = vpop.permute.xlu0 %8270
    %8272 = vrot.lane.b32.xlu0 %v8130, 80
    %v8273 = vpop.permute.xlu0 %8272
    %8274 = vrot.lane.b32.xlu0 %v8133, 80
    %v8275 = vpop.permute.xlu0 %8274
    %8276 = vrot.lane.b32.xlu0 %v8136, 80
    %v8277 = vpop.permute.xlu0 %8276
    %8278 = vrot.lane.b32.xlu0 %v8139, 80
    %v8279 = vpop.permute.xlu0 %8278
    %8280 = vrot.lane.b32.xlu0 %v8142, 80
    %v8281 = vpop.permute.xlu0 %8280
    %8282 = vrot.lane.b32.xlu0 %v8145, 80
    %v8283 = vpop.permute.xlu0 %8282
    %8284 = vrot.lane.b32.xlu0 %v8148, 80
    %v8285 = vpop.permute.xlu0 %8284
    %8286 = vrot.lane.b32.xlu0 %v8151, 80
    %v8287 = vpop.permute.xlu0 %8286
    %8288 = vrot.lane.b32.xlu0 %v8154, 80
    %v8289 = vpop.permute.xlu0 %8288
    %8290 = vrot.lane.b32.xlu0 %v8157, 80
    %v8291 = vpop.permute.xlu0 %8290
    %8292 = vrot.lane.b32.xlu0 %v8160, 80
    %v8293 = vpop.permute.xlu0 %8292
    %8294 = vrot.lane.b32.xlu0 %v8163, 80
    %v8295 = vpop.permute.xlu0 %8294
    %8296 = vrot.lane.b32.xlu0 %v8166, 80
    %v8297 = vpop.permute.xlu0 %8296
    %8298 = vrot.lane.b32.xlu0 %v8169, 80
    %v8299 = vpop.permute.xlu0 %8298
    %8300 = vrot.lane.b32.xlu0 %v8172, 80
    %v8301 = vpop.permute.xlu0 %8300
    %v8318 = vmul.f32 %v8238, %v8271
    %v8319 = vmul.f32 %v8239, %v8273
    %v8320 = vmul.f32 %v8240, %v8275
    %v8321 = vmul.f32 %v8241, %v8277
    %v8322 = vmul.f32 %v8242, %v8279
    %v8323 = vmul.f32 %v8243, %v8281
    %v8324 = vmul.f32 %v8244, %v8283
    %v8325 = vmul.f32 %v8245, %v8285
    %v8326 = vmul.f32 %v8246, %v8287
    %v8327 = vmul.f32 %v8247, %v8289
    %v8328 = vmul.f32 %v8248, %v8291
    %v8329 = vmul.f32 %v8249, %v8293
    %v8330 = vmul.f32 %v8250, %v8295
    %v8331 = vmul.f32 %v8251, %v8297
    %v8332 = vmul.f32 %v8252, %v8299
    %v8333 = vmul.f32 %v8253, %v8301
    %8350 = vrot.lane.b32.xlu0 %v8318, 32
    %v8351 = vpop.permute.xlu0 %8350
    %8352 = vrot.lane.b32.xlu0 %v8319, 32
    %v8353 = vpop.permute.xlu0 %8352
    %8354 = vrot.lane.b32.xlu0 %v8320, 32
    %v8355 = vpop.permute.xlu0 %8354
    %8356 = vrot.lane.b32.xlu0 %v8321, 32
    %v8357 = vpop.permute.xlu0 %8356
    %8358 = vrot.lane.b32.xlu0 %v8322, 32
    %v8359 = vpop.permute.xlu0 %8358
    %8360 = vrot.lane.b32.xlu0 %v8323, 32
    %v8361 = vpop.permute.xlu0 %8360
    %8362 = vrot.lane.b32.xlu0 %v8324, 32
    %v8363 = vpop.permute.xlu0 %8362
    %8364 = vrot.lane.b32.xlu0 %v8325, 32
    %v8365 = vpop.permute.xlu0 %8364
    %8366 = vrot.lane.b32.xlu0 %v8326, 32
    %v8367 = vpop.permute.xlu0 %8366
    %8368 = vrot.lane.b32.xlu0 %v8327, 32
    %v8369 = vpop.permute.xlu0 %8368
    %8370 = vrot.lane.b32.xlu0 %v8328, 32
    %v8371 = vpop.permute.xlu0 %8370
    %8372 = vrot.lane.b32.xlu0 %v8329, 32
    %v8373 = vpop.permute.xlu0 %8372
    %8374 = vrot.lane.b32.xlu0 %v8330, 32
    %v8375 = vpop.permute.xlu0 %8374
    %8376 = vrot.lane.b32.xlu0 %v8331, 32
    %v8377 = vpop.permute.xlu0 %8376
    %8378 = vrot.lane.b32.xlu0 %v8332, 32
    %v8379 = vpop.permute.xlu0 %8378
    %8380 = vrot.lane.b32.xlu0 %v8333, 32
    %v8381 = vpop.permute.xlu0 %8380
    %v8398 = vadd.f32 %v8127, %v8351
    %v8399 = vadd.f32 %v8130, %v8353
    %v8400 = vadd.f32 %v8133, %v8355
    %v8401 = vadd.f32 %v8136, %v8357
    %v8402 = vadd.f32 %v8139, %v8359
    %v8403 = vadd.f32 %v8142, %v8361
    %v8404 = vadd.f32 %v8145, %v8363
    %v8405 = vadd.f32 %v8148, %v8365
    %v8406 = vadd.f32 %v8151, %v8367
    %v8407 = vadd.f32 %v8154, %v8369
    %v8408 = vadd.f32 %v8157, %v8371
    %v8409 = vadd.f32 %v8160, %v8373
    %v8410 = vadd.f32 %v8163, %v8375
    %v8411 = vadd.f32 %v8166, %v8377
    %v8412 = vadd.f32 %v8169, %v8379
    %v8413 = vadd.f32 %v8172, %v8381
    %v8414 = vtanh.pop %v8398
    %v8415 = vtanh.pop %v8399
    %v8416 = vtanh.pop %v8400
    %v8417 = vtanh.pop %v8401
    %v8418 = vtanh.pop %v8402
    %v8419 = vtanh.pop %v8403
    %v8420 = vtanh.pop %v8404
    %v8421 = vtanh.pop %v8405
    %v8422 = vtanh.pop %v8406
    %v8423 = vtanh.pop %v8407
    %v8424 = vtanh.pop %v8408
    %v8425 = vtanh.pop %v8409
    %v8426 = vtanh.pop %v8410
    %v8427 = vtanh.pop %v8411
    %v8428 = vtanh.pop %v8412
    %v8429 = vtanh.pop %v8413
    %v8430 = vsub.f32 1.0, %v8238
    %v8431 = vsub.f32 1.0, %v8239
    %v8432 = vsub.f32 1.0, %v8240
    %v8433 = vsub.f32 1.0, %v8241
    %v8434 = vsub.f32 1.0, %v8242
    %v8435 = vsub.f32 1.0, %v8243
    %v8436 = vsub.f32 1.0, %v8244
    %v8437 = vsub.f32 1.0, %v8245
    %v8438 = vsub.f32 1.0, %v8246
    %v8439 = vsub.f32 1.0, %v8247
    %v8440 = vsub.f32 1.0, %v8248
    %v8441 = vsub.f32 1.0, %v8249
    %v8442 = vsub.f32 1.0, %v8250
    %v8443 = vsub.f32 1.0, %v8251
    %v8444 = vsub.f32 1.0, %v8252
    %v8445 = vsub.f32 1.0, %v8253
    %8462 = vrot.lane.b32.xlu0 %v8414, 112
    %v8463 = vpop.permute.xlu0 %8462
    %8464 = vrot.lane.b32.xlu0 %v8415, 112
    %v8465 = vpop.permute.xlu0 %8464
    %8466 = vrot.lane.b32.xlu0 %v8416, 112
    %v8467 = vpop.permute.xlu0 %8466
    %8468 = vrot.lane.b32.xlu0 %v8417, 112
    %v8469 = vpop.permute.xlu0 %8468
    %8470 = vrot.lane.b32.xlu0 %v8418, 112
    %v8471 = vpop.permute.xlu0 %8470
    %8472 = vrot.lane.b32.xlu0 %v8419, 112
    %v8473 = vpop.permute.xlu0 %8472
    %8474 = vrot.lane.b32.xlu0 %v8420, 112
    %v8475 = vpop.permute.xlu0 %8474
    %8476 = vrot.lane.b32.xlu0 %v8421, 112
    %v8477 = vpop.permute.xlu0 %8476
    %8478 = vrot.lane.b32.xlu0 %v8422, 112
    %v8479 = vpop.permute.xlu0 %8478
    %8480 = vrot.lane.b32.xlu0 %v8423, 112
    %v8481 = vpop.permute.xlu0 %8480
    %8482 = vrot.lane.b32.xlu0 %v8424, 112
    %v8483 = vpop.permute.xlu0 %8482
    %8484 = vrot.lane.b32.xlu0 %v8425, 112
    %v8485 = vpop.permute.xlu0 %8484
    %8486 = vrot.lane.b32.xlu0 %v8426, 112
    %v8487 = vpop.permute.xlu0 %8486
    %8488 = vrot.lane.b32.xlu0 %v8427, 112
    %v8489 = vpop.permute.xlu0 %8488
    %8490 = vrot.lane.b32.xlu0 %v8428, 112
    %v8491 = vpop.permute.xlu0 %8490
    %8492 = vrot.lane.b32.xlu0 %v8429, 112
    %v8493 = vpop.permute.xlu0 %8492
    %v8510 = vmul.f32 %v8430, %v8463
    %v8511 = vmul.f32 %v8431, %v8465
    %v8512 = vmul.f32 %v8432, %v8467
    %v8513 = vmul.f32 %v8433, %v8469
    %v8514 = vmul.f32 %v8434, %v8471
    %v8515 = vmul.f32 %v8435, %v8473
    %v8516 = vmul.f32 %v8436, %v8475
    %v8517 = vmul.f32 %v8437, %v8477
    %v8518 = vmul.f32 %v8438, %v8479
    %v8519 = vmul.f32 %v8439, %v8481
    %v8520 = vmul.f32 %v8440, %v8483
    %v8521 = vmul.f32 %v8441, %v8485
    %v8522 = vmul.f32 %v8442, %v8487
    %v8523 = vmul.f32 %v8443, %v8489
    %v8524 = vmul.f32 %v8444, %v8491
    %v8525 = vmul.f32 %v8445, %v8493
    %v8526 = vmul.f32 %v8238, %v6215
    %v8527 = vmul.f32 %v8239, %v6216
    %v8528 = vmul.f32 %v8240, %v6217
    %v8529 = vmul.f32 %v8241, %v6218
    %v8530 = vmul.f32 %v8242, %v6219
    %v8531 = vmul.f32 %v8243, %v6220
    %v8532 = vmul.f32 %v8244, %v6221
    %v8533 = vmul.f32 %v8245, %v6222
    %v8534 = vmul.f32 %v8246, %v6223
    %v8535 = vmul.f32 %v8247, %v6224
    %v8536 = vmul.f32 %v8248, %v6225
    %v8537 = vmul.f32 %v8249, %v6226
    %v8538 = vmul.f32 %v8250, %v6227
    %v8539 = vmul.f32 %v8251, %v6228
    %v8540 = vmul.f32 %v8252, %v6229
    %v8541 = vmul.f32 %v8253, %v6230
    %v8542 = vadd.f32 %v8510, %v8526
    %v8543 = vadd.f32 %v8511, %v8527
    %v8544 = vadd.f32 %v8512, %v8528
    %v8545 = vadd.f32 %v8513, %v8529
    %v8546 = vadd.f32 %v8514, %v8530
    %v8547 = vadd.f32 %v8515, %v8531
    %v8548 = vadd.f32 %v8516, %v8532
    %v8549 = vadd.f32 %v8517, %v8533
    %v8550 = vadd.f32 %v8518, %v8534
    %v8551 = vadd.f32 %v8519, %v8535
    %v8552 = vadd.f32 %v8520, %v8536
    %v8553 = vadd.f32 %v8521, %v8537
    %v8554 = vadd.f32 %v8522, %v8538
    %v8555 = vadd.f32 %v8523, %v8539
    %v8556 = vadd.f32 %v8524, %v8540
    %v8557 = vadd.f32 %v8525, %v8541
    %v8558 = vld [vmem:[#allocation2 + $0xf0] sm:$0xff]
    %v8559 = vld [vmem:[#allocation2 + $0xf8] sm:$0xff]
    %v8560 = vld [vmem:[#allocation2 + $0x100] sm:$0xff]
    %v8561 = vld [vmem:[#allocation2 + $0x108] sm:$0xff]
    %v8562 = vld [vmem:[#allocation2 + $0x110] sm:$0xff]
    %v8563 = vld [vmem:[#allocation2 + $0x118] sm:$0xff]
    %v8564 = vld [vmem:[#allocation2 + $0x120] sm:$0x1]
    %v8565 = vperm.slane %v8564, 0
    %v8567 = vsel %vm2451, 0.0, 0
    %8569 = vmatpush.msra.mxu0 0.0
    %8570 = vmatpush.msra.mxu0 0.0
    %8571 = vmatpush.msra.mxu0 0.0
    %8572 = vmatpush.msra.mxu0 0.0
    %8573 = vmatpush.msra.mxu0 0.0
    %8574 = vmatpush.msra.mxu0 0.0
    %8575 = vmatpush.msra.mxu0 0.0
    %8576 = vmatpush.msra.mxu0 0.0
    %8577 = vmatpush.msra.mxu0 0.0
    %8578 = vmatpush.msra.mxu0 0.0
    %8579 = vmatpush.msra.mxu0 %v8563
    %8580 = vmatpush.msra.mxu0 %v8562
    %8581 = vmatpush.msra.mxu0 %v8561
    %8582 = vmatpush.msra.mxu0 %v8560
    %8583 = vmatpush.msra.mxu0 %v8559
    %8584 = vmatpush.msra.mxu0 %v8558
    %8585 = vmatmul.f32.gmra.mxu0 %v8567
    %v8586 = vpop.f32.mrf.mxu0
    %v8587 = vadd.f32 %v8565, %v8586
    %8588 = vdwg.mxu0
    %v8589 = vsub.f32 0.0, %v8587
    %v8590 = vmul.f32 %v8589, 1.442695
    %v8591 = vpow.pop %v8590
    %v8592 = vadd.f32 %v8591, 1.0
    %v8593 = vrcp.pop %v8592
    %v8594 = vtanh.pop %v8587
    %v8595 = vmul.f32 %v8593, 0.0
    %8597 = vrot.lane.b32.xlu0 %v8594, 96
    %v8598 = vpop.permute.xlu0 %8597
    %v8600 = vmul.f32 %v8593, %v8598
    %8602 = vrot.lane.b32.xlu0 %v8600, 16
    %v8603 = vpop.permute.xlu0 %8602
    %v8605 = vadd.f32 %v8595, %v8603
    %v8606 = vtanh.pop %v8605
    %8608 = vrot.lane.b32.xlu0 %v8606, 32
    %v8609 = vpop.permute.xlu0 %8608
    %v8611 = vmul.f32 %v8593, %v8609
    %8613 = vrot.lane.b32.xlu0 %v8611, 80
    %v8614 = vpop.permute.xlu0 %8613
    %8631 = vrot.lane.b32.xlu0 %v8542, 112
    %v8632 = vpop.permute.xlu0 %8631
    %8633 = vrot.lane.b32.xlu0 %v8543, 112
    %v8634 = vpop.permute.xlu0 %8633
    %8635 = vrot.lane.b32.xlu0 %v8544, 112
    %v8636 = vpop.permute.xlu0 %8635
    %8637 = vrot.lane.b32.xlu0 %v8545, 112
    %v8638 = vpop.permute.xlu0 %8637
    %8639 = vrot.lane.b32.xlu0 %v8546, 112
    %v8640 = vpop.permute.xlu0 %8639
    %8641 = vrot.lane.b32.xlu0 %v8547, 112
    %v8642 = vpop.permute.xlu0 %8641
    %8643 = vrot.lane.b32.xlu0 %v8548, 112
    %v8644 = vpop.permute.xlu0 %8643
    %8645 = vrot.lane.b32.xlu0 %v8549, 112
    %v8646 = vpop.permute.xlu0 %8645
    %8647 = vrot.lane.b32.xlu0 %v8550, 112
    %v8648 = vpop.permute.xlu0 %8647
    %8649 = vrot.lane.b32.xlu0 %v8551, 112
    %v8650 = vpop.permute.xlu0 %8649
    %8651 = vrot.lane.b32.xlu0 %v8552, 112
    %v8652 = vpop.permute.xlu0 %8651
    %8653 = vrot.lane.b32.xlu0 %v8553, 112
    %v8654 = vpop.permute.xlu0 %8653
    %8655 = vrot.lane.b32.xlu0 %v8554, 112
    %v8656 = vpop.permute.xlu0 %8655
    %8657 = vrot.lane.b32.xlu0 %v8555, 112
    %v8658 = vpop.permute.xlu0 %8657
    %8659 = vrot.lane.b32.xlu0 %v8556, 112
    %v8660 = vpop.permute.xlu0 %8659
    %8661 = vrot.lane.b32.xlu0 %v8557, 112
    %v8662 = vpop.permute.xlu0 %8661
    %v8663 = vsel %vm2385, %v8614, 0
    %v8665 = vsel %vm2385, %v8632, 0
    %v8667 = vsel %vm2385, %v8634, 0
    %v8669 = vsel %vm2385, %v8636, 0
    %v8671 = vsel %vm2385, %v8638, 0
    %v8673 = vsel %vm2385, %v8640, 0
    %v8675 = vsel %vm2385, %v8642, 0
    %v8677 = vsel %vm2385, %v8644, 0
    %v8679 = vsel %vm2385, %v8646, 0
    %v8681 = vsel %vm2385, %v8648, 0
    %v8683 = vsel %vm2385, %v8650, 0
    %v8685 = vsel %vm2385, %v8652, 0
    %v8687 = vsel %vm2385, %v8654, 0
    %v8689 = vsel %vm2385, %v8656, 0
    %v8691 = vsel %vm2385, %v8658, 0
    %v8693 = vsel %vm2385, %v8660, 0
    %v8695 = vsel %vm2385, %v8662, 0
    %8697 = vmatpush.xpose.msra.mxu0 %v8695
    %8698 = vmatpush.xpose.msra.mxu0 %v8693
    %8699 = vmatpush.xpose.msra.mxu0 %v8691
    %8700 = vmatpush.xpose.msra.mxu0 %v8689
    %8701 = vmatpush.xpose.msra.mxu0 %v8687
    %8702 = vmatpush.xpose.msra.mxu0 %v8685
    %8703 = vmatpush.xpose.msra.mxu0 %v8683
    %8704 = vmatpush.xpose.msra.mxu0 %v8681
    %8705 = vmatpush.xpose.msra.mxu0 %v8679
    %8706 = vmatpush.xpose.msra.mxu0 %v8677
    %8707 = vmatpush.xpose.msra.mxu0 %v8675
    %8708 = vmatpush.xpose.msra.mxu0 %v8673
    %8709 = vmatpush.xpose.msra.mxu0 %v8671
    %8710 = vmatpush.xpose.msra.mxu0 %v8669
    %8711 = vmatpush.xpose.msra.mxu0 %v8667
    %8712 = vmatpush.xpose.msra.mxu0 %v8665
    %8713 = vmatmul.f32.gmra.mxu0 %v8663
    %v8714 = vpop.f32.mrf.mxu0
    %v8715 = vadd.f32 0.0, %v8714
    %8716 = vdwg.mxu0
    %vm8717 = vcmp.gt.f32.partialorder %v630, 0.0
    %v8718 = vsel %vm8717, %v8715, -1e+30
    %8719 = vmax.xlane.f32.xlu0 %v8718
    %v8720 = vpop.xlane.xlu0 %8719
    %v8721 = vsub.f32 %v8718, %v8720
    %v8722 = vmul.f32 %v8721, 1.442695
    %v8723 = vpow.pop %v8722
    %v8724 = vmul.f32 %v8723, %v630
    %8725 = vadd.xlane.f32.xlu0 %v8724
    %v8726 = vpop.xlane.xlu0 %8725
    %v8727 = vmax.f32 %v8726, 1e-12
    %v8728 = vrcp.pop %v8727
    %v8729 = vmul.f32 %v8727, %v8728
    %v8730 = vsub.f32 1.0, %v8729
    %v8731 = vmul.f32 %v8728, %v8730
    %v8732 = vadd.f32 %v8728, %v8731
    %vm8733 = vweird.f32 %v8727
    %vm8734 = vweird.f32 %v8728
    %vm8735 = vmor %vm8733, %vm8734
    %v8736 = vsel %vm8735, %v8728, %v8732
    %v8737 = vand.u32 2147483647, %v8727
    %vm8738 = vcmp.eq.f32.partialorder %v8737, 8.507059e+37
    %v8739 = vand.u32 %v8727, 2147483648
    %v8740 = vor.u32 1.1754944e-38, %v8739
    %v8741 = vsel %vm8738, %v8740, %v8736
    %v8742 = vmul.f32 %v8724, %v8741
    %8759 = vmatpush.msra.mxu0 %v8662
    %8760 = vmatpush.msra.mxu0 %v8660
    %8761 = vmatpush.msra.mxu0 %v8658
    %8762 = vmatpush.msra.mxu0 %v8656
    %8763 = vmatpush.msra.mxu0 %v8654
    %8764 = vmatpush.msra.mxu0 %v8652
    %8765 = vmatpush.msra.mxu0 %v8650
    %8766 = vmatpush.msra.mxu0 %v8648
    %8767 = vmatpush.msra.mxu0 %v8646
    %8768 = vmatpush.msra.mxu0 %v8644
    %8769 = vmatpush.msra.mxu0 %v8642
    %8770 = vmatpush.msra.mxu0 %v8640
    %8771 = vmatpush.msra.mxu0 %v8638
    %8772 = vmatpush.msra.mxu0 %v8636
    %8773 = vmatpush.msra.mxu0 %v8634
    %8774 = vmatpush.msra.mxu0 %v8632
    %8775 = vmatmul.f32.gmra.mxu0 %v8742
    %v8776 = vpop.f32.mrf.mxu0
    %v8777 = vadd.f32 0.0, %v8776
    %8778 = vdwg.mxu0
    %8781 = vrot.lane.b32.xlu0 %v8777, 16
    %v8782 = vpop.permute.xlu0 %8781
    %8784 = vrot.lane.b32.xlu0 %v8611, 112
    %v8785 = vpop.permute.xlu0 %8784
    %v8787 = vsel %vm2385, %v8614, %v8782
    %v8788 = vsel %vm2418, %v8787, %v8785
    %v8790 = vsel %vm2451, %v8788, 0
    %8792 = vmatpush.msra.mxu0 0.0
    %8793 = vmatpush.msra.mxu0 0.0
    %8794 = vmatpush.msra.mxu0 0.0
    %8795 = vmatpush.msra.mxu0 0.0
    %8796 = vmatpush.msra.mxu0 0.0
    %8797 = vmatpush.msra.mxu0 0.0
    %8798 = vmatpush.msra.mxu0 0.0
    %8799 = vmatpush.msra.mxu0 0.0
    %8800 = vmatpush.msra.mxu0 0.0
    %8801 = vmatpush.msra.mxu0 0.0
    %8802 = vmatpush.msra.mxu0 %v8563
    %8803 = vmatpush.msra.mxu0 %v8562
    %8804 = vmatpush.msra.mxu0 %v8561
    %8805 = vmatpush.msra.mxu0 %v8560
    %8806 = vmatpush.msra.mxu0 %v8559
    %8807 = vmatpush.msra.mxu0 %v8558
    %8808 = vmatmul.f32.gmra.mxu0 %v8790
    %v8809 = vpop.f32.mrf.mxu0
    %v8810 = vadd.f32 %v8565, %v8809
    %8811 = vdwg.mxu0
    %v8812 = vsub.f32 0.0, %v8810
    %v8813 = vmul.f32 %v8812, 1.442695
    %v8814 = vpow.pop %v8813
    %v8815 = vadd.f32 %v8814, 1.0
    %v8816 = vrcp.pop %v8815
    %v8817 = vtanh.pop %v8810
    %v8818 = vmul.f32 %v8816, %v8605
    %8820 = vrot.lane.b32.xlu0 %v8817, 96
    %v8821 = vpop.permute.xlu0 %8820
    %v8823 = vmul.f32 %v8816, %v8821
    %8825 = vrot.lane.b32.xlu0 %v8823, 16
    %v8826 = vpop.permute.xlu0 %8825
    %v8828 = vadd.f32 %v8818, %v8826
    %v8829 = vtanh.pop %v8828
    %8831 = vrot.lane.b32.xlu0 %v8829, 32
    %v8832 = vpop.permute.xlu0 %8831
    %v8834 = vmul.f32 %v8816, %v8832
    %8836 = vrot.lane.b32.xlu0 %v8834, 80
    %v8837 = vpop.permute.xlu0 %8836
    %v8838 = vsel %vm2385, %v8837, 0
    %8840 = vmatpush.xpose.msra.mxu0 %v8695
    %8841 = vmatpush.xpose.msra.mxu0 %v8693
    %8842 = vmatpush.xpose.msra.mxu0 %v8691
    %8843 = vmatpush.xpose.msra.mxu0 %v8689
    %8844 = vmatpush.xpose.msra.mxu0 %v8687
    %8845 = vmatpush.xpose.msra.mxu0 %v8685
    %8846 = vmatpush.xpose.msra.mxu0 %v8683
    %8847 = vmatpush.xpose.msra.mxu0 %v8681
    %8848 = vmatpush.xpose.msra.mxu0 %v8679
    %8849 = vmatpush.xpose.msra.mxu0 %v8677
    %8850 = vmatpush.xpose.msra.mxu0 %v8675
    %8851 = vmatpush.xpose.msra.mxu0 %v8673
    %8852 = vmatpush.xpose.msra.mxu0 %v8671
    %8853 = vmatpush.xpose.msra.mxu0 %v8669
    %8854 = vmatpush.xpose.msra.mxu0 %v8667
    %8855 = vmatpush.xpose.msra.mxu0 %v8665
    %8856 = vmatmul.f32.gmra.mxu0 %v8838
    %v8857 = vpop.f32.mrf.mxu0
    %v8858 = vadd.f32 0.0, %v8857
    %8859 = vdwg.mxu0
    %v8860 = vsel %vm8717, %v8858, -1e+30
    %8861 = vmax.xlane.f32.xlu0 %v8860
    %v8862 = vpop.xlane.xlu0 %8861
    %v8863 = vsub.f32 %v8860, %v8862
    %v8864 = vmul.f32 %v8863, 1.442695
    %v8865 = vpow.pop %v8864
    %v8866 = vmul.f32 %v8865, %v630
    %8867 = vadd.xlane.f32.xlu0 %v8866
    %v8868 = vpop.xlane.xlu0 %8867
    %v8869 = vmax.f32 %v8868, 1e-12
    %v8870 = vrcp.pop %v8869
    %v8871 = vmul.f32 %v8869, %v8870
    %v8872 = vsub.f32 1.0, %v8871
    %v8873 = vmul.f32 %v8870, %v8872
    %v8874 = vadd.f32 %v8870, %v8873
    %vm8875 = vweird.f32 %v8869
    %vm8876 = vweird.f32 %v8870
    %vm8877 = vmor %vm8875, %vm8876
    %v8878 = vsel %vm8877, %v8870, %v8874
    %v8879 = vand.u32 2147483647, %v8869
    %vm8880 = vcmp.eq.f32.partialorder %v8879, 8.507059e+37
    %v8881 = vand.u32 %v8869, 2147483648
    %v8882 = vor.u32 1.1754944e-38, %v8881
    %v8883 = vsel %vm8880, %v8882, %v8878
    %v8884 = vmul.f32 %v8866, %v8883
    %8885 = vmatpush.msra.mxu0 %v8662
    %8886 = vmatpush.msra.mxu0 %v8660
    %8887 = vmatpush.msra.mxu0 %v8658
    %8888 = vmatpush.msra.mxu0 %v8656
    %8889 = vmatpush.msra.mxu0 %v8654
    %8890 = vmatpush.msra.mxu0 %v8652
    %8891 = vmatpush.msra.mxu0 %v8650
    %8892 = vmatpush.msra.mxu0 %v8648
    %8893 = vmatpush.msra.mxu0 %v8646
    %8894 = vmatpush.msra.mxu0 %v8644
    %8895 = vmatpush.msra.mxu0 %v8642
    %8896 = vmatpush.msra.mxu0 %v8640
    %8897 = vmatpush.msra.mxu0 %v8638
    %8898 = vmatpush.msra.mxu0 %v8636
    %8899 = vmatpush.msra.mxu0 %v8634
    %8900 = vmatpush.msra.mxu0 %v8632
    %8901 = vmatmul.f32.gmra.mxu0 %v8884
    %v8902 = vpop.f32.mrf.mxu0
    %v8903 = vadd.f32 0.0, %v8902
    %8904 = vdwg.mxu0
    %8907 = vrot.lane.b32.xlu0 %v8903, 16
    %v8908 = vpop.permute.xlu0 %8907
    %8910 = vrot.lane.b32.xlu0 %v8834, 112
    %v8911 = vpop.permute.xlu0 %8910
    %v8913 = vsel %vm2385, %v8837, %v8908
    %v8914 = vsel %vm2418, %v8913, %v8911
    %v8916 = vsel %vm2451, %v8914, 0
    %8918 = vmatpush.msra.mxu0 0.0
    %8919 = vmatpush.msra.mxu0 0.0
    %8920 = vmatpush.msra.mxu0 0.0
    %8921 = vmatpush.msra.mxu0 0.0
    %8922 = vmatpush.msra.mxu0 0.0
    %8923 = vmatpush.msra.mxu0 0.0
    %8924 = vmatpush.msra.mxu0 0.0
    %8925 = vmatpush.msra.mxu0 0.0
    %8926 = vmatpush.msra.mxu0 0.0
    %8927 = vmatpush.msra.mxu0 0.0
    %8928 = vmatpush.msra.mxu0 %v8563
    %8929 = vmatpush.msra.mxu0 %v8562
    %8930 = vmatpush.msra.mxu0 %v8561
    %8931 = vmatpush.msra.mxu0 %v8560
    %8932 = vmatpush.msra.mxu0 %v8559
    %8933 = vmatpush.msra.mxu0 %v8558
    %8934 = vmatmul.f32.gmra.mxu0 %v8916
    %v8935 = vpop.f32.mrf.mxu0
    %v8936 = vadd.f32 %v8565, %v8935
    %8937 = vdwg.mxu0
    %v8938 = vsub.f32 0.0, %v8936
    %v8939 = vmul.f32 %v8938, 1.442695
    %v8940 = vpow.pop %v8939
    %v8941 = vadd.f32 %v8940, 1.0
    %v8942 = vrcp.pop %v8941
    %v8943 = vtanh.pop %v8936
    %v8944 = vmul.f32 %v8942, %v8828
    %8946 = vrot.lane.b32.xlu0 %v8943, 96
    %v8947 = vpop.permute.xlu0 %8946
    %v8949 = vmul.f32 %v8942, %v8947
    %8951 = vrot.lane.b32.xlu0 %v8949, 16
    %v8952 = vpop.permute.xlu0 %8951
    %v8954 = vadd.f32 %v8944, %v8952
    %v8955 = vtanh.pop %v8954
    %8957 = vrot.lane.b32.xlu0 %v8955, 32
    %v8958 = vpop.permute.xlu0 %8957
    %v8960 = vmul.f32 %v8942, %v8958
    %8962 = vrot.lane.b32.xlu0 %v8960, 80
    %v8963 = vpop.permute.xlu0 %8962
    %v8964 = vsel %vm2385, %v8963, 0
    %8966 = vmatpush.xpose.msra.mxu0 %v8695
    %8967 = vmatpush.xpose.msra.mxu0 %v8693
    %8968 = vmatpush.xpose.msra.mxu0 %v8691
    %8969 = vmatpush.xpose.msra.mxu0 %v8689
    %8970 = vmatpush.xpose.msra.mxu0 %v8687
    %8971 = vmatpush.xpose.msra.mxu0 %v8685
    %8972 = vmatpush.xpose.msra.mxu0 %v8683
    %8973 = vmatpush.xpose.msra.mxu0 %v8681
    %8974 = vmatpush.xpose.msra.mxu0 %v8679
    %8975 = vmatpush.xpose.msra.mxu0 %v8677
    %8976 = vmatpush.xpose.msra.mxu0 %v8675
    %8977 = vmatpush.xpose.msra.mxu0 %v8673
    %8978 = vmatpush.xpose.msra.mxu0 %v8671
    %8979 = vmatpush.xpose.msra.mxu0 %v8669
    %8980 = vmatpush.xpose.msra.mxu0 %v8667
    %8981 = vmatpush.xpose.msra.mxu0 %v8665
    %8982 = vmatmul.f32.gmra.mxu0 %v8964
    %v8983 = vpop.f32.mrf.mxu0
    %v8984 = vadd.f32 0.0, %v8983
    %8985 = vdwg.mxu0
    %v8986 = vsel %vm8717, %v8984, -1e+30
    %8987 = vmax.xlane.f32.xlu0 %v8986
    %v8988 = vpop.xlane.xlu0 %8987
    %v8989 = vsub.f32 %v8986, %v8988
    %v8990 = vmul.f32 %v8989, 1.442695
    %v8991 = vpow.pop %v8990
    %v8992 = vmul.f32 %v8991, %v630
    %8993 = vadd.xlane.f32.xlu0 %v8992
    %v8994 = vpop.xlane.xlu0 %8993
    %v8995 = vmax.f32 %v8994, 1e-12
    %v8996 = vrcp.pop %v8995
    %v8997 = vmul.f32 %v8995, %v8996
    %v8998 = vsub.f32 1.0, %v8997
    %v8999 = vmul.f32 %v8996, %v8998
    %v9000 = vadd.f32 %v8996, %v8999
    %vm9001 = vweird.f32 %v8995
    %vm9002 = vweird.f32 %v8996
    %vm9003 = vmor %vm9001, %vm9002
    %v9004 = vsel %vm9003, %v8996, %v9000
    %v9005 = vand.u32 2147483647, %v8995
    %vm9006 = vcmp.eq.f32.partialorder %v9005, 8.507059e+37
    %v9007 = vand.u32 %v8995, 2147483648
    %v9008 = vor.u32 1.1754944e-38, %v9007
    %v9009 = vsel %vm9006, %v9008, %v9004
    %v9010 = vmul.f32 %v8992, %v9009
    %9011 = vmatpush.msra.mxu0 %v8662
    %9012 = vmatpush.msra.mxu0 %v8660
    %9013 = vmatpush.msra.mxu0 %v8658
    %9014 = vmatpush.msra.mxu0 %v8656
    %9015 = vmatpush.msra.mxu0 %v8654
    %9016 = vmatpush.msra.mxu0 %v8652
    %9017 = vmatpush.msra.mxu0 %v8650
    %9018 = vmatpush.msra.mxu0 %v8648
    %9019 = vmatpush.msra.mxu0 %v8646
    %9020 = vmatpush.msra.mxu0 %v8644
    %9021 = vmatpush.msra.mxu0 %v8642
    %9022 = vmatpush.msra.mxu0 %v8640
    %9023 = vmatpush.msra.mxu0 %v8638
    %9024 = vmatpush.msra.mxu0 %v8636
    %9025 = vmatpush.msra.mxu0 %v8634
    %9026 = vmatpush.msra.mxu0 %v8632
    %9027 = vmatmul.f32.gmra.mxu0 %v9010
    %v9028 = vpop.f32.mrf.mxu0
    %v9029 = vadd.f32 0.0, %v9028
    %9030 = vdwg.mxu0
    %v9031 = vld [vmem:[%s6] sm:$0xff]
    %vm9032 = vcmp.ne.f32.partialorder %v9031, %v9031
    %v9033 = vsel %vm9032, 0.0, %v9031
    %v9034 = vld [vmem:[%s5] sm:$0xff]
    %9036 = vrot.lane.b32.xlu0 %v9033, 8
    %v9037 = vpop.permute.xlu0 %9036
    %v9039 = vsel %vm650, %v9034, %v9037
    %v9040 = vld [vmem:[#allocation2 + $0x128] sm:$0xff]
    %v9041 = vld [vmem:[#allocation2 + $0x130] sm:$0xff]
    %v9042 = vld [vmem:[#allocation2 + $0x138] sm:$0xff]
    %v9043 = vld [vmem:[#allocation2 + $0x140] sm:$0xff]
    %v9044 = vld [vmem:[#allocation2 + $0x148] sm:$0x1]
    %v9045 = vperm.slane %v9044, 0
    %v9047 = vsel %vm2418, %v9039, 0
    %9049 = vmatpush.msra.mxu0 0.0
    %9050 = vmatpush.msra.mxu0 0.0
    %9051 = vmatpush.msra.mxu0 0.0
    %9052 = vmatpush.msra.mxu0 0.0
    %9053 = vmatpush.msra.mxu0 0.0
    %9054 = vmatpush.msra.mxu0 0.0
    %9055 = vmatpush.msra.mxu0 0.0
    %9056 = vmatpush.msra.mxu0 0.0
    %9057 = vmatpush.msra.mxu0 0.0
    %9058 = vmatpush.msra.mxu0 0.0
    %9059 = vmatpush.msra.mxu0 0.0
    %9060 = vmatpush.msra.mxu0 0.0
    %9061 = vmatpush.msra.mxu0 %v9043
    %9062 = vmatpush.msra.mxu0 %v9042
    %9063 = vmatpush.msra.mxu0 %v9041
    %9064 = vmatpush.msra.mxu0 %v9040
    %9065 = vmatmul.f32.gmra.mxu0 %v9047
    %v9066 = vpop.f32.mrf.mxu0
    %v9067 = vadd.f32 %v9045, %v9066
    %9068 = vdwg.mxu0
    %vm9069 = vcmp.ge.f32.partialorder %v9067, 0.0
    %v9070 = vmul.f32 %v9067, 0.01
    %v9071 = vsel %vm9069, %v9067, %v9070
    %v9072 = vld [vmem:[#allocation2 + $0x150] sm:$0xff]
    %v9073 = vld [vmem:[#allocation2 + $0x158] sm:$0xff]
    %v9074 = vld [vmem:[#allocation2 + $0x160] sm:$0xff]
    %v9075 = vld [vmem:[#allocation2 + $0x168] sm:$0xff]
    %v9076 = vld [vmem:[#allocation2 + $0x170] sm:$0xff]
    %v9077 = vld [vmem:[#allocation2 + $0x178] sm:$0xff]
    %v9078 = vld [vmem:[#allocation2 + $0x180] sm:$0xff]
    %v9079 = vld [vmem:[#allocation2 + $0x188] sm:$0xff]
    %v9080 = vld [vmem:[#allocation2 + $0x190] sm:$0xff]
    %v9081 = vld [vmem:[#allocation2 + $0x198] sm:$0xff]
    %v9082 = vld [vmem:[#allocation2 + $0x1a0] sm:$0xff]
    %v9083 = vld [vmem:[#allocation2 + $0x1a8] sm:$0xff]
    %v9084 = vld [vmem:[#allocation2 + $0x1b0] sm:$0xff]
    %v9085 = vld [vmem:[#allocation2 + $0x1b8] sm:$0xff]
    %v9086 = vld [vmem:[#allocation2 + $0x1c0] sm:$0xff]
    %v9087 = vld [vmem:[#allocation2 + $0x1c8] sm:$0xff]
    %v9088 = vld [vmem:[#allocation2 + $0x1d0] sm:$0x1]
    %v9089 = vperm.slane %v9088, 0
    %9090 = vmatpush.msra.mxu0 %v9087
    %9091 = vmatpush.msra.mxu0 %v9086
    %9092 = vmatpush.msra.mxu0 %v9085
    %9093 = vmatpush.msra.mxu0 %v9084
    %9094 = vmatpush.msra.mxu0 %v9083
    %9095 = vmatpush.msra.mxu0 %v9082
    %9096 = vmatpush.msra.mxu0 %v9081
    %9097 = vmatpush.msra.mxu0 %v9080
    %9098 = vmatpush.msra.mxu0 %v9079
    %9099 = vmatpush.msra.mxu0 %v9078
    %9100 = vmatpush.msra.mxu0 %v9077
    %9101 = vmatpush.msra.mxu0 %v9076
    %9102 = vmatpush.msra.mxu0 %v9075
    %9103 = vmatpush.msra.mxu0 %v9074
    %9104 = vmatpush.msra.mxu0 %v9073
    %9105 = vmatpush.msra.mxu0 %v9072
    %9106 = vmatmul.f32.gmra.mxu0 %v9071
    %v9107 = vpop.f32.mrf.mxu0
    %v9108 = vadd.f32 %v9089, %v9107
    %9109 = vdwg.mxu0
    %vm9110 = vcmp.ge.f32.partialorder %v9108, 0.0
    %v9111 = vmul.f32 %v9108, 0.01
    %v9112 = vsel %vm9110, %v9108, %v9111
    %v9113 = vld [vmem:[#allocation2 + $0x1d8] sm:$0xff]
    %v9114 = vld [vmem:[#allocation2 + $0x1e0] sm:$0xff]
    %v9115 = vld [vmem:[#allocation2 + $0x1e8] sm:$0xff]
    %v9116 = vld [vmem:[#allocation2 + $0x1f0] sm:$0xff]
    %v9117 = vld [vmem:[#allocation2 + $0x1f8] sm:$0xff]
    %v9118 = vld [vmem:[#allocation2 + $0x200] sm:$0xff]
    %v9119 = vld [vmem:[#allocation2 + $0x208] sm:$0xff]
    %v9120 = vld [vmem:[#allocation2 + $0x210] sm:$0xff]
    %v9121 = vld [vmem:[#allocation2 + $0x218] sm:$0x1]
    %v9122 = vperm.slane %v9121, 0
    %v9124 = vsel %vm2484, %v9112, 0
    %9126 = vmatpush.msra.mxu0 0.0
    %9127 = vmatpush.msra.mxu0 0.0
    %9128 = vmatpush.msra.mxu0 0.0
    %9129 = vmatpush.msra.mxu0 0.0
    %9130 = vmatpush.msra.mxu0 0.0
    %9131 = vmatpush.msra.mxu0 0.0
    %9132 = vmatpush.msra.mxu0 0.0
    %9133 = vmatpush.msra.mxu0 0.0
    %9134 = vmatpush.msra.mxu0 %v9120
    %9135 = vmatpush.msra.mxu0 %v9119
    %9136 = vmatpush.msra.mxu0 %v9118
    %9137 = vmatpush.msra.mxu0 %v9117
    %9138 = vmatpush.msra.mxu0 %v9116
    %9139 = vmatpush.msra.mxu0 %v9115
    %9140 = vmatpush.msra.mxu0 %v9114
    %9141 = vmatpush.msra.mxu0 %v9113
    %9142 = vmatmul.f32.gmra.mxu0 %v9124
    %v9143 = vpop.f32.mrf.mxu0
    %v9144 = vadd.f32 %v9122, %v9143
    %9145 = vdwg.mxu0
    %vm9146 = vcmp.ge.f32.partialorder %v9144, 0.0
    %v9147 = vmul.f32 %v9144, 0.01
    %v9148 = vsel %vm9146, %v9144, %v9147
    %9151 = vrot.lane.b32.xlu0 %v9029, 16
    %v9152 = vpop.permute.xlu0 %9151
    %9155 = vrot.lane.b32.xlu0 %v9148, 32
    %v9156 = vpop.permute.xlu0 %9155
    %v9158 = vsel %vm2385, %v8963, %v9152
    %v9159 = vsel %vm2418, %v9158, %v9156
    %v9160 = vld [vmem:[#allocation2 + $0x220] sm:$0xff]
    %v9161 = vld [vmem:[#allocation2 + $0x228] sm:$0xff]
    %v9162 = vld [vmem:[#allocation2 + $0x230] sm:$0xff]
    %v9163 = vld [vmem:[#allocation2 + $0x238] sm:$0xff]
    %v9164 = vld [vmem:[#allocation2 + $0x240] sm:$0xff]
    %v9165 = vld [vmem:[#allocation2 + $0x248] sm:$0xff]
    %v9166 = vld [vmem:[#allocation2 + $0x250] sm:$0xff]
    %v9167 = vld [vmem:[#allocation2 + $0x258] sm:$0xff]
    %v9168 = vld [vmem:[#allocation2 + $0x260] sm:$0x1]
    %v9169 = vperm.slane %v9168, 0
    %v9171 = vsel %vm2484, %v9159, 0
    %9173 = vmatpush.msra.mxu0 0.0
    %9174 = vmatpush.msra.mxu0 0.0
    %9175 = vmatpush.msra.mxu0 0.0
    %9176 = vmatpush.msra.mxu0 0.0
    %9177 = vmatpush.msra.mxu0 0.0
    %9178 = vmatpush.msra.mxu0 0.0
    %9179 = vmatpush.msra.mxu0 0.0
    %9180 = vmatpush.msra.mxu0 0.0
    %9181 = vmatpush.msra.mxu0 %v9167
    %9182 = vmatpush.msra.mxu0 %v9166
    %9183 = vmatpush.msra.mxu0 %v9165
    %9184 = vmatpush.msra.mxu0 %v9164
    %9185 = vmatpush.msra.mxu0 %v9163
    %9186 = vmatpush.msra.mxu0 %v9162
    %9187 = vmatpush.msra.mxu0 %v9161
    %9188 = vmatpush.msra.mxu0 %v9160
    %9189 = vmatmul.f32.gmra.mxu0 %v9171
    %v9190 = vpop.f32.mrf.mxu0
    %v9191 = vadd.f32 %v9169, %v9190
    %9192 = vdwg.mxu0
    %vm9193 = vcmp.ge.f32.partialorder %v9191, 0.0
    %v9194 = vmul.f32 %v9191, 0.01
    %v9195 = vsel %vm9193, %v9191, %v9194
    %v9196 = vld [vmem:[#allocation2 + $0x268] sm:$0xff]
    %v9197 = vld [vmem:[#allocation2 + $0x270] sm:$0xff]
    %v9198 = vld [vmem:[#allocation2 + $0x278] sm:$0xff]
    %v9199 = vld [vmem:[#allocation2 + $0x280] sm:$0xff]
    %v9200 = vld [vmem:[#allocation2 + $0x288] sm:$0x1]
    %v9201 = vperm.slane %v9200, 0
    %v9203 = vsel %vm2418, %v9195, 0
    %9205 = vmatpush.msra.mxu0 0.0
    %9206 = vmatpush.msra.mxu0 0.0
    %9207 = vmatpush.msra.mxu0 0.0
    %9208 = vmatpush.msra.mxu0 0.0
    %9209 = vmatpush.msra.mxu0 0.0
    %9210 = vmatpush.msra.mxu0 0.0
    %9211 = vmatpush.msra.mxu0 0.0
    %9212 = vmatpush.msra.mxu0 0.0
    %9213 = vmatpush.msra.mxu0 0.0
    %9214 = vmatpush.msra.mxu0 0.0
    %9215 = vmatpush.msra.mxu0 0.0
    %9216 = vmatpush.msra.mxu0 0.0
    %9217 = vmatpush.msra.mxu0 %v9199
    %9218 = vmatpush.msra.mxu0 %v9198
    %9219 = vmatpush.msra.mxu0 %v9197
    %9220 = vmatpush.msra.mxu0 %v9196
    %9221 = vmatmul.f32.gmra.mxu0 %v9203
    %v9222 = vpop.f32.mrf.mxu0
    %v9223 = vadd.f32 %v9201, %v9222
    %9224 = vdwg.mxu0
    %vm9225 = vcmp.ge.f32.partialorder %v9223, 0.0
    %v9226 = vmul.f32 %v9223, 0.01
    %v9227 = vsel %vm9225, %v9223, %v9226
    %v9228 = vld [vmem:[#allocation2 + $0x290] sm:$0xff]
    %v9229 = vld [vmem:[#allocation2 + $0x298] sm:$0xff]
    %v9230 = vld [vmem:[#allocation2 + $0x2a0] sm:$0x1]
    %v9231 = vperm.slane %v9230, 0
    %v9233 = vsel %vm2385, %v9227, 0
    %9235 = vmatpush.msra.mxu0 0.0
    %9236 = vmatpush.msra.mxu0 0.0
    %9237 = vmatpush.msra.mxu0 0.0
    %9238 = vmatpush.msra.mxu0 0.0
    %9239 = vmatpush.msra.mxu0 0.0
    %9240 = vmatpush.msra.mxu0 0.0
    %9241 = vmatpush.msra.mxu0 0.0
    %9242 = vmatpush.msra.mxu0 0.0
    %9243 = vmatpush.msra.mxu0 0.0
    %9244 = vmatpush.msra.mxu0 0.0
    %9245 = vmatpush.msra.mxu0 0.0
    %9246 = vmatpush.msra.mxu0 0.0
    %9247 = vmatpush.msra.mxu0 0.0
    %9248 = vmatpush.msra.mxu0 0.0
    %9249 = vmatpush.msra.mxu0 %v9229
    %9250 = vmatpush.msra.mxu0 %v9228
    %9251 = vmatmul.f32.gmra.mxu0 %v9233
    %v9252 = vpop.f32.mrf.mxu0
    %v9253 = vadd.f32 %v9231, %v9252
    %9254 = vdwg.mxu0
    %vm9255 = vcmask 7168
    %9256 = vst.msk [vmem:[%s8] sm:$0xff] %vm9255, %v9253
    // Predicated region
    $region38: #{net_forward.1} parent=1 // pred_check
      _
    $region39: #{net_forward.1} parent=1 // pred_check_branch
      %9258 = sbr.rel (0) target = $region41
    $region40: #{net_forward.1} parent=1 // pred_region
      _
    $region41: #{net_forward.1} parent=1 // pred_fallthru
      _
    // Predicated region
    $region42: #{net_forward.1} parent=1 // pred_check
      _
    $region43: #{net_forward.1} parent=1 // pred_check_branch
      %9260 = sbr.rel (0) target = $region45
    $region44: #{net_forward.1} parent=1 // pred_region
      _
    $region45: #{net_forward.1} parent=1 // pred_fallthru
      _
    %9261 = vsyncpa [#allocation3], 1

</llo_original>
